<compile_context>
chip_gen: v7x
topology: tpu7x:2x2x1
jax: 0.10.0
libtpu: 0.0.40
codegen_flags: <defaults>
</compile_context>

<pallas_src>
import functools
import math

import numpy as np
import jax
import jax.numpy as jnp
from jax import lax
from jax.experimental import pallas as pl
from jax.experimental.pallas import tpu as pltpu


_HIGHEST = jax.lax.Precision.HIGHEST


# --------------------------------------------------------------------------
# Synthetic, deterministic stand-ins for the circuit-construction helpers.
# TODO(synk): the sources of QCNN_RBS_based_VQC / RBS_Unitaries_I2 are not
# provided; the gate list below is a deterministic per-window pyramid with the
# same parameter count K*(K-1) and the exact (A0*cos + A1*sin + A2) structure
# used by RBS_Conv_density.forward.
# --------------------------------------------------------------------------
def qcnn_rbs_based_vqc(I, K):
    n_half = K * (K - 1) // 2
    list_gates, param_dict = [], {}
    g = 0
    for reg, offset in ((0, 0), (1, I)):          # row qubits, then column qubits
        for w in range(I // K):
            base = offset + w * K
            p = 0
            for d in range(K - 1):
                for i in range(K - 1 - d):
                    list_gates.append((base + i, base + i + 1))
                    param_dict[g] = reg * n_half + p
                    p += 1
                    g += 1
    rbs_dict = {i: t for i, t in enumerate(list_gates)}
    return None, param_dict, rbs_dict


def rbs_unitaries_i2(I, list_gates):
    """For each qubit pair, the (A0, A1, A2) decomposition of the RBS unitary
    acting on the flattened I*I image basis."""
    D = I * I
    eye = np.eye(D, dtype=np.float32)
    out = {}
    for (a, b) in set(list_gates):
        A0 = np.zeros((D, D), np.float32)
        A1 = np.zeros((D, D), np.float32)
        if b < I:                                  # both row qubits: mix rows a, b
            idx_a = [a * I + c for c in range(I)]
            idx_b = [b * I + c for c in range(I)]
        else:                                      # both column qubits: mix cols
            idx_a = [r * I + (a - I) for r in range(I)]
            idx_b = [r * I + (b - I) for r in range(I)]
        for x, y in zip(idx_a, idx_b):
            A0[x, x] = 1.0
            A0[y, y] = 1.0
            A1[x, y] = 1.0
            A1[y, x] = -1.0
        out[(a, b)] = (A0, A1, eye - A0)
    return out


def build_u_stack(a0s, a1s, a2s, gate_thetas):
    """U_g = A0_g*cos(theta_g) + A1_g*sin(theta_g) + A2_g (exactly the module's
    per-gate unitary)."""
    c = jnp.cos(gate_thetas)[:, None, None]
    s = jnp.sin(gate_thetas)[:, None, None]
    return a0s * c + a1s * s + a2s


def compose_circuit(u_stack, precision=_HIGHEST):
    """W = U_{G-1} @ ... @ U_1 @ U_0 (gate 0 is the first applied to rho)."""
    D = u_stack.shape[1]

    def step(w, u):
        return jnp.dot(u, w, preferred_element_type=jnp.float32,
                       precision=precision), None

    w, _ = lax.scan(step, jnp.eye(D, dtype=jnp.float32),
                    u_stack.astype(jnp.float32))
    return w


# --------------------------------------------------------------------------
# Pallas kernel: grid = (B_padded // block_b,) (parallel over batch blocks).
# Lane-dense layout: x[j, b*D + k] = rho[b, j, k], so the left multiply
# W @ rho is ONE (D,D)x(D, block_b*D) MXU matmul for the whole block and the
# HBM load/store per grid step is a single lane-dense slab.
# --------------------------------------------------------------------------
def conv_rbs_kernel(w_ref, x_ref, o_ref, *, precision):
    D = w_ref.shape[0]
    nb = x_ref.shape[1] // D              # densities in this batch block

    w = w_ref[...]                                                # (D, D)
    # Left multiply, batch folded into the MXU free / lane dimension:
    #   t[i, b*D + k] = sum_j W[i, j] * rho[b, j, k]
    t = jnp.dot(w, x_ref[...], preferred_element_type=jnp.float32,
                precision=precision)                              # (D, nb*D)
    # Right multiply by W^T per batch column block: contraction against W's
    # dim 1 is a transposed-RHS MXU matmul (no transpose materialized).  With
    # the circuit composed into a single W this runs once per block total
    # (previously once per gate), so it is no longer on the critical path.
    for b in range(nb):
        blk = t[:, b * D:(b + 1) * D]                             # (D, D)
        o_ref[:, b * D:(b + 1) * D] = lax.dot_general(
            blk, w, (((1,), (1,)), ((), ())),
            preferred_element_type=jnp.float32, precision=precision)


def _default_block_b(B, D):
    """Fill the MXU free/lane dim (block_b*D) to ~1024 lanes; keep >= 2 grid
    steps on 2-TensorCore chips (v7x) when the batch allows it."""
    bb = max(1, min(B, max(1, 1024 // D)))
    try:
        kind = jax.devices()[0].device_kind.lower()
    except Exception:
        kind = ""
    if "v7" in kind and B >= 2:
        bb = min(bb, -(-B // 2))          # >= 2 grid steps so both TCs get work
    return bb


def conv_rbs_density_i2(rho, u_stack, *, block_b=None, precision=_HIGHEST):
    """Apply the full RBS circuit: rho <- W rho W^T with W = prod_g U_g.

    rho: (B, D, D) float32, u_stack: (G, D, D) float32 (per-gate unitaries).
    Mathematically identical to applying rho <- U_g rho U_g^T sequentially.
    """
    B, D, D2 = rho.shape
    assert D == D2 and u_stack.shape[1:] == (D, D)

    w = compose_circuit(u_stack, precision=precision)             # (D, D)

    if block_b is None:
        block_b = _default_block_b(B, D)
    # Each block's lane extent (block_b*D) must be a multiple of 128 unless a
    # single block covers the whole padded batch; round up (padding is cheap).
    if D % 128 != 0:
        lane_mult = 128 // math.gcd(128, D)
        block_b = -(-block_b // lane_mult) * lane_mult
    Bp = pl.cdiv(B, block_b) * block_b          # pad batch to a block multiple

    # Wrapper-side layout plumbing (fused by XLA, no compute hoisted):
    # (B, D, D) -> lane-dense (D, Bp*D) with rho2[j, b*D + k] = rho[b, j, k].
    rho_t = jnp.transpose(rho.astype(jnp.float32), (1, 0, 2))     # (D, B, D)
    if Bp != B:
        rho_t = jnp.pad(rho_t, ((0, 0), (0, Bp - B), (0, 0)))
    rho2 = rho_t.reshape(D, Bp * D)
    # TODO(synk): for batch-scaled B, fold batch->lanes inside the kernel from
    # a (block_b, D, D) BlockSpec to avoid this extra HBM transpose pass.

    grid = (Bp // block_b,)

    blk_bytes = block_b * D * D * 4
    need = 2 * D * D * 4 + 4 * blk_bytes + (1 << 20)   # W + dbl-buffered in/out
    vmem_limit = int(min(max(need, 8 << 20), 56 << 20))

    cost = pl.CostEstimate(
        flops=4 * D * D * D * Bp,              # two D^3 matmuls per density
        transcendentals=0,
        bytes_accessed=4 * (D * D + 2 * Bp * D * D),
    )

    out2 = pl.pallas_call(
        functools.partial(conv_rbs_kernel, precision=precision),
        out_shape=jax.ShapeDtypeStruct((D, Bp * D), jnp.float32),
        grid=grid,
        in_specs=[
            pl.BlockSpec((D, D), lambda i: (0, 0)),               # W (VMEM resident)
            pl.BlockSpec((D, block_b * D), lambda i: (0, i)),     # rho batch block
        ],
        out_specs=pl.BlockSpec((D, block_b * D), lambda i: (0, i)),
        compiler_params=pltpu.CompilerParams(
            dimension_semantics=("parallel",),
            vmem_limit_bytes=vmem_limit),
        cost_estimate=cost,
    )(w, rho2)

    out = out2.reshape(D, Bp, D)[:, :B, :]
    return jnp.transpose(out, (1, 0, 2)).astype(rho.dtype)


if __name__ == "__main__":
    I, K, B = 8, 2, 8          # image size I=8 -> D = 64, filter K=2, batch 8
    D = I * I

    _, param_dict, rbs_dict = qcnn_rbs_based_vqc(I, K)
    list_gates = [rbs_dict[k] for k in rbs_dict]
    unitaries = rbs_unitaries_i2(I, list_gates)
    G = len(list_gates)

    key = jax.random.PRNGKey(0)
    k_theta, k_rho = jax.random.split(key)

    # nn.ParameterList of K*(K-1) scalars initialized with torch.rand(())
    thetas = jax.random.uniform(k_theta, (K * (K - 1),), dtype=jnp.float32)

    a0s = jnp.stack([jnp.asarray(unitaries[t][0]) for t in list_gates])
    a1s = jnp.stack([jnp.asarray(unitaries[t][1]) for t in list_gates])
    a2s = jnp.stack([jnp.asarray(unitaries[t][2]) for t in list_gates])
    gate_thetas = jnp.stack([thetas[param_dict[i]] for i in range(G)])

    # deterministic batch of valid density matrices: rho = M M^T / tr(M M^T)
    m = jax.random.normal(k_rho, (B, D, D), dtype=jnp.float32)
    rho = jnp.einsum("bij,bkj->bik", m, m)
    rho = rho / jnp.trace(rho, axis1=-2, axis2=-1)[:, None, None]

    @jax.jit
    def forward(rho, a0s, a1s, a2s, gate_thetas):
        u_stack = build_u_stack(a0s, a1s, a2s, gate_thetas)
        return conv_rbs_density_i2(rho, u_stack)

    out = jax.block_until_ready(forward(rho, a0s, a1s, a2s, gate_thetas))

    # pure-JAX reference of the PyTorch forward: sequential U rho U^T per gate
    # (full f32 precision; composed-W only reorders f32 accumulation, so the
    # tolerance below has ample margin over the ~1e-6 reassociation error).
    u_all = build_u_stack(a0s, a1s, a2s, gate_thetas)
    ref = rho
    for g in range(G):
        ref = jnp.einsum("ij,bjk,lk->bil", u_all[g], ref, u_all[g],
                         precision=_HIGHEST)

    assert jnp.allclose(out, ref, atol=1e-4, rtol=1e-5), "mismatch vs reference"
    print("KERNEL_OK")
</pallas_src>

<mosaic_0001>
module attributes {stable_mosaic.version = 11 : i64} {
  func.func @conv_rbs_kernel(%arg0: i32, %arg1: memref<64x64xf32, #tpu.memory_space<vmem>>, %arg2: memref<64x512xf32, #tpu.memory_space<vmem>>, %arg3: memref<64x512xf32, #tpu.memory_space<vmem>>) attributes {dimension_semantics = [#tpu.dimension_semantics<parallel>], iteration_bounds = array<i64: 1>, scalar_prefetch = 0 : i64, scratch_operands = 0 : i64, tpu.core_type = #tpu.core_type<tc>, window_params = [{pipeline_mode = #tpu.pipeline_mode<synchronous>, transform_indices = @transform_0, window_bounds = array<i64: 64, 64>}, {transform_indices = @transform_1, window_bounds = array<i64: 64, 512>}, {transform_indices = @transform_2, window_bounds = array<i64: 64, 512>}]} {
    %c0 = arith.constant 0 : index
    %c0_0 = arith.constant 0 : index
    %0 = vector.load %arg1[%c0, %c0_0] : memref<64x64xf32, #tpu.memory_space<vmem>>, vector<64x64xf32>
    %c0_1 = arith.constant 0 : index
    %c0_2 = arith.constant 0 : index
    %1 = vector.load %arg2[%c0_1, %c0_2] : memref<64x512xf32, #tpu.memory_space<vmem>>, vector<64x512xf32>
    %cst = arith.constant dense<0.000000e+00> : vector<64x512xf32>
    %2 = tpu.matmul %0, %1, %cst {dimension_numbers = #tpu.dot_dimension_numbers<[1], [0], [0], [1], [0, 0, 1, 1], [], []>, precision = #tpu.contract_precision<fp32>} : vector<64x64xf32>, vector<64x512xf32>, vector<64x512xf32> -> vector<64x512xf32>
    %3 = vector.extract_strided_slice %2 {offsets = [0, 0], sizes = [64, 64], strides = [1, 1]} : vector<64x512xf32> to vector<64x64xf32>
    %cst_3 = arith.constant dense<0.000000e+00> : vector<64x64xf32>
    %4 = tpu.matmul %3, %0, %cst_3 {dimension_numbers = #tpu.dot_dimension_numbers<[1], [1], [0], [0], [0, 0, 1, 0], [], []>, precision = #tpu.contract_precision<fp32>} : vector<64x64xf32>, vector<64x64xf32>, vector<64x64xf32> -> vector<64x64xf32>
    %c0_4 = arith.constant 0 : index
    %c0_5 = arith.constant 0 : index
    %5 = vector.load %arg3[%c0_4, %c0_5] : memref<64x512xf32, #tpu.memory_space<vmem>>, vector<64x64xf32>
    tpu.vector_store %arg3[%c0_4, %c0_5], %4 {strides = array<i32>} : memref<64x512xf32, #tpu.memory_space<vmem>>, vector<64x64xf32>,
    %6 = vector.extract_strided_slice %2 {offsets = [0, 64], sizes = [64, 64], strides = [1, 1]} : vector<64x512xf32> to vector<64x64xf32>
    %cst_6 = arith.constant dense<0.000000e+00> : vector<64x64xf32>
    %7 = tpu.matmul %6, %0, %cst_6 {dimension_numbers = #tpu.dot_dimension_numbers<[1], [1], [0], [0], [0, 0, 1, 0], [], []>, precision = #tpu.contract_precision<fp32>} : vector<64x64xf32>, vector<64x64xf32>, vector<64x64xf32> -> vector<64x64xf32>
    %c0_7 = arith.constant 0 : index
    %c64 = arith.constant 64 : index
    %8 = vector.load %arg3[%c0_7, %c64] : memref<64x512xf32, #tpu.memory_space<vmem>>, vector<64x64xf32>
    tpu.vector_store %arg3[%c0_7, %c64], %7 {strides = array<i32>} : memref<64x512xf32, #tpu.memory_space<vmem>>, vector<64x64xf32>,
    %9 = vector.extract_strided_slice %2 {offsets = [0, 128], sizes = [64, 64], strides = [1, 1]} : vector<64x512xf32> to vector<64x64xf32>
    %cst_8 = arith.constant dense<0.000000e+00> : vector<64x64xf32>
    %10 = tpu.matmul %9, %0, %cst_8 {dimension_numbers = #tpu.dot_dimension_numbers<[1], [1], [0], [0], [0, 0, 1, 0], [], []>, precision = #tpu.contract_precision<fp32>} : vector<64x64xf32>, vector<64x64xf32>, vector<64x64xf32> -> vector<64x64xf32>
    %c0_9 = arith.constant 0 : index
    %c128 = arith.constant 128 : index
    %11 = vector.load %arg3[%c0_9, %c128] : memref<64x512xf32, #tpu.memory_space<vmem>>, vector<64x64xf32>
    tpu.vector_store %arg3[%c0_9, %c128], %10 {strides = array<i32>} : memref<64x512xf32, #tpu.memory_space<vmem>>, vector<64x64xf32>,
    %12 = vector.extract_strided_slice %2 {offsets = [0, 192], sizes = [64, 64], strides = [1, 1]} : vector<64x512xf32> to vector<64x64xf32>
    %cst_10 = arith.constant dense<0.000000e+00> : vector<64x64xf32>
    %13 = tpu.matmul %12, %0, %cst_10 {dimension_numbers = #tpu.dot_dimension_numbers<[1], [1], [0], [0], [0, 0, 1, 0], [], []>, precision = #tpu.contract_precision<fp32>} : vector<64x64xf32>, vector<64x64xf32>, vector<64x64xf32> -> vector<64x64xf32>
    %c0_11 = arith.constant 0 : index
    %c192 = arith.constant 192 : index
    %14 = vector.load %arg3[%c0_11, %c192] : memref<64x512xf32, #tpu.memory_space<vmem>>, vector<64x64xf32>
    tpu.vector_store %arg3[%c0_11, %c192], %13 {strides = array<i32>} : memref<64x512xf32, #tpu.memory_space<vmem>>, vector<64x64xf32>,
    %15 = vector.extract_strided_slice %2 {offsets = [0, 256], sizes = [64, 64], strides = [1, 1]} : vector<64x512xf32> to vector<64x64xf32>
    %cst_12 = arith.constant dense<0.000000e+00> : vector<64x64xf32>
    %16 = tpu.matmul %15, %0, %cst_12 {dimension_numbers = #tpu.dot_dimension_numbers<[1], [1], [0], [0], [0, 0, 1, 0], [], []>, precision = #tpu.contract_precision<fp32>} : vector<64x64xf32>, vector<64x64xf32>, vector<64x64xf32> -> vector<64x64xf32>
    %c0_13 = arith.constant 0 : index
    %c256 = arith.constant 256 : index
    %17 = vector.load %arg3[%c0_13, %c256] : memref<64x512xf32, #tpu.memory_space<vmem>>, vector<64x64xf32>
    tpu.vector_store %arg3[%c0_13, %c256], %16 {strides = array<i32>} : memref<64x512xf32, #tpu.memory_space<vmem>>, vector<64x64xf32>,
    %18 = vector.extract_strided_slice %2 {offsets = [0, 320], sizes = [64, 64], strides = [1, 1]} : vector<64x512xf32> to vector<64x64xf32>
    %cst_14 = arith.constant dense<0.000000e+00> : vector<64x64xf32>
    %19 = tpu.matmul %18, %0, %cst_14 {dimension_numbers = #tpu.dot_dimension_numbers<[1], [1], [0], [0], [0, 0, 1, 0], [], []>, precision = #tpu.contract_precision<fp32>} : vector<64x64xf32>, vector<64x64xf32>, vector<64x64xf32> -> vector<64x64xf32>
    %c0_15 = arith.constant 0 : index
    %c320 = arith.constant 320 : index
    %20 = vector.load %arg3[%c0_15, %c320] : memref<64x512xf32, #tpu.memory_space<vmem>>, vector<64x64xf32>
    tpu.vector_store %arg3[%c0_15, %c320], %19 {strides = array<i32>} : memref<64x512xf32, #tpu.memory_space<vmem>>, vector<64x64xf32>,
    %21 = vector.extract_strided_slice %2 {offsets = [0, 384], sizes = [64, 64], strides = [1, 1]} : vector<64x512xf32> to vector<64x64xf32>
    %cst_16 = arith.constant dense<0.000000e+00> : vector<64x64xf32>
    %22 = tpu.matmul %21, %0, %cst_16 {dimension_numbers = #tpu.dot_dimension_numbers<[1], [1], [0], [0], [0, 0, 1, 0], [], []>, precision = #tpu.contract_precision<fp32>} : vector<64x64xf32>, vector<64x64xf32>, vector<64x64xf32> -> vector<64x64xf32>
    %c0_17 = arith.constant 0 : index
    %c384 = arith.constant 384 : index
    %23 = vector.load %arg3[%c0_17, %c384] : memref<64x512xf32, #tpu.memory_space<vmem>>, vector<64x64xf32>
    tpu.vector_store %arg3[%c0_17, %c384], %22 {strides = array<i32>} : memref<64x512xf32, #tpu.memory_space<vmem>>, vector<64x64xf32>,
    %24 = vector.extract_strided_slice %2 {offsets = [0, 448], sizes = [64, 64], strides = [1, 1]} : vector<64x512xf32> to vector<64x64xf32>
    %cst_18 = arith.constant dense<0.000000e+00> : vector<64x64xf32>
    %25 = tpu.matmul %24, %0, %cst_18 {dimension_numbers = #tpu.dot_dimension_numbers<[1], [1], [0], [0], [0, 0, 1, 0], [], []>, precision = #tpu.contract_precision<fp32>} : vector<64x64xf32>, vector<64x64xf32>, vector<64x64xf32> -> vector<64x64xf32>
    %c0_19 = arith.constant 0 : index
    %c448 = arith.constant 448 : index
    %26 = vector.load %arg3[%c0_19, %c448] : memref<64x512xf32, #tpu.memory_space<vmem>>, vector<64x64xf32>
    tpu.vector_store %arg3[%c0_19, %c448], %25 {strides = array<i32>} : memref<64x512xf32, #tpu.memory_space<vmem>>, vector<64x64xf32>,
    return
  }
  func.func @transform_0(%arg0: i32) -> (i32, i32) {
    %c0_i32 = arith.constant 0 : i32
    %c0_i32_0 = arith.constant 0 : i32
    %c0_i32_1 = arith.constant 0 : i32
    return %c0_i32, %c0_i32_0 : i32, i32
  }
  func.func @transform_1(%arg0: i32) -> (i32, i32) {
    %c0_i32 = arith.constant 0 : i32
    %c0_i32_0 = arith.constant 0 : i32
    return %c0_i32, %arg0 : i32, i32
  }
  func.func @transform_2(%arg0: i32) -> (i32, i32) {
    %c0_i32 = arith.constant 0 : i32
    %c0_i32_0 = arith.constant 0 : i32
    return %c0_i32, %arg0 : i32, i32
  }
}

</mosaic_0001>

<llo_original>
// kernel: forward.1
$region0: #{forward.1}
  #allocation0 [shape = 'u32[]', space=smem, size = 0x4, offset = 0x4, fixed_abs, tag = 'smem constant byte address 0x4 - core index']
  #allocation1 [shape = 'u32[144,128]{1,0:T(1,128)}', space=vmem, size = 0x12000, scoped, tag = 'internal scratch']
  %s0 = inlined_call_operand.vmem [shape: f32[64,64], index: 0, kind: input, shape index: {}]
  %s1 = inlined_call_operand.vmem [shape: f32[64,512], index: 1, kind: input, shape index: {}]
  %s2 = inlined_call_operand.vmem [shape: f32[64,512], index: 2, kind: output, shape index: {}]
  %s3 = sld [smem:[#allocation0]]
  $region18: #{forward.1} parent=0
    _
  %s5 = ssub.s32 1, %s3
  %s6 = scalar_select 0, %s5, %s3
  // Predicated region
  $region2: #{forward.1} parent=0 // pred_check
    _
  $region3: #{forward.1} parent=0 // pred_check_branch
    %8 = sbr.rel (0) target = $region5
  $region4: #{forward.1} parent=0 // pred_region
    _
  $region5: #{forward.1} parent=0 // pred_fallthru
    _
  // Predicated region
  $region6: #{forward.1} parent=0 // pred_check
    _
  $region7: #{forward.1} parent=0 // pred_check_branch
    %10 = sbr.rel (0) target = $region9
  $region8: #{forward.1} parent=0 // pred_region
    _
  $region9: #{forward.1} parent=0 // pred_fallthru
    _
  %v11 = vld [vmem:[%s0] sm:$0xff]
  %v12 = vld [vmem:[%s0 + $0x8] sm:$0xff]
  %v13 = vld [vmem:[%s0 + $0x10] sm:$0xff]
  %v14 = vld [vmem:[%s0 + $0x18] sm:$0xff]
  %v15 = vld [vmem:[%s0 + $0x20] sm:$0xff]
  %v16 = vld [vmem:[%s0 + $0x28] sm:$0xff]
  %v17 = vld [vmem:[%s0 + $0x30] sm:$0xff]
  %v18 = vld [vmem:[%s0 + $0x38] sm:$0xff]
  %v19 = vld [vmem:[%s1] sm:$0xff]
  %v20 = vld [vmem:[%s1 + $0x8] sm:$0xff]
  %v21 = vld [vmem:[%s1 + $0x10] sm:$0xff]
  %v22 = vld [vmem:[%s1 + $0x18] sm:$0xff]
  %v23 = vld [vmem:[%s1 + $0x20] sm:$0xff]
  %v24 = vld [vmem:[%s1 + $0x28] sm:$0xff]
  %v25 = vld [vmem:[%s1 + $0x30] sm:$0xff]
  %v26 = vld [vmem:[%s1 + $0x38] sm:$0xff]
  %v27 = vld [vmem:[%s1 + $0x40] sm:$0xff]
  %v28 = vld [vmem:[%s1 + $0x48] sm:$0xff]
  %v29 = vld [vmem:[%s1 + $0x50] sm:$0xff]
  %v30 = vld [vmem:[%s1 + $0x58] sm:$0xff]
  %v31 = vld [vmem:[%s1 + $0x60] sm:$0xff]
  %v32 = vld [vmem:[%s1 + $0x68] sm:$0xff]
  %v33 = vld [vmem:[%s1 + $0x70] sm:$0xff]
  %v34 = vld [vmem:[%s1 + $0x78] sm:$0xff]
  %v35 = vld [vmem:[%s1 + $0x80] sm:$0xff]
  %v36 = vld [vmem:[%s1 + $0x88] sm:$0xff]
  %v37 = vld [vmem:[%s1 + $0x90] sm:$0xff]
  %v38 = vld [vmem:[%s1 + $0x98] sm:$0xff]
  %v39 = vld [vmem:[%s1 + $0xa0] sm:$0xff]
  %v40 = vld [vmem:[%s1 + $0xa8] sm:$0xff]
  %v41 = vld [vmem:[%s1 + $0xb0] sm:$0xff]
  %v42 = vld [vmem:[%s1 + $0xb8] sm:$0xff]
  %v43 = vld [vmem:[%s1 + $0xc0] sm:$0xff]
  %v44 = vld [vmem:[%s1 + $0xc8] sm:$0xff]
  %v45 = vld [vmem:[%s1 + $0xd0] sm:$0xff]
  %v46 = vld [vmem:[%s1 + $0xd8] sm:$0xff]
  %v47 = vld [vmem:[%s1 + $0xe0] sm:$0xff]
  %v48 = vld [vmem:[%s1 + $0xe8] sm:$0xff]
  %v49 = vld [vmem:[%s1 + $0xf0] sm:$0xff]
  %v50 = vld [vmem:[%s1 + $0xf8] sm:$0xff]
  %vm51 = vcmask 523264
  %v53 = vsel %vm51, %v11, 0
  %v56 = vsel %vm51, %v12, 0
  %v59 = vsel %vm51, %v13, 0
  %v62 = vsel %vm51, %v14, 0
  %v65 = vsel %vm51, %v15, 0
  %v68 = vsel %vm51, %v16, 0
  %v71 = vsel %vm51, %v17, 0
  %v74 = vsel %vm51, %v18, 0
  %v76 = vand.u32 %v20, 4294901760
  %77 = vmatprep.subr.mxu0 %v76
  %v78 = vand.u32 %v19, 4294901760
  %79 = vmatpush1.msra.mxu0 %v78
  %v80 = vand.u32 %v24, 4294901760
  %81 = vmatprep.subr.mxu0 %v80
  %v82 = vand.u32 %v23, 4294901760
  %83 = vmatpush1.msra.mxu0 %v82
  %v84 = vand.u32 %v28, 4294901760
  %85 = vmatprep.subr.mxu0 %v84
  %v86 = vand.u32 %v27, 4294901760
  %87 = vmatpush1.msra.mxu0 %v86
  %v88 = vand.u32 %v32, 4294901760
  %89 = vmatprep.subr.mxu0 %v88
  %v90 = vand.u32 %v31, 4294901760
  %91 = vmatpush1.msra.mxu0 %v90
  %v92 = vand.u32 %v36, 4294901760
  %93 = vmatprep.subr.mxu0 %v92
  %v94 = vand.u32 %v35, 4294901760
  %95 = vmatpush1.msra.mxu0 %v94
  %v96 = vand.u32 %v40, 4294901760
  %97 = vmatprep.subr.mxu0 %v96
  %v98 = vand.u32 %v39, 4294901760
  %99 = vmatpush1.msra.mxu0 %v98
  %v100 = vand.u32 %v44, 4294901760
  %101 = vmatprep.subr.mxu0 %v100
  %v102 = vand.u32 %v43, 4294901760
  %103 = vmatpush1.msra.mxu0 %v102
  %v104 = vand.u32 %v48, 4294901760
  %105 = vmatprep.subr.mxu0 %v104
  %v106 = vand.u32 %v47, 4294901760
  %107 = vmatpush1.msra.mxu0 %v106
  %108 = vmatprep.subr.mxu0 0.0
  %109 = vmatpush1.msra.mxu0 0.0
  %110 = vmatprep.subr.mxu0 0.0
  %111 = vmatpush1.msra.mxu0 0.0
  %112 = vmatprep.subr.mxu0 0.0
  %113 = vmatpush1.msra.mxu0 0.0
  %114 = vmatprep.subr.mxu0 0.0
  %115 = vmatpush1.msra.mxu0 0.0
  %116 = vmatprep.subr.mxu0 0.0
  %117 = vmatpush1.msra.mxu0 0.0
  %118 = vmatprep.subr.mxu0 0.0
  %119 = vmatpush1.msra.mxu0 0.0
  %120 = vmatprep.subr.mxu0 0.0
  %121 = vmatpush1.msra.mxu0 0.0
  %122 = vmatprep.subr.mxu0 0.0
  %123 = vmatpush1.msra.mxu0 0.0
  %124 = vmatprep.subr.mxu0 0.0
  %125 = vmatpush1.msra.mxu0 0.0
  %126 = vmatprep.subr.mxu0 0.0
  %127 = vmatpush1.msra.mxu0 0.0
  %128 = vmatprep.subr.mxu0 0.0
  %129 = vmatpush1.msra.mxu0 0.0
  %130 = vmatprep.subr.mxu0 0.0
  %131 = vmatpush1.msra.mxu0 0.0
  %132 = vmatprep.subr.mxu0 0.0
  %133 = vmatpush1.msra.mxu0 0.0
  %134 = vmatprep.subr.mxu0 0.0
  %135 = vmatpush1.msra.mxu0 0.0
  %136 = vmatprep.subr.mxu0 0.0
  %137 = vmatpush1.msra.mxu0 0.0
  %138 = vmatprep.subr.mxu0 0.0
  %139 = vmatpush1.msra.mxu0 0.0
  %140 = vmatprep.subr.mxu0 0.0
  %141 = vmatpush1.msra.mxu0 0.0
  %142 = vmatprep.subr.mxu0 0.0
  %143 = vmatpush1.msra.mxu0 0.0
  %144 = vmatprep.subr.mxu0 0.0
  %145 = vmatpush1.msra.mxu0 0.0
  %146 = vmatprep.subr.mxu0 0.0
  %147 = vmatpush1.msra.mxu0 0.0
  %148 = vmatprep.subr.mxu0 0.0
  %149 = vmatpush1.msra.mxu0 0.0
  %150 = vmatprep.subr.mxu0 0.0
  %151 = vmatpush1.msra.mxu0 0.0
  %152 = vmatprep.subr.mxu0 0.0
  %153 = vmatpush1.msra.mxu0 0.0
  %154 = vmatprep.subr.mxu0 0.0
  %155 = vmatpush1.msra.mxu0 0.0
  %156 = vmatprep.mubr.f32.mxu0 0.0
  %v157 = vand.u32 %v53, 4294901760
  %v158 = vsub.f32 %v53, %v157
  %v159 = vand.u32 %v158, 4294901760
  %v160 = vsub.f32 %v158, %v159
  %v161 = vand.u32 %v160, 4294901760
  %162 = vmatmul.mubr.f32.gmra.mrb[0].mxu0 %v161
  %v163 = vpop.f32.mrb[0].mxu0
  %v164 = vadd.f32 0.0, %v163
  %v165 = vpop.f32.mrb[0].mxu0
  %v166 = vadd.f32 0.0, %v165
  %167 = vmatprep.mubr.f32.mxu0 0.0
  %v168 = vand.u32 %v56, 4294901760
  %v169 = vsub.f32 %v56, %v168
  %v170 = vand.u32 %v169, 4294901760
  %v171 = vsub.f32 %v169, %v170
  %v172 = vand.u32 %v171, 4294901760
  %173 = vmatmul.mubr.f32.gmra.mrb[0].mxu0 %v172
  %v174 = vpop.f32.mrb[0].mxu0
  %v175 = vadd.f32 0.0, %v174
  %v176 = vpop.f32.mrb[0].mxu0
  %v177 = vadd.f32 0.0, %v176
  %178 = vmatprep.mubr.f32.mxu0 0.0
  %v179 = vand.u32 %v59, 4294901760
  %v180 = vsub.f32 %v59, %v179
  %v181 = vand.u32 %v180, 4294901760
  %v182 = vsub.f32 %v180, %v181
  %v183 = vand.u32 %v182, 4294901760
  %184 = vmatmul.mubr.f32.gmra.mrb[0].mxu0 %v183
  %v185 = vpop.f32.mrb[0].mxu0
  %v186 = vadd.f32 0.0, %v185
  %v187 = vpop.f32.mrb[0].mxu0
  %v188 = vadd.f32 0.0, %v187
  %189 = vmatprep.mubr.f32.mxu0 0.0
  %v190 = vand.u32 %v62, 4294901760
  %v191 = vsub.f32 %v62, %v190
  %v192 = vand.u32 %v191, 4294901760
  %v193 = vsub.f32 %v191, %v192
  %v194 = vand.u32 %v193, 4294901760
  %195 = vmatmul.mubr.f32.gmra.mrb[0].mxu0 %v194
  %v196 = vpop.f32.mrb[0].mxu0
  %v197 = vadd.f32 0.0, %v196
  %v198 = vpop.f32.mrb[0].mxu0
  %v199 = vadd.f32 0.0, %v198
  %200 = vmatprep.mubr.f32.mxu0 0.0
  %v201 = vand.u32 %v65, 4294901760
  %v202 = vsub.f32 %v65, %v201
  %v203 = vand.u32 %v202, 4294901760
  %v204 = vsub.f32 %v202, %v203
  %v205 = vand.u32 %v204, 4294901760
  %206 = vmatmul.mubr.f32.gmra.mrb[0].mxu0 %v205
  %v207 = vpop.f32.mrb[0].mxu0
  %v208 = vadd.f32 0.0, %v207
  %v209 = vpop.f32.mrb[0].mxu0
  %v210 = vadd.f32 0.0, %v209
  %211 = vmatprep.mubr.f32.mxu0 0.0
  %v212 = vand.u32 %v68, 4294901760
  %v213 = vsub.f32 %v68, %v212
  %v214 = vand.u32 %v213, 4294901760
  %v215 = vsub.f32 %v213, %v214
  %v216 = vand.u32 %v215, 4294901760
  %217 = vmatmul.mubr.f32.gmra.mrb[0].mxu0 %v216
  %v218 = vpop.f32.mrb[0].mxu0
  %v219 = vadd.f32 0.0, %v218
  %v220 = vpop.f32.mrb[0].mxu0
  %v221 = vadd.f32 0.0, %v220
  %222 = vmatprep.mubr.f32.mxu0 0.0
  %v223 = vand.u32 %v71, 4294901760
  %v224 = vsub.f32 %v71, %v223
  %v225 = vand.u32 %v224, 4294901760
  %v226 = vsub.f32 %v224, %v225
  %v227 = vand.u32 %v226, 4294901760
  %228 = vmatmul.mubr.f32.gmra.mrb[0].mxu0 %v227
  %v229 = vpop.f32.mrb[0].mxu0
  %v230 = vadd.f32 0.0, %v229
  %v231 = vpop.f32.mrb[0].mxu0
  %v232 = vadd.f32 0.0, %v231
  %233 = vmatprep.mubr.f32.mxu0 0.0
  %v234 = vand.u32 %v74, 4294901760
  %v235 = vsub.f32 %v74, %v234
  %v236 = vand.u32 %v235, 4294901760
  %v237 = vsub.f32 %v235, %v236
  %v238 = vand.u32 %v237, 4294901760
  %239 = vmatmul.mubr.f32.gmra.mrb[0].mxu0 %v238
  %v240 = vpop.f32.mrb[0].mxu0
  %v241 = vadd.f32 0.0, %v240
  %v242 = vpop.f32.mrb[0].mxu0
  %v243 = vadd.f32 0.0, %v242
  %244 = vdwg.mxu0
  %v245 = vand.u32 %v20, 4294901760
  %v246 = vsub.f32 %v20, %v245
  %v247 = vand.u32 %v246, 4294901760
  %v248 = vsub.f32 %v246, %v247
  %v249 = vand.u32 %v248, 4294901760
  %250 = vmatprep.subr.mxu0 %v249
  %v251 = vand.u32 %v19, 4294901760
  %v252 = vsub.f32 %v19, %v251
  %v253 = vand.u32 %v252, 4294901760
  %v254 = vsub.f32 %v252, %v253
  %v255 = vand.u32 %v254, 4294901760
  %256 = vmatpush1.msra.mxu0 %v255
  %v257 = vand.u32 %v24, 4294901760
  %v258 = vsub.f32 %v24, %v257
  %v259 = vand.u32 %v258, 4294901760
  %v260 = vsub.f32 %v258, %v259
  %v261 = vand.u32 %v260, 4294901760
  %262 = vmatprep.subr.mxu0 %v261
  %v263 = vand.u32 %v23, 4294901760
  %v264 = vsub.f32 %v23, %v263
  %v265 = vand.u32 %v264, 4294901760
  %v266 = vsub.f32 %v264, %v265
  %v267 = vand.u32 %v266, 4294901760
  %268 = vmatpush1.msra.mxu0 %v267
  %v269 = vand.u32 %v28, 4294901760
  %v270 = vsub.f32 %v28, %v269
  %v271 = vand.u32 %v270, 4294901760
  %v272 = vsub.f32 %v270, %v271
  %v273 = vand.u32 %v272, 4294901760
  %274 = vmatprep.subr.mxu0 %v273
  %v275 = vand.u32 %v27, 4294901760
  %v276 = vsub.f32 %v27, %v275
  %v277 = vand.u32 %v276, 4294901760
  %v278 = vsub.f32 %v276, %v277
  %v279 = vand.u32 %v278, 4294901760
  %280 = vmatpush1.msra.mxu0 %v279
  %v281 = vand.u32 %v32, 4294901760
  %v282 = vsub.f32 %v32, %v281
  %v283 = vand.u32 %v282, 4294901760
  %v284 = vsub.f32 %v282, %v283
  %v285 = vand.u32 %v284, 4294901760
  %286 = vmatprep.subr.mxu0 %v285
  %v287 = vand.u32 %v31, 4294901760
  %v288 = vsub.f32 %v31, %v287
  %v289 = vand.u32 %v288, 4294901760
  %v290 = vsub.f32 %v288, %v289
  %v291 = vand.u32 %v290, 4294901760
  %292 = vmatpush1.msra.mxu0 %v291
  %v293 = vand.u32 %v36, 4294901760
  %v294 = vsub.f32 %v36, %v293
  %v295 = vand.u32 %v294, 4294901760
  %v296 = vsub.f32 %v294, %v295
  %v297 = vand.u32 %v296, 4294901760
  %298 = vmatprep.subr.mxu0 %v297
  %v299 = vand.u32 %v35, 4294901760
  %v300 = vsub.f32 %v35, %v299
  %v301 = vand.u32 %v300, 4294901760
  %v302 = vsub.f32 %v300, %v301
  %v303 = vand.u32 %v302, 4294901760
  %304 = vmatpush1.msra.mxu0 %v303
  %v305 = vand.u32 %v40, 4294901760
  %v306 = vsub.f32 %v40, %v305
  %v307 = vand.u32 %v306, 4294901760
  %v308 = vsub.f32 %v306, %v307
  %v309 = vand.u32 %v308, 4294901760
  %310 = vmatprep.subr.mxu0 %v309
  %v311 = vand.u32 %v39, 4294901760
  %v312 = vsub.f32 %v39, %v311
  %v313 = vand.u32 %v312, 4294901760
  %v314 = vsub.f32 %v312, %v313
  %v315 = vand.u32 %v314, 4294901760
  %316 = vmatpush1.msra.mxu0 %v315
  %v317 = vand.u32 %v44, 4294901760
  %v318 = vsub.f32 %v44, %v317
  %v319 = vand.u32 %v318, 4294901760
  %v320 = vsub.f32 %v318, %v319
  %v321 = vand.u32 %v320, 4294901760
  %322 = vmatprep.subr.mxu0 %v321
  %v323 = vand.u32 %v43, 4294901760
  %v324 = vsub.f32 %v43, %v323
  %v325 = vand.u32 %v324, 4294901760
  %v326 = vsub.f32 %v324, %v325
  %v327 = vand.u32 %v326, 4294901760
  %328 = vmatpush1.msra.mxu0 %v327
  %v329 = vand.u32 %v48, 4294901760
  %v330 = vsub.f32 %v48, %v329
  %v331 = vand.u32 %v330, 4294901760
  %v332 = vsub.f32 %v330, %v331
  %v333 = vand.u32 %v332, 4294901760
  %334 = vmatprep.subr.mxu0 %v333
  %v335 = vand.u32 %v47, 4294901760
  %v336 = vsub.f32 %v47, %v335
  %v337 = vand.u32 %v336, 4294901760
  %v338 = vsub.f32 %v336, %v337
  %v339 = vand.u32 %v338, 4294901760
  %340 = vmatpush1.msra.mxu0 %v339
  %341 = vmatprep.subr.mxu0 0.0
  %342 = vmatpush1.msra.mxu0 0.0
  %343 = vmatprep.subr.mxu0 0.0
  %344 = vmatpush1.msra.mxu0 0.0
  %345 = vmatprep.subr.mxu0 0.0
  %346 = vmatpush1.msra.mxu0 0.0
  %347 = vmatprep.subr.mxu0 0.0
  %348 = vmatpush1.msra.mxu0 0.0
  %349 = vmatprep.subr.mxu0 0.0
  %350 = vmatpush1.msra.mxu0 0.0
  %351 = vmatprep.subr.mxu0 0.0
  %352 = vmatpush1.msra.mxu0 0.0
  %353 = vmatprep.subr.mxu0 0.0
  %354 = vmatpush1.msra.mxu0 0.0
  %355 = vmatprep.subr.mxu0 0.0
  %356 = vmatpush1.msra.mxu0 0.0
  %357 = vmatprep.subr.mxu0 0.0
  %358 = vmatpush1.msra.mxu0 0.0
  %359 = vmatprep.subr.mxu0 0.0
  %360 = vmatpush1.msra.mxu0 0.0
  %361 = vmatprep.subr.mxu0 0.0
  %362 = vmatpush1.msra.mxu0 0.0
  %363 = vmatprep.subr.mxu0 0.0
  %364 = vmatpush1.msra.mxu0 0.0
  %365 = vmatprep.subr.mxu0 0.0
  %366 = vmatpush1.msra.mxu0 0.0
  %367 = vmatprep.subr.mxu0 0.0
  %368 = vmatpush1.msra.mxu0 0.0
  %369 = vmatprep.subr.mxu0 0.0
  %370 = vmatpush1.msra.mxu0 0.0
  %371 = vmatprep.subr.mxu0 0.0
  %372 = vmatpush1.msra.mxu0 0.0
  %373 = vmatprep.subr.mxu0 0.0
  %374 = vmatpush1.msra.mxu0 0.0
  %375 = vmatprep.subr.mxu0 0.0
  %376 = vmatpush1.msra.mxu0 0.0
  %377 = vmatprep.subr.mxu0 0.0
  %378 = vmatpush1.msra.mxu0 0.0
  %379 = vmatprep.subr.mxu0 0.0
  %380 = vmatpush1.msra.mxu0 0.0
  %381 = vmatprep.subr.mxu0 0.0
  %382 = vmatpush1.msra.mxu0 0.0
  %383 = vmatprep.subr.mxu0 0.0
  %384 = vmatpush1.msra.mxu0 0.0
  %385 = vmatprep.subr.mxu0 0.0
  %386 = vmatpush1.msra.mxu0 0.0
  %387 = vmatprep.subr.mxu0 0.0
  %388 = vmatpush1.msra.mxu0 0.0
  %389 = vmatprep.mubr.f32.mxu0 0.0
  %v390 = vand.u32 %v53, 4294901760
  %391 = vmatmul.mubr.f32.gmra.mrb[0].mxu0 %v390
  %v392 = vpop.f32.mrb[0].mxu0
  %v393 = vadd.f32 %v164, %v392
  %v394 = vpop.f32.mrb[0].mxu0
  %v395 = vadd.f32 %v166, %v394
  %396 = vmatprep.mubr.f32.mxu0 0.0
  %v397 = vand.u32 %v56, 4294901760
  %398 = vmatmul.mubr.f32.gmra.mrb[0].mxu0 %v397
  %v399 = vpop.f32.mrb[0].mxu0
  %v400 = vadd.f32 %v175, %v399
  %v401 = vpop.f32.mrb[0].mxu0
  %v402 = vadd.f32 %v177, %v401
  %403 = vmatprep.mubr.f32.mxu0 0.0
  %v404 = vand.u32 %v59, 4294901760
  %405 = vmatmul.mubr.f32.gmra.mrb[0].mxu0 %v404
  %v406 = vpop.f32.mrb[0].mxu0
  %v407 = vadd.f32 %v186, %v406
  %v408 = vpop.f32.mrb[0].mxu0
  %v409 = vadd.f32 %v188, %v408
  %410 = vmatprep.mubr.f32.mxu0 0.0
  %v411 = vand.u32 %v62, 4294901760
  %412 = vmatmul.mubr.f32.gmra.mrb[0].mxu0 %v411
  %v413 = vpop.f32.mrb[0].mxu0
  %v414 = vadd.f32 %v197, %v413
  %v415 = vpop.f32.mrb[0].mxu0
  %v416 = vadd.f32 %v199, %v415
  %417 = vmatprep.mubr.f32.mxu0 0.0
  %v418 = vand.u32 %v65, 4294901760
  %419 = vmatmul.mubr.f32.gmra.mrb[0].mxu0 %v418
  %v420 = vpop.f32.mrb[0].mxu0
  %v421 = vadd.f32 %v208, %v420
  %v422 = vpop.f32.mrb[0].mxu0
  %v423 = vadd.f32 %v210, %v422
  %424 = vmatprep.mubr.f32.mxu0 0.0
  %v425 = vand.u32 %v68, 4294901760
  %426 = vmatmul.mubr.f32.gmra.mrb[0].mxu0 %v425
  %v427 = vpop.f32.mrb[0].mxu0
  %v428 = vadd.f32 %v219, %v427
  %v429 = vpop.f32.mrb[0].mxu0
  %v430 = vadd.f32 %v221, %v429
  %431 = vmatprep.mubr.f32.mxu0 0.0
  %v432 = vand.u32 %v71, 4294901760
  %433 = vmatmul.mubr.f32.gmra.mrb[0].mxu0 %v432
  %v434 = vpop.f32.mrb[0].mxu0
  %v435 = vadd.f32 %v230, %v434
  %v436 = vpop.f32.mrb[0].mxu0
  %v437 = vadd.f32 %v232, %v436
  %438 = vmatprep.mubr.f32.mxu0 0.0
  %v439 = vand.u32 %v74, 4294901760
  %440 = vmatmul.mubr.f32.gmra.mrb[0].mxu0 %v439
  %v441 = vpop.f32.mrb[0].mxu0
  %v442 = vadd.f32 %v241, %v441
  %v443 = vpop.f32.mrb[0].mxu0
  %v444 = vadd.f32 %v243, %v443
  %445 = vdwg.mxu0
  %v446 = vand.u32 %v20, 4294901760
  %v447 = vsub.f32 %v20, %v446
  %448 = vmatprep.subr.mxu0 %v447
  %v449 = vand.u32 %v19, 4294901760
  %v450 = vsub.f32 %v19, %v449
  %451 = vmatpush1.msra.mxu0 %v450
  %v452 = vand.u32 %v24, 4294901760
  %v453 = vsub.f32 %v24, %v452
  %454 = vmatprep.subr.mxu0 %v453
  %v455 = vand.u32 %v23, 4294901760
  %v456 = vsub.f32 %v23, %v455
  %457 = vmatpush1.msra.mxu0 %v456
  %v458 = vand.u32 %v28, 4294901760
  %v459 = vsub.f32 %v28, %v458
  %460 = vmatprep.subr.mxu0 %v459
  %v461 = vand.u32 %v27, 4294901760
  %v462 = vsub.f32 %v27, %v461
  %463 = vmatpush1.msra.mxu0 %v462
  %v464 = vand.u32 %v32, 4294901760
  %v465 = vsub.f32 %v32, %v464
  %466 = vmatprep.subr.mxu0 %v465
  %v467 = vand.u32 %v31, 4294901760
  %v468 = vsub.f32 %v31, %v467
  %469 = vmatpush1.msra.mxu0 %v468
  %v470 = vand.u32 %v36, 4294901760
  %v471 = vsub.f32 %v36, %v470
  %472 = vmatprep.subr.mxu0 %v471
  %v473 = vand.u32 %v35, 4294901760
  %v474 = vsub.f32 %v35, %v473
  %475 = vmatpush1.msra.mxu0 %v474
  %v476 = vand.u32 %v40, 4294901760
  %v477 = vsub.f32 %v40, %v476
  %478 = vmatprep.subr.mxu0 %v477
  %v479 = vand.u32 %v39, 4294901760
  %v480 = vsub.f32 %v39, %v479
  %481 = vmatpush1.msra.mxu0 %v480
  %v482 = vand.u32 %v44, 4294901760
  %v483 = vsub.f32 %v44, %v482
  %484 = vmatprep.subr.mxu0 %v483
  %v485 = vand.u32 %v43, 4294901760
  %v486 = vsub.f32 %v43, %v485
  %487 = vmatpush1.msra.mxu0 %v486
  %v488 = vand.u32 %v48, 4294901760
  %v489 = vsub.f32 %v48, %v488
  %490 = vmatprep.subr.mxu0 %v489
  %v491 = vand.u32 %v47, 4294901760
  %v492 = vsub.f32 %v47, %v491
  %493 = vmatpush1.msra.mxu0 %v492
  %494 = vmatprep.subr.mxu0 0.0
  %495 = vmatpush1.msra.mxu0 0.0
  %496 = vmatprep.subr.mxu0 0.0
  %497 = vmatpush1.msra.mxu0 0.0
  %498 = vmatprep.subr.mxu0 0.0
  %499 = vmatpush1.msra.mxu0 0.0
  %500 = vmatprep.subr.mxu0 0.0
  %501 = vmatpush1.msra.mxu0 0.0
  %502 = vmatprep.subr.mxu0 0.0
  %503 = vmatpush1.msra.mxu0 0.0
  %504 = vmatprep.subr.mxu0 0.0
  %505 = vmatpush1.msra.mxu0 0.0
  %506 = vmatprep.subr.mxu0 0.0
  %507 = vmatpush1.msra.mxu0 0.0
  %508 = vmatprep.subr.mxu0 0.0
  %509 = vmatpush1.msra.mxu0 0.0
  %510 = vmatprep.subr.mxu0 0.0
  %511 = vmatpush1.msra.mxu0 0.0
  %512 = vmatprep.subr.mxu0 0.0
  %513 = vmatpush1.msra.mxu0 0.0
  %514 = vmatprep.subr.mxu0 0.0
  %515 = vmatpush1.msra.mxu0 0.0
  %516 = vmatprep.subr.mxu0 0.0
  %517 = vmatpush1.msra.mxu0 0.0
  %518 = vmatprep.subr.mxu0 0.0
  %519 = vmatpush1.msra.mxu0 0.0
  %520 = vmatprep.subr.mxu0 0.0
  %521 = vmatpush1.msra.mxu0 0.0
  %522 = vmatprep.subr.mxu0 0.0
  %523 = vmatpush1.msra.mxu0 0.0
  %524 = vmatprep.subr.mxu0 0.0
  %525 = vmatpush1.msra.mxu0 0.0
  %526 = vmatprep.subr.mxu0 0.0
  %527 = vmatpush1.msra.mxu0 0.0
  %528 = vmatprep.subr.mxu0 0.0
  %529 = vmatpush1.msra.mxu0 0.0
  %530 = vmatprep.subr.mxu0 0.0
  %531 = vmatpush1.msra.mxu0 0.0
  %532 = vmatprep.subr.mxu0 0.0
  %533 = vmatpush1.msra.mxu0 0.0
  %534 = vmatprep.subr.mxu0 0.0
  %535 = vmatpush1.msra.mxu0 0.0
  %536 = vmatprep.subr.mxu0 0.0
  %537 = vmatpush1.msra.mxu0 0.0
  %538 = vmatprep.subr.mxu0 0.0
  %539 = vmatpush1.msra.mxu0 0.0
  %540 = vmatprep.subr.mxu0 0.0
  %541 = vmatpush1.msra.mxu0 0.0
  %542 = vmatprep.mubr.f32.mxu0 0.0
  %v543 = vand.u32 %v53, 4294901760
  %v544 = vsub.f32 %v53, %v543
  %545 = vmatmul.mubr.f32.gmra.mrb[0].mxu0 %v544
  %v546 = vpop.f32.mrb[0].mxu0
  %v547 = vadd.f32 %v393, %v546
  %v548 = vpop.f32.mrb[0].mxu0
  %v549 = vadd.f32 %v395, %v548
  %550 = vmatprep.mubr.f32.mxu0 0.0
  %v551 = vand.u32 %v56, 4294901760
  %v552 = vsub.f32 %v56, %v551
  %553 = vmatmul.mubr.f32.gmra.mrb[0].mxu0 %v552
  %v554 = vpop.f32.mrb[0].mxu0
  %v555 = vadd.f32 %v400, %v554
  %v556 = vpop.f32.mrb[0].mxu0
  %v557 = vadd.f32 %v402, %v556
  %558 = vmatprep.mubr.f32.mxu0 0.0
  %v559 = vand.u32 %v59, 4294901760
  %v560 = vsub.f32 %v59, %v559
  %561 = vmatmul.mubr.f32.gmra.mrb[0].mxu0 %v560
  %v562 = vpop.f32.mrb[0].mxu0
  %v563 = vadd.f32 %v407, %v562
  %v564 = vpop.f32.mrb[0].mxu0
  %v565 = vadd.f32 %v409, %v564
  %566 = vmatprep.mubr.f32.mxu0 0.0
  %v567 = vand.u32 %v62, 4294901760
  %v568 = vsub.f32 %v62, %v567
  %569 = vmatmul.mubr.f32.gmra.mrb[0].mxu0 %v568
  %v570 = vpop.f32.mrb[0].mxu0
  %v571 = vadd.f32 %v414, %v570
  %v572 = vpop.f32.mrb[0].mxu0
  %v573 = vadd.f32 %v416, %v572
  %574 = vmatprep.mubr.f32.mxu0 0.0
  %v575 = vand.u32 %v65, 4294901760
  %v576 = vsub.f32 %v65, %v575
  %577 = vmatmul.mubr.f32.gmra.mrb[0].mxu0 %v576
  %v578 = vpop.f32.mrb[0].mxu0
  %v579 = vadd.f32 %v421, %v578
  %v580 = vpop.f32.mrb[0].mxu0
  %v581 = vadd.f32 %v423, %v580
  %582 = vmatprep.mubr.f32.mxu0 0.0
  %v583 = vand.u32 %v68, 4294901760
  %v584 = vsub.f32 %v68, %v583
  %585 = vmatmul.mubr.f32.gmra.mrb[0].mxu0 %v584
  %v586 = vpop.f32.mrb[0].mxu0
  %v587 = vadd.f32 %v428, %v586
  %v588 = vpop.f32.mrb[0].mxu0
  %v589 = vadd.f32 %v430, %v588
  %590 = vmatprep.mubr.f32.mxu0 0.0
  %v591 = vand.u32 %v71, 4294901760
  %v592 = vsub.f32 %v71, %v591
  %593 = vmatmul.mubr.f32.gmra.mrb[0].mxu0 %v592
  %v594 = vpop.f32.mrb[0].mxu0
  %v595 = vadd.f32 %v435, %v594
  %v596 = vpop.f32.mrb[0].mxu0
  %v597 = vadd.f32 %v437, %v596
  %598 = vmatprep.mubr.f32.mxu0 0.0
  %v599 = vand.u32 %v74, 4294901760
  %v600 = vsub.f32 %v74, %v599
  %601 = vmatmul.mubr.f32.gmra.mrb[0].mxu0 %v600
  %v602 = vpop.f32.mrb[0].mxu0
  %v603 = vadd.f32 %v442, %v602
  %v604 = vpop.f32.mrb[0].mxu0
  %v605 = vadd.f32 %v444, %v604
  %606 = vdwg.mxu0
  %v607 = vand.u32 %v20, 4294901760
  %608 = vmatprep.subr.mxu0 %v607
  %v609 = vand.u32 %v19, 4294901760
  %610 = vmatpush1.msra.mxu0 %v609
  %v611 = vand.u32 %v24, 4294901760
  %612 = vmatprep.subr.mxu0 %v611
  %v613 = vand.u32 %v23, 4294901760
  %614 = vmatpush1.msra.mxu0 %v613
  %v615 = vand.u32 %v28, 4294901760
  %616 = vmatprep.subr.mxu0 %v615
  %v617 = vand.u32 %v27, 4294901760
  %618 = vmatpush1.msra.mxu0 %v617
  %v619 = vand.u32 %v32, 4294901760
  %620 = vmatprep.subr.mxu0 %v619
  %v621 = vand.u32 %v31, 4294901760
  %622 = vmatpush1.msra.mxu0 %v621
  %v623 = vand.u32 %v36, 4294901760
  %624 = vmatprep.subr.mxu0 %v623
  %v625 = vand.u32 %v35, 4294901760
  %626 = vmatpush1.msra.mxu0 %v625
  %v627 = vand.u32 %v40, 4294901760
  %628 = vmatprep.subr.mxu0 %v627
  %v629 = vand.u32 %v39, 4294901760
  %630 = vmatpush1.msra.mxu0 %v629
  %v631 = vand.u32 %v44, 4294901760
  %632 = vmatprep.subr.mxu0 %v631
  %v633 = vand.u32 %v43, 4294901760
  %634 = vmatpush1.msra.mxu0 %v633
  %v635 = vand.u32 %v48, 4294901760
  %636 = vmatprep.subr.mxu0 %v635
  %v637 = vand.u32 %v47, 4294901760
  %638 = vmatpush1.msra.mxu0 %v637
  %639 = vmatprep.subr.mxu0 0.0
  %640 = vmatpush1.msra.mxu0 0.0
  %641 = vmatprep.subr.mxu0 0.0
  %642 = vmatpush1.msra.mxu0 0.0
  %643 = vmatprep.subr.mxu0 0.0
  %644 = vmatpush1.msra.mxu0 0.0
  %645 = vmatprep.subr.mxu0 0.0
  %646 = vmatpush1.msra.mxu0 0.0
  %647 = vmatprep.subr.mxu0 0.0
  %648 = vmatpush1.msra.mxu0 0.0
  %649 = vmatprep.subr.mxu0 0.0
  %650 = vmatpush1.msra.mxu0 0.0
  %651 = vmatprep.subr.mxu0 0.0
  %652 = vmatpush1.msra.mxu0 0.0
  %653 = vmatprep.subr.mxu0 0.0
  %654 = vmatpush1.msra.mxu0 0.0
  %655 = vmatprep.subr.mxu0 0.0
  %656 = vmatpush1.msra.mxu0 0.0
  %657 = vmatprep.subr.mxu0 0.0
  %658 = vmatpush1.msra.mxu0 0.0
  %659 = vmatprep.subr.mxu0 0.0
  %660 = vmatpush1.msra.mxu0 0.0
  %661 = vmatprep.subr.mxu0 0.0
  %662 = vmatpush1.msra.mxu0 0.0
  %663 = vmatprep.subr.mxu0 0.0
  %664 = vmatpush1.msra.mxu0 0.0
  %665 = vmatprep.subr.mxu0 0.0
  %666 = vmatpush1.msra.mxu0 0.0
  %667 = vmatprep.subr.mxu0 0.0
  %668 = vmatpush1.msra.mxu0 0.0
  %669 = vmatprep.subr.mxu0 0.0
  %670 = vmatpush1.msra.mxu0 0.0
  %671 = vmatprep.subr.mxu0 0.0
  %672 = vmatpush1.msra.mxu0 0.0
  %673 = vmatprep.subr.mxu0 0.0
  %674 = vmatpush1.msra.mxu0 0.0
  %675 = vmatprep.subr.mxu0 0.0
  %676 = vmatpush1.msra.mxu0 0.0
  %677 = vmatprep.subr.mxu0 0.0
  %678 = vmatpush1.msra.mxu0 0.0
  %679 = vmatprep.subr.mxu0 0.0
  %680 = vmatpush1.msra.mxu0 0.0
  %681 = vmatprep.subr.mxu0 0.0
  %682 = vmatpush1.msra.mxu0 0.0
  %683 = vmatprep.subr.mxu0 0.0
  %684 = vmatpush1.msra.mxu0 0.0
  %685 = vmatprep.subr.mxu0 0.0
  %686 = vmatpush1.msra.mxu0 0.0
  %687 = vmatprep.mubr.f32.mxu0 0.0
  %v688 = vand.u32 %v53, 4294901760
  %v689 = vsub.f32 %v53, %v688
  %v690 = vand.u32 %v689, 4294901760
  %691 = vmatmul.mubr.f32.gmra.mrb[0].mxu0 %v690
  %v692 = vpop.f32.mrb[0].mxu0
  %v693 = vadd.f32 %v547, %v692
  %v694 = vpop.f32.mrb[0].mxu0
  %v695 = vadd.f32 %v549, %v694
  %696 = vmatprep.mubr.f32.mxu0 0.0
  %v697 = vand.u32 %v56, 4294901760
  %v698 = vsub.f32 %v56, %v697
  %v699 = vand.u32 %v698, 4294901760
  %700 = vmatmul.mubr.f32.gmra.mrb[0].mxu0 %v699
  %v701 = vpop.f32.mrb[0].mxu0
  %v702 = vadd.f32 %v555, %v701
  %v703 = vpop.f32.mrb[0].mxu0
  %v704 = vadd.f32 %v557, %v703
  %705 = vmatprep.mubr.f32.mxu0 0.0
  %v706 = vand.u32 %v59, 4294901760
  %v707 = vsub.f32 %v59, %v706
  %v708 = vand.u32 %v707, 4294901760
  %709 = vmatmul.mubr.f32.gmra.mrb[0].mxu0 %v708
  %v710 = vpop.f32.mrb[0].mxu0
  %v711 = vadd.f32 %v563, %v710
  %v712 = vpop.f32.mrb[0].mxu0
  %v713 = vadd.f32 %v565, %v712
  %714 = vmatprep.mubr.f32.mxu0 0.0
  %v715 = vand.u32 %v62, 4294901760
  %v716 = vsub.f32 %v62, %v715
  %v717 = vand.u32 %v716, 4294901760
  %718 = vmatmul.mubr.f32.gmra.mrb[0].mxu0 %v717
  %v719 = vpop.f32.mrb[0].mxu0
  %v720 = vadd.f32 %v571, %v719
  %v721 = vpop.f32.mrb[0].mxu0
  %v722 = vadd.f32 %v573, %v721
  %723 = vmatprep.mubr.f32.mxu0 0.0
  %v724 = vand.u32 %v65, 4294901760
  %v725 = vsub.f32 %v65, %v724
  %v726 = vand.u32 %v725, 4294901760
  %727 = vmatmul.mubr.f32.gmra.mrb[0].mxu0 %v726
  %v728 = vpop.f32.mrb[0].mxu0
  %v729 = vadd.f32 %v579, %v728
  %v730 = vpop.f32.mrb[0].mxu0
  %v731 = vadd.f32 %v581, %v730
  %732 = vmatprep.mubr.f32.mxu0 0.0
  %v733 = vand.u32 %v68, 4294901760
  %v734 = vsub.f32 %v68, %v733
  %v735 = vand.u32 %v734, 4294901760
  %736 = vmatmul.mubr.f32.gmra.mrb[0].mxu0 %v735
  %v737 = vpop.f32.mrb[0].mxu0
  %v738 = vadd.f32 %v587, %v737
  %v739 = vpop.f32.mrb[0].mxu0
  %v740 = vadd.f32 %v589, %v739
  %741 = vmatprep.mubr.f32.mxu0 0.0
  %v742 = vand.u32 %v71, 4294901760
  %v743 = vsub.f32 %v71, %v742
  %v744 = vand.u32 %v743, 4294901760
  %745 = vmatmul.mubr.f32.gmra.mrb[0].mxu0 %v744
  %v746 = vpop.f32.mrb[0].mxu0
  %v747 = vadd.f32 %v595, %v746
  %v748 = vpop.f32.mrb[0].mxu0
  %v749 = vadd.f32 %v597, %v748
  %750 = vmatprep.mubr.f32.mxu0 0.0
  %v751 = vand.u32 %v74, 4294901760
  %v752 = vsub.f32 %v74, %v751
  %v753 = vand.u32 %v752, 4294901760
  %754 = vmatmul.mubr.f32.gmra.mrb[0].mxu0 %v753
  %v755 = vpop.f32.mrb[0].mxu0
  %v756 = vadd.f32 %v603, %v755
  %v757 = vpop.f32.mrb[0].mxu0
  %v758 = vadd.f32 %v605, %v757
  %759 = vdwg.mxu0
  %v760 = vand.u32 %v20, 4294901760
  %v761 = vsub.f32 %v20, %v760
  %v762 = vand.u32 %v761, 4294901760
  %763 = vmatprep.subr.mxu0 %v762
  %v764 = vand.u32 %v19, 4294901760
  %v765 = vsub.f32 %v19, %v764
  %v766 = vand.u32 %v765, 4294901760
  %767 = vmatpush1.msra.mxu0 %v766
  %v768 = vand.u32 %v24, 4294901760
  %v769 = vsub.f32 %v24, %v768
  %v770 = vand.u32 %v769, 4294901760
  %771 = vmatprep.subr.mxu0 %v770
  %v772 = vand.u32 %v23, 4294901760
  %v773 = vsub.f32 %v23, %v772
  %v774 = vand.u32 %v773, 4294901760
  %775 = vmatpush1.msra.mxu0 %v774
  %v776 = vand.u32 %v28, 4294901760
  %v777 = vsub.f32 %v28, %v776
  %v778 = vand.u32 %v777, 4294901760
  %779 = vmatprep.subr.mxu0 %v778
  %v780 = vand.u32 %v27, 4294901760
  %v781 = vsub.f32 %v27, %v780
  %v782 = vand.u32 %v781, 4294901760
  %783 = vmatpush1.msra.mxu0 %v782
  %v784 = vand.u32 %v32, 4294901760
  %v785 = vsub.f32 %v32, %v784
  %v786 = vand.u32 %v785, 4294901760
  %787 = vmatprep.subr.mxu0 %v786
  %v788 = vand.u32 %v31, 4294901760
  %v789 = vsub.f32 %v31, %v788
  %v790 = vand.u32 %v789, 4294901760
  %791 = vmatpush1.msra.mxu0 %v790
  %v792 = vand.u32 %v36, 4294901760
  %v793 = vsub.f32 %v36, %v792
  %v794 = vand.u32 %v793, 4294901760
  %795 = vmatprep.subr.mxu0 %v794
  %v796 = vand.u32 %v35, 4294901760
  %v797 = vsub.f32 %v35, %v796
  %v798 = vand.u32 %v797, 4294901760
  %799 = vmatpush1.msra.mxu0 %v798
  %v800 = vand.u32 %v40, 4294901760
  %v801 = vsub.f32 %v40, %v800
  %v802 = vand.u32 %v801, 4294901760
  %803 = vmatprep.subr.mxu0 %v802
  %v804 = vand.u32 %v39, 4294901760
  %v805 = vsub.f32 %v39, %v804
  %v806 = vand.u32 %v805, 4294901760
  %807 = vmatpush1.msra.mxu0 %v806
  %v808 = vand.u32 %v44, 4294901760
  %v809 = vsub.f32 %v44, %v808
  %v810 = vand.u32 %v809, 4294901760
  %811 = vmatprep.subr.mxu0 %v810
  %v812 = vand.u32 %v43, 4294901760
  %v813 = vsub.f32 %v43, %v812
  %v814 = vand.u32 %v813, 4294901760
  %815 = vmatpush1.msra.mxu0 %v814
  %v816 = vand.u32 %v48, 4294901760
  %v817 = vsub.f32 %v48, %v816
  %v818 = vand.u32 %v817, 4294901760
  %819 = vmatprep.subr.mxu0 %v818
  %v820 = vand.u32 %v47, 4294901760
  %v821 = vsub.f32 %v47, %v820
  %v822 = vand.u32 %v821, 4294901760
  %823 = vmatpush1.msra.mxu0 %v822
  %824 = vmatprep.subr.mxu0 0.0
  %825 = vmatpush1.msra.mxu0 0.0
  %826 = vmatprep.subr.mxu0 0.0
  %827 = vmatpush1.msra.mxu0 0.0
  %828 = vmatprep.subr.mxu0 0.0
  %829 = vmatpush1.msra.mxu0 0.0
  %830 = vmatprep.subr.mxu0 0.0
  %831 = vmatpush1.msra.mxu0 0.0
  %832 = vmatprep.subr.mxu0 0.0
  %833 = vmatpush1.msra.mxu0 0.0
  %834 = vmatprep.subr.mxu0 0.0
  %835 = vmatpush1.msra.mxu0 0.0
  %836 = vmatprep.subr.mxu0 0.0
  %837 = vmatpush1.msra.mxu0 0.0
  %838 = vmatprep.subr.mxu0 0.0
  %839 = vmatpush1.msra.mxu0 0.0
  %840 = vmatprep.subr.mxu0 0.0
  %841 = vmatpush1.msra.mxu0 0.0
  %842 = vmatprep.subr.mxu0 0.0
  %843 = vmatpush1.msra.mxu0 0.0
  %844 = vmatprep.subr.mxu0 0.0
  %845 = vmatpush1.msra.mxu0 0.0
  %846 = vmatprep.subr.mxu0 0.0
  %847 = vmatpush1.msra.mxu0 0.0
  %848 = vmatprep.subr.mxu0 0.0
  %849 = vmatpush1.msra.mxu0 0.0
  %850 = vmatprep.subr.mxu0 0.0
  %851 = vmatpush1.msra.mxu0 0.0
  %852 = vmatprep.subr.mxu0 0.0
  %853 = vmatpush1.msra.mxu0 0.0
  %854 = vmatprep.subr.mxu0 0.0
  %855 = vmatpush1.msra.mxu0 0.0
  %856 = vmatprep.subr.mxu0 0.0
  %857 = vmatpush1.msra.mxu0 0.0
  %858 = vmatprep.subr.mxu0 0.0
  %859 = vmatpush1.msra.mxu0 0.0
  %860 = vmatprep.subr.mxu0 0.0
  %861 = vmatpush1.msra.mxu0 0.0
  %862 = vmatprep.subr.mxu0 0.0
  %863 = vmatpush1.msra.mxu0 0.0
  %864 = vmatprep.subr.mxu0 0.0
  %865 = vmatpush1.msra.mxu0 0.0
  %866 = vmatprep.subr.mxu0 0.0
  %867 = vmatpush1.msra.mxu0 0.0
  %868 = vmatprep.subr.mxu0 0.0
  %869 = vmatpush1.msra.mxu0 0.0
  %870 = vmatprep.subr.mxu0 0.0
  %871 = vmatpush1.msra.mxu0 0.0
  %872 = vmatprep.mubr.f32.mxu0 0.0
  %v873 = vand.u32 %v53, 4294901760
  %874 = vmatmul.mubr.f32.gmra.mrb[0].mxu0 %v873
  %v875 = vpop.f32.mrb[0].mxu0
  %v876 = vadd.f32 %v693, %v875
  %v877 = vpop.f32.mrb[0].mxu0
  %v878 = vadd.f32 %v695, %v877
  %879 = vmatprep.mubr.f32.mxu0 0.0
  %v880 = vand.u32 %v56, 4294901760
  %881 = vmatmul.mubr.f32.gmra.mrb[0].mxu0 %v880
  %v882 = vpop.f32.mrb[0].mxu0
  %v883 = vadd.f32 %v702, %v882
  %v884 = vpop.f32.mrb[0].mxu0
  %v885 = vadd.f32 %v704, %v884
  %886 = vmatprep.mubr.f32.mxu0 0.0
  %v887 = vand.u32 %v59, 4294901760
  %888 = vmatmul.mubr.f32.gmra.mrb[0].mxu0 %v887
  %v889 = vpop.f32.mrb[0].mxu0
  %v890 = vadd.f32 %v711, %v889
  %v891 = vpop.f32.mrb[0].mxu0
  %v892 = vadd.f32 %v713, %v891
  %893 = vmatprep.mubr.f32.mxu0 0.0
  %v894 = vand.u32 %v62, 4294901760
  %895 = vmatmul.mubr.f32.gmra.mrb[0].mxu0 %v894
  %v896 = vpop.f32.mrb[0].mxu0
  %v897 = vadd.f32 %v720, %v896
  %v898 = vpop.f32.mrb[0].mxu0
  %v899 = vadd.f32 %v722, %v898
  %900 = vmatprep.mubr.f32.mxu0 0.0
  %v901 = vand.u32 %v65, 4294901760
  %902 = vmatmul.mubr.f32.gmra.mrb[0].mxu0 %v901
  %v903 = vpop.f32.mrb[0].mxu0
  %v904 = vadd.f32 %v729, %v903
  %v905 = vpop.f32.mrb[0].mxu0
  %v906 = vadd.f32 %v731, %v905
  %907 = vmatprep.mubr.f32.mxu0 0.0
  %v908 = vand.u32 %v68, 4294901760
  %909 = vmatmul.mubr.f32.gmra.mrb[0].mxu0 %v908
  %v910 = vpop.f32.mrb[0].mxu0
  %v911 = vadd.f32 %v738, %v910
  %v912 = vpop.f32.mrb[0].mxu0
  %v913 = vadd.f32 %v740, %v912
  %914 = vmatprep.mubr.f32.mxu0 0.0
  %v915 = vand.u32 %v71, 4294901760
  %916 = vmatmul.mubr.f32.gmra.mrb[0].mxu0 %v915
  %v917 = vpop.f32.mrb[0].mxu0
  %v918 = vadd.f32 %v747, %v917
  %v919 = vpop.f32.mrb[0].mxu0
  %v920 = vadd.f32 %v749, %v919
  %921 = vmatprep.mubr.f32.mxu0 0.0
  %v922 = vand.u32 %v74, 4294901760
  %923 = vmatmul.mubr.f32.gmra.mrb[0].mxu0 %v922
  %v924 = vpop.f32.mrb[0].mxu0
  %v925 = vadd.f32 %v756, %v924
  %v926 = vpop.f32.mrb[0].mxu0
  %v927 = vadd.f32 %v758, %v926
  %928 = vdwg.mxu0
  %v929 = vand.u32 %v20, 4294901760
  %930 = vmatprep.subr.mxu0 %v929
  %v931 = vand.u32 %v19, 4294901760
  %932 = vmatpush1.msra.mxu0 %v931
  %v933 = vand.u32 %v24, 4294901760
  %934 = vmatprep.subr.mxu0 %v933
  %v935 = vand.u32 %v23, 4294901760
  %936 = vmatpush1.msra.mxu0 %v935
  %v937 = vand.u32 %v28, 4294901760
  %938 = vmatprep.subr.mxu0 %v937
  %v939 = vand.u32 %v27, 4294901760
  %940 = vmatpush1.msra.mxu0 %v939
  %v941 = vand.u32 %v32, 4294901760
  %942 = vmatprep.subr.mxu0 %v941
  %v943 = vand.u32 %v31, 4294901760
  %944 = vmatpush1.msra.mxu0 %v943
  %v945 = vand.u32 %v36, 4294901760
  %946 = vmatprep.subr.mxu0 %v945
  %v947 = vand.u32 %v35, 4294901760
  %948 = vmatpush1.msra.mxu0 %v947
  %v949 = vand.u32 %v40, 4294901760
  %950 = vmatprep.subr.mxu0 %v949
  %v951 = vand.u32 %v39, 4294901760
  %952 = vmatpush1.msra.mxu0 %v951
  %v953 = vand.u32 %v44, 4294901760
  %954 = vmatprep.subr.mxu0 %v953
  %v955 = vand.u32 %v43, 4294901760
  %956 = vmatpush1.msra.mxu0 %v955
  %v957 = vand.u32 %v48, 4294901760
  %958 = vmatprep.subr.mxu0 %v957
  %v959 = vand.u32 %v47, 4294901760
  %960 = vmatpush1.msra.mxu0 %v959
  %961 = vmatprep.subr.mxu0 0.0
  %962 = vmatpush1.msra.mxu0 0.0
  %963 = vmatprep.subr.mxu0 0.0
  %964 = vmatpush1.msra.mxu0 0.0
  %965 = vmatprep.subr.mxu0 0.0
  %966 = vmatpush1.msra.mxu0 0.0
  %967 = vmatprep.subr.mxu0 0.0
  %968 = vmatpush1.msra.mxu0 0.0
  %969 = vmatprep.subr.mxu0 0.0
  %970 = vmatpush1.msra.mxu0 0.0
  %971 = vmatprep.subr.mxu0 0.0
  %972 = vmatpush1.msra.mxu0 0.0
  %973 = vmatprep.subr.mxu0 0.0
  %974 = vmatpush1.msra.mxu0 0.0
  %975 = vmatprep.subr.mxu0 0.0
  %976 = vmatpush1.msra.mxu0 0.0
  %977 = vmatprep.subr.mxu0 0.0
  %978 = vmatpush1.msra.mxu0 0.0
  %979 = vmatprep.subr.mxu0 0.0
  %980 = vmatpush1.msra.mxu0 0.0
  %981 = vmatprep.subr.mxu0 0.0
  %982 = vmatpush1.msra.mxu0 0.0
  %983 = vmatprep.subr.mxu0 0.0
  %984 = vmatpush1.msra.mxu0 0.0
  %985 = vmatprep.subr.mxu0 0.0
  %986 = vmatpush1.msra.mxu0 0.0
  %987 = vmatprep.subr.mxu0 0.0
  %988 = vmatpush1.msra.mxu0 0.0
  %989 = vmatprep.subr.mxu0 0.0
  %990 = vmatpush1.msra.mxu0 0.0
  %991 = vmatprep.subr.mxu0 0.0
  %992 = vmatpush1.msra.mxu0 0.0
  %993 = vmatprep.subr.mxu0 0.0
  %994 = vmatpush1.msra.mxu0 0.0
  %995 = vmatprep.subr.mxu0 0.0
  %996 = vmatpush1.msra.mxu0 0.0
  %997 = vmatprep.subr.mxu0 0.0
  %998 = vmatpush1.msra.mxu0 0.0
  %999 = vmatprep.subr.mxu0 0.0
  %1000 = vmatpush1.msra.mxu0 0.0
  %1001 = vmatprep.subr.mxu0 0.0
  %1002 = vmatpush1.msra.mxu0 0.0
  %1003 = vmatprep.subr.mxu0 0.0
  %1004 = vmatpush1.msra.mxu0 0.0
  %1005 = vmatprep.subr.mxu0 0.0
  %1006 = vmatpush1.msra.mxu0 0.0
  %1007 = vmatprep.subr.mxu0 0.0
  %1008 = vmatpush1.msra.mxu0 0.0
  %1009 = vmatprep.mubr.f32.mxu0 0.0
  %v1010 = vand.u32 %v53, 4294901760
  %1011 = vmatmul.mubr.f32.gmra.mrb[0].mxu0 %v1010
  %v1012 = vpop.f32.mrb[0].mxu0
  %v1013 = vadd.f32 %v876, %v1012
  %v1014 = vpop.f32.mrb[0].mxu0
  %v1015 = vadd.f32 %v878, %v1014
  %1016 = vmatprep.mubr.f32.mxu0 0.0
  %v1017 = vand.u32 %v56, 4294901760
  %1018 = vmatmul.mubr.f32.gmra.mrb[0].mxu0 %v1017
  %v1019 = vpop.f32.mrb[0].mxu0
  %v1020 = vadd.f32 %v883, %v1019
  %v1021 = vpop.f32.mrb[0].mxu0
  %v1022 = vadd.f32 %v885, %v1021
  %1023 = vmatprep.mubr.f32.mxu0 0.0
  %v1024 = vand.u32 %v59, 4294901760
  %1025 = vmatmul.mubr.f32.gmra.mrb[0].mxu0 %v1024
  %v1026 = vpop.f32.mrb[0].mxu0
  %v1027 = vadd.f32 %v890, %v1026
  %v1028 = vpop.f32.mrb[0].mxu0
  %v1029 = vadd.f32 %v892, %v1028
  %1030 = vmatprep.mubr.f32.mxu0 0.0
  %v1031 = vand.u32 %v62, 4294901760
  %1032 = vmatmul.mubr.f32.gmra.mrb[0].mxu0 %v1031
  %v1033 = vpop.f32.mrb[0].mxu0
  %v1034 = vadd.f32 %v897, %v1033
  %v1035 = vpop.f32.mrb[0].mxu0
  %v1036 = vadd.f32 %v899, %v1035
  %1037 = vmatprep.mubr.f32.mxu0 0.0
  %v1038 = vand.u32 %v65, 4294901760
  %1039 = vmatmul.mubr.f32.gmra.mrb[0].mxu0 %v1038
  %v1040 = vpop.f32.mrb[0].mxu0
  %v1041 = vadd.f32 %v904, %v1040
  %v1042 = vpop.f32.mrb[0].mxu0
  %v1043 = vadd.f32 %v906, %v1042
  %1044 = vmatprep.mubr.f32.mxu0 0.0
  %v1045 = vand.u32 %v68, 4294901760
  %1046 = vmatmul.mubr.f32.gmra.mrb[0].mxu0 %v1045
  %v1047 = vpop.f32.mrb[0].mxu0
  %v1048 = vadd.f32 %v911, %v1047
  %v1049 = vpop.f32.mrb[0].mxu0
  %v1050 = vadd.f32 %v913, %v1049
  %1051 = vmatprep.mubr.f32.mxu0 0.0
  %v1052 = vand.u32 %v71, 4294901760
  %1053 = vmatmul.mubr.f32.gmra.mrb[0].mxu0 %v1052
  %v1054 = vpop.f32.mrb[0].mxu0
  %v1055 = vadd.f32 %v918, %v1054
  %v1056 = vpop.f32.mrb[0].mxu0
  %v1057 = vadd.f32 %v920, %v1056
  %1058 = vmatprep.mubr.f32.mxu0 0.0
  %v1059 = vand.u32 %v74, 4294901760
  %1060 = vmatmul.mubr.f32.gmra.mrb[0].mxu0 %v1059
  %v1061 = vpop.f32.mrb[0].mxu0
  %v1062 = vadd.f32 %v925, %v1061
  %v1063 = vpop.f32.mrb[0].mxu0
  %v1064 = vadd.f32 %v927, %v1063
  %1065 = vdwg.mxu0
  %v1066 = vand.u32 %v22, 4294901760
  %1067 = vmatprep.subr.mxu0 %v1066
  %v1068 = vand.u32 %v21, 4294901760
  %1069 = vmatpush1.msra.mxu0 %v1068
  %v1070 = vand.u32 %v26, 4294901760
  %1071 = vmatprep.subr.mxu0 %v1070
  %v1072 = vand.u32 %v25, 4294901760
  %1073 = vmatpush1.msra.mxu0 %v1072
  %v1074 = vand.u32 %v30, 4294901760
  %1075 = vmatprep.subr.mxu0 %v1074
  %v1076 = vand.u32 %v29, 4294901760
  %1077 = vmatpush1.msra.mxu0 %v1076
  %v1078 = vand.u32 %v34, 4294901760
  %1079 = vmatprep.subr.mxu0 %v1078
  %v1080 = vand.u32 %v33, 4294901760
  %1081 = vmatpush1.msra.mxu0 %v1080
  %v1082 = vand.u32 %v38, 4294901760
  %1083 = vmatprep.subr.mxu0 %v1082
  %v1084 = vand.u32 %v37, 4294901760
  %1085 = vmatpush1.msra.mxu0 %v1084
  %v1086 = vand.u32 %v42, 4294901760
  %1087 = vmatprep.subr.mxu0 %v1086
  %v1088 = vand.u32 %v41, 4294901760
  %1089 = vmatpush1.msra.mxu0 %v1088
  %v1090 = vand.u32 %v46, 4294901760
  %1091 = vmatprep.subr.mxu0 %v1090
  %v1092 = vand.u32 %v45, 4294901760
  %1093 = vmatpush1.msra.mxu0 %v1092
  %v1094 = vand.u32 %v50, 4294901760
  %1095 = vmatprep.subr.mxu0 %v1094
  %v1096 = vand.u32 %v49, 4294901760
  %1097 = vmatpush1.msra.mxu0 %v1096
  %1098 = vmatprep.subr.mxu0 0.0
  %1099 = vmatpush1.msra.mxu0 0.0
  %1100 = vmatprep.subr.mxu0 0.0
  %1101 = vmatpush1.msra.mxu0 0.0
  %1102 = vmatprep.subr.mxu0 0.0
  %1103 = vmatpush1.msra.mxu0 0.0
  %1104 = vmatprep.subr.mxu0 0.0
  %1105 = vmatpush1.msra.mxu0 0.0
  %1106 = vmatprep.subr.mxu0 0.0
  %1107 = vmatpush1.msra.mxu0 0.0
  %1108 = vmatprep.subr.mxu0 0.0
  %1109 = vmatpush1.msra.mxu0 0.0
  %1110 = vmatprep.subr.mxu0 0.0
  %1111 = vmatpush1.msra.mxu0 0.0
  %1112 = vmatprep.subr.mxu0 0.0
  %1113 = vmatpush1.msra.mxu0 0.0
  %1114 = vmatprep.subr.mxu0 0.0
  %1115 = vmatpush1.msra.mxu0 0.0
  %1116 = vmatprep.subr.mxu0 0.0
  %1117 = vmatpush1.msra.mxu0 0.0
  %1118 = vmatprep.subr.mxu0 0.0
  %1119 = vmatpush1.msra.mxu0 0.0
  %1120 = vmatprep.subr.mxu0 0.0
  %1121 = vmatpush1.msra.mxu0 0.0
  %1122 = vmatprep.subr.mxu0 0.0
  %1123 = vmatpush1.msra.mxu0 0.0
  %1124 = vmatprep.subr.mxu0 0.0
  %1125 = vmatpush1.msra.mxu0 0.0
  %1126 = vmatprep.subr.mxu0 0.0
  %1127 = vmatpush1.msra.mxu0 0.0
  %1128 = vmatprep.subr.mxu0 0.0
  %1129 = vmatpush1.msra.mxu0 0.0
  %1130 = vmatprep.subr.mxu0 0.0
  %1131 = vmatpush1.msra.mxu0 0.0
  %1132 = vmatprep.subr.mxu0 0.0
  %1133 = vmatpush1.msra.mxu0 0.0
  %1134 = vmatprep.subr.mxu0 0.0
  %1135 = vmatpush1.msra.mxu0 0.0
  %1136 = vmatprep.subr.mxu0 0.0
  %1137 = vmatpush1.msra.mxu0 0.0
  %1138 = vmatprep.subr.mxu0 0.0
  %1139 = vmatpush1.msra.mxu0 0.0
  %1140 = vmatprep.subr.mxu0 0.0
  %1141 = vmatpush1.msra.mxu0 0.0
  %1142 = vmatprep.subr.mxu0 0.0
  %1143 = vmatpush1.msra.mxu0 0.0
  %1144 = vmatprep.subr.mxu0 0.0
  %1145 = vmatpush1.msra.mxu0 0.0
  %1146 = vmatprep.mubr.f32.mxu0 0.0
  %v1147 = vand.u32 %v53, 4294901760
  %v1148 = vsub.f32 %v53, %v1147
  %v1149 = vand.u32 %v1148, 4294901760
  %v1150 = vsub.f32 %v1148, %v1149
  %v1151 = vand.u32 %v1150, 4294901760
  %1152 = vmatmul.mubr.f32.gmra.mrb[0].mxu0 %v1151
  %v1153 = vpop.f32.mrb[0].mxu0
  %v1154 = vadd.f32 0.0, %v1153
  %v1155 = vpop.f32.mrb[0].mxu0
  %v1156 = vadd.f32 0.0, %v1155
  %1157 = vmatprep.mubr.f32.mxu0 0.0
  %v1158 = vand.u32 %v56, 4294901760
  %v1159 = vsub.f32 %v56, %v1158
  %v1160 = vand.u32 %v1159, 4294901760
  %v1161 = vsub.f32 %v1159, %v1160
  %v1162 = vand.u32 %v1161, 4294901760
  %1163 = vmatmul.mubr.f32.gmra.mrb[0].mxu0 %v1162
  %v1164 = vpop.f32.mrb[0].mxu0
  %v1165 = vadd.f32 0.0, %v1164
  %v1166 = vpop.f32.mrb[0].mxu0
  %v1167 = vadd.f32 0.0, %v1166
  %1168 = vmatprep.mubr.f32.mxu0 0.0
  %v1169 = vand.u32 %v59, 4294901760
  %v1170 = vsub.f32 %v59, %v1169
  %v1171 = vand.u32 %v1170, 4294901760
  %v1172 = vsub.f32 %v1170, %v1171
  %v1173 = vand.u32 %v1172, 4294901760
  %1174 = vmatmul.mubr.f32.gmra.mrb[0].mxu0 %v1173
  %v1175 = vpop.f32.mrb[0].mxu0
  %v1176 = vadd.f32 0.0, %v1175
  %v1177 = vpop.f32.mrb[0].mxu0
  %v1178 = vadd.f32 0.0, %v1177
  %1179 = vmatprep.mubr.f32.mxu0 0.0
  %v1180 = vand.u32 %v62, 4294901760
  %v1181 = vsub.f32 %v62, %v1180
  %v1182 = vand.u32 %v1181, 4294901760
  %v1183 = vsub.f32 %v1181, %v1182
  %v1184 = vand.u32 %v1183, 4294901760
  %1185 = vmatmul.mubr.f32.gmra.mrb[0].mxu0 %v1184
  %v1186 = vpop.f32.mrb[0].mxu0
  %v1187 = vadd.f32 0.0, %v1186
  %v1188 = vpop.f32.mrb[0].mxu0
  %v1189 = vadd.f32 0.0, %v1188
  %1190 = vmatprep.mubr.f32.mxu0 0.0
  %v1191 = vand.u32 %v65, 4294901760
  %v1192 = vsub.f32 %v65, %v1191
  %v1193 = vand.u32 %v1192, 4294901760
  %v1194 = vsub.f32 %v1192, %v1193
  %v1195 = vand.u32 %v1194, 4294901760
  %1196 = vmatmul.mubr.f32.gmra.mrb[0].mxu0 %v1195
  %v1197 = vpop.f32.mrb[0].mxu0
  %v1198 = vadd.f32 0.0, %v1197
  %v1199 = vpop.f32.mrb[0].mxu0
  %v1200 = vadd.f32 0.0, %v1199
  %1201 = vmatprep.mubr.f32.mxu0 0.0
  %v1202 = vand.u32 %v68, 4294901760
  %v1203 = vsub.f32 %v68, %v1202
  %v1204 = vand.u32 %v1203, 4294901760
  %v1205 = vsub.f32 %v1203, %v1204
  %v1206 = vand.u32 %v1205, 4294901760
  %1207 = vmatmul.mubr.f32.gmra.mrb[0].mxu0 %v1206
  %v1208 = vpop.f32.mrb[0].mxu0
  %v1209 = vadd.f32 0.0, %v1208
  %v1210 = vpop.f32.mrb[0].mxu0
  %v1211 = vadd.f32 0.0, %v1210
  %1212 = vmatprep.mubr.f32.mxu0 0.0
  %v1213 = vand.u32 %v71, 4294901760
  %v1214 = vsub.f32 %v71, %v1213
  %v1215 = vand.u32 %v1214, 4294901760
  %v1216 = vsub.f32 %v1214, %v1215
  %v1217 = vand.u32 %v1216, 4294901760
  %1218 = vmatmul.mubr.f32.gmra.mrb[0].mxu0 %v1217
  %v1219 = vpop.f32.mrb[0].mxu0
  %v1220 = vadd.f32 0.0, %v1219
  %v1221 = vpop.f32.mrb[0].mxu0
  %v1222 = vadd.f32 0.0, %v1221
  %1223 = vmatprep.mubr.f32.mxu0 0.0
  %v1224 = vand.u32 %v74, 4294901760
  %v1225 = vsub.f32 %v74, %v1224
  %v1226 = vand.u32 %v1225, 4294901760
  %v1227 = vsub.f32 %v1225, %v1226
  %v1228 = vand.u32 %v1227, 4294901760
  %1229 = vmatmul.mubr.f32.gmra.mrb[0].mxu0 %v1228
  %v1230 = vpop.f32.mrb[0].mxu0
  %v1231 = vadd.f32 0.0, %v1230
  %v1232 = vpop.f32.mrb[0].mxu0
  %v1233 = vadd.f32 0.0, %v1232
  %1234 = vdwg.mxu0
  %v1235 = vand.u32 %v22, 4294901760
  %v1236 = vsub.f32 %v22, %v1235
  %v1237 = vand.u32 %v1236, 4294901760
  %v1238 = vsub.f32 %v1236, %v1237
  %v1239 = vand.u32 %v1238, 4294901760
  %1240 = vmatprep.subr.mxu0 %v1239
  %v1241 = vand.u32 %v21, 4294901760
  %v1242 = vsub.f32 %v21, %v1241
  %v1243 = vand.u32 %v1242, 4294901760
  %v1244 = vsub.f32 %v1242, %v1243
  %v1245 = vand.u32 %v1244, 4294901760
  %1246 = vmatpush1.msra.mxu0 %v1245
  %v1247 = vand.u32 %v26, 4294901760
  %v1248 = vsub.f32 %v26, %v1247
  %v1249 = vand.u32 %v1248, 4294901760
  %v1250 = vsub.f32 %v1248, %v1249
  %v1251 = vand.u32 %v1250, 4294901760
  %1252 = vmatprep.subr.mxu0 %v1251
  %v1253 = vand.u32 %v25, 4294901760
  %v1254 = vsub.f32 %v25, %v1253
  %v1255 = vand.u32 %v1254, 4294901760
  %v1256 = vsub.f32 %v1254, %v1255
  %v1257 = vand.u32 %v1256, 4294901760
  %1258 = vmatpush1.msra.mxu0 %v1257
  %v1259 = vand.u32 %v30, 4294901760
  %v1260 = vsub.f32 %v30, %v1259
  %v1261 = vand.u32 %v1260, 4294901760
  %v1262 = vsub.f32 %v1260, %v1261
  %v1263 = vand.u32 %v1262, 4294901760
  %1264 = vmatprep.subr.mxu0 %v1263
  %v1265 = vand.u32 %v29, 4294901760
  %v1266 = vsub.f32 %v29, %v1265
  %v1267 = vand.u32 %v1266, 4294901760
  %v1268 = vsub.f32 %v1266, %v1267
  %v1269 = vand.u32 %v1268, 4294901760
  %1270 = vmatpush1.msra.mxu0 %v1269
  %v1271 = vand.u32 %v34, 4294901760
  %v1272 = vsub.f32 %v34, %v1271
  %v1273 = vand.u32 %v1272, 4294901760
  %v1274 = vsub.f32 %v1272, %v1273
  %v1275 = vand.u32 %v1274, 4294901760
  %1276 = vmatprep.subr.mxu0 %v1275
  %v1277 = vand.u32 %v33, 4294901760
  %v1278 = vsub.f32 %v33, %v1277
  %v1279 = vand.u32 %v1278, 4294901760
  %v1280 = vsub.f32 %v1278, %v1279
  %v1281 = vand.u32 %v1280, 4294901760
  %1282 = vmatpush1.msra.mxu0 %v1281
  %v1283 = vand.u32 %v38, 4294901760
  %v1284 = vsub.f32 %v38, %v1283
  %v1285 = vand.u32 %v1284, 4294901760
  %v1286 = vsub.f32 %v1284, %v1285
  %v1287 = vand.u32 %v1286, 4294901760
  %1288 = vmatprep.subr.mxu0 %v1287
  %v1289 = vand.u32 %v37, 4294901760
  %v1290 = vsub.f32 %v37, %v1289
  %v1291 = vand.u32 %v1290, 4294901760
  %v1292 = vsub.f32 %v1290, %v1291
  %v1293 = vand.u32 %v1292, 4294901760
  %1294 = vmatpush1.msra.mxu0 %v1293
  %v1295 = vand.u32 %v42, 4294901760
  %v1296 = vsub.f32 %v42, %v1295
  %v1297 = vand.u32 %v1296, 4294901760
  %v1298 = vsub.f32 %v1296, %v1297
  %v1299 = vand.u32 %v1298, 4294901760
  %1300 = vmatprep.subr.mxu0 %v1299
  %v1301 = vand.u32 %v41, 4294901760
  %v1302 = vsub.f32 %v41, %v1301
  %v1303 = vand.u32 %v1302, 4294901760
  %v1304 = vsub.f32 %v1302, %v1303
  %v1305 = vand.u32 %v1304, 4294901760
  %1306 = vmatpush1.msra.mxu0 %v1305
  %v1307 = vand.u32 %v46, 4294901760
  %v1308 = vsub.f32 %v46, %v1307
  %v1309 = vand.u32 %v1308, 4294901760
  %v1310 = vsub.f32 %v1308, %v1309
  %v1311 = vand.u32 %v1310, 4294901760
  %1312 = vmatprep.subr.mxu0 %v1311
  %v1313 = vand.u32 %v45, 4294901760
  %v1314 = vsub.f32 %v45, %v1313
  %v1315 = vand.u32 %v1314, 4294901760
  %v1316 = vsub.f32 %v1314, %v1315
  %v1317 = vand.u32 %v1316, 4294901760
  %1318 = vmatpush1.msra.mxu0 %v1317
  %v1319 = vand.u32 %v50, 4294901760
  %v1320 = vsub.f32 %v50, %v1319
  %v1321 = vand.u32 %v1320, 4294901760
  %v1322 = vsub.f32 %v1320, %v1321
  %v1323 = vand.u32 %v1322, 4294901760
  %1324 = vmatprep.subr.mxu0 %v1323
  %v1325 = vand.u32 %v49, 4294901760
  %v1326 = vsub.f32 %v49, %v1325
  %v1327 = vand.u32 %v1326, 4294901760
  %v1328 = vsub.f32 %v1326, %v1327
  %v1329 = vand.u32 %v1328, 4294901760
  %1330 = vmatpush1.msra.mxu0 %v1329
  %1331 = vmatprep.subr.mxu0 0.0
  %1332 = vmatpush1.msra.mxu0 0.0
  %1333 = vmatprep.subr.mxu0 0.0
  %1334 = vmatpush1.msra.mxu0 0.0
  %1335 = vmatprep.subr.mxu0 0.0
  %1336 = vmatpush1.msra.mxu0 0.0
  %1337 = vmatprep.subr.mxu0 0.0
  %1338 = vmatpush1.msra.mxu0 0.0
  %1339 = vmatprep.subr.mxu0 0.0
  %1340 = vmatpush1.msra.mxu0 0.0
  %1341 = vmatprep.subr.mxu0 0.0
  %1342 = vmatpush1.msra.mxu0 0.0
  %1343 = vmatprep.subr.mxu0 0.0
  %1344 = vmatpush1.msra.mxu0 0.0
  %1345 = vmatprep.subr.mxu0 0.0
  %1346 = vmatpush1.msra.mxu0 0.0
  %1347 = vmatprep.subr.mxu0 0.0
  %1348 = vmatpush1.msra.mxu0 0.0
  %1349 = vmatprep.subr.mxu0 0.0
  %1350 = vmatpush1.msra.mxu0 0.0
  %1351 = vmatprep.subr.mxu0 0.0
  %1352 = vmatpush1.msra.mxu0 0.0
  %1353 = vmatprep.subr.mxu0 0.0
  %1354 = vmatpush1.msra.mxu0 0.0
  %1355 = vmatprep.subr.mxu0 0.0
  %1356 = vmatpush1.msra.mxu0 0.0
  %1357 = vmatprep.subr.mxu0 0.0
  %1358 = vmatpush1.msra.mxu0 0.0
  %1359 = vmatprep.subr.mxu0 0.0
  %1360 = vmatpush1.msra.mxu0 0.0
  %1361 = vmatprep.subr.mxu0 0.0
  %1362 = vmatpush1.msra.mxu0 0.0
  %1363 = vmatprep.subr.mxu0 0.0
  %1364 = vmatpush1.msra.mxu0 0.0
  %1365 = vmatprep.subr.mxu0 0.0
  %1366 = vmatpush1.msra.mxu0 0.0
  %1367 = vmatprep.subr.mxu0 0.0
  %1368 = vmatpush1.msra.mxu0 0.0
  %1369 = vmatprep.subr.mxu0 0.0
  %1370 = vmatpush1.msra.mxu0 0.0
  %1371 = vmatprep.subr.mxu0 0.0
  %1372 = vmatpush1.msra.mxu0 0.0
  %1373 = vmatprep.subr.mxu0 0.0
  %1374 = vmatpush1.msra.mxu0 0.0
  %1375 = vmatprep.subr.mxu0 0.0
  %1376 = vmatpush1.msra.mxu0 0.0
  %1377 = vmatprep.subr.mxu0 0.0
  %1378 = vmatpush1.msra.mxu0 0.0
  %1379 = vmatprep.mubr.f32.mxu0 0.0
  %v1380 = vand.u32 %v53, 4294901760
  %1381 = vmatmul.mubr.f32.gmra.mrb[0].mxu0 %v1380
  %v1382 = vpop.f32.mrb[0].mxu0
  %v1383 = vadd.f32 %v1154, %v1382
  %v1384 = vpop.f32.mrb[0].mxu0
  %v1385 = vadd.f32 %v1156, %v1384
  %1386 = vmatprep.mubr.f32.mxu0 0.0
  %v1387 = vand.u32 %v56, 4294901760
  %1388 = vmatmul.mubr.f32.gmra.mrb[0].mxu0 %v1387
  %v1389 = vpop.f32.mrb[0].mxu0
  %v1390 = vadd.f32 %v1165, %v1389
  %v1391 = vpop.f32.mrb[0].mxu0
  %v1392 = vadd.f32 %v1167, %v1391
  %1393 = vmatprep.mubr.f32.mxu0 0.0
  %v1394 = vand.u32 %v59, 4294901760
  %1395 = vmatmul.mubr.f32.gmra.mrb[0].mxu0 %v1394
  %v1396 = vpop.f32.mrb[0].mxu0
  %v1397 = vadd.f32 %v1176, %v1396
  %v1398 = vpop.f32.mrb[0].mxu0
  %v1399 = vadd.f32 %v1178, %v1398
  %1400 = vmatprep.mubr.f32.mxu0 0.0
  %v1401 = vand.u32 %v62, 4294901760
  %1402 = vmatmul.mubr.f32.gmra.mrb[0].mxu0 %v1401
  %v1403 = vpop.f32.mrb[0].mxu0
  %v1404 = vadd.f32 %v1187, %v1403
  %v1405 = vpop.f32.mrb[0].mxu0
  %v1406 = vadd.f32 %v1189, %v1405
  %1407 = vmatprep.mubr.f32.mxu0 0.0
  %v1408 = vand.u32 %v65, 4294901760
  %1409 = vmatmul.mubr.f32.gmra.mrb[0].mxu0 %v1408
  %v1410 = vpop.f32.mrb[0].mxu0
  %v1411 = vadd.f32 %v1198, %v1410
  %v1412 = vpop.f32.mrb[0].mxu0
  %v1413 = vadd.f32 %v1200, %v1412
  %1414 = vmatprep.mubr.f32.mxu0 0.0
  %v1415 = vand.u32 %v68, 4294901760
  %1416 = vmatmul.mubr.f32.gmra.mrb[0].mxu0 %v1415
  %v1417 = vpop.f32.mrb[0].mxu0
  %v1418 = vadd.f32 %v1209, %v1417
  %v1419 = vpop.f32.mrb[0].mxu0
  %v1420 = vadd.f32 %v1211, %v1419
  %1421 = vmatprep.mubr.f32.mxu0 0.0
  %v1422 = vand.u32 %v71, 4294901760
  %1423 = vmatmul.mubr.f32.gmra.mrb[0].mxu0 %v1422
  %v1424 = vpop.f32.mrb[0].mxu0
  %v1425 = vadd.f32 %v1220, %v1424
  %v1426 = vpop.f32.mrb[0].mxu0
  %v1427 = vadd.f32 %v1222, %v1426
  %1428 = vmatprep.mubr.f32.mxu0 0.0
  %v1429 = vand.u32 %v74, 4294901760
  %1430 = vmatmul.mubr.f32.gmra.mrb[0].mxu0 %v1429
  %v1431 = vpop.f32.mrb[0].mxu0
  %v1432 = vadd.f32 %v1231, %v1431
  %v1433 = vpop.f32.mrb[0].mxu0
  %v1434 = vadd.f32 %v1233, %v1433
  %1435 = vdwg.mxu0
  %v1436 = vand.u32 %v22, 4294901760
  %v1437 = vsub.f32 %v22, %v1436
  %1438 = vmatprep.subr.mxu0 %v1437
  %v1439 = vand.u32 %v21, 4294901760
  %v1440 = vsub.f32 %v21, %v1439
  %1441 = vmatpush1.msra.mxu0 %v1440
  %v1442 = vand.u32 %v26, 4294901760
  %v1443 = vsub.f32 %v26, %v1442
  %1444 = vmatprep.subr.mxu0 %v1443
  %v1445 = vand.u32 %v25, 4294901760
  %v1446 = vsub.f32 %v25, %v1445
  %1447 = vmatpush1.msra.mxu0 %v1446
  %v1448 = vand.u32 %v30, 4294901760
  %v1449 = vsub.f32 %v30, %v1448
  %1450 = vmatprep.subr.mxu0 %v1449
  %v1451 = vand.u32 %v29, 4294901760
  %v1452 = vsub.f32 %v29, %v1451
  %1453 = vmatpush1.msra.mxu0 %v1452
  %v1454 = vand.u32 %v34, 4294901760
  %v1455 = vsub.f32 %v34, %v1454
  %1456 = vmatprep.subr.mxu0 %v1455
  %v1457 = vand.u32 %v33, 4294901760
  %v1458 = vsub.f32 %v33, %v1457
  %1459 = vmatpush1.msra.mxu0 %v1458
  %v1460 = vand.u32 %v38, 4294901760
  %v1461 = vsub.f32 %v38, %v1460
  %1462 = vmatprep.subr.mxu0 %v1461
  %v1463 = vand.u32 %v37, 4294901760
  %v1464 = vsub.f32 %v37, %v1463
  %1465 = vmatpush1.msra.mxu0 %v1464
  %v1466 = vand.u32 %v42, 4294901760
  %v1467 = vsub.f32 %v42, %v1466
  %1468 = vmatprep.subr.mxu0 %v1467
  %v1469 = vand.u32 %v41, 4294901760
  %v1470 = vsub.f32 %v41, %v1469
  %1471 = vmatpush1.msra.mxu0 %v1470
  %v1472 = vand.u32 %v46, 4294901760
  %v1473 = vsub.f32 %v46, %v1472
  %1474 = vmatprep.subr.mxu0 %v1473
  %v1475 = vand.u32 %v45, 4294901760
  %v1476 = vsub.f32 %v45, %v1475
  %1477 = vmatpush1.msra.mxu0 %v1476
  %v1478 = vand.u32 %v50, 4294901760
  %v1479 = vsub.f32 %v50, %v1478
  %1480 = vmatprep.subr.mxu0 %v1479
  %v1481 = vand.u32 %v49, 4294901760
  %v1482 = vsub.f32 %v49, %v1481
  %1483 = vmatpush1.msra.mxu0 %v1482
  %1484 = vmatprep.subr.mxu0 0.0
  %1485 = vmatpush1.msra.mxu0 0.0
  %1486 = vmatprep.subr.mxu0 0.0
  %1487 = vmatpush1.msra.mxu0 0.0
  %1488 = vmatprep.subr.mxu0 0.0
  %1489 = vmatpush1.msra.mxu0 0.0
  %1490 = vmatprep.subr.mxu0 0.0
  %1491 = vmatpush1.msra.mxu0 0.0
  %1492 = vmatprep.subr.mxu0 0.0
  %1493 = vmatpush1.msra.mxu0 0.0
  %1494 = vmatprep.subr.mxu0 0.0
  %1495 = vmatpush1.msra.mxu0 0.0
  %1496 = vmatprep.subr.mxu0 0.0
  %1497 = vmatpush1.msra.mxu0 0.0
  %1498 = vmatprep.subr.mxu0 0.0
  %1499 = vmatpush1.msra.mxu0 0.0
  %1500 = vmatprep.subr.mxu0 0.0
  %1501 = vmatpush1.msra.mxu0 0.0
  %1502 = vmatprep.subr.mxu0 0.0
  %1503 = vmatpush1.msra.mxu0 0.0
  %1504 = vmatprep.subr.mxu0 0.0
  %1505 = vmatpush1.msra.mxu0 0.0
  %1506 = vmatprep.subr.mxu0 0.0
  %1507 = vmatpush1.msra.mxu0 0.0
  %1508 = vmatprep.subr.mxu0 0.0
  %1509 = vmatpush1.msra.mxu0 0.0
  %1510 = vmatprep.subr.mxu0 0.0
  %1511 = vmatpush1.msra.mxu0 0.0
  %1512 = vmatprep.subr.mxu0 0.0
  %1513 = vmatpush1.msra.mxu0 0.0
  %1514 = vmatprep.subr.mxu0 0.0
  %1515 = vmatpush1.msra.mxu0 0.0
  %1516 = vmatprep.subr.mxu0 0.0
  %1517 = vmatpush1.msra.mxu0 0.0
  %1518 = vmatprep.subr.mxu0 0.0
  %1519 = vmatpush1.msra.mxu0 0.0
  %1520 = vmatprep.subr.mxu0 0.0
  %1521 = vmatpush1.msra.mxu0 0.0
  %1522 = vmatprep.subr.mxu0 0.0
  %1523 = vmatpush1.msra.mxu0 0.0
  %1524 = vmatprep.subr.mxu0 0.0
  %1525 = vmatpush1.msra.mxu0 0.0
  %1526 = vmatprep.subr.mxu0 0.0
  %1527 = vmatpush1.msra.mxu0 0.0
  %1528 = vmatprep.subr.mxu0 0.0
  %1529 = vmatpush1.msra.mxu0 0.0
  %1530 = vmatprep.subr.mxu0 0.0
  %1531 = vmatpush1.msra.mxu0 0.0
  %1532 = vmatprep.mubr.f32.mxu0 0.0
  %v1533 = vand.u32 %v53, 4294901760
  %v1534 = vsub.f32 %v53, %v1533
  %1535 = vmatmul.mubr.f32.gmra.mrb[0].mxu0 %v1534
  %v1536 = vpop.f32.mrb[0].mxu0
  %v1537 = vadd.f32 %v1383, %v1536
  %v1538 = vpop.f32.mrb[0].mxu0
  %v1539 = vadd.f32 %v1385, %v1538
  %1540 = vmatprep.mubr.f32.mxu0 0.0
  %v1541 = vand.u32 %v56, 4294901760
  %v1542 = vsub.f32 %v56, %v1541
  %1543 = vmatmul.mubr.f32.gmra.mrb[0].mxu0 %v1542
  %v1544 = vpop.f32.mrb[0].mxu0
  %v1545 = vadd.f32 %v1390, %v1544
  %v1546 = vpop.f32.mrb[0].mxu0
  %v1547 = vadd.f32 %v1392, %v1546
  %1548 = vmatprep.mubr.f32.mxu0 0.0
  %v1549 = vand.u32 %v59, 4294901760
  %v1550 = vsub.f32 %v59, %v1549
  %1551 = vmatmul.mubr.f32.gmra.mrb[0].mxu0 %v1550
  %v1552 = vpop.f32.mrb[0].mxu0
  %v1553 = vadd.f32 %v1397, %v1552
  %v1554 = vpop.f32.mrb[0].mxu0
  %v1555 = vadd.f32 %v1399, %v1554
  %1556 = vmatprep.mubr.f32.mxu0 0.0
  %v1557 = vand.u32 %v62, 4294901760
  %v1558 = vsub.f32 %v62, %v1557
  %1559 = vmatmul.mubr.f32.gmra.mrb[0].mxu0 %v1558
  %v1560 = vpop.f32.mrb[0].mxu0
  %v1561 = vadd.f32 %v1404, %v1560
  %v1562 = vpop.f32.mrb[0].mxu0
  %v1563 = vadd.f32 %v1406, %v1562
  %1564 = vmatprep.mubr.f32.mxu0 0.0
  %v1565 = vand.u32 %v65, 4294901760
  %v1566 = vsub.f32 %v65, %v1565
  %1567 = vmatmul.mubr.f32.gmra.mrb[0].mxu0 %v1566
  %v1568 = vpop.f32.mrb[0].mxu0
  %v1569 = vadd.f32 %v1411, %v1568
  %v1570 = vpop.f32.mrb[0].mxu0
  %v1571 = vadd.f32 %v1413, %v1570
  %1572 = vmatprep.mubr.f32.mxu0 0.0
  %v1573 = vand.u32 %v68, 4294901760
  %v1574 = vsub.f32 %v68, %v1573
  %1575 = vmatmul.mubr.f32.gmra.mrb[0].mxu0 %v1574
  %v1576 = vpop.f32.mrb[0].mxu0
  %v1577 = vadd.f32 %v1418, %v1576
  %v1578 = vpop.f32.mrb[0].mxu0
  %v1579 = vadd.f32 %v1420, %v1578
  %1580 = vmatprep.mubr.f32.mxu0 0.0
  %v1581 = vand.u32 %v71, 4294901760
  %v1582 = vsub.f32 %v71, %v1581
  %1583 = vmatmul.mubr.f32.gmra.mrb[0].mxu0 %v1582
  %v1584 = vpop.f32.mrb[0].mxu0
  %v1585 = vadd.f32 %v1425, %v1584
  %v1586 = vpop.f32.mrb[0].mxu0
  %v1587 = vadd.f32 %v1427, %v1586
  %1588 = vmatprep.mubr.f32.mxu0 0.0
  %v1589 = vand.u32 %v74, 4294901760
  %v1590 = vsub.f32 %v74, %v1589
  %1591 = vmatmul.mubr.f32.gmra.mrb[0].mxu0 %v1590
  %v1592 = vpop.f32.mrb[0].mxu0
  %v1593 = vadd.f32 %v1432, %v1592
  %v1594 = vpop.f32.mrb[0].mxu0
  %v1595 = vadd.f32 %v1434, %v1594
  %1596 = vdwg.mxu0
  %v1597 = vand.u32 %v22, 4294901760
  %1598 = vmatprep.subr.mxu0 %v1597
  %v1599 = vand.u32 %v21, 4294901760
  %1600 = vmatpush1.msra.mxu0 %v1599
  %v1601 = vand.u32 %v26, 4294901760
  %1602 = vmatprep.subr.mxu0 %v1601
  %v1603 = vand.u32 %v25, 4294901760
  %1604 = vmatpush1.msra.mxu0 %v1603
  %v1605 = vand.u32 %v30, 4294901760
  %1606 = vmatprep.subr.mxu0 %v1605
  %v1607 = vand.u32 %v29, 4294901760
  %1608 = vmatpush1.msra.mxu0 %v1607
  %v1609 = vand.u32 %v34, 4294901760
  %1610 = vmatprep.subr.mxu0 %v1609
  %v1611 = vand.u32 %v33, 4294901760
  %1612 = vmatpush1.msra.mxu0 %v1611
  %v1613 = vand.u32 %v38, 4294901760
  %1614 = vmatprep.subr.mxu0 %v1613
  %v1615 = vand.u32 %v37, 4294901760
  %1616 = vmatpush1.msra.mxu0 %v1615
  %v1617 = vand.u32 %v42, 4294901760
  %1618 = vmatprep.subr.mxu0 %v1617
  %v1619 = vand.u32 %v41, 4294901760
  %1620 = vmatpush1.msra.mxu0 %v1619
  %v1621 = vand.u32 %v46, 4294901760
  %1622 = vmatprep.subr.mxu0 %v1621
  %v1623 = vand.u32 %v45, 4294901760
  %1624 = vmatpush1.msra.mxu0 %v1623
  %v1625 = vand.u32 %v50, 4294901760
  %1626 = vmatprep.subr.mxu0 %v1625
  %v1627 = vand.u32 %v49, 4294901760
  %1628 = vmatpush1.msra.mxu0 %v1627
  %1629 = vmatprep.subr.mxu0 0.0
  %1630 = vmatpush1.msra.mxu0 0.0
  %1631 = vmatprep.subr.mxu0 0.0
  %1632 = vmatpush1.msra.mxu0 0.0
  %1633 = vmatprep.subr.mxu0 0.0
  %1634 = vmatpush1.msra.mxu0 0.0
  %1635 = vmatprep.subr.mxu0 0.0
  %1636 = vmatpush1.msra.mxu0 0.0
  %1637 = vmatprep.subr.mxu0 0.0
  %1638 = vmatpush1.msra.mxu0 0.0
  %1639 = vmatprep.subr.mxu0 0.0
  %1640 = vmatpush1.msra.mxu0 0.0
  %1641 = vmatprep.subr.mxu0 0.0
  %1642 = vmatpush1.msra.mxu0 0.0
  %1643 = vmatprep.subr.mxu0 0.0
  %1644 = vmatpush1.msra.mxu0 0.0
  %1645 = vmatprep.subr.mxu0 0.0
  %1646 = vmatpush1.msra.mxu0 0.0
  %1647 = vmatprep.subr.mxu0 0.0
  %1648 = vmatpush1.msra.mxu0 0.0
  %1649 = vmatprep.subr.mxu0 0.0
  %1650 = vmatpush1.msra.mxu0 0.0
  %1651 = vmatprep.subr.mxu0 0.0
  %1652 = vmatpush1.msra.mxu0 0.0
  %1653 = vmatprep.subr.mxu0 0.0
  %1654 = vmatpush1.msra.mxu0 0.0
  %1655 = vmatprep.subr.mxu0 0.0
  %1656 = vmatpush1.msra.mxu0 0.0
  %1657 = vmatprep.subr.mxu0 0.0
  %1658 = vmatpush1.msra.mxu0 0.0
  %1659 = vmatprep.subr.mxu0 0.0
  %1660 = vmatpush1.msra.mxu0 0.0
  %1661 = vmatprep.subr.mxu0 0.0
  %1662 = vmatpush1.msra.mxu0 0.0
  %1663 = vmatprep.subr.mxu0 0.0
  %1664 = vmatpush1.msra.mxu0 0.0
  %1665 = vmatprep.subr.mxu0 0.0
  %1666 = vmatpush1.msra.mxu0 0.0
  %1667 = vmatprep.subr.mxu0 0.0
  %1668 = vmatpush1.msra.mxu0 0.0
  %1669 = vmatprep.subr.mxu0 0.0
  %1670 = vmatpush1.msra.mxu0 0.0
  %1671 = vmatprep.subr.mxu0 0.0
  %1672 = vmatpush1.msra.mxu0 0.0
  %1673 = vmatprep.subr.mxu0 0.0
  %1674 = vmatpush1.msra.mxu0 0.0
  %1675 = vmatprep.subr.mxu0 0.0
  %1676 = vmatpush1.msra.mxu0 0.0
  %1677 = vmatprep.mubr.f32.mxu0 0.0
  %v1678 = vand.u32 %v53, 4294901760
  %v1679 = vsub.f32 %v53, %v1678
  %v1680 = vand.u32 %v1679, 4294901760
  %1681 = vmatmul.mubr.f32.gmra.mrb[0].mxu0 %v1680
  %v1682 = vpop.f32.mrb[0].mxu0
  %v1683 = vadd.f32 %v1537, %v1682
  %v1684 = vpop.f32.mrb[0].mxu0
  %v1685 = vadd.f32 %v1539, %v1684
  %1686 = vmatprep.mubr.f32.mxu0 0.0
  %v1687 = vand.u32 %v56, 4294901760
  %v1688 = vsub.f32 %v56, %v1687
  %v1689 = vand.u32 %v1688, 4294901760
  %1690 = vmatmul.mubr.f32.gmra.mrb[0].mxu0 %v1689
  %v1691 = vpop.f32.mrb[0].mxu0
  %v1692 = vadd.f32 %v1545, %v1691
  %v1693 = vpop.f32.mrb[0].mxu0
  %v1694 = vadd.f32 %v1547, %v1693
  %1695 = vmatprep.mubr.f32.mxu0 0.0
  %v1696 = vand.u32 %v59, 4294901760
  %v1697 = vsub.f32 %v59, %v1696
  %v1698 = vand.u32 %v1697, 4294901760
  %1699 = vmatmul.mubr.f32.gmra.mrb[0].mxu0 %v1698
  %v1700 = vpop.f32.mrb[0].mxu0
  %v1701 = vadd.f32 %v1553, %v1700
  %v1702 = vpop.f32.mrb[0].mxu0
  %v1703 = vadd.f32 %v1555, %v1702
  %1704 = vmatprep.mubr.f32.mxu0 0.0
  %v1705 = vand.u32 %v62, 4294901760
  %v1706 = vsub.f32 %v62, %v1705
  %v1707 = vand.u32 %v1706, 4294901760
  %1708 = vmatmul.mubr.f32.gmra.mrb[0].mxu0 %v1707
  %v1709 = vpop.f32.mrb[0].mxu0
  %v1710 = vadd.f32 %v1561, %v1709
  %v1711 = vpop.f32.mrb[0].mxu0
  %v1712 = vadd.f32 %v1563, %v1711
  %1713 = vmatprep.mubr.f32.mxu0 0.0
  %v1714 = vand.u32 %v65, 4294901760
  %v1715 = vsub.f32 %v65, %v1714
  %v1716 = vand.u32 %v1715, 4294901760
  %1717 = vmatmul.mubr.f32.gmra.mrb[0].mxu0 %v1716
  %v1718 = vpop.f32.mrb[0].mxu0
  %v1719 = vadd.f32 %v1569, %v1718
  %v1720 = vpop.f32.mrb[0].mxu0
  %v1721 = vadd.f32 %v1571, %v1720
  %1722 = vmatprep.mubr.f32.mxu0 0.0
  %v1723 = vand.u32 %v68, 4294901760
  %v1724 = vsub.f32 %v68, %v1723
  %v1725 = vand.u32 %v1724, 4294901760
  %1726 = vmatmul.mubr.f32.gmra.mrb[0].mxu0 %v1725
  %v1727 = vpop.f32.mrb[0].mxu0
  %v1728 = vadd.f32 %v1577, %v1727
  %v1729 = vpop.f32.mrb[0].mxu0
  %v1730 = vadd.f32 %v1579, %v1729
  %1731 = vmatprep.mubr.f32.mxu0 0.0
  %v1732 = vand.u32 %v71, 4294901760
  %v1733 = vsub.f32 %v71, %v1732
  %v1734 = vand.u32 %v1733, 4294901760
  %1735 = vmatmul.mubr.f32.gmra.mrb[0].mxu0 %v1734
  %v1736 = vpop.f32.mrb[0].mxu0
  %v1737 = vadd.f32 %v1585, %v1736
  %v1738 = vpop.f32.mrb[0].mxu0
  %v1739 = vadd.f32 %v1587, %v1738
  %1740 = vmatprep.mubr.f32.mxu0 0.0
  %v1741 = vand.u32 %v74, 4294901760
  %v1742 = vsub.f32 %v74, %v1741
  %v1743 = vand.u32 %v1742, 4294901760
  %1744 = vmatmul.mubr.f32.gmra.mrb[0].mxu0 %v1743
  %v1745 = vpop.f32.mrb[0].mxu0
  %v1746 = vadd.f32 %v1593, %v1745
  %v1747 = vpop.f32.mrb[0].mxu0
  %v1748 = vadd.f32 %v1595, %v1747
  %1749 = vdwg.mxu0
  %v1750 = vand.u32 %v22, 4294901760
  %v1751 = vsub.f32 %v22, %v1750
  %v1752 = vand.u32 %v1751, 4294901760
  %1753 = vmatprep.subr.mxu0 %v1752
  %v1754 = vand.u32 %v21, 4294901760
  %v1755 = vsub.f32 %v21, %v1754
  %v1756 = vand.u32 %v1755, 4294901760
  %1757 = vmatpush1.msra.mxu0 %v1756
  %v1758 = vand.u32 %v26, 4294901760
  %v1759 = vsub.f32 %v26, %v1758
  %v1760 = vand.u32 %v1759, 4294901760
  %1761 = vmatprep.subr.mxu0 %v1760
  %v1762 = vand.u32 %v25, 4294901760
  %v1763 = vsub.f32 %v25, %v1762
  %v1764 = vand.u32 %v1763, 4294901760
  %1765 = vmatpush1.msra.mxu0 %v1764
  %v1766 = vand.u32 %v30, 4294901760
  %v1767 = vsub.f32 %v30, %v1766
  %v1768 = vand.u32 %v1767, 4294901760
  %1769 = vmatprep.subr.mxu0 %v1768
  %v1770 = vand.u32 %v29, 4294901760
  %v1771 = vsub.f32 %v29, %v1770
  %v1772 = vand.u32 %v1771, 4294901760
  %1773 = vmatpush1.msra.mxu0 %v1772
  %v1774 = vand.u32 %v34, 4294901760
  %v1775 = vsub.f32 %v34, %v1774
  %v1776 = vand.u32 %v1775, 4294901760
  %1777 = vmatprep.subr.mxu0 %v1776
  %v1778 = vand.u32 %v33, 4294901760
  %v1779 = vsub.f32 %v33, %v1778
  %v1780 = vand.u32 %v1779, 4294901760
  %1781 = vmatpush1.msra.mxu0 %v1780
  %v1782 = vand.u32 %v38, 4294901760
  %v1783 = vsub.f32 %v38, %v1782
  %v1784 = vand.u32 %v1783, 4294901760
  %1785 = vmatprep.subr.mxu0 %v1784
  %v1786 = vand.u32 %v37, 4294901760
  %v1787 = vsub.f32 %v37, %v1786
  %v1788 = vand.u32 %v1787, 4294901760
  %1789 = vmatpush1.msra.mxu0 %v1788
  %v1790 = vand.u32 %v42, 4294901760
  %v1791 = vsub.f32 %v42, %v1790
  %v1792 = vand.u32 %v1791, 4294901760
  %1793 = vmatprep.subr.mxu0 %v1792
  %v1794 = vand.u32 %v41, 4294901760
  %v1795 = vsub.f32 %v41, %v1794
  %v1796 = vand.u32 %v1795, 4294901760
  %1797 = vmatpush1.msra.mxu0 %v1796
  %v1798 = vand.u32 %v46, 4294901760
  %v1799 = vsub.f32 %v46, %v1798
  %v1800 = vand.u32 %v1799, 4294901760
  %1801 = vmatprep.subr.mxu0 %v1800
  %v1802 = vand.u32 %v45, 4294901760
  %v1803 = vsub.f32 %v45, %v1802
  %v1804 = vand.u32 %v1803, 4294901760
  %1805 = vmatpush1.msra.mxu0 %v1804
  %v1806 = vand.u32 %v50, 4294901760
  %v1807 = vsub.f32 %v50, %v1806
  %v1808 = vand.u32 %v1807, 4294901760
  %1809 = vmatprep.subr.mxu0 %v1808
  %v1810 = vand.u32 %v49, 4294901760
  %v1811 = vsub.f32 %v49, %v1810
  %v1812 = vand.u32 %v1811, 4294901760
  %1813 = vmatpush1.msra.mxu0 %v1812
  %1814 = vmatprep.subr.mxu0 0.0
  %1815 = vmatpush1.msra.mxu0 0.0
  %1816 = vmatprep.subr.mxu0 0.0
  %1817 = vmatpush1.msra.mxu0 0.0
  %1818 = vmatprep.subr.mxu0 0.0
  %1819 = vmatpush1.msra.mxu0 0.0
  %1820 = vmatprep.subr.mxu0 0.0
  %1821 = vmatpush1.msra.mxu0 0.0
  %1822 = vmatprep.subr.mxu0 0.0
  %1823 = vmatpush1.msra.mxu0 0.0
  %1824 = vmatprep.subr.mxu0 0.0
  %1825 = vmatpush1.msra.mxu0 0.0
  %1826 = vmatprep.subr.mxu0 0.0
  %1827 = vmatpush1.msra.mxu0 0.0
  %1828 = vmatprep.subr.mxu0 0.0
  %1829 = vmatpush1.msra.mxu0 0.0
  %1830 = vmatprep.subr.mxu0 0.0
  %1831 = vmatpush1.msra.mxu0 0.0
  %1832 = vmatprep.subr.mxu0 0.0
  %1833 = vmatpush1.msra.mxu0 0.0
  %1834 = vmatprep.subr.mxu0 0.0
  %1835 = vmatpush1.msra.mxu0 0.0
  %1836 = vmatprep.subr.mxu0 0.0
  %1837 = vmatpush1.msra.mxu0 0.0
  %1838 = vmatprep.subr.mxu0 0.0
  %1839 = vmatpush1.msra.mxu0 0.0
  %1840 = vmatprep.subr.mxu0 0.0
  %1841 = vmatpush1.msra.mxu0 0.0
  %1842 = vmatprep.subr.mxu0 0.0
  %1843 = vmatpush1.msra.mxu0 0.0
  %1844 = vmatprep.subr.mxu0 0.0
  %1845 = vmatpush1.msra.mxu0 0.0
  %1846 = vmatprep.subr.mxu0 0.0
  %1847 = vmatpush1.msra.mxu0 0.0
  %1848 = vmatprep.subr.mxu0 0.0
  %1849 = vmatpush1.msra.mxu0 0.0
  %1850 = vmatprep.subr.mxu0 0.0
  %1851 = vmatpush1.msra.mxu0 0.0
  %1852 = vmatprep.subr.mxu0 0.0
  %1853 = vmatpush1.msra.mxu0 0.0
  %1854 = vmatprep.subr.mxu0 0.0
  %1855 = vmatpush1.msra.mxu0 0.0
  %1856 = vmatprep.subr.mxu0 0.0
  %1857 = vmatpush1.msra.mxu0 0.0
  %1858 = vmatprep.subr.mxu0 0.0
  %1859 = vmatpush1.msra.mxu0 0.0
  %1860 = vmatprep.subr.mxu0 0.0
  %1861 = vmatpush1.msra.mxu0 0.0
  %1862 = vmatprep.mubr.f32.mxu0 0.0
  %v1863 = vand.u32 %v53, 4294901760
  %1864 = vmatmul.mubr.f32.gmra.mrb[0].mxu0 %v1863
  %v1865 = vpop.f32.mrb[0].mxu0
  %v1866 = vadd.f32 %v1683, %v1865
  %v1867 = vpop.f32.mrb[0].mxu0
  %v1868 = vadd.f32 %v1685, %v1867
  %1869 = vmatprep.mubr.f32.mxu0 0.0
  %v1870 = vand.u32 %v56, 4294901760
  %1871 = vmatmul.mubr.f32.gmra.mrb[0].mxu0 %v1870
  %v1872 = vpop.f32.mrb[0].mxu0
  %v1873 = vadd.f32 %v1692, %v1872
  %v1874 = vpop.f32.mrb[0].mxu0
  %v1875 = vadd.f32 %v1694, %v1874
  %1876 = vmatprep.mubr.f32.mxu0 0.0
  %v1877 = vand.u32 %v59, 4294901760
  %1878 = vmatmul.mubr.f32.gmra.mrb[0].mxu0 %v1877
  %v1879 = vpop.f32.mrb[0].mxu0
  %v1880 = vadd.f32 %v1701, %v1879
  %v1881 = vpop.f32.mrb[0].mxu0
  %v1882 = vadd.f32 %v1703, %v1881
  %1883 = vmatprep.mubr.f32.mxu0 0.0
  %v1884 = vand.u32 %v62, 4294901760
  %1885 = vmatmul.mubr.f32.gmra.mrb[0].mxu0 %v1884
  %v1886 = vpop.f32.mrb[0].mxu0
  %v1887 = vadd.f32 %v1710, %v1886
  %v1888 = vpop.f32.mrb[0].mxu0
  %v1889 = vadd.f32 %v1712, %v1888
  %1890 = vmatprep.mubr.f32.mxu0 0.0
  %v1891 = vand.u32 %v65, 4294901760
  %1892 = vmatmul.mubr.f32.gmra.mrb[0].mxu0 %v1891
  %v1893 = vpop.f32.mrb[0].mxu0
  %v1894 = vadd.f32 %v1719, %v1893
  %v1895 = vpop.f32.mrb[0].mxu0
  %v1896 = vadd.f32 %v1721, %v1895
  %1897 = vmatprep.mubr.f32.mxu0 0.0
  %v1898 = vand.u32 %v68, 4294901760
  %1899 = vmatmul.mubr.f32.gmra.mrb[0].mxu0 %v1898
  %v1900 = vpop.f32.mrb[0].mxu0
  %v1901 = vadd.f32 %v1728, %v1900
  %v1902 = vpop.f32.mrb[0].mxu0
  %v1903 = vadd.f32 %v1730, %v1902
  %1904 = vmatprep.mubr.f32.mxu0 0.0
  %v1905 = vand.u32 %v71, 4294901760
  %1906 = vmatmul.mubr.f32.gmra.mrb[0].mxu0 %v1905
  %v1907 = vpop.f32.mrb[0].mxu0
  %v1908 = vadd.f32 %v1737, %v1907
  %v1909 = vpop.f32.mrb[0].mxu0
  %v1910 = vadd.f32 %v1739, %v1909
  %1911 = vmatprep.mubr.f32.mxu0 0.0
  %v1912 = vand.u32 %v74, 4294901760
  %1913 = vmatmul.mubr.f32.gmra.mrb[0].mxu0 %v1912
  %v1914 = vpop.f32.mrb[0].mxu0
  %v1915 = vadd.f32 %v1746, %v1914
  %v1916 = vpop.f32.mrb[0].mxu0
  %v1917 = vadd.f32 %v1748, %v1916
  %1918 = vdwg.mxu0
  %v1919 = vand.u32 %v22, 4294901760
  %1920 = vmatprep.subr.mxu0 %v1919
  %v1921 = vand.u32 %v21, 4294901760
  %1922 = vmatpush1.msra.mxu0 %v1921
  %v1923 = vand.u32 %v26, 4294901760
  %1924 = vmatprep.subr.mxu0 %v1923
  %v1925 = vand.u32 %v25, 4294901760
  %1926 = vmatpush1.msra.mxu0 %v1925
  %v1927 = vand.u32 %v30, 4294901760
  %1928 = vmatprep.subr.mxu0 %v1927
  %v1929 = vand.u32 %v29, 4294901760
  %1930 = vmatpush1.msra.mxu0 %v1929
  %v1931 = vand.u32 %v34, 4294901760
  %1932 = vmatprep.subr.mxu0 %v1931
  %v1933 = vand.u32 %v33, 4294901760
  %1934 = vmatpush1.msra.mxu0 %v1933
  %v1935 = vand.u32 %v38, 4294901760
  %1936 = vmatprep.subr.mxu0 %v1935
  %v1937 = vand.u32 %v37, 4294901760
  %1938 = vmatpush1.msra.mxu0 %v1937
  %v1939 = vand.u32 %v42, 4294901760
  %1940 = vmatprep.subr.mxu0 %v1939
  %v1941 = vand.u32 %v41, 4294901760
  %1942 = vmatpush1.msra.mxu0 %v1941
  %v1943 = vand.u32 %v46, 4294901760
  %1944 = vmatprep.subr.mxu0 %v1943
  %v1945 = vand.u32 %v45, 4294901760
  %1946 = vmatpush1.msra.mxu0 %v1945
  %v1947 = vand.u32 %v50, 4294901760
  %1948 = vmatprep.subr.mxu0 %v1947
  %v1949 = vand.u32 %v49, 4294901760
  %1950 = vmatpush1.msra.mxu0 %v1949
  %1951 = vmatprep.subr.mxu0 0.0
  %1952 = vmatpush1.msra.mxu0 0.0
  %1953 = vmatprep.subr.mxu0 0.0
  %1954 = vmatpush1.msra.mxu0 0.0
  %1955 = vmatprep.subr.mxu0 0.0
  %1956 = vmatpush1.msra.mxu0 0.0
  %1957 = vmatprep.subr.mxu0 0.0
  %1958 = vmatpush1.msra.mxu0 0.0
  %1959 = vmatprep.subr.mxu0 0.0
  %1960 = vmatpush1.msra.mxu0 0.0
  %1961 = vmatprep.subr.mxu0 0.0
  %1962 = vmatpush1.msra.mxu0 0.0
  %1963 = vmatprep.subr.mxu0 0.0
  %1964 = vmatpush1.msra.mxu0 0.0
  %1965 = vmatprep.subr.mxu0 0.0
  %1966 = vmatpush1.msra.mxu0 0.0
  %1967 = vmatprep.subr.mxu0 0.0
  %1968 = vmatpush1.msra.mxu0 0.0
  %1969 = vmatprep.subr.mxu0 0.0
  %1970 = vmatpush1.msra.mxu0 0.0
  %1971 = vmatprep.subr.mxu0 0.0
  %1972 = vmatpush1.msra.mxu0 0.0
  %1973 = vmatprep.subr.mxu0 0.0
  %1974 = vmatpush1.msra.mxu0 0.0
  %1975 = vmatprep.subr.mxu0 0.0
  %1976 = vmatpush1.msra.mxu0 0.0
  %1977 = vmatprep.subr.mxu0 0.0
  %1978 = vmatpush1.msra.mxu0 0.0
  %1979 = vmatprep.subr.mxu0 0.0
  %1980 = vmatpush1.msra.mxu0 0.0
  %1981 = vmatprep.subr.mxu0 0.0
  %1982 = vmatpush1.msra.mxu0 0.0
  %1983 = vmatprep.subr.mxu0 0.0
  %1984 = vmatpush1.msra.mxu0 0.0
  %1985 = vmatprep.subr.mxu0 0.0
  %1986 = vmatpush1.msra.mxu0 0.0
  %1987 = vmatprep.subr.mxu0 0.0
  %1988 = vmatpush1.msra.mxu0 0.0
  %1989 = vmatprep.subr.mxu0 0.0
  %1990 = vmatpush1.msra.mxu0 0.0
  %1991 = vmatprep.subr.mxu0 0.0
  %1992 = vmatpush1.msra.mxu0 0.0
  %1993 = vmatprep.subr.mxu0 0.0
  %1994 = vmatpush1.msra.mxu0 0.0
  %1995 = vmatprep.subr.mxu0 0.0
  %1996 = vmatpush1.msra.mxu0 0.0
  %1997 = vmatprep.subr.mxu0 0.0
  %1998 = vmatpush1.msra.mxu0 0.0
  %1999 = vmatprep.mubr.f32.mxu0 0.0
  %v2000 = vand.u32 %v53, 4294901760
  %2001 = vmatmul.mubr.f32.gmra.mrb[0].mxu0 %v2000
  %v2002 = vpop.f32.mrb[0].mxu0
  %v2003 = vadd.f32 %v1866, %v2002
  %v2004 = vpop.f32.mrb[0].mxu0
  %v2005 = vadd.f32 %v1868, %v2004
  %2006 = vmatprep.mubr.f32.mxu0 0.0
  %v2007 = vand.u32 %v56, 4294901760
  %2008 = vmatmul.mubr.f32.gmra.mrb[0].mxu0 %v2007
  %v2009 = vpop.f32.mrb[0].mxu0
  %v2010 = vadd.f32 %v1873, %v2009
  %v2011 = vpop.f32.mrb[0].mxu0
  %v2012 = vadd.f32 %v1875, %v2011
  %2013 = vmatprep.mubr.f32.mxu0 0.0
  %v2014 = vand.u32 %v59, 4294901760
  %2015 = vmatmul.mubr.f32.gmra.mrb[0].mxu0 %v2014
  %v2016 = vpop.f32.mrb[0].mxu0
  %v2017 = vadd.f32 %v1880, %v2016
  %v2018 = vpop.f32.mrb[0].mxu0
  %v2019 = vadd.f32 %v1882, %v2018
  %2020 = vmatprep.mubr.f32.mxu0 0.0
  %v2021 = vand.u32 %v62, 4294901760
  %2022 = vmatmul.mubr.f32.gmra.mrb[0].mxu0 %v2021
  %v2023 = vpop.f32.mrb[0].mxu0
  %v2024 = vadd.f32 %v1887, %v2023
  %v2025 = vpop.f32.mrb[0].mxu0
  %v2026 = vadd.f32 %v1889, %v2025
  %2027 = vmatprep.mubr.f32.mxu0 0.0
  %v2028 = vand.u32 %v65, 4294901760
  %2029 = vmatmul.mubr.f32.gmra.mrb[0].mxu0 %v2028
  %v2030 = vpop.f32.mrb[0].mxu0
  %v2031 = vadd.f32 %v1894, %v2030
  %v2032 = vpop.f32.mrb[0].mxu0
  %v2033 = vadd.f32 %v1896, %v2032
  %2034 = vmatprep.mubr.f32.mxu0 0.0
  %v2035 = vand.u32 %v68, 4294901760
  %2036 = vmatmul.mubr.f32.gmra.mrb[0].mxu0 %v2035
  %v2037 = vpop.f32.mrb[0].mxu0
  %v2038 = vadd.f32 %v1901, %v2037
  %v2039 = vpop.f32.mrb[0].mxu0
  %v2040 = vadd.f32 %v1903, %v2039
  %2041 = vmatprep.mubr.f32.mxu0 0.0
  %v2042 = vand.u32 %v71, 4294901760
  %2043 = vmatmul.mubr.f32.gmra.mrb[0].mxu0 %v2042
  %v2044 = vpop.f32.mrb[0].mxu0
  %v2045 = vadd.f32 %v1908, %v2044
  %v2046 = vpop.f32.mrb[0].mxu0
  %v2047 = vadd.f32 %v1910, %v2046
  %2048 = vmatprep.mubr.f32.mxu0 0.0
  %v2049 = vand.u32 %v74, 4294901760
  %2050 = vmatmul.mubr.f32.gmra.mrb[0].mxu0 %v2049
  %v2051 = vpop.f32.mrb[0].mxu0
  %v2052 = vadd.f32 %v1915, %v2051
  %v2053 = vpop.f32.mrb[0].mxu0
  %v2054 = vadd.f32 %v1917, %v2053
  %2055 = vdwg.mxu0
  %v2057 = vsel %vm51, %v1013, 0
  %v2060 = vsel %vm51, %v1020, 0
  %v2063 = vsel %vm51, %v1027, 0
  %v2066 = vsel %vm51, %v1034, 0
  %v2069 = vsel %vm51, %v1041, 0
  %v2072 = vsel %vm51, %v1048, 0
  %v2075 = vsel %vm51, %v1055, 0
  %v2078 = vsel %vm51, %v1062, 0
  %2080 = vmatprep.subr.mxu0 0.0
  %v2081 = vand.u32 %v53, 4294901760
  %2082 = vmatpush1.xpose.msra.mxu0 %v2081
  %2083 = vmatprep.subr.mxu0 0.0
  %v2084 = vand.u32 %v56, 4294901760
  %2085 = vmatpush1.xpose.msra.mxu0 %v2084
  %2086 = vmatprep.subr.mxu0 0.0
  %v2087 = vand.u32 %v59, 4294901760
  %2088 = vmatpush1.xpose.msra.mxu0 %v2087
  %2089 = vmatprep.subr.mxu0 0.0
  %v2090 = vand.u32 %v62, 4294901760
  %2091 = vmatpush1.xpose.msra.mxu0 %v2090
  %2092 = vmatprep.subr.mxu0 0.0
  %v2093 = vand.u32 %v65, 4294901760
  %2094 = vmatpush1.xpose.msra.mxu0 %v2093
  %2095 = vmatprep.subr.mxu0 0.0
  %v2096 = vand.u32 %v68, 4294901760
  %2097 = vmatpush1.xpose.msra.mxu0 %v2096
  %2098 = vmatprep.subr.mxu0 0.0
  %v2099 = vand.u32 %v71, 4294901760
  %2100 = vmatpush1.xpose.msra.mxu0 %v2099
  %2101 = vmatprep.subr.mxu0 0.0
  %v2102 = vand.u32 %v74, 4294901760
  %2103 = vmatpush1.xpose.msra.mxu0 %v2102
  %2104 = vmatprep.subr.mxu0 0.0
  %2105 = vmatpush1.xpose.msra.mxu0 0.0
  %2106 = vmatprep.subr.mxu0 0.0
  %2107 = vmatpush1.xpose.msra.mxu0 0.0
  %2108 = vmatprep.subr.mxu0 0.0
  %2109 = vmatpush1.xpose.msra.mxu0 0.0
  %2110 = vmatprep.subr.mxu0 0.0
  %2111 = vmatpush1.xpose.msra.mxu0 0.0
  %2112 = vmatprep.subr.mxu0 0.0
  %2113 = vmatpush1.xpose.msra.mxu0 0.0
  %2114 = vmatprep.subr.mxu0 0.0
  %2115 = vmatpush1.xpose.msra.mxu0 0.0
  %2116 = vmatprep.subr.mxu0 0.0
  %2117 = vmatpush1.xpose.msra.mxu0 0.0
  %2118 = vmatprep.subr.mxu0 0.0
  %2119 = vmatpush1.xpose.msra.mxu0 0.0
  %2120 = vmatprep.subr.mxu0 0.0
  %2121 = vmatpush1.xpose.msra.mxu0 0.0
  %2122 = vmatprep.subr.mxu0 0.0
  %2123 = vmatpush1.xpose.msra.mxu0 0.0
  %2124 = vmatprep.subr.mxu0 0.0
  %2125 = vmatpush1.xpose.msra.mxu0 0.0
  %2126 = vmatprep.subr.mxu0 0.0
  %2127 = vmatpush1.xpose.msra.mxu0 0.0
  %2128 = vmatprep.subr.mxu0 0.0
  %2129 = vmatpush1.xpose.msra.mxu0 0.0
  %2130 = vmatprep.subr.mxu0 0.0
  %2131 = vmatpush1.xpose.msra.mxu0 0.0
  %2132 = vmatprep.subr.mxu0 0.0
  %2133 = vmatpush1.xpose.msra.mxu0 0.0
  %2134 = vmatprep.subr.mxu0 0.0
  %2135 = vmatpush1.xpose.msra.mxu0 0.0
  %2136 = vmatprep.subr.mxu0 0.0
  %2137 = vmatpush1.xpose.msra.mxu0 0.0
  %2138 = vmatprep.subr.mxu0 0.0
  %2139 = vmatpush1.xpose.msra.mxu0 0.0
  %2140 = vmatprep.subr.mxu0 0.0
  %2141 = vmatpush1.xpose.msra.mxu0 0.0
  %2142 = vmatprep.subr.mxu0 0.0
  %2143 = vmatpush1.xpose.msra.mxu0 0.0
  %2144 = vmatprep.subr.mxu0 0.0
  %2145 = vmatpush1.xpose.msra.mxu0 0.0
  %2146 = vmatprep.subr.mxu0 0.0
  %2147 = vmatpush1.xpose.msra.mxu0 0.0
  %2148 = vmatprep.subr.mxu0 0.0
  %2149 = vmatpush1.xpose.msra.mxu0 0.0
  %2150 = vmatprep.subr.mxu0 0.0
  %2151 = vmatpush1.xpose.msra.mxu0 0.0
  %2152 = vmatprep.mubr.f32.mxu0 0.0
  %v2153 = vand.u32 %v2057, 4294901760
  %v2154 = vsub.f32 %v2057, %v2153
  %v2155 = vand.u32 %v2154, 4294901760
  %v2156 = vsub.f32 %v2154, %v2155
  %v2157 = vand.u32 %v2156, 4294901760
  %2158 = vmatmul.mubr.f32.gmra.mrb[0].mxu0 %v2157
  %v2159 = vpop.f32.mrb[0].mxu0
  %v2160 = vadd.f32 0.0, %v2159
  %v2161 = vpop.f32.mrb[0].mxu0
  %2162 = vmatprep.mubr.f32.mxu0 0.0
  %v2163 = vand.u32 %v2060, 4294901760
  %v2164 = vsub.f32 %v2060, %v2163
  %v2165 = vand.u32 %v2164, 4294901760
  %v2166 = vsub.f32 %v2164, %v2165
  %v2167 = vand.u32 %v2166, 4294901760
  %2168 = vmatmul.mubr.f32.gmra.mrb[0].mxu0 %v2167
  %v2169 = vpop.f32.mrb[0].mxu0
  %v2170 = vadd.f32 0.0, %v2169
  %v2171 = vpop.f32.mrb[0].mxu0
  %2172 = vmatprep.mubr.f32.mxu0 0.0
  %v2173 = vand.u32 %v2063, 4294901760
  %v2174 = vsub.f32 %v2063, %v2173
  %v2175 = vand.u32 %v2174, 4294901760
  %v2176 = vsub.f32 %v2174, %v2175
  %v2177 = vand.u32 %v2176, 4294901760
  %2178 = vmatmul.mubr.f32.gmra.mrb[0].mxu0 %v2177
  %v2179 = vpop.f32.mrb[0].mxu0
  %v2180 = vadd.f32 0.0, %v2179
  %v2181 = vpop.f32.mrb[0].mxu0
  %2182 = vmatprep.mubr.f32.mxu0 0.0
  %v2183 = vand.u32 %v2066, 4294901760
  %v2184 = vsub.f32 %v2066, %v2183
  %v2185 = vand.u32 %v2184, 4294901760
  %v2186 = vsub.f32 %v2184, %v2185
  %v2187 = vand.u32 %v2186, 4294901760
  %2188 = vmatmul.mubr.f32.gmra.mrb[0].mxu0 %v2187
  %v2189 = vpop.f32.mrb[0].mxu0
  %v2190 = vadd.f32 0.0, %v2189
  %v2191 = vpop.f32.mrb[0].mxu0
  %2192 = vmatprep.mubr.f32.mxu0 0.0
  %v2193 = vand.u32 %v2069, 4294901760
  %v2194 = vsub.f32 %v2069, %v2193
  %v2195 = vand.u32 %v2194, 4294901760
  %v2196 = vsub.f32 %v2194, %v2195
  %v2197 = vand.u32 %v2196, 4294901760
  %2198 = vmatmul.mubr.f32.gmra.mrb[0].mxu0 %v2197
  %v2199 = vpop.f32.mrb[0].mxu0
  %v2200 = vadd.f32 0.0, %v2199
  %v2201 = vpop.f32.mrb[0].mxu0
  %2202 = vmatprep.mubr.f32.mxu0 0.0
  %v2203 = vand.u32 %v2072, 4294901760
  %v2204 = vsub.f32 %v2072, %v2203
  %v2205 = vand.u32 %v2204, 4294901760
  %v2206 = vsub.f32 %v2204, %v2205
  %v2207 = vand.u32 %v2206, 4294901760
  %2208 = vmatmul.mubr.f32.gmra.mrb[0].mxu0 %v2207
  %v2209 = vpop.f32.mrb[0].mxu0
  %v2210 = vadd.f32 0.0, %v2209
  %v2211 = vpop.f32.mrb[0].mxu0
  %2212 = vmatprep.mubr.f32.mxu0 0.0
  %v2213 = vand.u32 %v2075, 4294901760
  %v2214 = vsub.f32 %v2075, %v2213
  %v2215 = vand.u32 %v2214, 4294901760
  %v2216 = vsub.f32 %v2214, %v2215
  %v2217 = vand.u32 %v2216, 4294901760
  %2218 = vmatmul.mubr.f32.gmra.mrb[0].mxu0 %v2217
  %v2219 = vpop.f32.mrb[0].mxu0
  %v2220 = vadd.f32 0.0, %v2219
  %v2221 = vpop.f32.mrb[0].mxu0
  %2222 = vmatprep.mubr.f32.mxu0 0.0
  %v2223 = vand.u32 %v2078, 4294901760
  %v2224 = vsub.f32 %v2078, %v2223
  %v2225 = vand.u32 %v2224, 4294901760
  %v2226 = vsub.f32 %v2224, %v2225
  %v2227 = vand.u32 %v2226, 4294901760
  %2228 = vmatmul.mubr.f32.gmra.mrb[0].mxu0 %v2227
  %v2229 = vpop.f32.mrb[0].mxu0
  %v2230 = vadd.f32 0.0, %v2229
  %v2231 = vpop.f32.mrb[0].mxu0
  %2232 = vdwg.mxu0
  %2233 = vmatprep.subr.mxu0 0.0
  %v2234 = vand.u32 %v53, 4294901760
  %v2235 = vsub.f32 %v53, %v2234
  %v2236 = vand.u32 %v2235, 4294901760
  %v2237 = vsub.f32 %v2235, %v2236
  %v2238 = vand.u32 %v2237, 4294901760
  %2239 = vmatpush1.xpose.msra.mxu0 %v2238
  %2240 = vmatprep.subr.mxu0 0.0
  %v2241 = vand.u32 %v56, 4294901760
  %v2242 = vsub.f32 %v56, %v2241
  %v2243 = vand.u32 %v2242, 4294901760
  %v2244 = vsub.f32 %v2242, %v2243
  %v2245 = vand.u32 %v2244, 4294901760
  %2246 = vmatpush1.xpose.msra.mxu0 %v2245
  %2247 = vmatprep.subr.mxu0 0.0
  %v2248 = vand.u32 %v59, 4294901760
  %v2249 = vsub.f32 %v59, %v2248
  %v2250 = vand.u32 %v2249, 4294901760
  %v2251 = vsub.f32 %v2249, %v2250
  %v2252 = vand.u32 %v2251, 4294901760
  %2253 = vmatpush1.xpose.msra.mxu0 %v2252
  %2254 = vmatprep.subr.mxu0 0.0
  %v2255 = vand.u32 %v62, 4294901760
  %v2256 = vsub.f32 %v62, %v2255
  %v2257 = vand.u32 %v2256, 4294901760
  %v2258 = vsub.f32 %v2256, %v2257
  %v2259 = vand.u32 %v2258, 4294901760
  %2260 = vmatpush1.xpose.msra.mxu0 %v2259
  %2261 = vmatprep.subr.mxu0 0.0
  %v2262 = vand.u32 %v65, 4294901760
  %v2263 = vsub.f32 %v65, %v2262
  %v2264 = vand.u32 %v2263, 4294901760
  %v2265 = vsub.f32 %v2263, %v2264
  %v2266 = vand.u32 %v2265, 4294901760
  %2267 = vmatpush1.xpose.msra.mxu0 %v2266
  %2268 = vmatprep.subr.mxu0 0.0
  %v2269 = vand.u32 %v68, 4294901760
  %v2270 = vsub.f32 %v68, %v2269
  %v2271 = vand.u32 %v2270, 4294901760
  %v2272 = vsub.f32 %v2270, %v2271
  %v2273 = vand.u32 %v2272, 4294901760
  %2274 = vmatpush1.xpose.msra.mxu0 %v2273
  %2275 = vmatprep.subr.mxu0 0.0
  %v2276 = vand.u32 %v71, 4294901760
  %v2277 = vsub.f32 %v71, %v2276
  %v2278 = vand.u32 %v2277, 4294901760
  %v2279 = vsub.f32 %v2277, %v2278
  %v2280 = vand.u32 %v2279, 4294901760
  %2281 = vmatpush1.xpose.msra.mxu0 %v2280
  %2282 = vmatprep.subr.mxu0 0.0
  %v2283 = vand.u32 %v74, 4294901760
  %v2284 = vsub.f32 %v74, %v2283
  %v2285 = vand.u32 %v2284, 4294901760
  %v2286 = vsub.f32 %v2284, %v2285
  %v2287 = vand.u32 %v2286, 4294901760
  %2288 = vmatpush1.xpose.msra.mxu0 %v2287
  %2289 = vmatprep.subr.mxu0 0.0
  %2290 = vmatpush1.xpose.msra.mxu0 0.0
  %2291 = vmatprep.subr.mxu0 0.0
  %2292 = vmatpush1.xpose.msra.mxu0 0.0
  %2293 = vmatprep.subr.mxu0 0.0
  %2294 = vmatpush1.xpose.msra.mxu0 0.0
  %2295 = vmatprep.subr.mxu0 0.0
  %2296 = vmatpush1.xpose.msra.mxu0 0.0
  %2297 = vmatprep.subr.mxu0 0.0
  %2298 = vmatpush1.xpose.msra.mxu0 0.0
  %2299 = vmatprep.subr.mxu0 0.0
  %2300 = vmatpush1.xpose.msra.mxu0 0.0
  %2301 = vmatprep.subr.mxu0 0.0
  %2302 = vmatpush1.xpose.msra.mxu0 0.0
  %2303 = vmatprep.subr.mxu0 0.0
  %2304 = vmatpush1.xpose.msra.mxu0 0.0
  %2305 = vmatprep.subr.mxu0 0.0
  %2306 = vmatpush1.xpose.msra.mxu0 0.0
  %2307 = vmatprep.subr.mxu0 0.0
  %2308 = vmatpush1.xpose.msra.mxu0 0.0
  %2309 = vmatprep.subr.mxu0 0.0
  %2310 = vmatpush1.xpose.msra.mxu0 0.0
  %2311 = vmatprep.subr.mxu0 0.0
  %2312 = vmatpush1.xpose.msra.mxu0 0.0
  %2313 = vmatprep.subr.mxu0 0.0
  %2314 = vmatpush1.xpose.msra.mxu0 0.0
  %2315 = vmatprep.subr.mxu0 0.0
  %2316 = vmatpush1.xpose.msra.mxu0 0.0
  %2317 = vmatprep.subr.mxu0 0.0
  %2318 = vmatpush1.xpose.msra.mxu0 0.0
  %2319 = vmatprep.subr.mxu0 0.0
  %2320 = vmatpush1.xpose.msra.mxu0 0.0
  %2321 = vmatprep.subr.mxu0 0.0
  %2322 = vmatpush1.xpose.msra.mxu0 0.0
  %2323 = vmatprep.subr.mxu0 0.0
  %2324 = vmatpush1.xpose.msra.mxu0 0.0
  %2325 = vmatprep.subr.mxu0 0.0
  %2326 = vmatpush1.xpose.msra.mxu0 0.0
  %2327 = vmatprep.subr.mxu0 0.0
  %2328 = vmatpush1.xpose.msra.mxu0 0.0
  %2329 = vmatprep.subr.mxu0 0.0
  %2330 = vmatpush1.xpose.msra.mxu0 0.0
  %2331 = vmatprep.subr.mxu0 0.0
  %2332 = vmatpush1.xpose.msra.mxu0 0.0
  %2333 = vmatprep.subr.mxu0 0.0
  %2334 = vmatpush1.xpose.msra.mxu0 0.0
  %2335 = vmatprep.subr.mxu0 0.0
  %2336 = vmatpush1.xpose.msra.mxu0 0.0
  %2337 = vmatprep.mubr.f32.mxu0 0.0
  %v2338 = vand.u32 %v2057, 4294901760
  %2339 = vmatmul.mubr.f32.gmra.mrb[0].mxu0 %v2338
  %v2340 = vpop.f32.mrb[0].mxu0
  %v2341 = vadd.f32 %v2160, %v2340
  %v2342 = vpop.f32.mrb[0].mxu0
  %2343 = vmatprep.mubr.f32.mxu0 0.0
  %v2344 = vand.u32 %v2060, 4294901760
  %2345 = vmatmul.mubr.f32.gmra.mrb[0].mxu0 %v2344
  %v2346 = vpop.f32.mrb[0].mxu0
  %v2347 = vadd.f32 %v2170, %v2346
  %v2348 = vpop.f32.mrb[0].mxu0
  %2349 = vmatprep.mubr.f32.mxu0 0.0
  %v2350 = vand.u32 %v2063, 4294901760
  %2351 = vmatmul.mubr.f32.gmra.mrb[0].mxu0 %v2350
  %v2352 = vpop.f32.mrb[0].mxu0
  %v2353 = vadd.f32 %v2180, %v2352
  %v2354 = vpop.f32.mrb[0].mxu0
  %2355 = vmatprep.mubr.f32.mxu0 0.0
  %v2356 = vand.u32 %v2066, 4294901760
  %2357 = vmatmul.mubr.f32.gmra.mrb[0].mxu0 %v2356
  %v2358 = vpop.f32.mrb[0].mxu0
  %v2359 = vadd.f32 %v2190, %v2358
  %v2360 = vpop.f32.mrb[0].mxu0
  %2361 = vmatprep.mubr.f32.mxu0 0.0
  %v2362 = vand.u32 %v2069, 4294901760
  %2363 = vmatmul.mubr.f32.gmra.mrb[0].mxu0 %v2362
  %v2364 = vpop.f32.mrb[0].mxu0
  %v2365 = vadd.f32 %v2200, %v2364
  %v2366 = vpop.f32.mrb[0].mxu0
  %2367 = vmatprep.mubr.f32.mxu0 0.0
  %v2368 = vand.u32 %v2072, 4294901760
  %2369 = vmatmul.mubr.f32.gmra.mrb[0].mxu0 %v2368
  %v2370 = vpop.f32.mrb[0].mxu0
  %v2371 = vadd.f32 %v2210, %v2370
  %v2372 = vpop.f32.mrb[0].mxu0
  %2373 = vmatprep.mubr.f32.mxu0 0.0
  %v2374 = vand.u32 %v2075, 4294901760
  %2375 = vmatmul.mubr.f32.gmra.mrb[0].mxu0 %v2374
  %v2376 = vpop.f32.mrb[0].mxu0
  %v2377 = vadd.f32 %v2220, %v2376
  %v2378 = vpop.f32.mrb[0].mxu0
  %2379 = vmatprep.mubr.f32.mxu0 0.0
  %v2380 = vand.u32 %v2078, 4294901760
  %2381 = vmatmul.mubr.f32.gmra.mrb[0].mxu0 %v2380
  %v2382 = vpop.f32.mrb[0].mxu0
  %v2383 = vadd.f32 %v2230, %v2382
  %v2384 = vpop.f32.mrb[0].mxu0
  %2385 = vdwg.mxu0
  %2386 = vmatprep.subr.mxu0 0.0
  %v2387 = vand.u32 %v53, 4294901760
  %v2388 = vsub.f32 %v53, %v2387
  %2389 = vmatpush1.xpose.msra.mxu0 %v2388
  %2390 = vmatprep.subr.mxu0 0.0
  %v2391 = vand.u32 %v56, 4294901760
  %v2392 = vsub.f32 %v56, %v2391
  %2393 = vmatpush1.xpose.msra.mxu0 %v2392
  %2394 = vmatprep.subr.mxu0 0.0
  %v2395 = vand.u32 %v59, 4294901760
  %v2396 = vsub.f32 %v59, %v2395
  %2397 = vmatpush1.xpose.msra.mxu0 %v2396
  %2398 = vmatprep.subr.mxu0 0.0
  %v2399 = vand.u32 %v62, 4294901760
  %v2400 = vsub.f32 %v62, %v2399
  %2401 = vmatpush1.xpose.msra.mxu0 %v2400
  %2402 = vmatprep.subr.mxu0 0.0
  %v2403 = vand.u32 %v65, 4294901760
  %v2404 = vsub.f32 %v65, %v2403
  %2405 = vmatpush1.xpose.msra.mxu0 %v2404
  %2406 = vmatprep.subr.mxu0 0.0
  %v2407 = vand.u32 %v68, 4294901760
  %v2408 = vsub.f32 %v68, %v2407
  %2409 = vmatpush1.xpose.msra.mxu0 %v2408
  %2410 = vmatprep.subr.mxu0 0.0
  %v2411 = vand.u32 %v71, 4294901760
  %v2412 = vsub.f32 %v71, %v2411
  %2413 = vmatpush1.xpose.msra.mxu0 %v2412
  %2414 = vmatprep.subr.mxu0 0.0
  %v2415 = vand.u32 %v74, 4294901760
  %v2416 = vsub.f32 %v74, %v2415
  %2417 = vmatpush1.xpose.msra.mxu0 %v2416
  %2418 = vmatprep.subr.mxu0 0.0
  %2419 = vmatpush1.xpose.msra.mxu0 0.0
  %2420 = vmatprep.subr.mxu0 0.0
  %2421 = vmatpush1.xpose.msra.mxu0 0.0
  %2422 = vmatprep.subr.mxu0 0.0
  %2423 = vmatpush1.xpose.msra.mxu0 0.0
  %2424 = vmatprep.subr.mxu0 0.0
  %2425 = vmatpush1.xpose.msra.mxu0 0.0
  %2426 = vmatprep.subr.mxu0 0.0
  %2427 = vmatpush1.xpose.msra.mxu0 0.0
  %2428 = vmatprep.subr.mxu0 0.0
  %2429 = vmatpush1.xpose.msra.mxu0 0.0
  %2430 = vmatprep.subr.mxu0 0.0
  %2431 = vmatpush1.xpose.msra.mxu0 0.0
  %2432 = vmatprep.subr.mxu0 0.0
  %2433 = vmatpush1.xpose.msra.mxu0 0.0
  %2434 = vmatprep.subr.mxu0 0.0
  %2435 = vmatpush1.xpose.msra.mxu0 0.0
  %2436 = vmatprep.subr.mxu0 0.0
  %2437 = vmatpush1.xpose.msra.mxu0 0.0
  %2438 = vmatprep.subr.mxu0 0.0
  %2439 = vmatpush1.xpose.msra.mxu0 0.0
  %2440 = vmatprep.subr.mxu0 0.0
  %2441 = vmatpush1.xpose.msra.mxu0 0.0
  %2442 = vmatprep.subr.mxu0 0.0
  %2443 = vmatpush1.xpose.msra.mxu0 0.0
  %2444 = vmatprep.subr.mxu0 0.0
  %2445 = vmatpush1.xpose.msra.mxu0 0.0
  %2446 = vmatprep.subr.mxu0 0.0
  %2447 = vmatpush1.xpose.msra.mxu0 0.0
  %2448 = vmatprep.subr.mxu0 0.0
  %2449 = vmatpush1.xpose.msra.mxu0 0.0
  %2450 = vmatprep.subr.mxu0 0.0
  %2451 = vmatpush1.xpose.msra.mxu0 0.0
  %2452 = vmatprep.subr.mxu0 0.0
  %2453 = vmatpush1.xpose.msra.mxu0 0.0
  %2454 = vmatprep.subr.mxu0 0.0
  %2455 = vmatpush1.xpose.msra.mxu0 0.0
  %2456 = vmatprep.subr.mxu0 0.0
  %2457 = vmatpush1.xpose.msra.mxu0 0.0
  %2458 = vmatprep.subr.mxu0 0.0
  %2459 = vmatpush1.xpose.msra.mxu0 0.0
  %2460 = vmatprep.subr.mxu0 0.0
  %2461 = vmatpush1.xpose.msra.mxu0 0.0
  %2462 = vmatprep.subr.mxu0 0.0
  %2463 = vmatpush1.xpose.msra.mxu0 0.0
  %2464 = vmatprep.subr.mxu0 0.0
  %2465 = vmatpush1.xpose.msra.mxu0 0.0
  %2466 = vmatprep.mubr.f32.mxu0 0.0
  %v2467 = vand.u32 %v2057, 4294901760
  %v2468 = vsub.f32 %v2057, %v2467
  %2469 = vmatmul.mubr.f32.gmra.mrb[0].mxu0 %v2468
  %v2470 = vpop.f32.mrb[0].mxu0
  %v2471 = vadd.f32 %v2341, %v2470
  %v2472 = vpop.f32.mrb[0].mxu0
  %2473 = vmatprep.mubr.f32.mxu0 0.0
  %v2474 = vand.u32 %v2060, 4294901760
  %v2475 = vsub.f32 %v2060, %v2474
  %2476 = vmatmul.mubr.f32.gmra.mrb[0].mxu0 %v2475
  %v2477 = vpop.f32.mrb[0].mxu0
  %v2478 = vadd.f32 %v2347, %v2477
  %v2479 = vpop.f32.mrb[0].mxu0
  %2480 = vmatprep.mubr.f32.mxu0 0.0
  %v2481 = vand.u32 %v2063, 4294901760
  %v2482 = vsub.f32 %v2063, %v2481
  %2483 = vmatmul.mubr.f32.gmra.mrb[0].mxu0 %v2482
  %v2484 = vpop.f32.mrb[0].mxu0
  %v2485 = vadd.f32 %v2353, %v2484
  %v2486 = vpop.f32.mrb[0].mxu0
  %2487 = vmatprep.mubr.f32.mxu0 0.0
  %v2488 = vand.u32 %v2066, 4294901760
  %v2489 = vsub.f32 %v2066, %v2488
  %2490 = vmatmul.mubr.f32.gmra.mrb[0].mxu0 %v2489
  %v2491 = vpop.f32.mrb[0].mxu0
  %v2492 = vadd.f32 %v2359, %v2491
  %v2493 = vpop.f32.mrb[0].mxu0
  %2494 = vmatprep.mubr.f32.mxu0 0.0
  %v2495 = vand.u32 %v2069, 4294901760
  %v2496 = vsub.f32 %v2069, %v2495
  %2497 = vmatmul.mubr.f32.gmra.mrb[0].mxu0 %v2496
  %v2498 = vpop.f32.mrb[0].mxu0
  %v2499 = vadd.f32 %v2365, %v2498
  %v2500 = vpop.f32.mrb[0].mxu0
  %2501 = vmatprep.mubr.f32.mxu0 0.0
  %v2502 = vand.u32 %v2072, 4294901760
  %v2503 = vsub.f32 %v2072, %v2502
  %2504 = vmatmul.mubr.f32.gmra.mrb[0].mxu0 %v2503
  %v2505 = vpop.f32.mrb[0].mxu0
  %v2506 = vadd.f32 %v2371, %v2505
  %v2507 = vpop.f32.mrb[0].mxu0
  %2508 = vmatprep.mubr.f32.mxu0 0.0
  %v2509 = vand.u32 %v2075, 4294901760
  %v2510 = vsub.f32 %v2075, %v2509
  %2511 = vmatmul.mubr.f32.gmra.mrb[0].mxu0 %v2510
  %v2512 = vpop.f32.mrb[0].mxu0
  %v2513 = vadd.f32 %v2377, %v2512
  %v2514 = vpop.f32.mrb[0].mxu0
  %2515 = vmatprep.mubr.f32.mxu0 0.0
  %v2516 = vand.u32 %v2078, 4294901760
  %v2517 = vsub.f32 %v2078, %v2516
  %2518 = vmatmul.mubr.f32.gmra.mrb[0].mxu0 %v2517
  %v2519 = vpop.f32.mrb[0].mxu0
  %v2520 = vadd.f32 %v2383, %v2519
  %v2521 = vpop.f32.mrb[0].mxu0
  %2522 = vdwg.mxu0
  %2523 = vmatprep.subr.mxu0 0.0
  %v2524 = vand.u32 %v53, 4294901760
  %2525 = vmatpush1.xpose.msra.mxu0 %v2524
  %2526 = vmatprep.subr.mxu0 0.0
  %v2527 = vand.u32 %v56, 4294901760
  %2528 = vmatpush1.xpose.msra.mxu0 %v2527
  %2529 = vmatprep.subr.mxu0 0.0
  %v2530 = vand.u32 %v59, 4294901760
  %2531 = vmatpush1.xpose.msra.mxu0 %v2530
  %2532 = vmatprep.subr.mxu0 0.0
  %v2533 = vand.u32 %v62, 4294901760
  %2534 = vmatpush1.xpose.msra.mxu0 %v2533
  %2535 = vmatprep.subr.mxu0 0.0
  %v2536 = vand.u32 %v65, 4294901760
  %2537 = vmatpush1.xpose.msra.mxu0 %v2536
  %2538 = vmatprep.subr.mxu0 0.0
  %v2539 = vand.u32 %v68, 4294901760
  %2540 = vmatpush1.xpose.msra.mxu0 %v2539
  %2541 = vmatprep.subr.mxu0 0.0
  %v2542 = vand.u32 %v71, 4294901760
  %2543 = vmatpush1.xpose.msra.mxu0 %v2542
  %2544 = vmatprep.subr.mxu0 0.0
  %v2545 = vand.u32 %v74, 4294901760
  %2546 = vmatpush1.xpose.msra.mxu0 %v2545
  %2547 = vmatprep.subr.mxu0 0.0
  %2548 = vmatpush1.xpose.msra.mxu0 0.0
  %2549 = vmatprep.subr.mxu0 0.0
  %2550 = vmatpush1.xpose.msra.mxu0 0.0
  %2551 = vmatprep.subr.mxu0 0.0
  %2552 = vmatpush1.xpose.msra.mxu0 0.0
  %2553 = vmatprep.subr.mxu0 0.0
  %2554 = vmatpush1.xpose.msra.mxu0 0.0
  %2555 = vmatprep.subr.mxu0 0.0
  %2556 = vmatpush1.xpose.msra.mxu0 0.0
  %2557 = vmatprep.subr.mxu0 0.0
  %2558 = vmatpush1.xpose.msra.mxu0 0.0
  %2559 = vmatprep.subr.mxu0 0.0
  %2560 = vmatpush1.xpose.msra.mxu0 0.0
  %2561 = vmatprep.subr.mxu0 0.0
  %2562 = vmatpush1.xpose.msra.mxu0 0.0
  %2563 = vmatprep.subr.mxu0 0.0
  %2564 = vmatpush1.xpose.msra.mxu0 0.0
  %2565 = vmatprep.subr.mxu0 0.0
  %2566 = vmatpush1.xpose.msra.mxu0 0.0
  %2567 = vmatprep.subr.mxu0 0.0
  %2568 = vmatpush1.xpose.msra.mxu0 0.0
  %2569 = vmatprep.subr.mxu0 0.0
  %2570 = vmatpush1.xpose.msra.mxu0 0.0
  %2571 = vmatprep.subr.mxu0 0.0
  %2572 = vmatpush1.xpose.msra.mxu0 0.0
  %2573 = vmatprep.subr.mxu0 0.0
  %2574 = vmatpush1.xpose.msra.mxu0 0.0
  %2575 = vmatprep.subr.mxu0 0.0
  %2576 = vmatpush1.xpose.msra.mxu0 0.0
  %2577 = vmatprep.subr.mxu0 0.0
  %2578 = vmatpush1.xpose.msra.mxu0 0.0
  %2579 = vmatprep.subr.mxu0 0.0
  %2580 = vmatpush1.xpose.msra.mxu0 0.0
  %2581 = vmatprep.subr.mxu0 0.0
  %2582 = vmatpush1.xpose.msra.mxu0 0.0
  %2583 = vmatprep.subr.mxu0 0.0
  %2584 = vmatpush1.xpose.msra.mxu0 0.0
  %2585 = vmatprep.subr.mxu0 0.0
  %2586 = vmatpush1.xpose.msra.mxu0 0.0
  %2587 = vmatprep.subr.mxu0 0.0
  %2588 = vmatpush1.xpose.msra.mxu0 0.0
  %2589 = vmatprep.subr.mxu0 0.0
  %2590 = vmatpush1.xpose.msra.mxu0 0.0
  %2591 = vmatprep.subr.mxu0 0.0
  %2592 = vmatpush1.xpose.msra.mxu0 0.0
  %2593 = vmatprep.subr.mxu0 0.0
  %2594 = vmatpush1.xpose.msra.mxu0 0.0
  %2595 = vmatprep.mubr.f32.mxu0 0.0
  %v2596 = vand.u32 %v2057, 4294901760
  %v2597 = vsub.f32 %v2057, %v2596
  %v2598 = vand.u32 %v2597, 4294901760
  %2599 = vmatmul.mubr.f32.gmra.mrb[0].mxu0 %v2598
  %v2600 = vpop.f32.mrb[0].mxu0
  %v2601 = vadd.f32 %v2471, %v2600
  %v2602 = vpop.f32.mrb[0].mxu0
  %2603 = vmatprep.mubr.f32.mxu0 0.0
  %v2604 = vand.u32 %v2060, 4294901760
  %v2605 = vsub.f32 %v2060, %v2604
  %v2606 = vand.u32 %v2605, 4294901760
  %2607 = vmatmul.mubr.f32.gmra.mrb[0].mxu0 %v2606
  %v2608 = vpop.f32.mrb[0].mxu0
  %v2609 = vadd.f32 %v2478, %v2608
  %v2610 = vpop.f32.mrb[0].mxu0
  %2611 = vmatprep.mubr.f32.mxu0 0.0
  %v2612 = vand.u32 %v2063, 4294901760
  %v2613 = vsub.f32 %v2063, %v2612
  %v2614 = vand.u32 %v2613, 4294901760
  %2615 = vmatmul.mubr.f32.gmra.mrb[0].mxu0 %v2614
  %v2616 = vpop.f32.mrb[0].mxu0
  %v2617 = vadd.f32 %v2485, %v2616
  %v2618 = vpop.f32.mrb[0].mxu0
  %2619 = vmatprep.mubr.f32.mxu0 0.0
  %v2620 = vand.u32 %v2066, 4294901760
  %v2621 = vsub.f32 %v2066, %v2620
  %v2622 = vand.u32 %v2621, 4294901760
  %2623 = vmatmul.mubr.f32.gmra.mrb[0].mxu0 %v2622
  %v2624 = vpop.f32.mrb[0].mxu0
  %v2625 = vadd.f32 %v2492, %v2624
  %v2626 = vpop.f32.mrb[0].mxu0
  %2627 = vmatprep.mubr.f32.mxu0 0.0
  %v2628 = vand.u32 %v2069, 4294901760
  %v2629 = vsub.f32 %v2069, %v2628
  %v2630 = vand.u32 %v2629, 4294901760
  %2631 = vmatmul.mubr.f32.gmra.mrb[0].mxu0 %v2630
  %v2632 = vpop.f32.mrb[0].mxu0
  %v2633 = vadd.f32 %v2499, %v2632
  %v2634 = vpop.f32.mrb[0].mxu0
  %2635 = vmatprep.mubr.f32.mxu0 0.0
  %v2636 = vand.u32 %v2072, 4294901760
  %v2637 = vsub.f32 %v2072, %v2636
  %v2638 = vand.u32 %v2637, 4294901760
  %2639 = vmatmul.mubr.f32.gmra.mrb[0].mxu0 %v2638
  %v2640 = vpop.f32.mrb[0].mxu0
  %v2641 = vadd.f32 %v2506, %v2640
  %v2642 = vpop.f32.mrb[0].mxu0
  %2643 = vmatprep.mubr.f32.mxu0 0.0
  %v2644 = vand.u32 %v2075, 4294901760
  %v2645 = vsub.f32 %v2075, %v2644
  %v2646 = vand.u32 %v2645, 4294901760
  %2647 = vmatmul.mubr.f32.gmra.mrb[0].mxu0 %v2646
  %v2648 = vpop.f32.mrb[0].mxu0
  %v2649 = vadd.f32 %v2513, %v2648
  %v2650 = vpop.f32.mrb[0].mxu0
  %2651 = vmatprep.mubr.f32.mxu0 0.0
  %v2652 = vand.u32 %v2078, 4294901760
  %v2653 = vsub.f32 %v2078, %v2652
  %v2654 = vand.u32 %v2653, 4294901760
  %2655 = vmatmul.mubr.f32.gmra.mrb[0].mxu0 %v2654
  %v2656 = vpop.f32.mrb[0].mxu0
  %v2657 = vadd.f32 %v2520, %v2656
  %v2658 = vpop.f32.mrb[0].mxu0
  %2659 = vdwg.mxu0
  %2660 = vmatprep.subr.mxu0 0.0
  %v2661 = vand.u32 %v53, 4294901760
  %v2662 = vsub.f32 %v53, %v2661
  %v2663 = vand.u32 %v2662, 4294901760
  %2664 = vmatpush1.xpose.msra.mxu0 %v2663
  %2665 = vmatprep.subr.mxu0 0.0
  %v2666 = vand.u32 %v56, 4294901760
  %v2667 = vsub.f32 %v56, %v2666
  %v2668 = vand.u32 %v2667, 4294901760
  %2669 = vmatpush1.xpose.msra.mxu0 %v2668
  %2670 = vmatprep.subr.mxu0 0.0
  %v2671 = vand.u32 %v59, 4294901760
  %v2672 = vsub.f32 %v59, %v2671
  %v2673 = vand.u32 %v2672, 4294901760
  %2674 = vmatpush1.xpose.msra.mxu0 %v2673
  %2675 = vmatprep.subr.mxu0 0.0
  %v2676 = vand.u32 %v62, 4294901760
  %v2677 = vsub.f32 %v62, %v2676
  %v2678 = vand.u32 %v2677, 4294901760
  %2679 = vmatpush1.xpose.msra.mxu0 %v2678
  %2680 = vmatprep.subr.mxu0 0.0
  %v2681 = vand.u32 %v65, 4294901760
  %v2682 = vsub.f32 %v65, %v2681
  %v2683 = vand.u32 %v2682, 4294901760
  %2684 = vmatpush1.xpose.msra.mxu0 %v2683
  %2685 = vmatprep.subr.mxu0 0.0
  %v2686 = vand.u32 %v68, 4294901760
  %v2687 = vsub.f32 %v68, %v2686
  %v2688 = vand.u32 %v2687, 4294901760
  %2689 = vmatpush1.xpose.msra.mxu0 %v2688
  %2690 = vmatprep.subr.mxu0 0.0
  %v2691 = vand.u32 %v71, 4294901760
  %v2692 = vsub.f32 %v71, %v2691
  %v2693 = vand.u32 %v2692, 4294901760
  %2694 = vmatpush1.xpose.msra.mxu0 %v2693
  %2695 = vmatprep.subr.mxu0 0.0
  %v2696 = vand.u32 %v74, 4294901760
  %v2697 = vsub.f32 %v74, %v2696
  %v2698 = vand.u32 %v2697, 4294901760
  %2699 = vmatpush1.xpose.msra.mxu0 %v2698
  %2700 = vmatprep.subr.mxu0 0.0
  %2701 = vmatpush1.xpose.msra.mxu0 0.0
  %2702 = vmatprep.subr.mxu0 0.0
  %2703 = vmatpush1.xpose.msra.mxu0 0.0
  %2704 = vmatprep.subr.mxu0 0.0
  %2705 = vmatpush1.xpose.msra.mxu0 0.0
  %2706 = vmatprep.subr.mxu0 0.0
  %2707 = vmatpush1.xpose.msra.mxu0 0.0
  %2708 = vmatprep.subr.mxu0 0.0
  %2709 = vmatpush1.xpose.msra.mxu0 0.0
  %2710 = vmatprep.subr.mxu0 0.0
  %2711 = vmatpush1.xpose.msra.mxu0 0.0
  %2712 = vmatprep.subr.mxu0 0.0
  %2713 = vmatpush1.xpose.msra.mxu0 0.0
  %2714 = vmatprep.subr.mxu0 0.0
  %2715 = vmatpush1.xpose.msra.mxu0 0.0
  %2716 = vmatprep.subr.mxu0 0.0
  %2717 = vmatpush1.xpose.msra.mxu0 0.0
  %2718 = vmatprep.subr.mxu0 0.0
  %2719 = vmatpush1.xpose.msra.mxu0 0.0
  %2720 = vmatprep.subr.mxu0 0.0
  %2721 = vmatpush1.xpose.msra.mxu0 0.0
  %2722 = vmatprep.subr.mxu0 0.0
  %2723 = vmatpush1.xpose.msra.mxu0 0.0
  %2724 = vmatprep.subr.mxu0 0.0
  %2725 = vmatpush1.xpose.msra.mxu0 0.0
  %2726 = vmatprep.subr.mxu0 0.0
  %2727 = vmatpush1.xpose.msra.mxu0 0.0
  %2728 = vmatprep.subr.mxu0 0.0
  %2729 = vmatpush1.xpose.msra.mxu0 0.0
  %2730 = vmatprep.subr.mxu0 0.0
  %2731 = vmatpush1.xpose.msra.mxu0 0.0
  %2732 = vmatprep.subr.mxu0 0.0
  %2733 = vmatpush1.xpose.msra.mxu0 0.0
  %2734 = vmatprep.subr.mxu0 0.0
  %2735 = vmatpush1.xpose.msra.mxu0 0.0
  %2736 = vmatprep.subr.mxu0 0.0
  %2737 = vmatpush1.xpose.msra.mxu0 0.0
  %2738 = vmatprep.subr.mxu0 0.0
  %2739 = vmatpush1.xpose.msra.mxu0 0.0
  %2740 = vmatprep.subr.mxu0 0.0
  %2741 = vmatpush1.xpose.msra.mxu0 0.0
  %2742 = vmatprep.subr.mxu0 0.0
  %2743 = vmatpush1.xpose.msra.mxu0 0.0
  %2744 = vmatprep.subr.mxu0 0.0
  %2745 = vmatpush1.xpose.msra.mxu0 0.0
  %2746 = vmatprep.subr.mxu0 0.0
  %2747 = vmatpush1.xpose.msra.mxu0 0.0
  %2748 = vmatprep.mubr.f32.mxu0 0.0
  %v2749 = vand.u32 %v2057, 4294901760
  %2750 = vmatmul.mubr.f32.gmra.mrb[0].mxu0 %v2749
  %v2751 = vpop.f32.mrb[0].mxu0
  %v2752 = vadd.f32 %v2601, %v2751
  %v2753 = vpop.f32.mrb[0].mxu0
  %2754 = vmatprep.mubr.f32.mxu0 0.0
  %v2755 = vand.u32 %v2060, 4294901760
  %2756 = vmatmul.mubr.f32.gmra.mrb[0].mxu0 %v2755
  %v2757 = vpop.f32.mrb[0].mxu0
  %v2758 = vadd.f32 %v2609, %v2757
  %v2759 = vpop.f32.mrb[0].mxu0
  %2760 = vmatprep.mubr.f32.mxu0 0.0
  %v2761 = vand.u32 %v2063, 4294901760
  %2762 = vmatmul.mubr.f32.gmra.mrb[0].mxu0 %v2761
  %v2763 = vpop.f32.mrb[0].mxu0
  %v2764 = vadd.f32 %v2617, %v2763
  %v2765 = vpop.f32.mrb[0].mxu0
  %2766 = vmatprep.mubr.f32.mxu0 0.0
  %v2767 = vand.u32 %v2066, 4294901760
  %2768 = vmatmul.mubr.f32.gmra.mrb[0].mxu0 %v2767
  %v2769 = vpop.f32.mrb[0].mxu0
  %v2770 = vadd.f32 %v2625, %v2769
  %v2771 = vpop.f32.mrb[0].mxu0
  %2772 = vmatprep.mubr.f32.mxu0 0.0
  %v2773 = vand.u32 %v2069, 4294901760
  %2774 = vmatmul.mubr.f32.gmra.mrb[0].mxu0 %v2773
  %v2775 = vpop.f32.mrb[0].mxu0
  %v2776 = vadd.f32 %v2633, %v2775
  %v2777 = vpop.f32.mrb[0].mxu0
  %2778 = vmatprep.mubr.f32.mxu0 0.0
  %v2779 = vand.u32 %v2072, 4294901760
  %2780 = vmatmul.mubr.f32.gmra.mrb[0].mxu0 %v2779
  %v2781 = vpop.f32.mrb[0].mxu0
  %v2782 = vadd.f32 %v2641, %v2781
  %v2783 = vpop.f32.mrb[0].mxu0
  %2784 = vmatprep.mubr.f32.mxu0 0.0
  %v2785 = vand.u32 %v2075, 4294901760
  %2786 = vmatmul.mubr.f32.gmra.mrb[0].mxu0 %v2785
  %v2787 = vpop.f32.mrb[0].mxu0
  %v2788 = vadd.f32 %v2649, %v2787
  %v2789 = vpop.f32.mrb[0].mxu0
  %2790 = vmatprep.mubr.f32.mxu0 0.0
  %v2791 = vand.u32 %v2078, 4294901760
  %2792 = vmatmul.mubr.f32.gmra.mrb[0].mxu0 %v2791
  %v2793 = vpop.f32.mrb[0].mxu0
  %v2794 = vadd.f32 %v2657, %v2793
  %v2795 = vpop.f32.mrb[0].mxu0
  %2796 = vdwg.mxu0
  %2797 = vmatprep.subr.mxu0 0.0
  %v2798 = vand.u32 %v53, 4294901760
  %2799 = vmatpush1.xpose.msra.mxu0 %v2798
  %2800 = vmatprep.subr.mxu0 0.0
  %v2801 = vand.u32 %v56, 4294901760
  %2802 = vmatpush1.xpose.msra.mxu0 %v2801
  %2803 = vmatprep.subr.mxu0 0.0
  %v2804 = vand.u32 %v59, 4294901760
  %2805 = vmatpush1.xpose.msra.mxu0 %v2804
  %2806 = vmatprep.subr.mxu0 0.0
  %v2807 = vand.u32 %v62, 4294901760
  %2808 = vmatpush1.xpose.msra.mxu0 %v2807
  %2809 = vmatprep.subr.mxu0 0.0
  %v2810 = vand.u32 %v65, 4294901760
  %2811 = vmatpush1.xpose.msra.mxu0 %v2810
  %2812 = vmatprep.subr.mxu0 0.0
  %v2813 = vand.u32 %v68, 4294901760
  %2814 = vmatpush1.xpose.msra.mxu0 %v2813
  %2815 = vmatprep.subr.mxu0 0.0
  %v2816 = vand.u32 %v71, 4294901760
  %2817 = vmatpush1.xpose.msra.mxu0 %v2816
  %2818 = vmatprep.subr.mxu0 0.0
  %v2819 = vand.u32 %v74, 4294901760
  %2820 = vmatpush1.xpose.msra.mxu0 %v2819
  %2821 = vmatprep.subr.mxu0 0.0
  %2822 = vmatpush1.xpose.msra.mxu0 0.0
  %2823 = vmatprep.subr.mxu0 0.0
  %2824 = vmatpush1.xpose.msra.mxu0 0.0
  %2825 = vmatprep.subr.mxu0 0.0
  %2826 = vmatpush1.xpose.msra.mxu0 0.0
  %2827 = vmatprep.subr.mxu0 0.0
  %2828 = vmatpush1.xpose.msra.mxu0 0.0
  %2829 = vmatprep.subr.mxu0 0.0
  %2830 = vmatpush1.xpose.msra.mxu0 0.0
  %2831 = vmatprep.subr.mxu0 0.0
  %2832 = vmatpush1.xpose.msra.mxu0 0.0
  %2833 = vmatprep.subr.mxu0 0.0
  %2834 = vmatpush1.xpose.msra.mxu0 0.0
  %2835 = vmatprep.subr.mxu0 0.0
  %2836 = vmatpush1.xpose.msra.mxu0 0.0
  %2837 = vmatprep.subr.mxu0 0.0
  %2838 = vmatpush1.xpose.msra.mxu0 0.0
  %2839 = vmatprep.subr.mxu0 0.0
  %2840 = vmatpush1.xpose.msra.mxu0 0.0
  %2841 = vmatprep.subr.mxu0 0.0
  %2842 = vmatpush1.xpose.msra.mxu0 0.0
  %2843 = vmatprep.subr.mxu0 0.0
  %2844 = vmatpush1.xpose.msra.mxu0 0.0
  %2845 = vmatprep.subr.mxu0 0.0
  %2846 = vmatpush1.xpose.msra.mxu0 0.0
  %2847 = vmatprep.subr.mxu0 0.0
  %2848 = vmatpush1.xpose.msra.mxu0 0.0
  %2849 = vmatprep.subr.mxu0 0.0
  %2850 = vmatpush1.xpose.msra.mxu0 0.0
  %2851 = vmatprep.subr.mxu0 0.0
  %2852 = vmatpush1.xpose.msra.mxu0 0.0
  %2853 = vmatprep.subr.mxu0 0.0
  %2854 = vmatpush1.xpose.msra.mxu0 0.0
  %2855 = vmatprep.subr.mxu0 0.0
  %2856 = vmatpush1.xpose.msra.mxu0 0.0
  %2857 = vmatprep.subr.mxu0 0.0
  %2858 = vmatpush1.xpose.msra.mxu0 0.0
  %2859 = vmatprep.subr.mxu0 0.0
  %2860 = vmatpush1.xpose.msra.mxu0 0.0
  %2861 = vmatprep.subr.mxu0 0.0
  %2862 = vmatpush1.xpose.msra.mxu0 0.0
  %2863 = vmatprep.subr.mxu0 0.0
  %2864 = vmatpush1.xpose.msra.mxu0 0.0
  %2865 = vmatprep.subr.mxu0 0.0
  %2866 = vmatpush1.xpose.msra.mxu0 0.0
  %2867 = vmatprep.subr.mxu0 0.0
  %2868 = vmatpush1.xpose.msra.mxu0 0.0
  %2869 = vmatprep.mubr.f32.mxu0 0.0
  %v2870 = vand.u32 %v2057, 4294901760
  %2871 = vmatmul.mubr.f32.gmra.mrb[0].mxu0 %v2870
  %v2872 = vpop.f32.mrb[0].mxu0
  %v2873 = vadd.f32 %v2752, %v2872
  %v2874 = vpop.f32.mrb[0].mxu0
  %2875 = vmatprep.mubr.f32.mxu0 0.0
  %v2876 = vand.u32 %v2060, 4294901760
  %2877 = vmatmul.mubr.f32.gmra.mrb[0].mxu0 %v2876
  %v2878 = vpop.f32.mrb[0].mxu0
  %v2879 = vadd.f32 %v2758, %v2878
  %v2880 = vpop.f32.mrb[0].mxu0
  %2881 = vmatprep.mubr.f32.mxu0 0.0
  %v2882 = vand.u32 %v2063, 4294901760
  %2883 = vmatmul.mubr.f32.gmra.mrb[0].mxu0 %v2882
  %v2884 = vpop.f32.mrb[0].mxu0
  %v2885 = vadd.f32 %v2764, %v2884
  %v2886 = vpop.f32.mrb[0].mxu0
  %2887 = vmatprep.mubr.f32.mxu0 0.0
  %v2888 = vand.u32 %v2066, 4294901760
  %2889 = vmatmul.mubr.f32.gmra.mrb[0].mxu0 %v2888
  %v2890 = vpop.f32.mrb[0].mxu0
  %v2891 = vadd.f32 %v2770, %v2890
  %v2892 = vpop.f32.mrb[0].mxu0
  %2893 = vmatprep.mubr.f32.mxu0 0.0
  %v2894 = vand.u32 %v2069, 4294901760
  %2895 = vmatmul.mubr.f32.gmra.mrb[0].mxu0 %v2894
  %v2896 = vpop.f32.mrb[0].mxu0
  %v2897 = vadd.f32 %v2776, %v2896
  %v2898 = vpop.f32.mrb[0].mxu0
  %2899 = vmatprep.mubr.f32.mxu0 0.0
  %v2900 = vand.u32 %v2072, 4294901760
  %2901 = vmatmul.mubr.f32.gmra.mrb[0].mxu0 %v2900
  %v2902 = vpop.f32.mrb[0].mxu0
  %v2903 = vadd.f32 %v2782, %v2902
  %v2904 = vpop.f32.mrb[0].mxu0
  %2905 = vmatprep.mubr.f32.mxu0 0.0
  %v2906 = vand.u32 %v2075, 4294901760
  %2907 = vmatmul.mubr.f32.gmra.mrb[0].mxu0 %v2906
  %v2908 = vpop.f32.mrb[0].mxu0
  %v2909 = vadd.f32 %v2788, %v2908
  %v2910 = vpop.f32.mrb[0].mxu0
  %2911 = vmatprep.mubr.f32.mxu0 0.0
  %v2912 = vand.u32 %v2078, 4294901760
  %2913 = vmatmul.mubr.f32.gmra.mrb[0].mxu0 %v2912
  %v2914 = vpop.f32.mrb[0].mxu0
  %v2915 = vadd.f32 %v2794, %v2914
  %v2916 = vpop.f32.mrb[0].mxu0
  %2917 = vdwg.mxu0
  %2918 = vst.msk [vmem:[%s2] sm:$0xff] %vm51, %v2873
  %2919 = vst.msk [vmem:[%s2 + $0x20] sm:$0xff] %vm51, %v2879
  %2920 = vst.msk [vmem:[%s2 + $0x40] sm:$0xff] %vm51, %v2885
  %2921 = vst.msk [vmem:[%s2 + $0x60] sm:$0xff] %vm51, %v2891
  %2922 = vst.msk [vmem:[%s2 + $0x80] sm:$0xff] %vm51, %v2897
  %2923 = vst.msk [vmem:[%s2 + $0xa0] sm:$0xff] %vm51, %v2903
  %2924 = vst.msk [vmem:[%s2 + $0xc0] sm:$0xff] %vm51, %v2909
  %2925 = vst.msk [vmem:[%s2 + $0xe0] sm:$0xff] %vm51, %v2915
  %2926 = vrot.lane.b32.xlu0 %v1013, 64
  %v2927 = vpop.permute.xlu0 %2926
  %2928 = vrot.lane.b32.xlu0 %v1020, 64
  %v2929 = vpop.permute.xlu0 %2928
  %2930 = vrot.lane.b32.xlu0 %v1027, 64
  %v2931 = vpop.permute.xlu0 %2930
  %2932 = vrot.lane.b32.xlu0 %v1034, 64
  %v2933 = vpop.permute.xlu0 %2932
  %2934 = vrot.lane.b32.xlu0 %v1041, 64
  %v2935 = vpop.permute.xlu0 %2934
  %2936 = vrot.lane.b32.xlu0 %v1048, 64
  %v2937 = vpop.permute.xlu0 %2936
  %2938 = vrot.lane.b32.xlu0 %v1055, 64
  %v2939 = vpop.permute.xlu0 %2938
  %2940 = vrot.lane.b32.xlu0 %v1062, 64
  %v2941 = vpop.permute.xlu0 %2940
  %v2942 = vsel %vm51, %v2927, 0
  %v2944 = vsel %vm51, %v2929, 0
  %v2946 = vsel %vm51, %v2931, 0
  %v2948 = vsel %vm51, %v2933, 0
  %v2950 = vsel %vm51, %v2935, 0
  %v2952 = vsel %vm51, %v2937, 0
  %v2954 = vsel %vm51, %v2939, 0
  %v2956 = vsel %vm51, %v2941, 0
  %2958 = vmatprep.subr.mxu0 0.0
  %v2959 = vand.u32 %v53, 4294901760
  %2960 = vmatpush1.xpose.msra.mxu0 %v2959
  %2961 = vmatprep.subr.mxu0 0.0
  %v2962 = vand.u32 %v56, 4294901760
  %2963 = vmatpush1.xpose.msra.mxu0 %v2962
  %2964 = vmatprep.subr.mxu0 0.0
  %v2965 = vand.u32 %v59, 4294901760
  %2966 = vmatpush1.xpose.msra.mxu0 %v2965
  %2967 = vmatprep.subr.mxu0 0.0
  %v2968 = vand.u32 %v62, 4294901760
  %2969 = vmatpush1.xpose.msra.mxu0 %v2968
  %2970 = vmatprep.subr.mxu0 0.0
  %v2971 = vand.u32 %v65, 4294901760
  %2972 = vmatpush1.xpose.msra.mxu0 %v2971
  %2973 = vmatprep.subr.mxu0 0.0
  %v2974 = vand.u32 %v68, 4294901760
  %2975 = vmatpush1.xpose.msra.mxu0 %v2974
  %2976 = vmatprep.subr.mxu0 0.0
  %v2977 = vand.u32 %v71, 4294901760
  %2978 = vmatpush1.xpose.msra.mxu0 %v2977
  %2979 = vmatprep.subr.mxu0 0.0
  %v2980 = vand.u32 %v74, 4294901760
  %2981 = vmatpush1.xpose.msra.mxu0 %v2980
  %2982 = vmatprep.subr.mxu0 0.0
  %2983 = vmatpush1.xpose.msra.mxu0 0.0
  %2984 = vmatprep.subr.mxu0 0.0
  %2985 = vmatpush1.xpose.msra.mxu0 0.0
  %2986 = vmatprep.subr.mxu0 0.0
  %2987 = vmatpush1.xpose.msra.mxu0 0.0
  %2988 = vmatprep.subr.mxu0 0.0
  %2989 = vmatpush1.xpose.msra.mxu0 0.0
  %2990 = vmatprep.subr.mxu0 0.0
  %2991 = vmatpush1.xpose.msra.mxu0 0.0
  %2992 = vmatprep.subr.mxu0 0.0
  %2993 = vmatpush1.xpose.msra.mxu0 0.0
  %2994 = vmatprep.subr.mxu0 0.0
  %2995 = vmatpush1.xpose.msra.mxu0 0.0
  %2996 = vmatprep.subr.mxu0 0.0
  %2997 = vmatpush1.xpose.msra.mxu0 0.0
  %2998 = vmatprep.subr.mxu0 0.0
  %2999 = vmatpush1.xpose.msra.mxu0 0.0
  %3000 = vmatprep.subr.mxu0 0.0
  %3001 = vmatpush1.xpose.msra.mxu0 0.0
  %3002 = vmatprep.subr.mxu0 0.0
  %3003 = vmatpush1.xpose.msra.mxu0 0.0
  %3004 = vmatprep.subr.mxu0 0.0
  %3005 = vmatpush1.xpose.msra.mxu0 0.0
  %3006 = vmatprep.subr.mxu0 0.0
  %3007 = vmatpush1.xpose.msra.mxu0 0.0
  %3008 = vmatprep.subr.mxu0 0.0
  %3009 = vmatpush1.xpose.msra.mxu0 0.0
  %3010 = vmatprep.subr.mxu0 0.0
  %3011 = vmatpush1.xpose.msra.mxu0 0.0
  %3012 = vmatprep.subr.mxu0 0.0
  %3013 = vmatpush1.xpose.msra.mxu0 0.0
  %3014 = vmatprep.subr.mxu0 0.0
  %3015 = vmatpush1.xpose.msra.mxu0 0.0
  %3016 = vmatprep.subr.mxu0 0.0
  %3017 = vmatpush1.xpose.msra.mxu0 0.0
  %3018 = vmatprep.subr.mxu0 0.0
  %3019 = vmatpush1.xpose.msra.mxu0 0.0
  %3020 = vmatprep.subr.mxu0 0.0
  %3021 = vmatpush1.xpose.msra.mxu0 0.0
  %3022 = vmatprep.subr.mxu0 0.0
  %3023 = vmatpush1.xpose.msra.mxu0 0.0
  %3024 = vmatprep.subr.mxu0 0.0
  %3025 = vmatpush1.xpose.msra.mxu0 0.0
  %3026 = vmatprep.subr.mxu0 0.0
  %3027 = vmatpush1.xpose.msra.mxu0 0.0
  %3028 = vmatprep.subr.mxu0 0.0
  %3029 = vmatpush1.xpose.msra.mxu0 0.0
  %3030 = vmatprep.mubr.f32.mxu0 0.0
  %v3031 = vand.u32 %v2942, 4294901760
  %v3032 = vsub.f32 %v2942, %v3031
  %v3033 = vand.u32 %v3032, 4294901760
  %v3034 = vsub.f32 %v3032, %v3033
  %v3035 = vand.u32 %v3034, 4294901760
  %3036 = vmatmul.mubr.f32.gmra.mrb[0].mxu0 %v3035
  %v3037 = vpop.f32.mrb[0].mxu0
  %v3038 = vadd.f32 0.0, %v3037
  %v3039 = vpop.f32.mrb[0].mxu0
  %3040 = vmatprep.mubr.f32.mxu0 0.0
  %v3041 = vand.u32 %v2944, 4294901760
  %v3042 = vsub.f32 %v2944, %v3041
  %v3043 = vand.u32 %v3042, 4294901760
  %v3044 = vsub.f32 %v3042, %v3043
  %v3045 = vand.u32 %v3044, 4294901760
  %3046 = vmatmul.mubr.f32.gmra.mrb[0].mxu0 %v3045
  %v3047 = vpop.f32.mrb[0].mxu0
  %v3048 = vadd.f32 0.0, %v3047
  %v3049 = vpop.f32.mrb[0].mxu0
  %3050 = vmatprep.mubr.f32.mxu0 0.0
  %v3051 = vand.u32 %v2946, 4294901760
  %v3052 = vsub.f32 %v2946, %v3051
  %v3053 = vand.u32 %v3052, 4294901760
  %v3054 = vsub.f32 %v3052, %v3053
  %v3055 = vand.u32 %v3054, 4294901760
  %3056 = vmatmul.mubr.f32.gmra.mrb[0].mxu0 %v3055
  %v3057 = vpop.f32.mrb[0].mxu0
  %v3058 = vadd.f32 0.0, %v3057
  %v3059 = vpop.f32.mrb[0].mxu0
  %3060 = vmatprep.mubr.f32.mxu0 0.0
  %v3061 = vand.u32 %v2948, 4294901760
  %v3062 = vsub.f32 %v2948, %v3061
  %v3063 = vand.u32 %v3062, 4294901760
  %v3064 = vsub.f32 %v3062, %v3063
  %v3065 = vand.u32 %v3064, 4294901760
  %3066 = vmatmul.mubr.f32.gmra.mrb[0].mxu0 %v3065
  %v3067 = vpop.f32.mrb[0].mxu0
  %v3068 = vadd.f32 0.0, %v3067
  %v3069 = vpop.f32.mrb[0].mxu0
  %3070 = vmatprep.mubr.f32.mxu0 0.0
  %v3071 = vand.u32 %v2950, 4294901760
  %v3072 = vsub.f32 %v2950, %v3071
  %v3073 = vand.u32 %v3072, 4294901760
  %v3074 = vsub.f32 %v3072, %v3073
  %v3075 = vand.u32 %v3074, 4294901760
  %3076 = vmatmul.mubr.f32.gmra.mrb[0].mxu0 %v3075
  %v3077 = vpop.f32.mrb[0].mxu0
  %v3078 = vadd.f32 0.0, %v3077
  %v3079 = vpop.f32.mrb[0].mxu0
  %3080 = vmatprep.mubr.f32.mxu0 0.0
  %v3081 = vand.u32 %v2952, 4294901760
  %v3082 = vsub.f32 %v2952, %v3081
  %v3083 = vand.u32 %v3082, 4294901760
  %v3084 = vsub.f32 %v3082, %v3083
  %v3085 = vand.u32 %v3084, 4294901760
  %3086 = vmatmul.mubr.f32.gmra.mrb[0].mxu0 %v3085
  %v3087 = vpop.f32.mrb[0].mxu0
  %v3088 = vadd.f32 0.0, %v3087
  %v3089 = vpop.f32.mrb[0].mxu0
  %3090 = vmatprep.mubr.f32.mxu0 0.0
  %v3091 = vand.u32 %v2954, 4294901760
  %v3092 = vsub.f32 %v2954, %v3091
  %v3093 = vand.u32 %v3092, 4294901760
  %v3094 = vsub.f32 %v3092, %v3093
  %v3095 = vand.u32 %v3094, 4294901760
  %3096 = vmatmul.mubr.f32.gmra.mrb[0].mxu0 %v3095
  %v3097 = vpop.f32.mrb[0].mxu0
  %v3098 = vadd.f32 0.0, %v3097
  %v3099 = vpop.f32.mrb[0].mxu0
  %3100 = vmatprep.mubr.f32.mxu0 0.0
  %v3101 = vand.u32 %v2956, 4294901760
  %v3102 = vsub.f32 %v2956, %v3101
  %v3103 = vand.u32 %v3102, 4294901760
  %v3104 = vsub.f32 %v3102, %v3103
  %v3105 = vand.u32 %v3104, 4294901760
  %3106 = vmatmul.mubr.f32.gmra.mrb[0].mxu0 %v3105
  %v3107 = vpop.f32.mrb[0].mxu0
  %v3108 = vadd.f32 0.0, %v3107
  %v3109 = vpop.f32.mrb[0].mxu0
  %3110 = vdwg.mxu0
  %3111 = vmatprep.subr.mxu0 0.0
  %v3112 = vand.u32 %v53, 4294901760
  %v3113 = vsub.f32 %v53, %v3112
  %v3114 = vand.u32 %v3113, 4294901760
  %v3115 = vsub.f32 %v3113, %v3114
  %v3116 = vand.u32 %v3115, 4294901760
  %3117 = vmatpush1.xpose.msra.mxu0 %v3116
  %3118 = vmatprep.subr.mxu0 0.0
  %v3119 = vand.u32 %v56, 4294901760
  %v3120 = vsub.f32 %v56, %v3119
  %v3121 = vand.u32 %v3120, 4294901760
  %v3122 = vsub.f32 %v3120, %v3121
  %v3123 = vand.u32 %v3122, 4294901760
  %3124 = vmatpush1.xpose.msra.mxu0 %v3123
  %3125 = vmatprep.subr.mxu0 0.0
  %v3126 = vand.u32 %v59, 4294901760
  %v3127 = vsub.f32 %v59, %v3126
  %v3128 = vand.u32 %v3127, 4294901760
  %v3129 = vsub.f32 %v3127, %v3128
  %v3130 = vand.u32 %v3129, 4294901760
  %3131 = vmatpush1.xpose.msra.mxu0 %v3130
  %3132 = vmatprep.subr.mxu0 0.0
  %v3133 = vand.u32 %v62, 4294901760
  %v3134 = vsub.f32 %v62, %v3133
  %v3135 = vand.u32 %v3134, 4294901760
  %v3136 = vsub.f32 %v3134, %v3135
  %v3137 = vand.u32 %v3136, 4294901760
  %3138 = vmatpush1.xpose.msra.mxu0 %v3137
  %3139 = vmatprep.subr.mxu0 0.0
  %v3140 = vand.u32 %v65, 4294901760
  %v3141 = vsub.f32 %v65, %v3140
  %v3142 = vand.u32 %v3141, 4294901760
  %v3143 = vsub.f32 %v3141, %v3142
  %v3144 = vand.u32 %v3143, 4294901760
  %3145 = vmatpush1.xpose.msra.mxu0 %v3144
  %3146 = vmatprep.subr.mxu0 0.0
  %v3147 = vand.u32 %v68, 4294901760
  %v3148 = vsub.f32 %v68, %v3147
  %v3149 = vand.u32 %v3148, 4294901760
  %v3150 = vsub.f32 %v3148, %v3149
  %v3151 = vand.u32 %v3150, 4294901760
  %3152 = vmatpush1.xpose.msra.mxu0 %v3151
  %3153 = vmatprep.subr.mxu0 0.0
  %v3154 = vand.u32 %v71, 4294901760
  %v3155 = vsub.f32 %v71, %v3154
  %v3156 = vand.u32 %v3155, 4294901760
  %v3157 = vsub.f32 %v3155, %v3156
  %v3158 = vand.u32 %v3157, 4294901760
  %3159 = vmatpush1.xpose.msra.mxu0 %v3158
  %3160 = vmatprep.subr.mxu0 0.0
  %v3161 = vand.u32 %v74, 4294901760
  %v3162 = vsub.f32 %v74, %v3161
  %v3163 = vand.u32 %v3162, 4294901760
  %v3164 = vsub.f32 %v3162, %v3163
  %v3165 = vand.u32 %v3164, 4294901760
  %3166 = vmatpush1.xpose.msra.mxu0 %v3165
  %3167 = vmatprep.subr.mxu0 0.0
  %3168 = vmatpush1.xpose.msra.mxu0 0.0
  %3169 = vmatprep.subr.mxu0 0.0
  %3170 = vmatpush1.xpose.msra.mxu0 0.0
  %3171 = vmatprep.subr.mxu0 0.0
  %3172 = vmatpush1.xpose.msra.mxu0 0.0
  %3173 = vmatprep.subr.mxu0 0.0
  %3174 = vmatpush1.xpose.msra.mxu0 0.0
  %3175 = vmatprep.subr.mxu0 0.0
  %3176 = vmatpush1.xpose.msra.mxu0 0.0
  %3177 = vmatprep.subr.mxu0 0.0
  %3178 = vmatpush1.xpose.msra.mxu0 0.0
  %3179 = vmatprep.subr.mxu0 0.0
  %3180 = vmatpush1.xpose.msra.mxu0 0.0
  %3181 = vmatprep.subr.mxu0 0.0
  %3182 = vmatpush1.xpose.msra.mxu0 0.0
  %3183 = vmatprep.subr.mxu0 0.0
  %3184 = vmatpush1.xpose.msra.mxu0 0.0
  %3185 = vmatprep.subr.mxu0 0.0
  %3186 = vmatpush1.xpose.msra.mxu0 0.0
  %3187 = vmatprep.subr.mxu0 0.0
  %3188 = vmatpush1.xpose.msra.mxu0 0.0
  %3189 = vmatprep.subr.mxu0 0.0
  %3190 = vmatpush1.xpose.msra.mxu0 0.0
  %3191 = vmatprep.subr.mxu0 0.0
  %3192 = vmatpush1.xpose.msra.mxu0 0.0
  %3193 = vmatprep.subr.mxu0 0.0
  %3194 = vmatpush1.xpose.msra.mxu0 0.0
  %3195 = vmatprep.subr.mxu0 0.0
  %3196 = vmatpush1.xpose.msra.mxu0 0.0
  %3197 = vmatprep.subr.mxu0 0.0
  %3198 = vmatpush1.xpose.msra.mxu0 0.0
  %3199 = vmatprep.subr.mxu0 0.0
  %3200 = vmatpush1.xpose.msra.mxu0 0.0
  %3201 = vmatprep.subr.mxu0 0.0
  %3202 = vmatpush1.xpose.msra.mxu0 0.0
  %3203 = vmatprep.subr.mxu0 0.0
  %3204 = vmatpush1.xpose.msra.mxu0 0.0
  %3205 = vmatprep.subr.mxu0 0.0
  %3206 = vmatpush1.xpose.msra.mxu0 0.0
  %3207 = vmatprep.subr.mxu0 0.0
  %3208 = vmatpush1.xpose.msra.mxu0 0.0
  %3209 = vmatprep.subr.mxu0 0.0
  %3210 = vmatpush1.xpose.msra.mxu0 0.0
  %3211 = vmatprep.subr.mxu0 0.0
  %3212 = vmatpush1.xpose.msra.mxu0 0.0
  %3213 = vmatprep.subr.mxu0 0.0
  %3214 = vmatpush1.xpose.msra.mxu0 0.0
  %3215 = vmatprep.mubr.f32.mxu0 0.0
  %v3216 = vand.u32 %v2942, 4294901760
  %3217 = vmatmul.mubr.f32.gmra.mrb[0].mxu0 %v3216
  %v3218 = vpop.f32.mrb[0].mxu0
  %v3219 = vadd.f32 %v3038, %v3218
  %v3220 = vpop.f32.mrb[0].mxu0
  %3221 = vmatprep.mubr.f32.mxu0 0.0
  %v3222 = vand.u32 %v2944, 4294901760
  %3223 = vmatmul.mubr.f32.gmra.mrb[0].mxu0 %v3222
  %v3224 = vpop.f32.mrb[0].mxu0
  %v3225 = vadd.f32 %v3048, %v3224
  %v3226 = vpop.f32.mrb[0].mxu0
  %3227 = vmatprep.mubr.f32.mxu0 0.0
  %v3228 = vand.u32 %v2946, 4294901760
  %3229 = vmatmul.mubr.f32.gmra.mrb[0].mxu0 %v3228
  %v3230 = vpop.f32.mrb[0].mxu0
  %v3231 = vadd.f32 %v3058, %v3230
  %v3232 = vpop.f32.mrb[0].mxu0
  %3233 = vmatprep.mubr.f32.mxu0 0.0
  %v3234 = vand.u32 %v2948, 4294901760
  %3235 = vmatmul.mubr.f32.gmra.mrb[0].mxu0 %v3234
  %v3236 = vpop.f32.mrb[0].mxu0
  %v3237 = vadd.f32 %v3068, %v3236
  %v3238 = vpop.f32.mrb[0].mxu0
  %3239 = vmatprep.mubr.f32.mxu0 0.0
  %v3240 = vand.u32 %v2950, 4294901760
  %3241 = vmatmul.mubr.f32.gmra.mrb[0].mxu0 %v3240
  %v3242 = vpop.f32.mrb[0].mxu0
  %v3243 = vadd.f32 %v3078, %v3242
  %v3244 = vpop.f32.mrb[0].mxu0
  %3245 = vmatprep.mubr.f32.mxu0 0.0
  %v3246 = vand.u32 %v2952, 4294901760
  %3247 = vmatmul.mubr.f32.gmra.mrb[0].mxu0 %v3246
  %v3248 = vpop.f32.mrb[0].mxu0
  %v3249 = vadd.f32 %v3088, %v3248
  %v3250 = vpop.f32.mrb[0].mxu0
  %3251 = vmatprep.mubr.f32.mxu0 0.0
  %v3252 = vand.u32 %v2954, 4294901760
  %3253 = vmatmul.mubr.f32.gmra.mrb[0].mxu0 %v3252
  %v3254 = vpop.f32.mrb[0].mxu0
  %v3255 = vadd.f32 %v3098, %v3254
  %v3256 = vpop.f32.mrb[0].mxu0
  %3257 = vmatprep.mubr.f32.mxu0 0.0
  %v3258 = vand.u32 %v2956, 4294901760
  %3259 = vmatmul.mubr.f32.gmra.mrb[0].mxu0 %v3258
  %v3260 = vpop.f32.mrb[0].mxu0
  %v3261 = vadd.f32 %v3108, %v3260
  %v3262 = vpop.f32.mrb[0].mxu0
  %3263 = vdwg.mxu0
  %3264 = vmatprep.subr.mxu0 0.0
  %v3265 = vand.u32 %v53, 4294901760
  %v3266 = vsub.f32 %v53, %v3265
  %3267 = vmatpush1.xpose.msra.mxu0 %v3266
  %3268 = vmatprep.subr.mxu0 0.0
  %v3269 = vand.u32 %v56, 4294901760
  %v3270 = vsub.f32 %v56, %v3269
  %3271 = vmatpush1.xpose.msra.mxu0 %v3270
  %3272 = vmatprep.subr.mxu0 0.0
  %v3273 = vand.u32 %v59, 4294901760
  %v3274 = vsub.f32 %v59, %v3273
  %3275 = vmatpush1.xpose.msra.mxu0 %v3274
  %3276 = vmatprep.subr.mxu0 0.0
  %v3277 = vand.u32 %v62, 4294901760
  %v3278 = vsub.f32 %v62, %v3277
  %3279 = vmatpush1.xpose.msra.mxu0 %v3278
  %3280 = vmatprep.subr.mxu0 0.0
  %v3281 = vand.u32 %v65, 4294901760
  %v3282 = vsub.f32 %v65, %v3281
  %3283 = vmatpush1.xpose.msra.mxu0 %v3282
  %3284 = vmatprep.subr.mxu0 0.0
  %v3285 = vand.u32 %v68, 4294901760
  %v3286 = vsub.f32 %v68, %v3285
  %3287 = vmatpush1.xpose.msra.mxu0 %v3286
  %3288 = vmatprep.subr.mxu0 0.0
  %v3289 = vand.u32 %v71, 4294901760
  %v3290 = vsub.f32 %v71, %v3289
  %3291 = vmatpush1.xpose.msra.mxu0 %v3290
  %3292 = vmatprep.subr.mxu0 0.0
  %v3293 = vand.u32 %v74, 4294901760
  %v3294 = vsub.f32 %v74, %v3293
  %3295 = vmatpush1.xpose.msra.mxu0 %v3294
  %3296 = vmatprep.subr.mxu0 0.0
  %3297 = vmatpush1.xpose.msra.mxu0 0.0
  %3298 = vmatprep.subr.mxu0 0.0
  %3299 = vmatpush1.xpose.msra.mxu0 0.0
  %3300 = vmatprep.subr.mxu0 0.0
  %3301 = vmatpush1.xpose.msra.mxu0 0.0
  %3302 = vmatprep.subr.mxu0 0.0
  %3303 = vmatpush1.xpose.msra.mxu0 0.0
  %3304 = vmatprep.subr.mxu0 0.0
  %3305 = vmatpush1.xpose.msra.mxu0 0.0
  %3306 = vmatprep.subr.mxu0 0.0
  %3307 = vmatpush1.xpose.msra.mxu0 0.0
  %3308 = vmatprep.subr.mxu0 0.0
  %3309 = vmatpush1.xpose.msra.mxu0 0.0
  %3310 = vmatprep.subr.mxu0 0.0
  %3311 = vmatpush1.xpose.msra.mxu0 0.0
  %3312 = vmatprep.subr.mxu0 0.0
  %3313 = vmatpush1.xpose.msra.mxu0 0.0
  %3314 = vmatprep.subr.mxu0 0.0
  %3315 = vmatpush1.xpose.msra.mxu0 0.0
  %3316 = vmatprep.subr.mxu0 0.0
  %3317 = vmatpush1.xpose.msra.mxu0 0.0
  %3318 = vmatprep.subr.mxu0 0.0
  %3319 = vmatpush1.xpose.msra.mxu0 0.0
  %3320 = vmatprep.subr.mxu0 0.0
  %3321 = vmatpush1.xpose.msra.mxu0 0.0
  %3322 = vmatprep.subr.mxu0 0.0
  %3323 = vmatpush1.xpose.msra.mxu0 0.0
  %3324 = vmatprep.subr.mxu0 0.0
  %3325 = vmatpush1.xpose.msra.mxu0 0.0
  %3326 = vmatprep.subr.mxu0 0.0
  %3327 = vmatpush1.xpose.msra.mxu0 0.0
  %3328 = vmatprep.subr.mxu0 0.0
  %3329 = vmatpush1.xpose.msra.mxu0 0.0
  %3330 = vmatprep.subr.mxu0 0.0
  %3331 = vmatpush1.xpose.msra.mxu0 0.0
  %3332 = vmatprep.subr.mxu0 0.0
  %3333 = vmatpush1.xpose.msra.mxu0 0.0
  %3334 = vmatprep.subr.mxu0 0.0
  %3335 = vmatpush1.xpose.msra.mxu0 0.0
  %3336 = vmatprep.subr.mxu0 0.0
  %3337 = vmatpush1.xpose.msra.mxu0 0.0
  %3338 = vmatprep.subr.mxu0 0.0
  %3339 = vmatpush1.xpose.msra.mxu0 0.0
  %3340 = vmatprep.subr.mxu0 0.0
  %3341 = vmatpush1.xpose.msra.mxu0 0.0
  %3342 = vmatprep.subr.mxu0 0.0
  %3343 = vmatpush1.xpose.msra.mxu0 0.0
  %3344 = vmatprep.mubr.f32.mxu0 0.0
  %v3345 = vand.u32 %v2942, 4294901760
  %v3346 = vsub.f32 %v2942, %v3345
  %3347 = vmatmul.mubr.f32.gmra.mrb[0].mxu0 %v3346
  %v3348 = vpop.f32.mrb[0].mxu0
  %v3349 = vadd.f32 %v3219, %v3348
  %v3350 = vpop.f32.mrb[0].mxu0
  %3351 = vmatprep.mubr.f32.mxu0 0.0
  %v3352 = vand.u32 %v2944, 4294901760
  %v3353 = vsub.f32 %v2944, %v3352
  %3354 = vmatmul.mubr.f32.gmra.mrb[0].mxu0 %v3353
  %v3355 = vpop.f32.mrb[0].mxu0
  %v3356 = vadd.f32 %v3225, %v3355
  %v3357 = vpop.f32.mrb[0].mxu0
  %3358 = vmatprep.mubr.f32.mxu0 0.0
  %v3359 = vand.u32 %v2946, 4294901760
  %v3360 = vsub.f32 %v2946, %v3359
  %3361 = vmatmul.mubr.f32.gmra.mrb[0].mxu0 %v3360
  %v3362 = vpop.f32.mrb[0].mxu0
  %v3363 = vadd.f32 %v3231, %v3362
  %v3364 = vpop.f32.mrb[0].mxu0
  %3365 = vmatprep.mubr.f32.mxu0 0.0
  %v3366 = vand.u32 %v2948, 4294901760
  %v3367 = vsub.f32 %v2948, %v3366
  %3368 = vmatmul.mubr.f32.gmra.mrb[0].mxu0 %v3367
  %v3369 = vpop.f32.mrb[0].mxu0
  %v3370 = vadd.f32 %v3237, %v3369
  %v3371 = vpop.f32.mrb[0].mxu0
  %3372 = vmatprep.mubr.f32.mxu0 0.0
  %v3373 = vand.u32 %v2950, 4294901760
  %v3374 = vsub.f32 %v2950, %v3373
  %3375 = vmatmul.mubr.f32.gmra.mrb[0].mxu0 %v3374
  %v3376 = vpop.f32.mrb[0].mxu0
  %v3377 = vadd.f32 %v3243, %v3376
  %v3378 = vpop.f32.mrb[0].mxu0
  %3379 = vmatprep.mubr.f32.mxu0 0.0
  %v3380 = vand.u32 %v2952, 4294901760
  %v3381 = vsub.f32 %v2952, %v3380
  %3382 = vmatmul.mubr.f32.gmra.mrb[0].mxu0 %v3381
  %v3383 = vpop.f32.mrb[0].mxu0
  %v3384 = vadd.f32 %v3249, %v3383
  %v3385 = vpop.f32.mrb[0].mxu0
  %3386 = vmatprep.mubr.f32.mxu0 0.0
  %v3387 = vand.u32 %v2954, 4294901760
  %v3388 = vsub.f32 %v2954, %v3387
  %3389 = vmatmul.mubr.f32.gmra.mrb[0].mxu0 %v3388
  %v3390 = vpop.f32.mrb[0].mxu0
  %v3391 = vadd.f32 %v3255, %v3390
  %v3392 = vpop.f32.mrb[0].mxu0
  %3393 = vmatprep.mubr.f32.mxu0 0.0
  %v3394 = vand.u32 %v2956, 4294901760
  %v3395 = vsub.f32 %v2956, %v3394
  %3396 = vmatmul.mubr.f32.gmra.mrb[0].mxu0 %v3395
  %v3397 = vpop.f32.mrb[0].mxu0
  %v3398 = vadd.f32 %v3261, %v3397
  %v3399 = vpop.f32.mrb[0].mxu0
  %3400 = vdwg.mxu0
  %3401 = vmatprep.subr.mxu0 0.0
  %v3402 = vand.u32 %v53, 4294901760
  %3403 = vmatpush1.xpose.msra.mxu0 %v3402
  %3404 = vmatprep.subr.mxu0 0.0
  %v3405 = vand.u32 %v56, 4294901760
  %3406 = vmatpush1.xpose.msra.mxu0 %v3405
  %3407 = vmatprep.subr.mxu0 0.0
  %v3408 = vand.u32 %v59, 4294901760
  %3409 = vmatpush1.xpose.msra.mxu0 %v3408
  %3410 = vmatprep.subr.mxu0 0.0
  %v3411 = vand.u32 %v62, 4294901760
  %3412 = vmatpush1.xpose.msra.mxu0 %v3411
  %3413 = vmatprep.subr.mxu0 0.0
  %v3414 = vand.u32 %v65, 4294901760
  %3415 = vmatpush1.xpose.msra.mxu0 %v3414
  %3416 = vmatprep.subr.mxu0 0.0
  %v3417 = vand.u32 %v68, 4294901760
  %3418 = vmatpush1.xpose.msra.mxu0 %v3417
  %3419 = vmatprep.subr.mxu0 0.0
  %v3420 = vand.u32 %v71, 4294901760
  %3421 = vmatpush1.xpose.msra.mxu0 %v3420
  %3422 = vmatprep.subr.mxu0 0.0
  %v3423 = vand.u32 %v74, 4294901760
  %3424 = vmatpush1.xpose.msra.mxu0 %v3423
  %3425 = vmatprep.subr.mxu0 0.0
  %3426 = vmatpush1.xpose.msra.mxu0 0.0
  %3427 = vmatprep.subr.mxu0 0.0
  %3428 = vmatpush1.xpose.msra.mxu0 0.0
  %3429 = vmatprep.subr.mxu0 0.0
  %3430 = vmatpush1.xpose.msra.mxu0 0.0
  %3431 = vmatprep.subr.mxu0 0.0
  %3432 = vmatpush1.xpose.msra.mxu0 0.0
  %3433 = vmatprep.subr.mxu0 0.0
  %3434 = vmatpush1.xpose.msra.mxu0 0.0
  %3435 = vmatprep.subr.mxu0 0.0
  %3436 = vmatpush1.xpose.msra.mxu0 0.0
  %3437 = vmatprep.subr.mxu0 0.0
  %3438 = vmatpush1.xpose.msra.mxu0 0.0
  %3439 = vmatprep.subr.mxu0 0.0
  %3440 = vmatpush1.xpose.msra.mxu0 0.0
  %3441 = vmatprep.subr.mxu0 0.0
  %3442 = vmatpush1.xpose.msra.mxu0 0.0
  %3443 = vmatprep.subr.mxu0 0.0
  %3444 = vmatpush1.xpose.msra.mxu0 0.0
  %3445 = vmatprep.subr.mxu0 0.0
  %3446 = vmatpush1.xpose.msra.mxu0 0.0
  %3447 = vmatprep.subr.mxu0 0.0
  %3448 = vmatpush1.xpose.msra.mxu0 0.0
  %3449 = vmatprep.subr.mxu0 0.0
  %3450 = vmatpush1.xpose.msra.mxu0 0.0
  %3451 = vmatprep.subr.mxu0 0.0
  %3452 = vmatpush1.xpose.msra.mxu0 0.0
  %3453 = vmatprep.subr.mxu0 0.0
  %3454 = vmatpush1.xpose.msra.mxu0 0.0
  %3455 = vmatprep.subr.mxu0 0.0
  %3456 = vmatpush1.xpose.msra.mxu0 0.0
  %3457 = vmatprep.subr.mxu0 0.0
  %3458 = vmatpush1.xpose.msra.mxu0 0.0
  %3459 = vmatprep.subr.mxu0 0.0
  %3460 = vmatpush1.xpose.msra.mxu0 0.0
  %3461 = vmatprep.subr.mxu0 0.0
  %3462 = vmatpush1.xpose.msra.mxu0 0.0
  %3463 = vmatprep.subr.mxu0 0.0
  %3464 = vmatpush1.xpose.msra.mxu0 0.0
  %3465 = vmatprep.subr.mxu0 0.0
  %3466 = vmatpush1.xpose.msra.mxu0 0.0
  %3467 = vmatprep.subr.mxu0 0.0
  %3468 = vmatpush1.xpose.msra.mxu0 0.0
  %3469 = vmatprep.subr.mxu0 0.0
  %3470 = vmatpush1.xpose.msra.mxu0 0.0
  %3471 = vmatprep.subr.mxu0 0.0
  %3472 = vmatpush1.xpose.msra.mxu0 0.0
  %3473 = vmatprep.mubr.f32.mxu0 0.0
  %v3474 = vand.u32 %v2942, 4294901760
  %v3475 = vsub.f32 %v2942, %v3474
  %v3476 = vand.u32 %v3475, 4294901760
  %3477 = vmatmul.mubr.f32.gmra.mrb[0].mxu0 %v3476
  %v3478 = vpop.f32.mrb[0].mxu0
  %v3479 = vadd.f32 %v3349, %v3478
  %v3480 = vpop.f32.mrb[0].mxu0
  %3481 = vmatprep.mubr.f32.mxu0 0.0
  %v3482 = vand.u32 %v2944, 4294901760
  %v3483 = vsub.f32 %v2944, %v3482
  %v3484 = vand.u32 %v3483, 4294901760
  %3485 = vmatmul.mubr.f32.gmra.mrb[0].mxu0 %v3484
  %v3486 = vpop.f32.mrb[0].mxu0
  %v3487 = vadd.f32 %v3356, %v3486
  %v3488 = vpop.f32.mrb[0].mxu0
  %3489 = vmatprep.mubr.f32.mxu0 0.0
  %v3490 = vand.u32 %v2946, 4294901760
  %v3491 = vsub.f32 %v2946, %v3490
  %v3492 = vand.u32 %v3491, 4294901760
  %3493 = vmatmul.mubr.f32.gmra.mrb[0].mxu0 %v3492
  %v3494 = vpop.f32.mrb[0].mxu0
  %v3495 = vadd.f32 %v3363, %v3494
  %v3496 = vpop.f32.mrb[0].mxu0
  %3497 = vmatprep.mubr.f32.mxu0 0.0
  %v3498 = vand.u32 %v2948, 4294901760
  %v3499 = vsub.f32 %v2948, %v3498
  %v3500 = vand.u32 %v3499, 4294901760
  %3501 = vmatmul.mubr.f32.gmra.mrb[0].mxu0 %v3500
  %v3502 = vpop.f32.mrb[0].mxu0
  %v3503 = vadd.f32 %v3370, %v3502
  %v3504 = vpop.f32.mrb[0].mxu0
  %3505 = vmatprep.mubr.f32.mxu0 0.0
  %v3506 = vand.u32 %v2950, 4294901760
  %v3507 = vsub.f32 %v2950, %v3506
  %v3508 = vand.u32 %v3507, 4294901760
  %3509 = vmatmul.mubr.f32.gmra.mrb[0].mxu0 %v3508
  %v3510 = vpop.f32.mrb[0].mxu0
  %v3511 = vadd.f32 %v3377, %v3510
  %v3512 = vpop.f32.mrb[0].mxu0
  %3513 = vmatprep.mubr.f32.mxu0 0.0
  %v3514 = vand.u32 %v2952, 4294901760
  %v3515 = vsub.f32 %v2952, %v3514
  %v3516 = vand.u32 %v3515, 4294901760
  %3517 = vmatmul.mubr.f32.gmra.mrb[0].mxu0 %v3516
  %v3518 = vpop.f32.mrb[0].mxu0
  %v3519 = vadd.f32 %v3384, %v3518
  %v3520 = vpop.f32.mrb[0].mxu0
  %3521 = vmatprep.mubr.f32.mxu0 0.0
  %v3522 = vand.u32 %v2954, 4294901760
  %v3523 = vsub.f32 %v2954, %v3522
  %v3524 = vand.u32 %v3523, 4294901760
  %3525 = vmatmul.mubr.f32.gmra.mrb[0].mxu0 %v3524
  %v3526 = vpop.f32.mrb[0].mxu0
  %v3527 = vadd.f32 %v3391, %v3526
  %v3528 = vpop.f32.mrb[0].mxu0
  %3529 = vmatprep.mubr.f32.mxu0 0.0
  %v3530 = vand.u32 %v2956, 4294901760
  %v3531 = vsub.f32 %v2956, %v3530
  %v3532 = vand.u32 %v3531, 4294901760
  %3533 = vmatmul.mubr.f32.gmra.mrb[0].mxu0 %v3532
  %v3534 = vpop.f32.mrb[0].mxu0
  %v3535 = vadd.f32 %v3398, %v3534
  %v3536 = vpop.f32.mrb[0].mxu0
  %3537 = vdwg.mxu0
  %3538 = vmatprep.subr.mxu0 0.0
  %v3539 = vand.u32 %v53, 4294901760
  %v3540 = vsub.f32 %v53, %v3539
  %v3541 = vand.u32 %v3540, 4294901760
  %3542 = vmatpush1.xpose.msra.mxu0 %v3541
  %3543 = vmatprep.subr.mxu0 0.0
  %v3544 = vand.u32 %v56, 4294901760
  %v3545 = vsub.f32 %v56, %v3544
  %v3546 = vand.u32 %v3545, 4294901760
  %3547 = vmatpush1.xpose.msra.mxu0 %v3546
  %3548 = vmatprep.subr.mxu0 0.0
  %v3549 = vand.u32 %v59, 4294901760
  %v3550 = vsub.f32 %v59, %v3549
  %v3551 = vand.u32 %v3550, 4294901760
  %3552 = vmatpush1.xpose.msra.mxu0 %v3551
  %3553 = vmatprep.subr.mxu0 0.0
  %v3554 = vand.u32 %v62, 4294901760
  %v3555 = vsub.f32 %v62, %v3554
  %v3556 = vand.u32 %v3555, 4294901760
  %3557 = vmatpush1.xpose.msra.mxu0 %v3556
  %3558 = vmatprep.subr.mxu0 0.0
  %v3559 = vand.u32 %v65, 4294901760
  %v3560 = vsub.f32 %v65, %v3559
  %v3561 = vand.u32 %v3560, 4294901760
  %3562 = vmatpush1.xpose.msra.mxu0 %v3561
  %3563 = vmatprep.subr.mxu0 0.0
  %v3564 = vand.u32 %v68, 4294901760
  %v3565 = vsub.f32 %v68, %v3564
  %v3566 = vand.u32 %v3565, 4294901760
  %3567 = vmatpush1.xpose.msra.mxu0 %v3566
  %3568 = vmatprep.subr.mxu0 0.0
  %v3569 = vand.u32 %v71, 4294901760
  %v3570 = vsub.f32 %v71, %v3569
  %v3571 = vand.u32 %v3570, 4294901760
  %3572 = vmatpush1.xpose.msra.mxu0 %v3571
  %3573 = vmatprep.subr.mxu0 0.0
  %v3574 = vand.u32 %v74, 4294901760
  %v3575 = vsub.f32 %v74, %v3574
  %v3576 = vand.u32 %v3575, 4294901760
  %3577 = vmatpush1.xpose.msra.mxu0 %v3576
  %3578 = vmatprep.subr.mxu0 0.0
  %3579 = vmatpush1.xpose.msra.mxu0 0.0
  %3580 = vmatprep.subr.mxu0 0.0
  %3581 = vmatpush1.xpose.msra.mxu0 0.0
  %3582 = vmatprep.subr.mxu0 0.0
  %3583 = vmatpush1.xpose.msra.mxu0 0.0
  %3584 = vmatprep.subr.mxu0 0.0
  %3585 = vmatpush1.xpose.msra.mxu0 0.0
  %3586 = vmatprep.subr.mxu0 0.0
  %3587 = vmatpush1.xpose.msra.mxu0 0.0
  %3588 = vmatprep.subr.mxu0 0.0
  %3589 = vmatpush1.xpose.msra.mxu0 0.0
  %3590 = vmatprep.subr.mxu0 0.0
  %3591 = vmatpush1.xpose.msra.mxu0 0.0
  %3592 = vmatprep.subr.mxu0 0.0
  %3593 = vmatpush1.xpose.msra.mxu0 0.0
  %3594 = vmatprep.subr.mxu0 0.0
  %3595 = vmatpush1.xpose.msra.mxu0 0.0
  %3596 = vmatprep.subr.mxu0 0.0
  %3597 = vmatpush1.xpose.msra.mxu0 0.0
  %3598 = vmatprep.subr.mxu0 0.0
  %3599 = vmatpush1.xpose.msra.mxu0 0.0
  %3600 = vmatprep.subr.mxu0 0.0
  %3601 = vmatpush1.xpose.msra.mxu0 0.0
  %3602 = vmatprep.subr.mxu0 0.0
  %3603 = vmatpush1.xpose.msra.mxu0 0.0
  %3604 = vmatprep.subr.mxu0 0.0
  %3605 = vmatpush1.xpose.msra.mxu0 0.0
  %3606 = vmatprep.subr.mxu0 0.0
  %3607 = vmatpush1.xpose.msra.mxu0 0.0
  %3608 = vmatprep.subr.mxu0 0.0
  %3609 = vmatpush1.xpose.msra.mxu0 0.0
  %3610 = vmatprep.subr.mxu0 0.0
  %3611 = vmatpush1.xpose.msra.mxu0 0.0
  %3612 = vmatprep.subr.mxu0 0.0
  %3613 = vmatpush1.xpose.msra.mxu0 0.0
  %3614 = vmatprep.subr.mxu0 0.0
  %3615 = vmatpush1.xpose.msra.mxu0 0.0
  %3616 = vmatprep.subr.mxu0 0.0
  %3617 = vmatpush1.xpose.msra.mxu0 0.0
  %3618 = vmatprep.subr.mxu0 0.0
  %3619 = vmatpush1.xpose.msra.mxu0 0.0
  %3620 = vmatprep.subr.mxu0 0.0
  %3621 = vmatpush1.xpose.msra.mxu0 0.0
  %3622 = vmatprep.subr.mxu0 0.0
  %3623 = vmatpush1.xpose.msra.mxu0 0.0
  %3624 = vmatprep.subr.mxu0 0.0
  %3625 = vmatpush1.xpose.msra.mxu0 0.0
  %3626 = vmatprep.mubr.f32.mxu0 0.0
  %v3627 = vand.u32 %v2942, 4294901760
  %3628 = vmatmul.mubr.f32.gmra.mrb[0].mxu0 %v3627
  %v3629 = vpop.f32.mrb[0].mxu0
  %v3630 = vadd.f32 %v3479, %v3629
  %v3631 = vpop.f32.mrb[0].mxu0
  %3632 = vmatprep.mubr.f32.mxu0 0.0
  %v3633 = vand.u32 %v2944, 4294901760
  %3634 = vmatmul.mubr.f32.gmra.mrb[0].mxu0 %v3633
  %v3635 = vpop.f32.mrb[0].mxu0
  %v3636 = vadd.f32 %v3487, %v3635
  %v3637 = vpop.f32.mrb[0].mxu0
  %3638 = vmatprep.mubr.f32.mxu0 0.0
  %v3639 = vand.u32 %v2946, 4294901760
  %3640 = vmatmul.mubr.f32.gmra.mrb[0].mxu0 %v3639
  %v3641 = vpop.f32.mrb[0].mxu0
  %v3642 = vadd.f32 %v3495, %v3641
  %v3643 = vpop.f32.mrb[0].mxu0
  %3644 = vmatprep.mubr.f32.mxu0 0.0
  %v3645 = vand.u32 %v2948, 4294901760
  %3646 = vmatmul.mubr.f32.gmra.mrb[0].mxu0 %v3645
  %v3647 = vpop.f32.mrb[0].mxu0
  %v3648 = vadd.f32 %v3503, %v3647
  %v3649 = vpop.f32.mrb[0].mxu0
  %3650 = vmatprep.mubr.f32.mxu0 0.0
  %v3651 = vand.u32 %v2950, 4294901760
  %3652 = vmatmul.mubr.f32.gmra.mrb[0].mxu0 %v3651
  %v3653 = vpop.f32.mrb[0].mxu0
  %v3654 = vadd.f32 %v3511, %v3653
  %v3655 = vpop.f32.mrb[0].mxu0
  %3656 = vmatprep.mubr.f32.mxu0 0.0
  %v3657 = vand.u32 %v2952, 4294901760
  %3658 = vmatmul.mubr.f32.gmra.mrb[0].mxu0 %v3657
  %v3659 = vpop.f32.mrb[0].mxu0
  %v3660 = vadd.f32 %v3519, %v3659
  %v3661 = vpop.f32.mrb[0].mxu0
  %3662 = vmatprep.mubr.f32.mxu0 0.0
  %v3663 = vand.u32 %v2954, 4294901760
  %3664 = vmatmul.mubr.f32.gmra.mrb[0].mxu0 %v3663
  %v3665 = vpop.f32.mrb[0].mxu0
  %v3666 = vadd.f32 %v3527, %v3665
  %v3667 = vpop.f32.mrb[0].mxu0
  %3668 = vmatprep.mubr.f32.mxu0 0.0
  %v3669 = vand.u32 %v2956, 4294901760
  %3670 = vmatmul.mubr.f32.gmra.mrb[0].mxu0 %v3669
  %v3671 = vpop.f32.mrb[0].mxu0
  %v3672 = vadd.f32 %v3535, %v3671
  %v3673 = vpop.f32.mrb[0].mxu0
  %3674 = vdwg.mxu0
  %3675 = vmatprep.subr.mxu0 0.0
  %v3676 = vand.u32 %v53, 4294901760
  %3677 = vmatpush1.xpose.msra.mxu0 %v3676
  %3678 = vmatprep.subr.mxu0 0.0
  %v3679 = vand.u32 %v56, 4294901760
  %3680 = vmatpush1.xpose.msra.mxu0 %v3679
  %3681 = vmatprep.subr.mxu0 0.0
  %v3682 = vand.u32 %v59, 4294901760
  %3683 = vmatpush1.xpose.msra.mxu0 %v3682
  %3684 = vmatprep.subr.mxu0 0.0
  %v3685 = vand.u32 %v62, 4294901760
  %3686 = vmatpush1.xpose.msra.mxu0 %v3685
  %3687 = vmatprep.subr.mxu0 0.0
  %v3688 = vand.u32 %v65, 4294901760
  %3689 = vmatpush1.xpose.msra.mxu0 %v3688
  %3690 = vmatprep.subr.mxu0 0.0
  %v3691 = vand.u32 %v68, 4294901760
  %3692 = vmatpush1.xpose.msra.mxu0 %v3691
  %3693 = vmatprep.subr.mxu0 0.0
  %v3694 = vand.u32 %v71, 4294901760
  %3695 = vmatpush1.xpose.msra.mxu0 %v3694
  %3696 = vmatprep.subr.mxu0 0.0
  %v3697 = vand.u32 %v74, 4294901760
  %3698 = vmatpush1.xpose.msra.mxu0 %v3697
  %3699 = vmatprep.subr.mxu0 0.0
  %3700 = vmatpush1.xpose.msra.mxu0 0.0
  %3701 = vmatprep.subr.mxu0 0.0
  %3702 = vmatpush1.xpose.msra.mxu0 0.0
  %3703 = vmatprep.subr.mxu0 0.0
  %3704 = vmatpush1.xpose.msra.mxu0 0.0
  %3705 = vmatprep.subr.mxu0 0.0
  %3706 = vmatpush1.xpose.msra.mxu0 0.0
  %3707 = vmatprep.subr.mxu0 0.0
  %3708 = vmatpush1.xpose.msra.mxu0 0.0
  %3709 = vmatprep.subr.mxu0 0.0
  %3710 = vmatpush1.xpose.msra.mxu0 0.0
  %3711 = vmatprep.subr.mxu0 0.0
  %3712 = vmatpush1.xpose.msra.mxu0 0.0
  %3713 = vmatprep.subr.mxu0 0.0
  %3714 = vmatpush1.xpose.msra.mxu0 0.0
  %3715 = vmatprep.subr.mxu0 0.0
  %3716 = vmatpush1.xpose.msra.mxu0 0.0
  %3717 = vmatprep.subr.mxu0 0.0
  %3718 = vmatpush1.xpose.msra.mxu0 0.0
  %3719 = vmatprep.subr.mxu0 0.0
  %3720 = vmatpush1.xpose.msra.mxu0 0.0
  %3721 = vmatprep.subr.mxu0 0.0
  %3722 = vmatpush1.xpose.msra.mxu0 0.0
  %3723 = vmatprep.subr.mxu0 0.0
  %3724 = vmatpush1.xpose.msra.mxu0 0.0
  %3725 = vmatprep.subr.mxu0 0.0
  %3726 = vmatpush1.xpose.msra.mxu0 0.0
  %3727 = vmatprep.subr.mxu0 0.0
  %3728 = vmatpush1.xpose.msra.mxu0 0.0
  %3729 = vmatprep.subr.mxu0 0.0
  %3730 = vmatpush1.xpose.msra.mxu0 0.0
  %3731 = vmatprep.subr.mxu0 0.0
  %3732 = vmatpush1.xpose.msra.mxu0 0.0
  %3733 = vmatprep.subr.mxu0 0.0
  %3734 = vmatpush1.xpose.msra.mxu0 0.0
  %3735 = vmatprep.subr.mxu0 0.0
  %3736 = vmatpush1.xpose.msra.mxu0 0.0
  %3737 = vmatprep.subr.mxu0 0.0
  %3738 = vmatpush1.xpose.msra.mxu0 0.0
  %3739 = vmatprep.subr.mxu0 0.0
  %3740 = vmatpush1.xpose.msra.mxu0 0.0
  %3741 = vmatprep.subr.mxu0 0.0
  %3742 = vmatpush1.xpose.msra.mxu0 0.0
  %3743 = vmatprep.subr.mxu0 0.0
  %3744 = vmatpush1.xpose.msra.mxu0 0.0
  %3745 = vmatprep.subr.mxu0 0.0
  %3746 = vmatpush1.xpose.msra.mxu0 0.0
  %3747 = vmatprep.mubr.f32.mxu0 0.0
  %v3748 = vand.u32 %v2942, 4294901760
  %3749 = vmatmul.mubr.f32.gmra.mrb[0].mxu0 %v3748
  %v3750 = vpop.f32.mrb[0].mxu0
  %v3751 = vadd.f32 %v3630, %v3750
  %v3752 = vpop.f32.mrb[0].mxu0
  %3753 = vmatprep.mubr.f32.mxu0 0.0
  %v3754 = vand.u32 %v2944, 4294901760
  %3755 = vmatmul.mubr.f32.gmra.mrb[0].mxu0 %v3754
  %v3756 = vpop.f32.mrb[0].mxu0
  %v3757 = vadd.f32 %v3636, %v3756
  %v3758 = vpop.f32.mrb[0].mxu0
  %3759 = vmatprep.mubr.f32.mxu0 0.0
  %v3760 = vand.u32 %v2946, 4294901760
  %3761 = vmatmul.mubr.f32.gmra.mrb[0].mxu0 %v3760
  %v3762 = vpop.f32.mrb[0].mxu0
  %v3763 = vadd.f32 %v3642, %v3762
  %v3764 = vpop.f32.mrb[0].mxu0
  %3765 = vmatprep.mubr.f32.mxu0 0.0
  %v3766 = vand.u32 %v2948, 4294901760
  %3767 = vmatmul.mubr.f32.gmra.mrb[0].mxu0 %v3766
  %v3768 = vpop.f32.mrb[0].mxu0
  %v3769 = vadd.f32 %v3648, %v3768
  %v3770 = vpop.f32.mrb[0].mxu0
  %3771 = vmatprep.mubr.f32.mxu0 0.0
  %v3772 = vand.u32 %v2950, 4294901760
  %3773 = vmatmul.mubr.f32.gmra.mrb[0].mxu0 %v3772
  %v3774 = vpop.f32.mrb[0].mxu0
  %v3775 = vadd.f32 %v3654, %v3774
  %v3776 = vpop.f32.mrb[0].mxu0
  %3777 = vmatprep.mubr.f32.mxu0 0.0
  %v3778 = vand.u32 %v2952, 4294901760
  %3779 = vmatmul.mubr.f32.gmra.mrb[0].mxu0 %v3778
  %v3780 = vpop.f32.mrb[0].mxu0
  %v3781 = vadd.f32 %v3660, %v3780
  %v3782 = vpop.f32.mrb[0].mxu0
  %3783 = vmatprep.mubr.f32.mxu0 0.0
  %v3784 = vand.u32 %v2954, 4294901760
  %3785 = vmatmul.mubr.f32.gmra.mrb[0].mxu0 %v3784
  %v3786 = vpop.f32.mrb[0].mxu0
  %v3787 = vadd.f32 %v3666, %v3786
  %v3788 = vpop.f32.mrb[0].mxu0
  %3789 = vmatprep.mubr.f32.mxu0 0.0
  %v3790 = vand.u32 %v2956, 4294901760
  %3791 = vmatmul.mubr.f32.gmra.mrb[0].mxu0 %v3790
  %v3792 = vpop.f32.mrb[0].mxu0
  %v3793 = vadd.f32 %v3672, %v3792
  %v3794 = vpop.f32.mrb[0].mxu0
  %3795 = vdwg.mxu0
  %3804 = vrot.lane.b32.xlu0 %v3751, 64
  %v3805 = vpop.permute.xlu0 %3804
  %3806 = vrot.lane.b32.xlu0 %v3757, 64
  %v3807 = vpop.permute.xlu0 %3806
  %3808 = vrot.lane.b32.xlu0 %v3763, 64
  %v3809 = vpop.permute.xlu0 %3808
  %3810 = vrot.lane.b32.xlu0 %v3769, 64
  %v3811 = vpop.permute.xlu0 %3810
  %3812 = vrot.lane.b32.xlu0 %v3775, 64
  %v3813 = vpop.permute.xlu0 %3812
  %3814 = vrot.lane.b32.xlu0 %v3781, 64
  %v3815 = vpop.permute.xlu0 %3814
  %3816 = vrot.lane.b32.xlu0 %v3787, 64
  %v3817 = vpop.permute.xlu0 %3816
  %3818 = vrot.lane.b32.xlu0 %v3793, 64
  %v3819 = vpop.permute.xlu0 %3818
  %vm3828 = vcmask 1048064
  %3829 = vst.msk [vmem:[%s2] sm:$0xff] %vm3828, %v3805
  %3830 = vst.msk [vmem:[%s2 + $0x20] sm:$0xff] %vm3828, %v3807
  %3831 = vst.msk [vmem:[%s2 + $0x40] sm:$0xff] %vm3828, %v3809
  %3832 = vst.msk [vmem:[%s2 + $0x60] sm:$0xff] %vm3828, %v3811
  %3833 = vst.msk [vmem:[%s2 + $0x80] sm:$0xff] %vm3828, %v3813
  %3834 = vst.msk [vmem:[%s2 + $0xa0] sm:$0xff] %vm3828, %v3815
  %3835 = vst.msk [vmem:[%s2 + $0xc0] sm:$0xff] %vm3828, %v3817
  %3836 = vst.msk [vmem:[%s2 + $0xe0] sm:$0xff] %vm3828, %v3819
  %v3838 = vsel %vm51, %v1015, 0
  %v3841 = vsel %vm51, %v1022, 0
  %v3844 = vsel %vm51, %v1029, 0
  %v3847 = vsel %vm51, %v1036, 0
  %v3850 = vsel %vm51, %v1043, 0
  %v3853 = vsel %vm51, %v1050, 0
  %v3856 = vsel %vm51, %v1057, 0
  %v3859 = vsel %vm51, %v1064, 0
  %3861 = vmatprep.subr.mxu0 0.0
  %v3862 = vand.u32 %v53, 4294901760
  %3863 = vmatpush1.xpose.msra.mxu0 %v3862
  %3864 = vmatprep.subr.mxu0 0.0
  %v3865 = vand.u32 %v56, 4294901760
  %3866 = vmatpush1.xpose.msra.mxu0 %v3865
  %3867 = vmatprep.subr.mxu0 0.0
  %v3868 = vand.u32 %v59, 4294901760
  %3869 = vmatpush1.xpose.msra.mxu0 %v3868
  %3870 = vmatprep.subr.mxu0 0.0
  %v3871 = vand.u32 %v62, 4294901760
  %3872 = vmatpush1.xpose.msra.mxu0 %v3871
  %3873 = vmatprep.subr.mxu0 0.0
  %v3874 = vand.u32 %v65, 4294901760
  %3875 = vmatpush1.xpose.msra.mxu0 %v3874
  %3876 = vmatprep.subr.mxu0 0.0
  %v3877 = vand.u32 %v68, 4294901760
  %3878 = vmatpush1.xpose.msra.mxu0 %v3877
  %3879 = vmatprep.subr.mxu0 0.0
  %v3880 = vand.u32 %v71, 4294901760
  %3881 = vmatpush1.xpose.msra.mxu0 %v3880
  %3882 = vmatprep.subr.mxu0 0.0
  %v3883 = vand.u32 %v74, 4294901760
  %3884 = vmatpush1.xpose.msra.mxu0 %v3883
  %3885 = vmatprep.subr.mxu0 0.0
  %3886 = vmatpush1.xpose.msra.mxu0 0.0
  %3887 = vmatprep.subr.mxu0 0.0
  %3888 = vmatpush1.xpose.msra.mxu0 0.0
  %3889 = vmatprep.subr.mxu0 0.0
  %3890 = vmatpush1.xpose.msra.mxu0 0.0
  %3891 = vmatprep.subr.mxu0 0.0
  %3892 = vmatpush1.xpose.msra.mxu0 0.0
  %3893 = vmatprep.subr.mxu0 0.0
  %3894 = vmatpush1.xpose.msra.mxu0 0.0
  %3895 = vmatprep.subr.mxu0 0.0
  %3896 = vmatpush1.xpose.msra.mxu0 0.0
  %3897 = vmatprep.subr.mxu0 0.0
  %3898 = vmatpush1.xpose.msra.mxu0 0.0
  %3899 = vmatprep.subr.mxu0 0.0
  %3900 = vmatpush1.xpose.msra.mxu0 0.0
  %3901 = vmatprep.subr.mxu0 0.0
  %3902 = vmatpush1.xpose.msra.mxu0 0.0
  %3903 = vmatprep.subr.mxu0 0.0
  %3904 = vmatpush1.xpose.msra.mxu0 0.0
  %3905 = vmatprep.subr.mxu0 0.0
  %3906 = vmatpush1.xpose.msra.mxu0 0.0
  %3907 = vmatprep.subr.mxu0 0.0
  %3908 = vmatpush1.xpose.msra.mxu0 0.0
  %3909 = vmatprep.subr.mxu0 0.0
  %3910 = vmatpush1.xpose.msra.mxu0 0.0
  %3911 = vmatprep.subr.mxu0 0.0
  %3912 = vmatpush1.xpose.msra.mxu0 0.0
  %3913 = vmatprep.subr.mxu0 0.0
  %3914 = vmatpush1.xpose.msra.mxu0 0.0
  %3915 = vmatprep.subr.mxu0 0.0
  %3916 = vmatpush1.xpose.msra.mxu0 0.0
  %3917 = vmatprep.subr.mxu0 0.0
  %3918 = vmatpush1.xpose.msra.mxu0 0.0
  %3919 = vmatprep.subr.mxu0 0.0
  %3920 = vmatpush1.xpose.msra.mxu0 0.0
  %3921 = vmatprep.subr.mxu0 0.0
  %3922 = vmatpush1.xpose.msra.mxu0 0.0
  %3923 = vmatprep.subr.mxu0 0.0
  %3924 = vmatpush1.xpose.msra.mxu0 0.0
  %3925 = vmatprep.subr.mxu0 0.0
  %3926 = vmatpush1.xpose.msra.mxu0 0.0
  %3927 = vmatprep.subr.mxu0 0.0
  %3928 = vmatpush1.xpose.msra.mxu0 0.0
  %3929 = vmatprep.subr.mxu0 0.0
  %3930 = vmatpush1.xpose.msra.mxu0 0.0
  %3931 = vmatprep.subr.mxu0 0.0
  %3932 = vmatpush1.xpose.msra.mxu0 0.0
  %3933 = vmatprep.mubr.f32.mxu0 0.0
  %v3934 = vand.u32 %v3838, 4294901760
  %v3935 = vsub.f32 %v3838, %v3934
  %v3936 = vand.u32 %v3935, 4294901760
  %v3937 = vsub.f32 %v3935, %v3936
  %v3938 = vand.u32 %v3937, 4294901760
  %3939 = vmatmul.mubr.f32.gmra.mrb[0].mxu0 %v3938
  %v3940 = vpop.f32.mrb[0].mxu0
  %v3941 = vadd.f32 0.0, %v3940
  %v3942 = vpop.f32.mrb[0].mxu0
  %3943 = vmatprep.mubr.f32.mxu0 0.0
  %v3944 = vand.u32 %v3841, 4294901760
  %v3945 = vsub.f32 %v3841, %v3944
  %v3946 = vand.u32 %v3945, 4294901760
  %v3947 = vsub.f32 %v3945, %v3946
  %v3948 = vand.u32 %v3947, 4294901760
  %3949 = vmatmul.mubr.f32.gmra.mrb[0].mxu0 %v3948
  %v3950 = vpop.f32.mrb[0].mxu0
  %v3951 = vadd.f32 0.0, %v3950
  %v3952 = vpop.f32.mrb[0].mxu0
  %3953 = vmatprep.mubr.f32.mxu0 0.0
  %v3954 = vand.u32 %v3844, 4294901760
  %v3955 = vsub.f32 %v3844, %v3954
  %v3956 = vand.u32 %v3955, 4294901760
  %v3957 = vsub.f32 %v3955, %v3956
  %v3958 = vand.u32 %v3957, 4294901760
  %3959 = vmatmul.mubr.f32.gmra.mrb[0].mxu0 %v3958
  %v3960 = vpop.f32.mrb[0].mxu0
  %v3961 = vadd.f32 0.0, %v3960
  %v3962 = vpop.f32.mrb[0].mxu0
  %3963 = vmatprep.mubr.f32.mxu0 0.0
  %v3964 = vand.u32 %v3847, 4294901760
  %v3965 = vsub.f32 %v3847, %v3964
  %v3966 = vand.u32 %v3965, 4294901760
  %v3967 = vsub.f32 %v3965, %v3966
  %v3968 = vand.u32 %v3967, 4294901760
  %3969 = vmatmul.mubr.f32.gmra.mrb[0].mxu0 %v3968
  %v3970 = vpop.f32.mrb[0].mxu0
  %v3971 = vadd.f32 0.0, %v3970
  %v3972 = vpop.f32.mrb[0].mxu0
  %3973 = vmatprep.mubr.f32.mxu0 0.0
  %v3974 = vand.u32 %v3850, 4294901760
  %v3975 = vsub.f32 %v3850, %v3974
  %v3976 = vand.u32 %v3975, 4294901760
  %v3977 = vsub.f32 %v3975, %v3976
  %v3978 = vand.u32 %v3977, 4294901760
  %3979 = vmatmul.mubr.f32.gmra.mrb[0].mxu0 %v3978
  %v3980 = vpop.f32.mrb[0].mxu0
  %v3981 = vadd.f32 0.0, %v3980
  %v3982 = vpop.f32.mrb[0].mxu0
  %3983 = vmatprep.mubr.f32.mxu0 0.0
  %v3984 = vand.u32 %v3853, 4294901760
  %v3985 = vsub.f32 %v3853, %v3984
  %v3986 = vand.u32 %v3985, 4294901760
  %v3987 = vsub.f32 %v3985, %v3986
  %v3988 = vand.u32 %v3987, 4294901760
  %3989 = vmatmul.mubr.f32.gmra.mrb[0].mxu0 %v3988
  %v3990 = vpop.f32.mrb[0].mxu0
  %v3991 = vadd.f32 0.0, %v3990
  %v3992 = vpop.f32.mrb[0].mxu0
  %3993 = vmatprep.mubr.f32.mxu0 0.0
  %v3994 = vand.u32 %v3856, 4294901760
  %v3995 = vsub.f32 %v3856, %v3994
  %v3996 = vand.u32 %v3995, 4294901760
  %v3997 = vsub.f32 %v3995, %v3996
  %v3998 = vand.u32 %v3997, 4294901760
  %3999 = vmatmul.mubr.f32.gmra.mrb[0].mxu0 %v3998
  %v4000 = vpop.f32.mrb[0].mxu0
  %v4001 = vadd.f32 0.0, %v4000
  %v4002 = vpop.f32.mrb[0].mxu0
  %4003 = vmatprep.mubr.f32.mxu0 0.0
  %v4004 = vand.u32 %v3859, 4294901760
  %v4005 = vsub.f32 %v3859, %v4004
  %v4006 = vand.u32 %v4005, 4294901760
  %v4007 = vsub.f32 %v4005, %v4006
  %v4008 = vand.u32 %v4007, 4294901760
  %4009 = vmatmul.mubr.f32.gmra.mrb[0].mxu0 %v4008
  %v4010 = vpop.f32.mrb[0].mxu0
  %v4011 = vadd.f32 0.0, %v4010
  %v4012 = vpop.f32.mrb[0].mxu0
  %4013 = vdwg.mxu0
  %4014 = vmatprep.subr.mxu0 0.0
  %v4015 = vand.u32 %v53, 4294901760
  %v4016 = vsub.f32 %v53, %v4015
  %v4017 = vand.u32 %v4016, 4294901760
  %v4018 = vsub.f32 %v4016, %v4017
  %v4019 = vand.u32 %v4018, 4294901760
  %4020 = vmatpush1.xpose.msra.mxu0 %v4019
  %4021 = vmatprep.subr.mxu0 0.0
  %v4022 = vand.u32 %v56, 4294901760
  %v4023 = vsub.f32 %v56, %v4022
  %v4024 = vand.u32 %v4023, 4294901760
  %v4025 = vsub.f32 %v4023, %v4024
  %v4026 = vand.u32 %v4025, 4294901760
  %4027 = vmatpush1.xpose.msra.mxu0 %v4026
  %4028 = vmatprep.subr.mxu0 0.0
  %v4029 = vand.u32 %v59, 4294901760
  %v4030 = vsub.f32 %v59, %v4029
  %v4031 = vand.u32 %v4030, 4294901760
  %v4032 = vsub.f32 %v4030, %v4031
  %v4033 = vand.u32 %v4032, 4294901760
  %4034 = vmatpush1.xpose.msra.mxu0 %v4033
  %4035 = vmatprep.subr.mxu0 0.0
  %v4036 = vand.u32 %v62, 4294901760
  %v4037 = vsub.f32 %v62, %v4036
  %v4038 = vand.u32 %v4037, 4294901760
  %v4039 = vsub.f32 %v4037, %v4038
  %v4040 = vand.u32 %v4039, 4294901760
  %4041 = vmatpush1.xpose.msra.mxu0 %v4040
  %4042 = vmatprep.subr.mxu0 0.0
  %v4043 = vand.u32 %v65, 4294901760
  %v4044 = vsub.f32 %v65, %v4043
  %v4045 = vand.u32 %v4044, 4294901760
  %v4046 = vsub.f32 %v4044, %v4045
  %v4047 = vand.u32 %v4046, 4294901760
  %4048 = vmatpush1.xpose.msra.mxu0 %v4047
  %4049 = vmatprep.subr.mxu0 0.0
  %v4050 = vand.u32 %v68, 4294901760
  %v4051 = vsub.f32 %v68, %v4050
  %v4052 = vand.u32 %v4051, 4294901760
  %v4053 = vsub.f32 %v4051, %v4052
  %v4054 = vand.u32 %v4053, 4294901760
  %4055 = vmatpush1.xpose.msra.mxu0 %v4054
  %4056 = vmatprep.subr.mxu0 0.0
  %v4057 = vand.u32 %v71, 4294901760
  %v4058 = vsub.f32 %v71, %v4057
  %v4059 = vand.u32 %v4058, 4294901760
  %v4060 = vsub.f32 %v4058, %v4059
  %v4061 = vand.u32 %v4060, 4294901760
  %4062 = vmatpush1.xpose.msra.mxu0 %v4061
  %4063 = vmatprep.subr.mxu0 0.0
  %v4064 = vand.u32 %v74, 4294901760
  %v4065 = vsub.f32 %v74, %v4064
  %v4066 = vand.u32 %v4065, 4294901760
  %v4067 = vsub.f32 %v4065, %v4066
  %v4068 = vand.u32 %v4067, 4294901760
  %4069 = vmatpush1.xpose.msra.mxu0 %v4068
  %4070 = vmatprep.subr.mxu0 0.0
  %4071 = vmatpush1.xpose.msra.mxu0 0.0
  %4072 = vmatprep.subr.mxu0 0.0
  %4073 = vmatpush1.xpose.msra.mxu0 0.0
  %4074 = vmatprep.subr.mxu0 0.0
  %4075 = vmatpush1.xpose.msra.mxu0 0.0
  %4076 = vmatprep.subr.mxu0 0.0
  %4077 = vmatpush1.xpose.msra.mxu0 0.0
  %4078 = vmatprep.subr.mxu0 0.0
  %4079 = vmatpush1.xpose.msra.mxu0 0.0
  %4080 = vmatprep.subr.mxu0 0.0
  %4081 = vmatpush1.xpose.msra.mxu0 0.0
  %4082 = vmatprep.subr.mxu0 0.0
  %4083 = vmatpush1.xpose.msra.mxu0 0.0
  %4084 = vmatprep.subr.mxu0 0.0
  %4085 = vmatpush1.xpose.msra.mxu0 0.0
  %4086 = vmatprep.subr.mxu0 0.0
  %4087 = vmatpush1.xpose.msra.mxu0 0.0
  %4088 = vmatprep.subr.mxu0 0.0
  %4089 = vmatpush1.xpose.msra.mxu0 0.0
  %4090 = vmatprep.subr.mxu0 0.0
  %4091 = vmatpush1.xpose.msra.mxu0 0.0
  %4092 = vmatprep.subr.mxu0 0.0
  %4093 = vmatpush1.xpose.msra.mxu0 0.0
  %4094 = vmatprep.subr.mxu0 0.0
  %4095 = vmatpush1.xpose.msra.mxu0 0.0
  %4096 = vmatprep.subr.mxu0 0.0
  %4097 = vmatpush1.xpose.msra.mxu0 0.0
  %4098 = vmatprep.subr.mxu0 0.0
  %4099 = vmatpush1.xpose.msra.mxu0 0.0
  %4100 = vmatprep.subr.mxu0 0.0
  %4101 = vmatpush1.xpose.msra.mxu0 0.0
  %4102 = vmatprep.subr.mxu0 0.0
  %4103 = vmatpush1.xpose.msra.mxu0 0.0
  %4104 = vmatprep.subr.mxu0 0.0
  %4105 = vmatpush1.xpose.msra.mxu0 0.0
  %4106 = vmatprep.subr.mxu0 0.0
  %4107 = vmatpush1.xpose.msra.mxu0 0.0
  %4108 = vmatprep.subr.mxu0 0.0
  %4109 = vmatpush1.xpose.msra.mxu0 0.0
  %4110 = vmatprep.subr.mxu0 0.0
  %4111 = vmatpush1.xpose.msra.mxu0 0.0
  %4112 = vmatprep.subr.mxu0 0.0
  %4113 = vmatpush1.xpose.msra.mxu0 0.0
  %4114 = vmatprep.subr.mxu0 0.0
  %4115 = vmatpush1.xpose.msra.mxu0 0.0
  %4116 = vmatprep.subr.mxu0 0.0
  %4117 = vmatpush1.xpose.msra.mxu0 0.0
  %4118 = vmatprep.mubr.f32.mxu0 0.0
  %v4119 = vand.u32 %v3838, 4294901760
  %4120 = vmatmul.mubr.f32.gmra.mrb[0].mxu0 %v4119
  %v4121 = vpop.f32.mrb[0].mxu0
  %v4122 = vadd.f32 %v3941, %v4121
  %v4123 = vpop.f32.mrb[0].mxu0
  %4124 = vmatprep.mubr.f32.mxu0 0.0
  %v4125 = vand.u32 %v3841, 4294901760
  %4126 = vmatmul.mubr.f32.gmra.mrb[0].mxu0 %v4125
  %v4127 = vpop.f32.mrb[0].mxu0
  %v4128 = vadd.f32 %v3951, %v4127
  %v4129 = vpop.f32.mrb[0].mxu0
  %4130 = vmatprep.mubr.f32.mxu0 0.0
  %v4131 = vand.u32 %v3844, 4294901760
  %4132 = vmatmul.mubr.f32.gmra.mrb[0].mxu0 %v4131
  %v4133 = vpop.f32.mrb[0].mxu0
  %v4134 = vadd.f32 %v3961, %v4133
  %v4135 = vpop.f32.mrb[0].mxu0
  %4136 = vmatprep.mubr.f32.mxu0 0.0
  %v4137 = vand.u32 %v3847, 4294901760
  %4138 = vmatmul.mubr.f32.gmra.mrb[0].mxu0 %v4137
  %v4139 = vpop.f32.mrb[0].mxu0
  %v4140 = vadd.f32 %v3971, %v4139
  %v4141 = vpop.f32.mrb[0].mxu0
  %4142 = vmatprep.mubr.f32.mxu0 0.0
  %v4143 = vand.u32 %v3850, 4294901760
  %4144 = vmatmul.mubr.f32.gmra.mrb[0].mxu0 %v4143
  %v4145 = vpop.f32.mrb[0].mxu0
  %v4146 = vadd.f32 %v3981, %v4145
  %v4147 = vpop.f32.mrb[0].mxu0
  %4148 = vmatprep.mubr.f32.mxu0 0.0
  %v4149 = vand.u32 %v3853, 4294901760
  %4150 = vmatmul.mubr.f32.gmra.mrb[0].mxu0 %v4149
  %v4151 = vpop.f32.mrb[0].mxu0
  %v4152 = vadd.f32 %v3991, %v4151
  %v4153 = vpop.f32.mrb[0].mxu0
  %4154 = vmatprep.mubr.f32.mxu0 0.0
  %v4155 = vand.u32 %v3856, 4294901760
  %4156 = vmatmul.mubr.f32.gmra.mrb[0].mxu0 %v4155
  %v4157 = vpop.f32.mrb[0].mxu0
  %v4158 = vadd.f32 %v4001, %v4157
  %v4159 = vpop.f32.mrb[0].mxu0
  %4160 = vmatprep.mubr.f32.mxu0 0.0
  %v4161 = vand.u32 %v3859, 4294901760
  %4162 = vmatmul.mubr.f32.gmra.mrb[0].mxu0 %v4161
  %v4163 = vpop.f32.mrb[0].mxu0
  %v4164 = vadd.f32 %v4011, %v4163
  %v4165 = vpop.f32.mrb[0].mxu0
  %4166 = vdwg.mxu0
  %4167 = vmatprep.subr.mxu0 0.0
  %v4168 = vand.u32 %v53, 4294901760
  %v4169 = vsub.f32 %v53, %v4168
  %4170 = vmatpush1.xpose.msra.mxu0 %v4169
  %4171 = vmatprep.subr.mxu0 0.0
  %v4172 = vand.u32 %v56, 4294901760
  %v4173 = vsub.f32 %v56, %v4172
  %4174 = vmatpush1.xpose.msra.mxu0 %v4173
  %4175 = vmatprep.subr.mxu0 0.0
  %v4176 = vand.u32 %v59, 4294901760
  %v4177 = vsub.f32 %v59, %v4176
  %4178 = vmatpush1.xpose.msra.mxu0 %v4177
  %4179 = vmatprep.subr.mxu0 0.0
  %v4180 = vand.u32 %v62, 4294901760
  %v4181 = vsub.f32 %v62, %v4180
  %4182 = vmatpush1.xpose.msra.mxu0 %v4181
  %4183 = vmatprep.subr.mxu0 0.0
  %v4184 = vand.u32 %v65, 4294901760
  %v4185 = vsub.f32 %v65, %v4184
  %4186 = vmatpush1.xpose.msra.mxu0 %v4185
  %4187 = vmatprep.subr.mxu0 0.0
  %v4188 = vand.u32 %v68, 4294901760
  %v4189 = vsub.f32 %v68, %v4188
  %4190 = vmatpush1.xpose.msra.mxu0 %v4189
  %4191 = vmatprep.subr.mxu0 0.0
  %v4192 = vand.u32 %v71, 4294901760
  %v4193 = vsub.f32 %v71, %v4192
  %4194 = vmatpush1.xpose.msra.mxu0 %v4193
  %4195 = vmatprep.subr.mxu0 0.0
  %v4196 = vand.u32 %v74, 4294901760
  %v4197 = vsub.f32 %v74, %v4196
  %4198 = vmatpush1.xpose.msra.mxu0 %v4197
  %4199 = vmatprep.subr.mxu0 0.0
  %4200 = vmatpush1.xpose.msra.mxu0 0.0
  %4201 = vmatprep.subr.mxu0 0.0
  %4202 = vmatpush1.xpose.msra.mxu0 0.0
  %4203 = vmatprep.subr.mxu0 0.0
  %4204 = vmatpush1.xpose.msra.mxu0 0.0
  %4205 = vmatprep.subr.mxu0 0.0
  %4206 = vmatpush1.xpose.msra.mxu0 0.0
  %4207 = vmatprep.subr.mxu0 0.0
  %4208 = vmatpush1.xpose.msra.mxu0 0.0
  %4209 = vmatprep.subr.mxu0 0.0
  %4210 = vmatpush1.xpose.msra.mxu0 0.0
  %4211 = vmatprep.subr.mxu0 0.0
  %4212 = vmatpush1.xpose.msra.mxu0 0.0
  %4213 = vmatprep.subr.mxu0 0.0
  %4214 = vmatpush1.xpose.msra.mxu0 0.0
  %4215 = vmatprep.subr.mxu0 0.0
  %4216 = vmatpush1.xpose.msra.mxu0 0.0
  %4217 = vmatprep.subr.mxu0 0.0
  %4218 = vmatpush1.xpose.msra.mxu0 0.0
  %4219 = vmatprep.subr.mxu0 0.0
  %4220 = vmatpush1.xpose.msra.mxu0 0.0
  %4221 = vmatprep.subr.mxu0 0.0
  %4222 = vmatpush1.xpose.msra.mxu0 0.0
  %4223 = vmatprep.subr.mxu0 0.0
  %4224 = vmatpush1.xpose.msra.mxu0 0.0
  %4225 = vmatprep.subr.mxu0 0.0
  %4226 = vmatpush1.xpose.msra.mxu0 0.0
  %4227 = vmatprep.subr.mxu0 0.0
  %4228 = vmatpush1.xpose.msra.mxu0 0.0
  %4229 = vmatprep.subr.mxu0 0.0
  %4230 = vmatpush1.xpose.msra.mxu0 0.0
  %4231 = vmatprep.subr.mxu0 0.0
  %4232 = vmatpush1.xpose.msra.mxu0 0.0
  %4233 = vmatprep.subr.mxu0 0.0
  %4234 = vmatpush1.xpose.msra.mxu0 0.0
  %4235 = vmatprep.subr.mxu0 0.0
  %4236 = vmatpush1.xpose.msra.mxu0 0.0
  %4237 = vmatprep.subr.mxu0 0.0
  %4238 = vmatpush1.xpose.msra.mxu0 0.0
  %4239 = vmatprep.subr.mxu0 0.0
  %4240 = vmatpush1.xpose.msra.mxu0 0.0
  %4241 = vmatprep.subr.mxu0 0.0
  %4242 = vmatpush1.xpose.msra.mxu0 0.0
  %4243 = vmatprep.subr.mxu0 0.0
  %4244 = vmatpush1.xpose.msra.mxu0 0.0
  %4245 = vmatprep.subr.mxu0 0.0
  %4246 = vmatpush1.xpose.msra.mxu0 0.0
  %4247 = vmatprep.mubr.f32.mxu0 0.0
  %v4248 = vand.u32 %v3838, 4294901760
  %v4249 = vsub.f32 %v3838, %v4248
  %4250 = vmatmul.mubr.f32.gmra.mrb[0].mxu0 %v4249
  %v4251 = vpop.f32.mrb[0].mxu0
  %v4252 = vadd.f32 %v4122, %v4251
  %v4253 = vpop.f32.mrb[0].mxu0
  %4254 = vmatprep.mubr.f32.mxu0 0.0
  %v4255 = vand.u32 %v3841, 4294901760
  %v4256 = vsub.f32 %v3841, %v4255
  %4257 = vmatmul.mubr.f32.gmra.mrb[0].mxu0 %v4256
  %v4258 = vpop.f32.mrb[0].mxu0
  %v4259 = vadd.f32 %v4128, %v4258
  %v4260 = vpop.f32.mrb[0].mxu0
  %4261 = vmatprep.mubr.f32.mxu0 0.0
  %v4262 = vand.u32 %v3844, 4294901760
  %v4263 = vsub.f32 %v3844, %v4262
  %4264 = vmatmul.mubr.f32.gmra.mrb[0].mxu0 %v4263
  %v4265 = vpop.f32.mrb[0].mxu0
  %v4266 = vadd.f32 %v4134, %v4265
  %v4267 = vpop.f32.mrb[0].mxu0
  %4268 = vmatprep.mubr.f32.mxu0 0.0
  %v4269 = vand.u32 %v3847, 4294901760
  %v4270 = vsub.f32 %v3847, %v4269
  %4271 = vmatmul.mubr.f32.gmra.mrb[0].mxu0 %v4270
  %v4272 = vpop.f32.mrb[0].mxu0
  %v4273 = vadd.f32 %v4140, %v4272
  %v4274 = vpop.f32.mrb[0].mxu0
  %4275 = vmatprep.mubr.f32.mxu0 0.0
  %v4276 = vand.u32 %v3850, 4294901760
  %v4277 = vsub.f32 %v3850, %v4276
  %4278 = vmatmul.mubr.f32.gmra.mrb[0].mxu0 %v4277
  %v4279 = vpop.f32.mrb[0].mxu0
  %v4280 = vadd.f32 %v4146, %v4279
  %v4281 = vpop.f32.mrb[0].mxu0
  %4282 = vmatprep.mubr.f32.mxu0 0.0
  %v4283 = vand.u32 %v3853, 4294901760
  %v4284 = vsub.f32 %v3853, %v4283
  %4285 = vmatmul.mubr.f32.gmra.mrb[0].mxu0 %v4284
  %v4286 = vpop.f32.mrb[0].mxu0
  %v4287 = vadd.f32 %v4152, %v4286
  %v4288 = vpop.f32.mrb[0].mxu0
  %4289 = vmatprep.mubr.f32.mxu0 0.0
  %v4290 = vand.u32 %v3856, 4294901760
  %v4291 = vsub.f32 %v3856, %v4290
  %4292 = vmatmul.mubr.f32.gmra.mrb[0].mxu0 %v4291
  %v4293 = vpop.f32.mrb[0].mxu0
  %v4294 = vadd.f32 %v4158, %v4293
  %v4295 = vpop.f32.mrb[0].mxu0
  %4296 = vmatprep.mubr.f32.mxu0 0.0
  %v4297 = vand.u32 %v3859, 4294901760
  %v4298 = vsub.f32 %v3859, %v4297
  %4299 = vmatmul.mubr.f32.gmra.mrb[0].mxu0 %v4298
  %v4300 = vpop.f32.mrb[0].mxu0
  %v4301 = vadd.f32 %v4164, %v4300
  %v4302 = vpop.f32.mrb[0].mxu0
  %4303 = vdwg.mxu0
  %4304 = vmatprep.subr.mxu0 0.0
  %v4305 = vand.u32 %v53, 4294901760
  %4306 = vmatpush1.xpose.msra.mxu0 %v4305
  %4307 = vmatprep.subr.mxu0 0.0
  %v4308 = vand.u32 %v56, 4294901760
  %4309 = vmatpush1.xpose.msra.mxu0 %v4308
  %4310 = vmatprep.subr.mxu0 0.0
  %v4311 = vand.u32 %v59, 4294901760
  %4312 = vmatpush1.xpose.msra.mxu0 %v4311
  %4313 = vmatprep.subr.mxu0 0.0
  %v4314 = vand.u32 %v62, 4294901760
  %4315 = vmatpush1.xpose.msra.mxu0 %v4314
  %4316 = vmatprep.subr.mxu0 0.0
  %v4317 = vand.u32 %v65, 4294901760
  %4318 = vmatpush1.xpose.msra.mxu0 %v4317
  %4319 = vmatprep.subr.mxu0 0.0
  %v4320 = vand.u32 %v68, 4294901760
  %4321 = vmatpush1.xpose.msra.mxu0 %v4320
  %4322 = vmatprep.subr.mxu0 0.0
  %v4323 = vand.u32 %v71, 4294901760
  %4324 = vmatpush1.xpose.msra.mxu0 %v4323
  %4325 = vmatprep.subr.mxu0 0.0
  %v4326 = vand.u32 %v74, 4294901760
  %4327 = vmatpush1.xpose.msra.mxu0 %v4326
  %4328 = vmatprep.subr.mxu0 0.0
  %4329 = vmatpush1.xpose.msra.mxu0 0.0
  %4330 = vmatprep.subr.mxu0 0.0
  %4331 = vmatpush1.xpose.msra.mxu0 0.0
  %4332 = vmatprep.subr.mxu0 0.0
  %4333 = vmatpush1.xpose.msra.mxu0 0.0
  %4334 = vmatprep.subr.mxu0 0.0
  %4335 = vmatpush1.xpose.msra.mxu0 0.0
  %4336 = vmatprep.subr.mxu0 0.0
  %4337 = vmatpush1.xpose.msra.mxu0 0.0
  %4338 = vmatprep.subr.mxu0 0.0
  %4339 = vmatpush1.xpose.msra.mxu0 0.0
  %4340 = vmatprep.subr.mxu0 0.0
  %4341 = vmatpush1.xpose.msra.mxu0 0.0
  %4342 = vmatprep.subr.mxu0 0.0
  %4343 = vmatpush1.xpose.msra.mxu0 0.0
  %4344 = vmatprep.subr.mxu0 0.0
  %4345 = vmatpush1.xpose.msra.mxu0 0.0
  %4346 = vmatprep.subr.mxu0 0.0
  %4347 = vmatpush1.xpose.msra.mxu0 0.0
  %4348 = vmatprep.subr.mxu0 0.0
  %4349 = vmatpush1.xpose.msra.mxu0 0.0
  %4350 = vmatprep.subr.mxu0 0.0
  %4351 = vmatpush1.xpose.msra.mxu0 0.0
  %4352 = vmatprep.subr.mxu0 0.0
  %4353 = vmatpush1.xpose.msra.mxu0 0.0
  %4354 = vmatprep.subr.mxu0 0.0
  %4355 = vmatpush1.xpose.msra.mxu0 0.0
  %4356 = vmatprep.subr.mxu0 0.0
  %4357 = vmatpush1.xpose.msra.mxu0 0.0
  %4358 = vmatprep.subr.mxu0 0.0
  %4359 = vmatpush1.xpose.msra.mxu0 0.0
  %4360 = vmatprep.subr.mxu0 0.0
  %4361 = vmatpush1.xpose.msra.mxu0 0.0
  %4362 = vmatprep.subr.mxu0 0.0
  %4363 = vmatpush1.xpose.msra.mxu0 0.0
  %4364 = vmatprep.subr.mxu0 0.0
  %4365 = vmatpush1.xpose.msra.mxu0 0.0
  %4366 = vmatprep.subr.mxu0 0.0
  %4367 = vmatpush1.xpose.msra.mxu0 0.0
  %4368 = vmatprep.subr.mxu0 0.0
  %4369 = vmatpush1.xpose.msra.mxu0 0.0
  %4370 = vmatprep.subr.mxu0 0.0
  %4371 = vmatpush1.xpose.msra.mxu0 0.0
  %4372 = vmatprep.subr.mxu0 0.0
  %4373 = vmatpush1.xpose.msra.mxu0 0.0
  %4374 = vmatprep.subr.mxu0 0.0
  %4375 = vmatpush1.xpose.msra.mxu0 0.0
  %4376 = vmatprep.mubr.f32.mxu0 0.0
  %v4377 = vand.u32 %v3838, 4294901760
  %v4378 = vsub.f32 %v3838, %v4377
  %v4379 = vand.u32 %v4378, 4294901760
  %4380 = vmatmul.mubr.f32.gmra.mrb[0].mxu0 %v4379
  %v4381 = vpop.f32.mrb[0].mxu0
  %v4382 = vadd.f32 %v4252, %v4381
  %v4383 = vpop.f32.mrb[0].mxu0
  %4384 = vmatprep.mubr.f32.mxu0 0.0
  %v4385 = vand.u32 %v3841, 4294901760
  %v4386 = vsub.f32 %v3841, %v4385
  %v4387 = vand.u32 %v4386, 4294901760
  %4388 = vmatmul.mubr.f32.gmra.mrb[0].mxu0 %v4387
  %v4389 = vpop.f32.mrb[0].mxu0
  %v4390 = vadd.f32 %v4259, %v4389
  %v4391 = vpop.f32.mrb[0].mxu0
  %4392 = vmatprep.mubr.f32.mxu0 0.0
  %v4393 = vand.u32 %v3844, 4294901760
  %v4394 = vsub.f32 %v3844, %v4393
  %v4395 = vand.u32 %v4394, 4294901760
  %4396 = vmatmul.mubr.f32.gmra.mrb[0].mxu0 %v4395
  %v4397 = vpop.f32.mrb[0].mxu0
  %v4398 = vadd.f32 %v4266, %v4397
  %v4399 = vpop.f32.mrb[0].mxu0
  %4400 = vmatprep.mubr.f32.mxu0 0.0
  %v4401 = vand.u32 %v3847, 4294901760
  %v4402 = vsub.f32 %v3847, %v4401
  %v4403 = vand.u32 %v4402, 4294901760
  %4404 = vmatmul.mubr.f32.gmra.mrb[0].mxu0 %v4403
  %v4405 = vpop.f32.mrb[0].mxu0
  %v4406 = vadd.f32 %v4273, %v4405
  %v4407 = vpop.f32.mrb[0].mxu0
  %4408 = vmatprep.mubr.f32.mxu0 0.0
  %v4409 = vand.u32 %v3850, 4294901760
  %v4410 = vsub.f32 %v3850, %v4409
  %v4411 = vand.u32 %v4410, 4294901760
  %4412 = vmatmul.mubr.f32.gmra.mrb[0].mxu0 %v4411
  %v4413 = vpop.f32.mrb[0].mxu0
  %v4414 = vadd.f32 %v4280, %v4413
  %v4415 = vpop.f32.mrb[0].mxu0
  %4416 = vmatprep.mubr.f32.mxu0 0.0
  %v4417 = vand.u32 %v3853, 4294901760
  %v4418 = vsub.f32 %v3853, %v4417
  %v4419 = vand.u32 %v4418, 4294901760
  %4420 = vmatmul.mubr.f32.gmra.mrb[0].mxu0 %v4419
  %v4421 = vpop.f32.mrb[0].mxu0
  %v4422 = vadd.f32 %v4287, %v4421
  %v4423 = vpop.f32.mrb[0].mxu0
  %4424 = vmatprep.mubr.f32.mxu0 0.0
  %v4425 = vand.u32 %v3856, 4294901760
  %v4426 = vsub.f32 %v3856, %v4425
  %v4427 = vand.u32 %v4426, 4294901760
  %4428 = vmatmul.mubr.f32.gmra.mrb[0].mxu0 %v4427
  %v4429 = vpop.f32.mrb[0].mxu0
  %v4430 = vadd.f32 %v4294, %v4429
  %v4431 = vpop.f32.mrb[0].mxu0
  %4432 = vmatprep.mubr.f32.mxu0 0.0
  %v4433 = vand.u32 %v3859, 4294901760
  %v4434 = vsub.f32 %v3859, %v4433
  %v4435 = vand.u32 %v4434, 4294901760
  %4436 = vmatmul.mubr.f32.gmra.mrb[0].mxu0 %v4435
  %v4437 = vpop.f32.mrb[0].mxu0
  %v4438 = vadd.f32 %v4301, %v4437
  %v4439 = vpop.f32.mrb[0].mxu0
  %4440 = vdwg.mxu0
  %4441 = vmatprep.subr.mxu0 0.0
  %v4442 = vand.u32 %v53, 4294901760
  %v4443 = vsub.f32 %v53, %v4442
  %v4444 = vand.u32 %v4443, 4294901760
  %4445 = vmatpush1.xpose.msra.mxu0 %v4444
  %4446 = vmatprep.subr.mxu0 0.0
  %v4447 = vand.u32 %v56, 4294901760
  %v4448 = vsub.f32 %v56, %v4447
  %v4449 = vand.u32 %v4448, 4294901760
  %4450 = vmatpush1.xpose.msra.mxu0 %v4449
  %4451 = vmatprep.subr.mxu0 0.0
  %v4452 = vand.u32 %v59, 4294901760
  %v4453 = vsub.f32 %v59, %v4452
  %v4454 = vand.u32 %v4453, 4294901760
  %4455 = vmatpush1.xpose.msra.mxu0 %v4454
  %4456 = vmatprep.subr.mxu0 0.0
  %v4457 = vand.u32 %v62, 4294901760
  %v4458 = vsub.f32 %v62, %v4457
  %v4459 = vand.u32 %v4458, 4294901760
  %4460 = vmatpush1.xpose.msra.mxu0 %v4459
  %4461 = vmatprep.subr.mxu0 0.0
  %v4462 = vand.u32 %v65, 4294901760
  %v4463 = vsub.f32 %v65, %v4462
  %v4464 = vand.u32 %v4463, 4294901760
  %4465 = vmatpush1.xpose.msra.mxu0 %v4464
  %4466 = vmatprep.subr.mxu0 0.0
  %v4467 = vand.u32 %v68, 4294901760
  %v4468 = vsub.f32 %v68, %v4467
  %v4469 = vand.u32 %v4468, 4294901760
  %4470 = vmatpush1.xpose.msra.mxu0 %v4469
  %4471 = vmatprep.subr.mxu0 0.0
  %v4472 = vand.u32 %v71, 4294901760
  %v4473 = vsub.f32 %v71, %v4472
  %v4474 = vand.u32 %v4473, 4294901760
  %4475 = vmatpush1.xpose.msra.mxu0 %v4474
  %4476 = vmatprep.subr.mxu0 0.0
  %v4477 = vand.u32 %v74, 4294901760
  %v4478 = vsub.f32 %v74, %v4477
  %v4479 = vand.u32 %v4478, 4294901760
  %4480 = vmatpush1.xpose.msra.mxu0 %v4479
  %4481 = vmatprep.subr.mxu0 0.0
  %4482 = vmatpush1.xpose.msra.mxu0 0.0
  %4483 = vmatprep.subr.mxu0 0.0
  %4484 = vmatpush1.xpose.msra.mxu0 0.0
  %4485 = vmatprep.subr.mxu0 0.0
  %4486 = vmatpush1.xpose.msra.mxu0 0.0
  %4487 = vmatprep.subr.mxu0 0.0
  %4488 = vmatpush1.xpose.msra.mxu0 0.0
  %4489 = vmatprep.subr.mxu0 0.0
  %4490 = vmatpush1.xpose.msra.mxu0 0.0
  %4491 = vmatprep.subr.mxu0 0.0
  %4492 = vmatpush1.xpose.msra.mxu0 0.0
  %4493 = vmatprep.subr.mxu0 0.0
  %4494 = vmatpush1.xpose.msra.mxu0 0.0
  %4495 = vmatprep.subr.mxu0 0.0
  %4496 = vmatpush1.xpose.msra.mxu0 0.0
  %4497 = vmatprep.subr.mxu0 0.0
  %4498 = vmatpush1.xpose.msra.mxu0 0.0
  %4499 = vmatprep.subr.mxu0 0.0
  %4500 = vmatpush1.xpose.msra.mxu0 0.0
  %4501 = vmatprep.subr.mxu0 0.0
  %4502 = vmatpush1.xpose.msra.mxu0 0.0
  %4503 = vmatprep.subr.mxu0 0.0
  %4504 = vmatpush1.xpose.msra.mxu0 0.0
  %4505 = vmatprep.subr.mxu0 0.0
  %4506 = vmatpush1.xpose.msra.mxu0 0.0
  %4507 = vmatprep.subr.mxu0 0.0
  %4508 = vmatpush1.xpose.msra.mxu0 0.0
  %4509 = vmatprep.subr.mxu0 0.0
  %4510 = vmatpush1.xpose.msra.mxu0 0.0
  %4511 = vmatprep.subr.mxu0 0.0
  %4512 = vmatpush1.xpose.msra.mxu0 0.0
  %4513 = vmatprep.subr.mxu0 0.0
  %4514 = vmatpush1.xpose.msra.mxu0 0.0
  %4515 = vmatprep.subr.mxu0 0.0
  %4516 = vmatpush1.xpose.msra.mxu0 0.0
  %4517 = vmatprep.subr.mxu0 0.0
  %4518 = vmatpush1.xpose.msra.mxu0 0.0
  %4519 = vmatprep.subr.mxu0 0.0
  %4520 = vmatpush1.xpose.msra.mxu0 0.0
  %4521 = vmatprep.subr.mxu0 0.0
  %4522 = vmatpush1.xpose.msra.mxu0 0.0
  %4523 = vmatprep.subr.mxu0 0.0
  %4524 = vmatpush1.xpose.msra.mxu0 0.0
  %4525 = vmatprep.subr.mxu0 0.0
  %4526 = vmatpush1.xpose.msra.mxu0 0.0
  %4527 = vmatprep.subr.mxu0 0.0
  %4528 = vmatpush1.xpose.msra.mxu0 0.0
  %4529 = vmatprep.mubr.f32.mxu0 0.0
  %v4530 = vand.u32 %v3838, 4294901760
  %4531 = vmatmul.mubr.f32.gmra.mrb[0].mxu0 %v4530
  %v4532 = vpop.f32.mrb[0].mxu0
  %v4533 = vadd.f32 %v4382, %v4532
  %v4534 = vpop.f32.mrb[0].mxu0
  %4535 = vmatprep.mubr.f32.mxu0 0.0
  %v4536 = vand.u32 %v3841, 4294901760
  %4537 = vmatmul.mubr.f32.gmra.mrb[0].mxu0 %v4536
  %v4538 = vpop.f32.mrb[0].mxu0
  %v4539 = vadd.f32 %v4390, %v4538
  %v4540 = vpop.f32.mrb[0].mxu0
  %4541 = vmatprep.mubr.f32.mxu0 0.0
  %v4542 = vand.u32 %v3844, 4294901760
  %4543 = vmatmul.mubr.f32.gmra.mrb[0].mxu0 %v4542
  %v4544 = vpop.f32.mrb[0].mxu0
  %v4545 = vadd.f32 %v4398, %v4544
  %v4546 = vpop.f32.mrb[0].mxu0
  %4547 = vmatprep.mubr.f32.mxu0 0.0
  %v4548 = vand.u32 %v3847, 4294901760
  %4549 = vmatmul.mubr.f32.gmra.mrb[0].mxu0 %v4548
  %v4550 = vpop.f32.mrb[0].mxu0
  %v4551 = vadd.f32 %v4406, %v4550
  %v4552 = vpop.f32.mrb[0].mxu0
  %4553 = vmatprep.mubr.f32.mxu0 0.0
  %v4554 = vand.u32 %v3850, 4294901760
  %4555 = vmatmul.mubr.f32.gmra.mrb[0].mxu0 %v4554
  %v4556 = vpop.f32.mrb[0].mxu0
  %v4557 = vadd.f32 %v4414, %v4556
  %v4558 = vpop.f32.mrb[0].mxu0
  %4559 = vmatprep.mubr.f32.mxu0 0.0
  %v4560 = vand.u32 %v3853, 4294901760
  %4561 = vmatmul.mubr.f32.gmra.mrb[0].mxu0 %v4560
  %v4562 = vpop.f32.mrb[0].mxu0
  %v4563 = vadd.f32 %v4422, %v4562
  %v4564 = vpop.f32.mrb[0].mxu0
  %4565 = vmatprep.mubr.f32.mxu0 0.0
  %v4566 = vand.u32 %v3856, 4294901760
  %4567 = vmatmul.mubr.f32.gmra.mrb[0].mxu0 %v4566
  %v4568 = vpop.f32.mrb[0].mxu0
  %v4569 = vadd.f32 %v4430, %v4568
  %v4570 = vpop.f32.mrb[0].mxu0
  %4571 = vmatprep.mubr.f32.mxu0 0.0
  %v4572 = vand.u32 %v3859, 4294901760
  %4573 = vmatmul.mubr.f32.gmra.mrb[0].mxu0 %v4572
  %v4574 = vpop.f32.mrb[0].mxu0
  %v4575 = vadd.f32 %v4438, %v4574
  %v4576 = vpop.f32.mrb[0].mxu0
  %4577 = vdwg.mxu0
  %4578 = vmatprep.subr.mxu0 0.0
  %v4579 = vand.u32 %v53, 4294901760
  %4580 = vmatpush1.xpose.msra.mxu0 %v4579
  %4581 = vmatprep.subr.mxu0 0.0
  %v4582 = vand.u32 %v56, 4294901760
  %4583 = vmatpush1.xpose.msra.mxu0 %v4582
  %4584 = vmatprep.subr.mxu0 0.0
  %v4585 = vand.u32 %v59, 4294901760
  %4586 = vmatpush1.xpose.msra.mxu0 %v4585
  %4587 = vmatprep.subr.mxu0 0.0
  %v4588 = vand.u32 %v62, 4294901760
  %4589 = vmatpush1.xpose.msra.mxu0 %v4588
  %4590 = vmatprep.subr.mxu0 0.0
  %v4591 = vand.u32 %v65, 4294901760
  %4592 = vmatpush1.xpose.msra.mxu0 %v4591
  %4593 = vmatprep.subr.mxu0 0.0
  %v4594 = vand.u32 %v68, 4294901760
  %4595 = vmatpush1.xpose.msra.mxu0 %v4594
  %4596 = vmatprep.subr.mxu0 0.0
  %v4597 = vand.u32 %v71, 4294901760
  %4598 = vmatpush1.xpose.msra.mxu0 %v4597
  %4599 = vmatprep.subr.mxu0 0.0
  %v4600 = vand.u32 %v74, 4294901760
  %4601 = vmatpush1.xpose.msra.mxu0 %v4600
  %4602 = vmatprep.subr.mxu0 0.0
  %4603 = vmatpush1.xpose.msra.mxu0 0.0
  %4604 = vmatprep.subr.mxu0 0.0
  %4605 = vmatpush1.xpose.msra.mxu0 0.0
  %4606 = vmatprep.subr.mxu0 0.0
  %4607 = vmatpush1.xpose.msra.mxu0 0.0
  %4608 = vmatprep.subr.mxu0 0.0
  %4609 = vmatpush1.xpose.msra.mxu0 0.0
  %4610 = vmatprep.subr.mxu0 0.0
  %4611 = vmatpush1.xpose.msra.mxu0 0.0
  %4612 = vmatprep.subr.mxu0 0.0
  %4613 = vmatpush1.xpose.msra.mxu0 0.0
  %4614 = vmatprep.subr.mxu0 0.0
  %4615 = vmatpush1.xpose.msra.mxu0 0.0
  %4616 = vmatprep.subr.mxu0 0.0
  %4617 = vmatpush1.xpose.msra.mxu0 0.0
  %4618 = vmatprep.subr.mxu0 0.0
  %4619 = vmatpush1.xpose.msra.mxu0 0.0
  %4620 = vmatprep.subr.mxu0 0.0
  %4621 = vmatpush1.xpose.msra.mxu0 0.0
  %4622 = vmatprep.subr.mxu0 0.0
  %4623 = vmatpush1.xpose.msra.mxu0 0.0
  %4624 = vmatprep.subr.mxu0 0.0
  %4625 = vmatpush1.xpose.msra.mxu0 0.0
  %4626 = vmatprep.subr.mxu0 0.0
  %4627 = vmatpush1.xpose.msra.mxu0 0.0
  %4628 = vmatprep.subr.mxu0 0.0
  %4629 = vmatpush1.xpose.msra.mxu0 0.0
  %4630 = vmatprep.subr.mxu0 0.0
  %4631 = vmatpush1.xpose.msra.mxu0 0.0
  %4632 = vmatprep.subr.mxu0 0.0
  %4633 = vmatpush1.xpose.msra.mxu0 0.0
  %4634 = vmatprep.subr.mxu0 0.0
  %4635 = vmatpush1.xpose.msra.mxu0 0.0
  %4636 = vmatprep.subr.mxu0 0.0
  %4637 = vmatpush1.xpose.msra.mxu0 0.0
  %4638 = vmatprep.subr.mxu0 0.0
  %4639 = vmatpush1.xpose.msra.mxu0 0.0
  %4640 = vmatprep.subr.mxu0 0.0
  %4641 = vmatpush1.xpose.msra.mxu0 0.0
  %4642 = vmatprep.subr.mxu0 0.0
  %4643 = vmatpush1.xpose.msra.mxu0 0.0
  %4644 = vmatprep.subr.mxu0 0.0
  %4645 = vmatpush1.xpose.msra.mxu0 0.0
  %4646 = vmatprep.subr.mxu0 0.0
  %4647 = vmatpush1.xpose.msra.mxu0 0.0
  %4648 = vmatprep.subr.mxu0 0.0
  %4649 = vmatpush1.xpose.msra.mxu0 0.0
  %4650 = vmatprep.mubr.f32.mxu0 0.0
  %v4651 = vand.u32 %v3838, 4294901760
  %4652 = vmatmul.mubr.f32.gmra.mrb[0].mxu0 %v4651
  %v4653 = vpop.f32.mrb[0].mxu0
  %v4654 = vadd.f32 %v4533, %v4653
  %v4655 = vpop.f32.mrb[0].mxu0
  %4656 = vmatprep.mubr.f32.mxu0 0.0
  %v4657 = vand.u32 %v3841, 4294901760
  %4658 = vmatmul.mubr.f32.gmra.mrb[0].mxu0 %v4657
  %v4659 = vpop.f32.mrb[0].mxu0
  %v4660 = vadd.f32 %v4539, %v4659
  %v4661 = vpop.f32.mrb[0].mxu0
  %4662 = vmatprep.mubr.f32.mxu0 0.0
  %v4663 = vand.u32 %v3844, 4294901760
  %4664 = vmatmul.mubr.f32.gmra.mrb[0].mxu0 %v4663
  %v4665 = vpop.f32.mrb[0].mxu0
  %v4666 = vadd.f32 %v4545, %v4665
  %v4667 = vpop.f32.mrb[0].mxu0
  %4668 = vmatprep.mubr.f32.mxu0 0.0
  %v4669 = vand.u32 %v3847, 4294901760
  %4670 = vmatmul.mubr.f32.gmra.mrb[0].mxu0 %v4669
  %v4671 = vpop.f32.mrb[0].mxu0
  %v4672 = vadd.f32 %v4551, %v4671
  %v4673 = vpop.f32.mrb[0].mxu0
  %4674 = vmatprep.mubr.f32.mxu0 0.0
  %v4675 = vand.u32 %v3850, 4294901760
  %4676 = vmatmul.mubr.f32.gmra.mrb[0].mxu0 %v4675
  %v4677 = vpop.f32.mrb[0].mxu0
  %v4678 = vadd.f32 %v4557, %v4677
  %v4679 = vpop.f32.mrb[0].mxu0
  %4680 = vmatprep.mubr.f32.mxu0 0.0
  %v4681 = vand.u32 %v3853, 4294901760
  %4682 = vmatmul.mubr.f32.gmra.mrb[0].mxu0 %v4681
  %v4683 = vpop.f32.mrb[0].mxu0
  %v4684 = vadd.f32 %v4563, %v4683
  %v4685 = vpop.f32.mrb[0].mxu0
  %4686 = vmatprep.mubr.f32.mxu0 0.0
  %v4687 = vand.u32 %v3856, 4294901760
  %4688 = vmatmul.mubr.f32.gmra.mrb[0].mxu0 %v4687
  %v4689 = vpop.f32.mrb[0].mxu0
  %v4690 = vadd.f32 %v4569, %v4689
  %v4691 = vpop.f32.mrb[0].mxu0
  %4692 = vmatprep.mubr.f32.mxu0 0.0
  %v4693 = vand.u32 %v3859, 4294901760
  %4694 = vmatmul.mubr.f32.gmra.mrb[0].mxu0 %v4693
  %v4695 = vpop.f32.mrb[0].mxu0
  %v4696 = vadd.f32 %v4575, %v4695
  %v4697 = vpop.f32.mrb[0].mxu0
  %4698 = vdwg.mxu0
  %4699 = vst.msk [vmem:[%s2 + $0x8] sm:$0xff] %vm51, %v4654
  %4700 = vst.msk [vmem:[%s2 + $0x28] sm:$0xff] %vm51, %v4660
  %4701 = vst.msk [vmem:[%s2 + $0x48] sm:$0xff] %vm51, %v4666
  %4702 = vst.msk [vmem:[%s2 + $0x68] sm:$0xff] %vm51, %v4672
  %4703 = vst.msk [vmem:[%s2 + $0x88] sm:$0xff] %vm51, %v4678
  %4704 = vst.msk [vmem:[%s2 + $0xa8] sm:$0xff] %vm51, %v4684
  %4705 = vst.msk [vmem:[%s2 + $0xc8] sm:$0xff] %vm51, %v4690
  %4706 = vst.msk [vmem:[%s2 + $0xe8] sm:$0xff] %vm51, %v4696
  %4707 = vrot.lane.b32.xlu0 %v1015, 64
  %v4708 = vpop.permute.xlu0 %4707
  %4709 = vrot.lane.b32.xlu0 %v1022, 64
  %v4710 = vpop.permute.xlu0 %4709
  %4711 = vrot.lane.b32.xlu0 %v1029, 64
  %v4712 = vpop.permute.xlu0 %4711
  %4713 = vrot.lane.b32.xlu0 %v1036, 64
  %v4714 = vpop.permute.xlu0 %4713
  %4715 = vrot.lane.b32.xlu0 %v1043, 64
  %v4716 = vpop.permute.xlu0 %4715
  %4717 = vrot.lane.b32.xlu0 %v1050, 64
  %v4718 = vpop.permute.xlu0 %4717
  %4719 = vrot.lane.b32.xlu0 %v1057, 64
  %v4720 = vpop.permute.xlu0 %4719
  %4721 = vrot.lane.b32.xlu0 %v1064, 64
  %v4722 = vpop.permute.xlu0 %4721
  %v4723 = vsel %vm51, %v4708, 0
  %v4725 = vsel %vm51, %v4710, 0
  %v4727 = vsel %vm51, %v4712, 0
  %v4729 = vsel %vm51, %v4714, 0
  %v4731 = vsel %vm51, %v4716, 0
  %v4733 = vsel %vm51, %v4718, 0
  %v4735 = vsel %vm51, %v4720, 0
  %v4737 = vsel %vm51, %v4722, 0
  %4739 = vmatprep.subr.mxu0 0.0
  %v4740 = vand.u32 %v53, 4294901760
  %4741 = vmatpush1.xpose.msra.mxu0 %v4740
  %4742 = vmatprep.subr.mxu0 0.0
  %v4743 = vand.u32 %v56, 4294901760
  %4744 = vmatpush1.xpose.msra.mxu0 %v4743
  %4745 = vmatprep.subr.mxu0 0.0
  %v4746 = vand.u32 %v59, 4294901760
  %4747 = vmatpush1.xpose.msra.mxu0 %v4746
  %4748 = vmatprep.subr.mxu0 0.0
  %v4749 = vand.u32 %v62, 4294901760
  %4750 = vmatpush1.xpose.msra.mxu0 %v4749
  %4751 = vmatprep.subr.mxu0 0.0
  %v4752 = vand.u32 %v65, 4294901760
  %4753 = vmatpush1.xpose.msra.mxu0 %v4752
  %4754 = vmatprep.subr.mxu0 0.0
  %v4755 = vand.u32 %v68, 4294901760
  %4756 = vmatpush1.xpose.msra.mxu0 %v4755
  %4757 = vmatprep.subr.mxu0 0.0
  %v4758 = vand.u32 %v71, 4294901760
  %4759 = vmatpush1.xpose.msra.mxu0 %v4758
  %4760 = vmatprep.subr.mxu0 0.0
  %v4761 = vand.u32 %v74, 4294901760
  %4762 = vmatpush1.xpose.msra.mxu0 %v4761
  %4763 = vmatprep.subr.mxu0 0.0
  %4764 = vmatpush1.xpose.msra.mxu0 0.0
  %4765 = vmatprep.subr.mxu0 0.0
  %4766 = vmatpush1.xpose.msra.mxu0 0.0
  %4767 = vmatprep.subr.mxu0 0.0
  %4768 = vmatpush1.xpose.msra.mxu0 0.0
  %4769 = vmatprep.subr.mxu0 0.0
  %4770 = vmatpush1.xpose.msra.mxu0 0.0
  %4771 = vmatprep.subr.mxu0 0.0
  %4772 = vmatpush1.xpose.msra.mxu0 0.0
  %4773 = vmatprep.subr.mxu0 0.0
  %4774 = vmatpush1.xpose.msra.mxu0 0.0
  %4775 = vmatprep.subr.mxu0 0.0
  %4776 = vmatpush1.xpose.msra.mxu0 0.0
  %4777 = vmatprep.subr.mxu0 0.0
  %4778 = vmatpush1.xpose.msra.mxu0 0.0
  %4779 = vmatprep.subr.mxu0 0.0
  %4780 = vmatpush1.xpose.msra.mxu0 0.0
  %4781 = vmatprep.subr.mxu0 0.0
  %4782 = vmatpush1.xpose.msra.mxu0 0.0
  %4783 = vmatprep.subr.mxu0 0.0
  %4784 = vmatpush1.xpose.msra.mxu0 0.0
  %4785 = vmatprep.subr.mxu0 0.0
  %4786 = vmatpush1.xpose.msra.mxu0 0.0
  %4787 = vmatprep.subr.mxu0 0.0
  %4788 = vmatpush1.xpose.msra.mxu0 0.0
  %4789 = vmatprep.subr.mxu0 0.0
  %4790 = vmatpush1.xpose.msra.mxu0 0.0
  %4791 = vmatprep.subr.mxu0 0.0
  %4792 = vmatpush1.xpose.msra.mxu0 0.0
  %4793 = vmatprep.subr.mxu0 0.0
  %4794 = vmatpush1.xpose.msra.mxu0 0.0
  %4795 = vmatprep.subr.mxu0 0.0
  %4796 = vmatpush1.xpose.msra.mxu0 0.0
  %4797 = vmatprep.subr.mxu0 0.0
  %4798 = vmatpush1.xpose.msra.mxu0 0.0
  %4799 = vmatprep.subr.mxu0 0.0
  %4800 = vmatpush1.xpose.msra.mxu0 0.0
  %4801 = vmatprep.subr.mxu0 0.0
  %4802 = vmatpush1.xpose.msra.mxu0 0.0
  %4803 = vmatprep.subr.mxu0 0.0
  %4804 = vmatpush1.xpose.msra.mxu0 0.0
  %4805 = vmatprep.subr.mxu0 0.0
  %4806 = vmatpush1.xpose.msra.mxu0 0.0
  %4807 = vmatprep.subr.mxu0 0.0
  %4808 = vmatpush1.xpose.msra.mxu0 0.0
  %4809 = vmatprep.subr.mxu0 0.0
  %4810 = vmatpush1.xpose.msra.mxu0 0.0
  %4811 = vmatprep.mubr.f32.mxu0 0.0
  %v4812 = vand.u32 %v4723, 4294901760
  %v4813 = vsub.f32 %v4723, %v4812
  %v4814 = vand.u32 %v4813, 4294901760
  %v4815 = vsub.f32 %v4813, %v4814
  %v4816 = vand.u32 %v4815, 4294901760
  %4817 = vmatmul.mubr.f32.gmra.mrb[0].mxu0 %v4816
  %v4818 = vpop.f32.mrb[0].mxu0
  %v4819 = vadd.f32 0.0, %v4818
  %v4820 = vpop.f32.mrb[0].mxu0
  %4821 = vmatprep.mubr.f32.mxu0 0.0
  %v4822 = vand.u32 %v4725, 4294901760
  %v4823 = vsub.f32 %v4725, %v4822
  %v4824 = vand.u32 %v4823, 4294901760
  %v4825 = vsub.f32 %v4823, %v4824
  %v4826 = vand.u32 %v4825, 4294901760
  %4827 = vmatmul.mubr.f32.gmra.mrb[0].mxu0 %v4826
  %v4828 = vpop.f32.mrb[0].mxu0
  %v4829 = vadd.f32 0.0, %v4828
  %v4830 = vpop.f32.mrb[0].mxu0
  %4831 = vmatprep.mubr.f32.mxu0 0.0
  %v4832 = vand.u32 %v4727, 4294901760
  %v4833 = vsub.f32 %v4727, %v4832
  %v4834 = vand.u32 %v4833, 4294901760
  %v4835 = vsub.f32 %v4833, %v4834
  %v4836 = vand.u32 %v4835, 4294901760
  %4837 = vmatmul.mubr.f32.gmra.mrb[0].mxu0 %v4836
  %v4838 = vpop.f32.mrb[0].mxu0
  %v4839 = vadd.f32 0.0, %v4838
  %v4840 = vpop.f32.mrb[0].mxu0
  %4841 = vmatprep.mubr.f32.mxu0 0.0
  %v4842 = vand.u32 %v4729, 4294901760
  %v4843 = vsub.f32 %v4729, %v4842
  %v4844 = vand.u32 %v4843, 4294901760
  %v4845 = vsub.f32 %v4843, %v4844
  %v4846 = vand.u32 %v4845, 4294901760
  %4847 = vmatmul.mubr.f32.gmra.mrb[0].mxu0 %v4846
  %v4848 = vpop.f32.mrb[0].mxu0
  %v4849 = vadd.f32 0.0, %v4848
  %v4850 = vpop.f32.mrb[0].mxu0
  %4851 = vmatprep.mubr.f32.mxu0 0.0
  %v4852 = vand.u32 %v4731, 4294901760
  %v4853 = vsub.f32 %v4731, %v4852
  %v4854 = vand.u32 %v4853, 4294901760
  %v4855 = vsub.f32 %v4853, %v4854
  %v4856 = vand.u32 %v4855, 4294901760
  %4857 = vmatmul.mubr.f32.gmra.mrb[0].mxu0 %v4856
  %v4858 = vpop.f32.mrb[0].mxu0
  %v4859 = vadd.f32 0.0, %v4858
  %v4860 = vpop.f32.mrb[0].mxu0
  %4861 = vmatprep.mubr.f32.mxu0 0.0
  %v4862 = vand.u32 %v4733, 4294901760
  %v4863 = vsub.f32 %v4733, %v4862
  %v4864 = vand.u32 %v4863, 4294901760
  %v4865 = vsub.f32 %v4863, %v4864
  %v4866 = vand.u32 %v4865, 4294901760
  %4867 = vmatmul.mubr.f32.gmra.mrb[0].mxu0 %v4866
  %v4868 = vpop.f32.mrb[0].mxu0
  %v4869 = vadd.f32 0.0, %v4868
  %v4870 = vpop.f32.mrb[0].mxu0
  %4871 = vmatprep.mubr.f32.mxu0 0.0
  %v4872 = vand.u32 %v4735, 4294901760
  %v4873 = vsub.f32 %v4735, %v4872
  %v4874 = vand.u32 %v4873, 4294901760
  %v4875 = vsub.f32 %v4873, %v4874
  %v4876 = vand.u32 %v4875, 4294901760
  %4877 = vmatmul.mubr.f32.gmra.mrb[0].mxu0 %v4876
  %v4878 = vpop.f32.mrb[0].mxu0
  %v4879 = vadd.f32 0.0, %v4878
  %v4880 = vpop.f32.mrb[0].mxu0
  %4881 = vmatprep.mubr.f32.mxu0 0.0
  %v4882 = vand.u32 %v4737, 4294901760
  %v4883 = vsub.f32 %v4737, %v4882
  %v4884 = vand.u32 %v4883, 4294901760
  %v4885 = vsub.f32 %v4883, %v4884
  %v4886 = vand.u32 %v4885, 4294901760
  %4887 = vmatmul.mubr.f32.gmra.mrb[0].mxu0 %v4886
  %v4888 = vpop.f32.mrb[0].mxu0
  %v4889 = vadd.f32 0.0, %v4888
  %v4890 = vpop.f32.mrb[0].mxu0
  %4891 = vdwg.mxu0
  %4892 = vmatprep.subr.mxu0 0.0
  %v4893 = vand.u32 %v53, 4294901760
  %v4894 = vsub.f32 %v53, %v4893
  %v4895 = vand.u32 %v4894, 4294901760
  %v4896 = vsub.f32 %v4894, %v4895
  %v4897 = vand.u32 %v4896, 4294901760
  %4898 = vmatpush1.xpose.msra.mxu0 %v4897
  %4899 = vmatprep.subr.mxu0 0.0
  %v4900 = vand.u32 %v56, 4294901760
  %v4901 = vsub.f32 %v56, %v4900
  %v4902 = vand.u32 %v4901, 4294901760
  %v4903 = vsub.f32 %v4901, %v4902
  %v4904 = vand.u32 %v4903, 4294901760
  %4905 = vmatpush1.xpose.msra.mxu0 %v4904
  %4906 = vmatprep.subr.mxu0 0.0
  %v4907 = vand.u32 %v59, 4294901760
  %v4908 = vsub.f32 %v59, %v4907
  %v4909 = vand.u32 %v4908, 4294901760
  %v4910 = vsub.f32 %v4908, %v4909
  %v4911 = vand.u32 %v4910, 4294901760
  %4912 = vmatpush1.xpose.msra.mxu0 %v4911
  %4913 = vmatprep.subr.mxu0 0.0
  %v4914 = vand.u32 %v62, 4294901760
  %v4915 = vsub.f32 %v62, %v4914
  %v4916 = vand.u32 %v4915, 4294901760
  %v4917 = vsub.f32 %v4915, %v4916
  %v4918 = vand.u32 %v4917, 4294901760
  %4919 = vmatpush1.xpose.msra.mxu0 %v4918
  %4920 = vmatprep.subr.mxu0 0.0
  %v4921 = vand.u32 %v65, 4294901760
  %v4922 = vsub.f32 %v65, %v4921
  %v4923 = vand.u32 %v4922, 4294901760
  %v4924 = vsub.f32 %v4922, %v4923
  %v4925 = vand.u32 %v4924, 4294901760
  %4926 = vmatpush1.xpose.msra.mxu0 %v4925
  %4927 = vmatprep.subr.mxu0 0.0
  %v4928 = vand.u32 %v68, 4294901760
  %v4929 = vsub.f32 %v68, %v4928
  %v4930 = vand.u32 %v4929, 4294901760
  %v4931 = vsub.f32 %v4929, %v4930
  %v4932 = vand.u32 %v4931, 4294901760
  %4933 = vmatpush1.xpose.msra.mxu0 %v4932
  %4934 = vmatprep.subr.mxu0 0.0
  %v4935 = vand.u32 %v71, 4294901760
  %v4936 = vsub.f32 %v71, %v4935
  %v4937 = vand.u32 %v4936, 4294901760
  %v4938 = vsub.f32 %v4936, %v4937
  %v4939 = vand.u32 %v4938, 4294901760
  %4940 = vmatpush1.xpose.msra.mxu0 %v4939
  %4941 = vmatprep.subr.mxu0 0.0
  %v4942 = vand.u32 %v74, 4294901760
  %v4943 = vsub.f32 %v74, %v4942
  %v4944 = vand.u32 %v4943, 4294901760
  %v4945 = vsub.f32 %v4943, %v4944
  %v4946 = vand.u32 %v4945, 4294901760
  %4947 = vmatpush1.xpose.msra.mxu0 %v4946
  %4948 = vmatprep.subr.mxu0 0.0
  %4949 = vmatpush1.xpose.msra.mxu0 0.0
  %4950 = vmatprep.subr.mxu0 0.0
  %4951 = vmatpush1.xpose.msra.mxu0 0.0
  %4952 = vmatprep.subr.mxu0 0.0
  %4953 = vmatpush1.xpose.msra.mxu0 0.0
  %4954 = vmatprep.subr.mxu0 0.0
  %4955 = vmatpush1.xpose.msra.mxu0 0.0
  %4956 = vmatprep.subr.mxu0 0.0
  %4957 = vmatpush1.xpose.msra.mxu0 0.0
  %4958 = vmatprep.subr.mxu0 0.0
  %4959 = vmatpush1.xpose.msra.mxu0 0.0
  %4960 = vmatprep.subr.mxu0 0.0
  %4961 = vmatpush1.xpose.msra.mxu0 0.0
  %4962 = vmatprep.subr.mxu0 0.0
  %4963 = vmatpush1.xpose.msra.mxu0 0.0
  %4964 = vmatprep.subr.mxu0 0.0
  %4965 = vmatpush1.xpose.msra.mxu0 0.0
  %4966 = vmatprep.subr.mxu0 0.0
  %4967 = vmatpush1.xpose.msra.mxu0 0.0
  %4968 = vmatprep.subr.mxu0 0.0
  %4969 = vmatpush1.xpose.msra.mxu0 0.0
  %4970 = vmatprep.subr.mxu0 0.0
  %4971 = vmatpush1.xpose.msra.mxu0 0.0
  %4972 = vmatprep.subr.mxu0 0.0
  %4973 = vmatpush1.xpose.msra.mxu0 0.0
  %4974 = vmatprep.subr.mxu0 0.0
  %4975 = vmatpush1.xpose.msra.mxu0 0.0
  %4976 = vmatprep.subr.mxu0 0.0
  %4977 = vmatpush1.xpose.msra.mxu0 0.0
  %4978 = vmatprep.subr.mxu0 0.0
  %4979 = vmatpush1.xpose.msra.mxu0 0.0
  %4980 = vmatprep.subr.mxu0 0.0
  %4981 = vmatpush1.xpose.msra.mxu0 0.0
  %4982 = vmatprep.subr.mxu0 0.0
  %4983 = vmatpush1.xpose.msra.mxu0 0.0
  %4984 = vmatprep.subr.mxu0 0.0
  %4985 = vmatpush1.xpose.msra.mxu0 0.0
  %4986 = vmatprep.subr.mxu0 0.0
  %4987 = vmatpush1.xpose.msra.mxu0 0.0
  %4988 = vmatprep.subr.mxu0 0.0
  %4989 = vmatpush1.xpose.msra.mxu0 0.0
  %4990 = vmatprep.subr.mxu0 0.0
  %4991 = vmatpush1.xpose.msra.mxu0 0.0
  %4992 = vmatprep.subr.mxu0 0.0
  %4993 = vmatpush1.xpose.msra.mxu0 0.0
  %4994 = vmatprep.subr.mxu0 0.0
  %4995 = vmatpush1.xpose.msra.mxu0 0.0
  %4996 = vmatprep.mubr.f32.mxu0 0.0
  %v4997 = vand.u32 %v4723, 4294901760
  %4998 = vmatmul.mubr.f32.gmra.mrb[0].mxu0 %v4997
  %v4999 = vpop.f32.mrb[0].mxu0
  %v5000 = vadd.f32 %v4819, %v4999
  %v5001 = vpop.f32.mrb[0].mxu0
  %5002 = vmatprep.mubr.f32.mxu0 0.0
  %v5003 = vand.u32 %v4725, 4294901760
  %5004 = vmatmul.mubr.f32.gmra.mrb[0].mxu0 %v5003
  %v5005 = vpop.f32.mrb[0].mxu0
  %v5006 = vadd.f32 %v4829, %v5005
  %v5007 = vpop.f32.mrb[0].mxu0
  %5008 = vmatprep.mubr.f32.mxu0 0.0
  %v5009 = vand.u32 %v4727, 4294901760
  %5010 = vmatmul.mubr.f32.gmra.mrb[0].mxu0 %v5009
  %v5011 = vpop.f32.mrb[0].mxu0
  %v5012 = vadd.f32 %v4839, %v5011
  %v5013 = vpop.f32.mrb[0].mxu0
  %5014 = vmatprep.mubr.f32.mxu0 0.0
  %v5015 = vand.u32 %v4729, 4294901760
  %5016 = vmatmul.mubr.f32.gmra.mrb[0].mxu0 %v5015
  %v5017 = vpop.f32.mrb[0].mxu0
  %v5018 = vadd.f32 %v4849, %v5017
  %v5019 = vpop.f32.mrb[0].mxu0
  %5020 = vmatprep.mubr.f32.mxu0 0.0
  %v5021 = vand.u32 %v4731, 4294901760
  %5022 = vmatmul.mubr.f32.gmra.mrb[0].mxu0 %v5021
  %v5023 = vpop.f32.mrb[0].mxu0
  %v5024 = vadd.f32 %v4859, %v5023
  %v5025 = vpop.f32.mrb[0].mxu0
  %5026 = vmatprep.mubr.f32.mxu0 0.0
  %v5027 = vand.u32 %v4733, 4294901760
  %5028 = vmatmul.mubr.f32.gmra.mrb[0].mxu0 %v5027
  %v5029 = vpop.f32.mrb[0].mxu0
  %v5030 = vadd.f32 %v4869, %v5029
  %v5031 = vpop.f32.mrb[0].mxu0
  %5032 = vmatprep.mubr.f32.mxu0 0.0
  %v5033 = vand.u32 %v4735, 4294901760
  %5034 = vmatmul.mubr.f32.gmra.mrb[0].mxu0 %v5033
  %v5035 = vpop.f32.mrb[0].mxu0
  %v5036 = vadd.f32 %v4879, %v5035
  %v5037 = vpop.f32.mrb[0].mxu0
  %5038 = vmatprep.mubr.f32.mxu0 0.0
  %v5039 = vand.u32 %v4737, 4294901760
  %5040 = vmatmul.mubr.f32.gmra.mrb[0].mxu0 %v5039
  %v5041 = vpop.f32.mrb[0].mxu0
  %v5042 = vadd.f32 %v4889, %v5041
  %v5043 = vpop.f32.mrb[0].mxu0
  %5044 = vdwg.mxu0
  %5045 = vmatprep.subr.mxu0 0.0
  %v5046 = vand.u32 %v53, 4294901760
  %v5047 = vsub.f32 %v53, %v5046
  %5048 = vmatpush1.xpose.msra.mxu0 %v5047
  %5049 = vmatprep.subr.mxu0 0.0
  %v5050 = vand.u32 %v56, 4294901760
  %v5051 = vsub.f32 %v56, %v5050
  %5052 = vmatpush1.xpose.msra.mxu0 %v5051
  %5053 = vmatprep.subr.mxu0 0.0
  %v5054 = vand.u32 %v59, 4294901760
  %v5055 = vsub.f32 %v59, %v5054
  %5056 = vmatpush1.xpose.msra.mxu0 %v5055
  %5057 = vmatprep.subr.mxu0 0.0
  %v5058 = vand.u32 %v62, 4294901760
  %v5059 = vsub.f32 %v62, %v5058
  %5060 = vmatpush1.xpose.msra.mxu0 %v5059
  %5061 = vmatprep.subr.mxu0 0.0
  %v5062 = vand.u32 %v65, 4294901760
  %v5063 = vsub.f32 %v65, %v5062
  %5064 = vmatpush1.xpose.msra.mxu0 %v5063
  %5065 = vmatprep.subr.mxu0 0.0
  %v5066 = vand.u32 %v68, 4294901760
  %v5067 = vsub.f32 %v68, %v5066
  %5068 = vmatpush1.xpose.msra.mxu0 %v5067
  %5069 = vmatprep.subr.mxu0 0.0
  %v5070 = vand.u32 %v71, 4294901760
  %v5071 = vsub.f32 %v71, %v5070
  %5072 = vmatpush1.xpose.msra.mxu0 %v5071
  %5073 = vmatprep.subr.mxu0 0.0
  %v5074 = vand.u32 %v74, 4294901760
  %v5075 = vsub.f32 %v74, %v5074
  %5076 = vmatpush1.xpose.msra.mxu0 %v5075
  %5077 = vmatprep.subr.mxu0 0.0
  %5078 = vmatpush1.xpose.msra.mxu0 0.0
  %5079 = vmatprep.subr.mxu0 0.0
  %5080 = vmatpush1.xpose.msra.mxu0 0.0
  %5081 = vmatprep.subr.mxu0 0.0
  %5082 = vmatpush1.xpose.msra.mxu0 0.0
  %5083 = vmatprep.subr.mxu0 0.0
  %5084 = vmatpush1.xpose.msra.mxu0 0.0
  %5085 = vmatprep.subr.mxu0 0.0
  %5086 = vmatpush1.xpose.msra.mxu0 0.0
  %5087 = vmatprep.subr.mxu0 0.0
  %5088 = vmatpush1.xpose.msra.mxu0 0.0
  %5089 = vmatprep.subr.mxu0 0.0
  %5090 = vmatpush1.xpose.msra.mxu0 0.0
  %5091 = vmatprep.subr.mxu0 0.0
  %5092 = vmatpush1.xpose.msra.mxu0 0.0
  %5093 = vmatprep.subr.mxu0 0.0
  %5094 = vmatpush1.xpose.msra.mxu0 0.0
  %5095 = vmatprep.subr.mxu0 0.0
  %5096 = vmatpush1.xpose.msra.mxu0 0.0
  %5097 = vmatprep.subr.mxu0 0.0
  %5098 = vmatpush1.xpose.msra.mxu0 0.0
  %5099 = vmatprep.subr.mxu0 0.0
  %5100 = vmatpush1.xpose.msra.mxu0 0.0
  %5101 = vmatprep.subr.mxu0 0.0
  %5102 = vmatpush1.xpose.msra.mxu0 0.0
  %5103 = vmatprep.subr.mxu0 0.0
  %5104 = vmatpush1.xpose.msra.mxu0 0.0
  %5105 = vmatprep.subr.mxu0 0.0
  %5106 = vmatpush1.xpose.msra.mxu0 0.0
  %5107 = vmatprep.subr.mxu0 0.0
  %5108 = vmatpush1.xpose.msra.mxu0 0.0
  %5109 = vmatprep.subr.mxu0 0.0
  %5110 = vmatpush1.xpose.msra.mxu0 0.0
  %5111 = vmatprep.subr.mxu0 0.0
  %5112 = vmatpush1.xpose.msra.mxu0 0.0
  %5113 = vmatprep.subr.mxu0 0.0
  %5114 = vmatpush1.xpose.msra.mxu0 0.0
  %5115 = vmatprep.subr.mxu0 0.0
  %5116 = vmatpush1.xpose.msra.mxu0 0.0
  %5117 = vmatprep.subr.mxu0 0.0
  %5118 = vmatpush1.xpose.msra.mxu0 0.0
  %5119 = vmatprep.subr.mxu0 0.0
  %5120 = vmatpush1.xpose.msra.mxu0 0.0
  %5121 = vmatprep.subr.mxu0 0.0
  %5122 = vmatpush1.xpose.msra.mxu0 0.0
  %5123 = vmatprep.subr.mxu0 0.0
  %5124 = vmatpush1.xpose.msra.mxu0 0.0
  %5125 = vmatprep.mubr.f32.mxu0 0.0
  %v5126 = vand.u32 %v4723, 4294901760
  %v5127 = vsub.f32 %v4723, %v5126
  %5128 = vmatmul.mubr.f32.gmra.mrb[0].mxu0 %v5127
  %v5129 = vpop.f32.mrb[0].mxu0
  %v5130 = vadd.f32 %v5000, %v5129
  %v5131 = vpop.f32.mrb[0].mxu0
  %5132 = vmatprep.mubr.f32.mxu0 0.0
  %v5133 = vand.u32 %v4725, 4294901760
  %v5134 = vsub.f32 %v4725, %v5133
  %5135 = vmatmul.mubr.f32.gmra.mrb[0].mxu0 %v5134
  %v5136 = vpop.f32.mrb[0].mxu0
  %v5137 = vadd.f32 %v5006, %v5136
  %v5138 = vpop.f32.mrb[0].mxu0
  %5139 = vmatprep.mubr.f32.mxu0 0.0
  %v5140 = vand.u32 %v4727, 4294901760
  %v5141 = vsub.f32 %v4727, %v5140
  %5142 = vmatmul.mubr.f32.gmra.mrb[0].mxu0 %v5141
  %v5143 = vpop.f32.mrb[0].mxu0
  %v5144 = vadd.f32 %v5012, %v5143
  %v5145 = vpop.f32.mrb[0].mxu0
  %5146 = vmatprep.mubr.f32.mxu0 0.0
  %v5147 = vand.u32 %v4729, 4294901760
  %v5148 = vsub.f32 %v4729, %v5147
  %5149 = vmatmul.mubr.f32.gmra.mrb[0].mxu0 %v5148
  %v5150 = vpop.f32.mrb[0].mxu0
  %v5151 = vadd.f32 %v5018, %v5150
  %v5152 = vpop.f32.mrb[0].mxu0
  %5153 = vmatprep.mubr.f32.mxu0 0.0
  %v5154 = vand.u32 %v4731, 4294901760
  %v5155 = vsub.f32 %v4731, %v5154
  %5156 = vmatmul.mubr.f32.gmra.mrb[0].mxu0 %v5155
  %v5157 = vpop.f32.mrb[0].mxu0
  %v5158 = vadd.f32 %v5024, %v5157
  %v5159 = vpop.f32.mrb[0].mxu0
  %5160 = vmatprep.mubr.f32.mxu0 0.0
  %v5161 = vand.u32 %v4733, 4294901760
  %v5162 = vsub.f32 %v4733, %v5161
  %5163 = vmatmul.mubr.f32.gmra.mrb[0].mxu0 %v5162
  %v5164 = vpop.f32.mrb[0].mxu0
  %v5165 = vadd.f32 %v5030, %v5164
  %v5166 = vpop.f32.mrb[0].mxu0
  %5167 = vmatprep.mubr.f32.mxu0 0.0
  %v5168 = vand.u32 %v4735, 4294901760
  %v5169 = vsub.f32 %v4735, %v5168
  %5170 = vmatmul.mubr.f32.gmra.mrb[0].mxu0 %v5169
  %v5171 = vpop.f32.mrb[0].mxu0
  %v5172 = vadd.f32 %v5036, %v5171
  %v5173 = vpop.f32.mrb[0].mxu0
  %5174 = vmatprep.mubr.f32.mxu0 0.0
  %v5175 = vand.u32 %v4737, 4294901760
  %v5176 = vsub.f32 %v4737, %v5175
  %5177 = vmatmul.mubr.f32.gmra.mrb[0].mxu0 %v5176
  %v5178 = vpop.f32.mrb[0].mxu0
  %v5179 = vadd.f32 %v5042, %v5178
  %v5180 = vpop.f32.mrb[0].mxu0
  %5181 = vdwg.mxu0
  %5182 = vmatprep.subr.mxu0 0.0
  %v5183 = vand.u32 %v53, 4294901760
  %5184 = vmatpush1.xpose.msra.mxu0 %v5183
  %5185 = vmatprep.subr.mxu0 0.0
  %v5186 = vand.u32 %v56, 4294901760
  %5187 = vmatpush1.xpose.msra.mxu0 %v5186
  %5188 = vmatprep.subr.mxu0 0.0
  %v5189 = vand.u32 %v59, 4294901760
  %5190 = vmatpush1.xpose.msra.mxu0 %v5189
  %5191 = vmatprep.subr.mxu0 0.0
  %v5192 = vand.u32 %v62, 4294901760
  %5193 = vmatpush1.xpose.msra.mxu0 %v5192
  %5194 = vmatprep.subr.mxu0 0.0
  %v5195 = vand.u32 %v65, 4294901760
  %5196 = vmatpush1.xpose.msra.mxu0 %v5195
  %5197 = vmatprep.subr.mxu0 0.0
  %v5198 = vand.u32 %v68, 4294901760
  %5199 = vmatpush1.xpose.msra.mxu0 %v5198
  %5200 = vmatprep.subr.mxu0 0.0
  %v5201 = vand.u32 %v71, 4294901760
  %5202 = vmatpush1.xpose.msra.mxu0 %v5201
  %5203 = vmatprep.subr.mxu0 0.0
  %v5204 = vand.u32 %v74, 4294901760
  %5205 = vmatpush1.xpose.msra.mxu0 %v5204
  %5206 = vmatprep.subr.mxu0 0.0
  %5207 = vmatpush1.xpose.msra.mxu0 0.0
  %5208 = vmatprep.subr.mxu0 0.0
  %5209 = vmatpush1.xpose.msra.mxu0 0.0
  %5210 = vmatprep.subr.mxu0 0.0
  %5211 = vmatpush1.xpose.msra.mxu0 0.0
  %5212 = vmatprep.subr.mxu0 0.0
  %5213 = vmatpush1.xpose.msra.mxu0 0.0
  %5214 = vmatprep.subr.mxu0 0.0
  %5215 = vmatpush1.xpose.msra.mxu0 0.0
  %5216 = vmatprep.subr.mxu0 0.0
  %5217 = vmatpush1.xpose.msra.mxu0 0.0
  %5218 = vmatprep.subr.mxu0 0.0
  %5219 = vmatpush1.xpose.msra.mxu0 0.0
  %5220 = vmatprep.subr.mxu0 0.0
  %5221 = vmatpush1.xpose.msra.mxu0 0.0
  %5222 = vmatprep.subr.mxu0 0.0
  %5223 = vmatpush1.xpose.msra.mxu0 0.0
  %5224 = vmatprep.subr.mxu0 0.0
  %5225 = vmatpush1.xpose.msra.mxu0 0.0
  %5226 = vmatprep.subr.mxu0 0.0
  %5227 = vmatpush1.xpose.msra.mxu0 0.0
  %5228 = vmatprep.subr.mxu0 0.0
  %5229 = vmatpush1.xpose.msra.mxu0 0.0
  %5230 = vmatprep.subr.mxu0 0.0
  %5231 = vmatpush1.xpose.msra.mxu0 0.0
  %5232 = vmatprep.subr.mxu0 0.0
  %5233 = vmatpush1.xpose.msra.mxu0 0.0
  %5234 = vmatprep.subr.mxu0 0.0
  %5235 = vmatpush1.xpose.msra.mxu0 0.0
  %5236 = vmatprep.subr.mxu0 0.0
  %5237 = vmatpush1.xpose.msra.mxu0 0.0
  %5238 = vmatprep.subr.mxu0 0.0
  %5239 = vmatpush1.xpose.msra.mxu0 0.0
  %5240 = vmatprep.subr.mxu0 0.0
  %5241 = vmatpush1.xpose.msra.mxu0 0.0
  %5242 = vmatprep.subr.mxu0 0.0
  %5243 = vmatpush1.xpose.msra.mxu0 0.0
  %5244 = vmatprep.subr.mxu0 0.0
  %5245 = vmatpush1.xpose.msra.mxu0 0.0
  %5246 = vmatprep.subr.mxu0 0.0
  %5247 = vmatpush1.xpose.msra.mxu0 0.0
  %5248 = vmatprep.subr.mxu0 0.0
  %5249 = vmatpush1.xpose.msra.mxu0 0.0
  %5250 = vmatprep.subr.mxu0 0.0
  %5251 = vmatpush1.xpose.msra.mxu0 0.0
  %5252 = vmatprep.subr.mxu0 0.0
  %5253 = vmatpush1.xpose.msra.mxu0 0.0
  %5254 = vmatprep.mubr.f32.mxu0 0.0
  %v5255 = vand.u32 %v4723, 4294901760
  %v5256 = vsub.f32 %v4723, %v5255
  %v5257 = vand.u32 %v5256, 4294901760
  %5258 = vmatmul.mubr.f32.gmra.mrb[0].mxu0 %v5257
  %v5259 = vpop.f32.mrb[0].mxu0
  %v5260 = vadd.f32 %v5130, %v5259
  %v5261 = vpop.f32.mrb[0].mxu0
  %5262 = vmatprep.mubr.f32.mxu0 0.0
  %v5263 = vand.u32 %v4725, 4294901760
  %v5264 = vsub.f32 %v4725, %v5263
  %v5265 = vand.u32 %v5264, 4294901760
  %5266 = vmatmul.mubr.f32.gmra.mrb[0].mxu0 %v5265
  %v5267 = vpop.f32.mrb[0].mxu0
  %v5268 = vadd.f32 %v5137, %v5267
  %v5269 = vpop.f32.mrb[0].mxu0
  %5270 = vmatprep.mubr.f32.mxu0 0.0
  %v5271 = vand.u32 %v4727, 4294901760
  %v5272 = vsub.f32 %v4727, %v5271
  %v5273 = vand.u32 %v5272, 4294901760
  %5274 = vmatmul.mubr.f32.gmra.mrb[0].mxu0 %v5273
  %v5275 = vpop.f32.mrb[0].mxu0
  %v5276 = vadd.f32 %v5144, %v5275
  %v5277 = vpop.f32.mrb[0].mxu0
  %5278 = vmatprep.mubr.f32.mxu0 0.0
  %v5279 = vand.u32 %v4729, 4294901760
  %v5280 = vsub.f32 %v4729, %v5279
  %v5281 = vand.u32 %v5280, 4294901760
  %5282 = vmatmul.mubr.f32.gmra.mrb[0].mxu0 %v5281
  %v5283 = vpop.f32.mrb[0].mxu0
  %v5284 = vadd.f32 %v5151, %v5283
  %v5285 = vpop.f32.mrb[0].mxu0
  %5286 = vmatprep.mubr.f32.mxu0 0.0
  %v5287 = vand.u32 %v4731, 4294901760
  %v5288 = vsub.f32 %v4731, %v5287
  %v5289 = vand.u32 %v5288, 4294901760
  %5290 = vmatmul.mubr.f32.gmra.mrb[0].mxu0 %v5289
  %v5291 = vpop.f32.mrb[0].mxu0
  %v5292 = vadd.f32 %v5158, %v5291
  %v5293 = vpop.f32.mrb[0].mxu0
  %5294 = vmatprep.mubr.f32.mxu0 0.0
  %v5295 = vand.u32 %v4733, 4294901760
  %v5296 = vsub.f32 %v4733, %v5295
  %v5297 = vand.u32 %v5296, 4294901760
  %5298 = vmatmul.mubr.f32.gmra.mrb[0].mxu0 %v5297
  %v5299 = vpop.f32.mrb[0].mxu0
  %v5300 = vadd.f32 %v5165, %v5299
  %v5301 = vpop.f32.mrb[0].mxu0
  %5302 = vmatprep.mubr.f32.mxu0 0.0
  %v5303 = vand.u32 %v4735, 4294901760
  %v5304 = vsub.f32 %v4735, %v5303
  %v5305 = vand.u32 %v5304, 4294901760
  %5306 = vmatmul.mubr.f32.gmra.mrb[0].mxu0 %v5305
  %v5307 = vpop.f32.mrb[0].mxu0
  %v5308 = vadd.f32 %v5172, %v5307
  %v5309 = vpop.f32.mrb[0].mxu0
  %5310 = vmatprep.mubr.f32.mxu0 0.0
  %v5311 = vand.u32 %v4737, 4294901760
  %v5312 = vsub.f32 %v4737, %v5311
  %v5313 = vand.u32 %v5312, 4294901760
  %5314 = vmatmul.mubr.f32.gmra.mrb[0].mxu0 %v5313
  %v5315 = vpop.f32.mrb[0].mxu0
  %v5316 = vadd.f32 %v5179, %v5315
  %v5317 = vpop.f32.mrb[0].mxu0
  %5318 = vdwg.mxu0
  %5319 = vmatprep.subr.mxu0 0.0
  %v5320 = vand.u32 %v53, 4294901760
  %v5321 = vsub.f32 %v53, %v5320
  %v5322 = vand.u32 %v5321, 4294901760
  %5323 = vmatpush1.xpose.msra.mxu0 %v5322
  %5324 = vmatprep.subr.mxu0 0.0
  %v5325 = vand.u32 %v56, 4294901760
  %v5326 = vsub.f32 %v56, %v5325
  %v5327 = vand.u32 %v5326, 4294901760
  %5328 = vmatpush1.xpose.msra.mxu0 %v5327
  %5329 = vmatprep.subr.mxu0 0.0
  %v5330 = vand.u32 %v59, 4294901760
  %v5331 = vsub.f32 %v59, %v5330
  %v5332 = vand.u32 %v5331, 4294901760
  %5333 = vmatpush1.xpose.msra.mxu0 %v5332
  %5334 = vmatprep.subr.mxu0 0.0
  %v5335 = vand.u32 %v62, 4294901760
  %v5336 = vsub.f32 %v62, %v5335
  %v5337 = vand.u32 %v5336, 4294901760
  %5338 = vmatpush1.xpose.msra.mxu0 %v5337
  %5339 = vmatprep.subr.mxu0 0.0
  %v5340 = vand.u32 %v65, 4294901760
  %v5341 = vsub.f32 %v65, %v5340
  %v5342 = vand.u32 %v5341, 4294901760
  %5343 = vmatpush1.xpose.msra.mxu0 %v5342
  %5344 = vmatprep.subr.mxu0 0.0
  %v5345 = vand.u32 %v68, 4294901760
  %v5346 = vsub.f32 %v68, %v5345
  %v5347 = vand.u32 %v5346, 4294901760
  %5348 = vmatpush1.xpose.msra.mxu0 %v5347
  %5349 = vmatprep.subr.mxu0 0.0
  %v5350 = vand.u32 %v71, 4294901760
  %v5351 = vsub.f32 %v71, %v5350
  %v5352 = vand.u32 %v5351, 4294901760
  %5353 = vmatpush1.xpose.msra.mxu0 %v5352
  %5354 = vmatprep.subr.mxu0 0.0
  %v5355 = vand.u32 %v74, 4294901760
  %v5356 = vsub.f32 %v74, %v5355
  %v5357 = vand.u32 %v5356, 4294901760
  %5358 = vmatpush1.xpose.msra.mxu0 %v5357
  %5359 = vmatprep.subr.mxu0 0.0
  %5360 = vmatpush1.xpose.msra.mxu0 0.0
  %5361 = vmatprep.subr.mxu0 0.0
  %5362 = vmatpush1.xpose.msra.mxu0 0.0
  %5363 = vmatprep.subr.mxu0 0.0
  %5364 = vmatpush1.xpose.msra.mxu0 0.0
  %5365 = vmatprep.subr.mxu0 0.0
  %5366 = vmatpush1.xpose.msra.mxu0 0.0
  %5367 = vmatprep.subr.mxu0 0.0
  %5368 = vmatpush1.xpose.msra.mxu0 0.0
  %5369 = vmatprep.subr.mxu0 0.0
  %5370 = vmatpush1.xpose.msra.mxu0 0.0
  %5371 = vmatprep.subr.mxu0 0.0
  %5372 = vmatpush1.xpose.msra.mxu0 0.0
  %5373 = vmatprep.subr.mxu0 0.0
  %5374 = vmatpush1.xpose.msra.mxu0 0.0
  %5375 = vmatprep.subr.mxu0 0.0
  %5376 = vmatpush1.xpose.msra.mxu0 0.0
  %5377 = vmatprep.subr.mxu0 0.0
  %5378 = vmatpush1.xpose.msra.mxu0 0.0
  %5379 = vmatprep.subr.mxu0 0.0
  %5380 = vmatpush1.xpose.msra.mxu0 0.0
  %5381 = vmatprep.subr.mxu0 0.0
  %5382 = vmatpush1.xpose.msra.mxu0 0.0
  %5383 = vmatprep.subr.mxu0 0.0
  %5384 = vmatpush1.xpose.msra.mxu0 0.0
  %5385 = vmatprep.subr.mxu0 0.0
  %5386 = vmatpush1.xpose.msra.mxu0 0.0
  %5387 = vmatprep.subr.mxu0 0.0
  %5388 = vmatpush1.xpose.msra.mxu0 0.0
  %5389 = vmatprep.subr.mxu0 0.0
  %5390 = vmatpush1.xpose.msra.mxu0 0.0
  %5391 = vmatprep.subr.mxu0 0.0
  %5392 = vmatpush1.xpose.msra.mxu0 0.0
  %5393 = vmatprep.subr.mxu0 0.0
  %5394 = vmatpush1.xpose.msra.mxu0 0.0
  %5395 = vmatprep.subr.mxu0 0.0
  %5396 = vmatpush1.xpose.msra.mxu0 0.0
  %5397 = vmatprep.subr.mxu0 0.0
  %5398 = vmatpush1.xpose.msra.mxu0 0.0
  %5399 = vmatprep.subr.mxu0 0.0
  %5400 = vmatpush1.xpose.msra.mxu0 0.0
  %5401 = vmatprep.subr.mxu0 0.0
  %5402 = vmatpush1.xpose.msra.mxu0 0.0
  %5403 = vmatprep.subr.mxu0 0.0
  %5404 = vmatpush1.xpose.msra.mxu0 0.0
  %5405 = vmatprep.subr.mxu0 0.0
  %5406 = vmatpush1.xpose.msra.mxu0 0.0
  %5407 = vmatprep.mubr.f32.mxu0 0.0
  %v5408 = vand.u32 %v4723, 4294901760
  %5409 = vmatmul.mubr.f32.gmra.mrb[0].mxu0 %v5408
  %v5410 = vpop.f32.mrb[0].mxu0
  %v5411 = vadd.f32 %v5260, %v5410
  %v5412 = vpop.f32.mrb[0].mxu0
  %5413 = vmatprep.mubr.f32.mxu0 0.0
  %v5414 = vand.u32 %v4725, 4294901760
  %5415 = vmatmul.mubr.f32.gmra.mrb[0].mxu0 %v5414
  %v5416 = vpop.f32.mrb[0].mxu0
  %v5417 = vadd.f32 %v5268, %v5416
  %v5418 = vpop.f32.mrb[0].mxu0
  %5419 = vmatprep.mubr.f32.mxu0 0.0
  %v5420 = vand.u32 %v4727, 4294901760
  %5421 = vmatmul.mubr.f32.gmra.mrb[0].mxu0 %v5420
  %v5422 = vpop.f32.mrb[0].mxu0
  %v5423 = vadd.f32 %v5276, %v5422
  %v5424 = vpop.f32.mrb[0].mxu0
  %5425 = vmatprep.mubr.f32.mxu0 0.0
  %v5426 = vand.u32 %v4729, 4294901760
  %5427 = vmatmul.mubr.f32.gmra.mrb[0].mxu0 %v5426
  %v5428 = vpop.f32.mrb[0].mxu0
  %v5429 = vadd.f32 %v5284, %v5428
  %v5430 = vpop.f32.mrb[0].mxu0
  %5431 = vmatprep.mubr.f32.mxu0 0.0
  %v5432 = vand.u32 %v4731, 4294901760
  %5433 = vmatmul.mubr.f32.gmra.mrb[0].mxu0 %v5432
  %v5434 = vpop.f32.mrb[0].mxu0
  %v5435 = vadd.f32 %v5292, %v5434
  %v5436 = vpop.f32.mrb[0].mxu0
  %5437 = vmatprep.mubr.f32.mxu0 0.0
  %v5438 = vand.u32 %v4733, 4294901760
  %5439 = vmatmul.mubr.f32.gmra.mrb[0].mxu0 %v5438
  %v5440 = vpop.f32.mrb[0].mxu0
  %v5441 = vadd.f32 %v5300, %v5440
  %v5442 = vpop.f32.mrb[0].mxu0
  %5443 = vmatprep.mubr.f32.mxu0 0.0
  %v5444 = vand.u32 %v4735, 4294901760
  %5445 = vmatmul.mubr.f32.gmra.mrb[0].mxu0 %v5444
  %v5446 = vpop.f32.mrb[0].mxu0
  %v5447 = vadd.f32 %v5308, %v5446
  %v5448 = vpop.f32.mrb[0].mxu0
  %5449 = vmatprep.mubr.f32.mxu0 0.0
  %v5450 = vand.u32 %v4737, 4294901760
  %5451 = vmatmul.mubr.f32.gmra.mrb[0].mxu0 %v5450
  %v5452 = vpop.f32.mrb[0].mxu0
  %v5453 = vadd.f32 %v5316, %v5452
  %v5454 = vpop.f32.mrb[0].mxu0
  %5455 = vdwg.mxu0
  %5456 = vmatprep.subr.mxu0 0.0
  %v5457 = vand.u32 %v53, 4294901760
  %5458 = vmatpush1.xpose.msra.mxu0 %v5457
  %5459 = vmatprep.subr.mxu0 0.0
  %v5460 = vand.u32 %v56, 4294901760
  %5461 = vmatpush1.xpose.msra.mxu0 %v5460
  %5462 = vmatprep.subr.mxu0 0.0
  %v5463 = vand.u32 %v59, 4294901760
  %5464 = vmatpush1.xpose.msra.mxu0 %v5463
  %5465 = vmatprep.subr.mxu0 0.0
  %v5466 = vand.u32 %v62, 4294901760
  %5467 = vmatpush1.xpose.msra.mxu0 %v5466
  %5468 = vmatprep.subr.mxu0 0.0
  %v5469 = vand.u32 %v65, 4294901760
  %5470 = vmatpush1.xpose.msra.mxu0 %v5469
  %5471 = vmatprep.subr.mxu0 0.0
  %v5472 = vand.u32 %v68, 4294901760
  %5473 = vmatpush1.xpose.msra.mxu0 %v5472
  %5474 = vmatprep.subr.mxu0 0.0
  %v5475 = vand.u32 %v71, 4294901760
  %5476 = vmatpush1.xpose.msra.mxu0 %v5475
  %5477 = vmatprep.subr.mxu0 0.0
  %v5478 = vand.u32 %v74, 4294901760
  %5479 = vmatpush1.xpose.msra.mxu0 %v5478
  %5480 = vmatprep.subr.mxu0 0.0
  %5481 = vmatpush1.xpose.msra.mxu0 0.0
  %5482 = vmatprep.subr.mxu0 0.0
  %5483 = vmatpush1.xpose.msra.mxu0 0.0
  %5484 = vmatprep.subr.mxu0 0.0
  %5485 = vmatpush1.xpose.msra.mxu0 0.0
  %5486 = vmatprep.subr.mxu0 0.0
  %5487 = vmatpush1.xpose.msra.mxu0 0.0
  %5488 = vmatprep.subr.mxu0 0.0
  %5489 = vmatpush1.xpose.msra.mxu0 0.0
  %5490 = vmatprep.subr.mxu0 0.0
  %5491 = vmatpush1.xpose.msra.mxu0 0.0
  %5492 = vmatprep.subr.mxu0 0.0
  %5493 = vmatpush1.xpose.msra.mxu0 0.0
  %5494 = vmatprep.subr.mxu0 0.0
  %5495 = vmatpush1.xpose.msra.mxu0 0.0
  %5496 = vmatprep.subr.mxu0 0.0
  %5497 = vmatpush1.xpose.msra.mxu0 0.0
  %5498 = vmatprep.subr.mxu0 0.0
  %5499 = vmatpush1.xpose.msra.mxu0 0.0
  %5500 = vmatprep.subr.mxu0 0.0
  %5501 = vmatpush1.xpose.msra.mxu0 0.0
  %5502 = vmatprep.subr.mxu0 0.0
  %5503 = vmatpush1.xpose.msra.mxu0 0.0
  %5504 = vmatprep.subr.mxu0 0.0
  %5505 = vmatpush1.xpose.msra.mxu0 0.0
  %5506 = vmatprep.subr.mxu0 0.0
  %5507 = vmatpush1.xpose.msra.mxu0 0.0
  %5508 = vmatprep.subr.mxu0 0.0
  %5509 = vmatpush1.xpose.msra.mxu0 0.0
  %5510 = vmatprep.subr.mxu0 0.0
  %5511 = vmatpush1.xpose.msra.mxu0 0.0
  %5512 = vmatprep.subr.mxu0 0.0
  %5513 = vmatpush1.xpose.msra.mxu0 0.0
  %5514 = vmatprep.subr.mxu0 0.0
  %5515 = vmatpush1.xpose.msra.mxu0 0.0
  %5516 = vmatprep.subr.mxu0 0.0
  %5517 = vmatpush1.xpose.msra.mxu0 0.0
  %5518 = vmatprep.subr.mxu0 0.0
  %5519 = vmatpush1.xpose.msra.mxu0 0.0
  %5520 = vmatprep.subr.mxu0 0.0
  %5521 = vmatpush1.xpose.msra.mxu0 0.0
  %5522 = vmatprep.subr.mxu0 0.0
  %5523 = vmatpush1.xpose.msra.mxu0 0.0
  %5524 = vmatprep.subr.mxu0 0.0
  %5525 = vmatpush1.xpose.msra.mxu0 0.0
  %5526 = vmatprep.subr.mxu0 0.0
  %5527 = vmatpush1.xpose.msra.mxu0 0.0
  %5528 = vmatprep.mubr.f32.mxu0 0.0
  %v5529 = vand.u32 %v4723, 4294901760
  %5530 = vmatmul.mubr.f32.gmra.mrb[0].mxu0 %v5529
  %v5531 = vpop.f32.mrb[0].mxu0
  %v5532 = vadd.f32 %v5411, %v5531
  %v5533 = vpop.f32.mrb[0].mxu0
  %5534 = vmatprep.mubr.f32.mxu0 0.0
  %v5535 = vand.u32 %v4725, 4294901760
  %5536 = vmatmul.mubr.f32.gmra.mrb[0].mxu0 %v5535
  %v5537 = vpop.f32.mrb[0].mxu0
  %v5538 = vadd.f32 %v5417, %v5537
  %v5539 = vpop.f32.mrb[0].mxu0
  %5540 = vmatprep.mubr.f32.mxu0 0.0
  %v5541 = vand.u32 %v4727, 4294901760
  %5542 = vmatmul.mubr.f32.gmra.mrb[0].mxu0 %v5541
  %v5543 = vpop.f32.mrb[0].mxu0
  %v5544 = vadd.f32 %v5423, %v5543
  %v5545 = vpop.f32.mrb[0].mxu0
  %5546 = vmatprep.mubr.f32.mxu0 0.0
  %v5547 = vand.u32 %v4729, 4294901760
  %5548 = vmatmul.mubr.f32.gmra.mrb[0].mxu0 %v5547
  %v5549 = vpop.f32.mrb[0].mxu0
  %v5550 = vadd.f32 %v5429, %v5549
  %v5551 = vpop.f32.mrb[0].mxu0
  %5552 = vmatprep.mubr.f32.mxu0 0.0
  %v5553 = vand.u32 %v4731, 4294901760
  %5554 = vmatmul.mubr.f32.gmra.mrb[0].mxu0 %v5553
  %v5555 = vpop.f32.mrb[0].mxu0
  %v5556 = vadd.f32 %v5435, %v5555
  %v5557 = vpop.f32.mrb[0].mxu0
  %5558 = vmatprep.mubr.f32.mxu0 0.0
  %v5559 = vand.u32 %v4733, 4294901760
  %5560 = vmatmul.mubr.f32.gmra.mrb[0].mxu0 %v5559
  %v5561 = vpop.f32.mrb[0].mxu0
  %v5562 = vadd.f32 %v5441, %v5561
  %v5563 = vpop.f32.mrb[0].mxu0
  %5564 = vmatprep.mubr.f32.mxu0 0.0
  %v5565 = vand.u32 %v4735, 4294901760
  %5566 = vmatmul.mubr.f32.gmra.mrb[0].mxu0 %v5565
  %v5567 = vpop.f32.mrb[0].mxu0
  %v5568 = vadd.f32 %v5447, %v5567
  %v5569 = vpop.f32.mrb[0].mxu0
  %5570 = vmatprep.mubr.f32.mxu0 0.0
  %v5571 = vand.u32 %v4737, 4294901760
  %5572 = vmatmul.mubr.f32.gmra.mrb[0].mxu0 %v5571
  %v5573 = vpop.f32.mrb[0].mxu0
  %v5574 = vadd.f32 %v5453, %v5573
  %v5575 = vpop.f32.mrb[0].mxu0
  %5576 = vdwg.mxu0
  %5585 = vrot.lane.b32.xlu0 %v5532, 64
  %v5586 = vpop.permute.xlu0 %5585
  %5587 = vrot.lane.b32.xlu0 %v5538, 64
  %v5588 = vpop.permute.xlu0 %5587
  %5589 = vrot.lane.b32.xlu0 %v5544, 64
  %v5590 = vpop.permute.xlu0 %5589
  %5591 = vrot.lane.b32.xlu0 %v5550, 64
  %v5592 = vpop.permute.xlu0 %5591
  %5593 = vrot.lane.b32.xlu0 %v5556, 64
  %v5594 = vpop.permute.xlu0 %5593
  %5595 = vrot.lane.b32.xlu0 %v5562, 64
  %v5596 = vpop.permute.xlu0 %5595
  %5597 = vrot.lane.b32.xlu0 %v5568, 64
  %v5598 = vpop.permute.xlu0 %5597
  %5599 = vrot.lane.b32.xlu0 %v5574, 64
  %v5600 = vpop.permute.xlu0 %5599
  %5609 = vst.msk [vmem:[%s2 + $0x8] sm:$0xff] %vm3828, %v5586
  %5610 = vst.msk [vmem:[%s2 + $0x28] sm:$0xff] %vm3828, %v5588
  %5611 = vst.msk [vmem:[%s2 + $0x48] sm:$0xff] %vm3828, %v5590
  %5612 = vst.msk [vmem:[%s2 + $0x68] sm:$0xff] %vm3828, %v5592
  %5613 = vst.msk [vmem:[%s2 + $0x88] sm:$0xff] %vm3828, %v5594
  %5614 = vst.msk [vmem:[%s2 + $0xa8] sm:$0xff] %vm3828, %v5596
  %5615 = vst.msk [vmem:[%s2 + $0xc8] sm:$0xff] %vm3828, %v5598
  %5616 = vst.msk [vmem:[%s2 + $0xe8] sm:$0xff] %vm3828, %v5600
  %v5618 = vsel %vm51, %v2003, 0
  %v5621 = vsel %vm51, %v2010, 0
  %v5624 = vsel %vm51, %v2017, 0
  %v5627 = vsel %vm51, %v2024, 0
  %v5630 = vsel %vm51, %v2031, 0
  %v5633 = vsel %vm51, %v2038, 0
  %v5636 = vsel %vm51, %v2045, 0
  %v5639 = vsel %vm51, %v2052, 0
  %5641 = vmatprep.subr.mxu0 0.0
  %v5642 = vand.u32 %v53, 4294901760
  %5643 = vmatpush1.xpose.msra.mxu0 %v5642
  %5644 = vmatprep.subr.mxu0 0.0
  %v5645 = vand.u32 %v56, 4294901760
  %5646 = vmatpush1.xpose.msra.mxu0 %v5645
  %5647 = vmatprep.subr.mxu0 0.0
  %v5648 = vand.u32 %v59, 4294901760
  %5649 = vmatpush1.xpose.msra.mxu0 %v5648
  %5650 = vmatprep.subr.mxu0 0.0
  %v5651 = vand.u32 %v62, 4294901760
  %5652 = vmatpush1.xpose.msra.mxu0 %v5651
  %5653 = vmatprep.subr.mxu0 0.0
  %v5654 = vand.u32 %v65, 4294901760
  %5655 = vmatpush1.xpose.msra.mxu0 %v5654
  %5656 = vmatprep.subr.mxu0 0.0
  %v5657 = vand.u32 %v68, 4294901760
  %5658 = vmatpush1.xpose.msra.mxu0 %v5657
  %5659 = vmatprep.subr.mxu0 0.0
  %v5660 = vand.u32 %v71, 4294901760
  %5661 = vmatpush1.xpose.msra.mxu0 %v5660
  %5662 = vmatprep.subr.mxu0 0.0
  %v5663 = vand.u32 %v74, 4294901760
  %5664 = vmatpush1.xpose.msra.mxu0 %v5663
  %5665 = vmatprep.subr.mxu0 0.0
  %5666 = vmatpush1.xpose.msra.mxu0 0.0
  %5667 = vmatprep.subr.mxu0 0.0
  %5668 = vmatpush1.xpose.msra.mxu0 0.0
  %5669 = vmatprep.subr.mxu0 0.0
  %5670 = vmatpush1.xpose.msra.mxu0 0.0
  %5671 = vmatprep.subr.mxu0 0.0
  %5672 = vmatpush1.xpose.msra.mxu0 0.0
  %5673 = vmatprep.subr.mxu0 0.0
  %5674 = vmatpush1.xpose.msra.mxu0 0.0
  %5675 = vmatprep.subr.mxu0 0.0
  %5676 = vmatpush1.xpose.msra.mxu0 0.0
  %5677 = vmatprep.subr.mxu0 0.0
  %5678 = vmatpush1.xpose.msra.mxu0 0.0
  %5679 = vmatprep.subr.mxu0 0.0
  %5680 = vmatpush1.xpose.msra.mxu0 0.0
  %5681 = vmatprep.subr.mxu0 0.0
  %5682 = vmatpush1.xpose.msra.mxu0 0.0
  %5683 = vmatprep.subr.mxu0 0.0
  %5684 = vmatpush1.xpose.msra.mxu0 0.0
  %5685 = vmatprep.subr.mxu0 0.0
  %5686 = vmatpush1.xpose.msra.mxu0 0.0
  %5687 = vmatprep.subr.mxu0 0.0
  %5688 = vmatpush1.xpose.msra.mxu0 0.0
  %5689 = vmatprep.subr.mxu0 0.0
  %5690 = vmatpush1.xpose.msra.mxu0 0.0
  %5691 = vmatprep.subr.mxu0 0.0
  %5692 = vmatpush1.xpose.msra.mxu0 0.0
  %5693 = vmatprep.subr.mxu0 0.0
  %5694 = vmatpush1.xpose.msra.mxu0 0.0
  %5695 = vmatprep.subr.mxu0 0.0
  %5696 = vmatpush1.xpose.msra.mxu0 0.0
  %5697 = vmatprep.subr.mxu0 0.0
  %5698 = vmatpush1.xpose.msra.mxu0 0.0
  %5699 = vmatprep.subr.mxu0 0.0
  %5700 = vmatpush1.xpose.msra.mxu0 0.0
  %5701 = vmatprep.subr.mxu0 0.0
  %5702 = vmatpush1.xpose.msra.mxu0 0.0
  %5703 = vmatprep.subr.mxu0 0.0
  %5704 = vmatpush1.xpose.msra.mxu0 0.0
  %5705 = vmatprep.subr.mxu0 0.0
  %5706 = vmatpush1.xpose.msra.mxu0 0.0
  %5707 = vmatprep.subr.mxu0 0.0
  %5708 = vmatpush1.xpose.msra.mxu0 0.0
  %5709 = vmatprep.subr.mxu0 0.0
  %5710 = vmatpush1.xpose.msra.mxu0 0.0
  %5711 = vmatprep.subr.mxu0 0.0
  %5712 = vmatpush1.xpose.msra.mxu0 0.0
  %5713 = vmatprep.mubr.f32.mxu0 0.0
  %v5714 = vand.u32 %v5618, 4294901760
  %v5715 = vsub.f32 %v5618, %v5714
  %v5716 = vand.u32 %v5715, 4294901760
  %v5717 = vsub.f32 %v5715, %v5716
  %v5718 = vand.u32 %v5717, 4294901760
  %5719 = vmatmul.mubr.f32.gmra.mrb[0].mxu0 %v5718
  %v5720 = vpop.f32.mrb[0].mxu0
  %v5721 = vadd.f32 0.0, %v5720
  %v5722 = vpop.f32.mrb[0].mxu0
  %5723 = vmatprep.mubr.f32.mxu0 0.0
  %v5724 = vand.u32 %v5621, 4294901760
  %v5725 = vsub.f32 %v5621, %v5724
  %v5726 = vand.u32 %v5725, 4294901760
  %v5727 = vsub.f32 %v5725, %v5726
  %v5728 = vand.u32 %v5727, 4294901760
  %5729 = vmatmul.mubr.f32.gmra.mrb[0].mxu0 %v5728
  %v5730 = vpop.f32.mrb[0].mxu0
  %v5731 = vadd.f32 0.0, %v5730
  %v5732 = vpop.f32.mrb[0].mxu0
  %5733 = vmatprep.mubr.f32.mxu0 0.0
  %v5734 = vand.u32 %v5624, 4294901760
  %v5735 = vsub.f32 %v5624, %v5734
  %v5736 = vand.u32 %v5735, 4294901760
  %v5737 = vsub.f32 %v5735, %v5736
  %v5738 = vand.u32 %v5737, 4294901760
  %5739 = vmatmul.mubr.f32.gmra.mrb[0].mxu0 %v5738
  %v5740 = vpop.f32.mrb[0].mxu0
  %v5741 = vadd.f32 0.0, %v5740
  %v5742 = vpop.f32.mrb[0].mxu0
  %5743 = vmatprep.mubr.f32.mxu0 0.0
  %v5744 = vand.u32 %v5627, 4294901760
  %v5745 = vsub.f32 %v5627, %v5744
  %v5746 = vand.u32 %v5745, 4294901760
  %v5747 = vsub.f32 %v5745, %v5746
  %v5748 = vand.u32 %v5747, 4294901760
  %5749 = vmatmul.mubr.f32.gmra.mrb[0].mxu0 %v5748
  %v5750 = vpop.f32.mrb[0].mxu0
  %v5751 = vadd.f32 0.0, %v5750
  %v5752 = vpop.f32.mrb[0].mxu0
  %5753 = vmatprep.mubr.f32.mxu0 0.0
  %v5754 = vand.u32 %v5630, 4294901760
  %v5755 = vsub.f32 %v5630, %v5754
  %v5756 = vand.u32 %v5755, 4294901760
  %v5757 = vsub.f32 %v5755, %v5756
  %v5758 = vand.u32 %v5757, 4294901760
  %5759 = vmatmul.mubr.f32.gmra.mrb[0].mxu0 %v5758
  %v5760 = vpop.f32.mrb[0].mxu0
  %v5761 = vadd.f32 0.0, %v5760
  %v5762 = vpop.f32.mrb[0].mxu0
  %5763 = vmatprep.mubr.f32.mxu0 0.0
  %v5764 = vand.u32 %v5633, 4294901760
  %v5765 = vsub.f32 %v5633, %v5764
  %v5766 = vand.u32 %v5765, 4294901760
  %v5767 = vsub.f32 %v5765, %v5766
  %v5768 = vand.u32 %v5767, 4294901760
  %5769 = vmatmul.mubr.f32.gmra.mrb[0].mxu0 %v5768
  %v5770 = vpop.f32.mrb[0].mxu0
  %v5771 = vadd.f32 0.0, %v5770
  %v5772 = vpop.f32.mrb[0].mxu0
  %5773 = vmatprep.mubr.f32.mxu0 0.0
  %v5774 = vand.u32 %v5636, 4294901760
  %v5775 = vsub.f32 %v5636, %v5774
  %v5776 = vand.u32 %v5775, 4294901760
  %v5777 = vsub.f32 %v5775, %v5776
  %v5778 = vand.u32 %v5777, 4294901760
  %5779 = vmatmul.mubr.f32.gmra.mrb[0].mxu0 %v5778
  %v5780 = vpop.f32.mrb[0].mxu0
  %v5781 = vadd.f32 0.0, %v5780
  %v5782 = vpop.f32.mrb[0].mxu0
  %5783 = vmatprep.mubr.f32.mxu0 0.0
  %v5784 = vand.u32 %v5639, 4294901760
  %v5785 = vsub.f32 %v5639, %v5784
  %v5786 = vand.u32 %v5785, 4294901760
  %v5787 = vsub.f32 %v5785, %v5786
  %v5788 = vand.u32 %v5787, 4294901760
  %5789 = vmatmul.mubr.f32.gmra.mrb[0].mxu0 %v5788
  %v5790 = vpop.f32.mrb[0].mxu0
  %v5791 = vadd.f32 0.0, %v5790
  %v5792 = vpop.f32.mrb[0].mxu0
  %5793 = vdwg.mxu0
  %5794 = vmatprep.subr.mxu0 0.0
  %v5795 = vand.u32 %v53, 4294901760
  %v5796 = vsub.f32 %v53, %v5795
  %v5797 = vand.u32 %v5796, 4294901760
  %v5798 = vsub.f32 %v5796, %v5797
  %v5799 = vand.u32 %v5798, 4294901760
  %5800 = vmatpush1.xpose.msra.mxu0 %v5799
  %5801 = vmatprep.subr.mxu0 0.0
  %v5802 = vand.u32 %v56, 4294901760
  %v5803 = vsub.f32 %v56, %v5802
  %v5804 = vand.u32 %v5803, 4294901760
  %v5805 = vsub.f32 %v5803, %v5804
  %v5806 = vand.u32 %v5805, 4294901760
  %5807 = vmatpush1.xpose.msra.mxu0 %v5806
  %5808 = vmatprep.subr.mxu0 0.0
  %v5809 = vand.u32 %v59, 4294901760
  %v5810 = vsub.f32 %v59, %v5809
  %v5811 = vand.u32 %v5810, 4294901760
  %v5812 = vsub.f32 %v5810, %v5811
  %v5813 = vand.u32 %v5812, 4294901760
  %5814 = vmatpush1.xpose.msra.mxu0 %v5813
  %5815 = vmatprep.subr.mxu0 0.0
  %v5816 = vand.u32 %v62, 4294901760
  %v5817 = vsub.f32 %v62, %v5816
  %v5818 = vand.u32 %v5817, 4294901760
  %v5819 = vsub.f32 %v5817, %v5818
  %v5820 = vand.u32 %v5819, 4294901760
  %5821 = vmatpush1.xpose.msra.mxu0 %v5820
  %5822 = vmatprep.subr.mxu0 0.0
  %v5823 = vand.u32 %v65, 4294901760
  %v5824 = vsub.f32 %v65, %v5823
  %v5825 = vand.u32 %v5824, 4294901760
  %v5826 = vsub.f32 %v5824, %v5825
  %v5827 = vand.u32 %v5826, 4294901760
  %5828 = vmatpush1.xpose.msra.mxu0 %v5827
  %5829 = vmatprep.subr.mxu0 0.0
  %v5830 = vand.u32 %v68, 4294901760
  %v5831 = vsub.f32 %v68, %v5830
  %v5832 = vand.u32 %v5831, 4294901760
  %v5833 = vsub.f32 %v5831, %v5832
  %v5834 = vand.u32 %v5833, 4294901760
  %5835 = vmatpush1.xpose.msra.mxu0 %v5834
  %5836 = vmatprep.subr.mxu0 0.0
  %v5837 = vand.u32 %v71, 4294901760
  %v5838 = vsub.f32 %v71, %v5837
  %v5839 = vand.u32 %v5838, 4294901760
  %v5840 = vsub.f32 %v5838, %v5839
  %v5841 = vand.u32 %v5840, 4294901760
  %5842 = vmatpush1.xpose.msra.mxu0 %v5841
  %5843 = vmatprep.subr.mxu0 0.0
  %v5844 = vand.u32 %v74, 4294901760
  %v5845 = vsub.f32 %v74, %v5844
  %v5846 = vand.u32 %v5845, 4294901760
  %v5847 = vsub.f32 %v5845, %v5846
  %v5848 = vand.u32 %v5847, 4294901760
  %5849 = vmatpush1.xpose.msra.mxu0 %v5848
  %5850 = vmatprep.subr.mxu0 0.0
  %5851 = vmatpush1.xpose.msra.mxu0 0.0
  %5852 = vmatprep.subr.mxu0 0.0
  %5853 = vmatpush1.xpose.msra.mxu0 0.0
  %5854 = vmatprep.subr.mxu0 0.0
  %5855 = vmatpush1.xpose.msra.mxu0 0.0
  %5856 = vmatprep.subr.mxu0 0.0
  %5857 = vmatpush1.xpose.msra.mxu0 0.0
  %5858 = vmatprep.subr.mxu0 0.0
  %5859 = vmatpush1.xpose.msra.mxu0 0.0
  %5860 = vmatprep.subr.mxu0 0.0
  %5861 = vmatpush1.xpose.msra.mxu0 0.0
  %5862 = vmatprep.subr.mxu0 0.0
  %5863 = vmatpush1.xpose.msra.mxu0 0.0
  %5864 = vmatprep.subr.mxu0 0.0
  %5865 = vmatpush1.xpose.msra.mxu0 0.0
  %5866 = vmatprep.subr.mxu0 0.0
  %5867 = vmatpush1.xpose.msra.mxu0 0.0
  %5868 = vmatprep.subr.mxu0 0.0
  %5869 = vmatpush1.xpose.msra.mxu0 0.0
  %5870 = vmatprep.subr.mxu0 0.0
  %5871 = vmatpush1.xpose.msra.mxu0 0.0
  %5872 = vmatprep.subr.mxu0 0.0
  %5873 = vmatpush1.xpose.msra.mxu0 0.0
  %5874 = vmatprep.subr.mxu0 0.0
  %5875 = vmatpush1.xpose.msra.mxu0 0.0
  %5876 = vmatprep.subr.mxu0 0.0
  %5877 = vmatpush1.xpose.msra.mxu0 0.0
  %5878 = vmatprep.subr.mxu0 0.0
  %5879 = vmatpush1.xpose.msra.mxu0 0.0
  %5880 = vmatprep.subr.mxu0 0.0
  %5881 = vmatpush1.xpose.msra.mxu0 0.0
  %5882 = vmatprep.subr.mxu0 0.0
  %5883 = vmatpush1.xpose.msra.mxu0 0.0
  %5884 = vmatprep.subr.mxu0 0.0
  %5885 = vmatpush1.xpose.msra.mxu0 0.0
  %5886 = vmatprep.subr.mxu0 0.0
  %5887 = vmatpush1.xpose.msra.mxu0 0.0
  %5888 = vmatprep.subr.mxu0 0.0
  %5889 = vmatpush1.xpose.msra.mxu0 0.0
  %5890 = vmatprep.subr.mxu0 0.0
  %5891 = vmatpush1.xpose.msra.mxu0 0.0
  %5892 = vmatprep.subr.mxu0 0.0
  %5893 = vmatpush1.xpose.msra.mxu0 0.0
  %5894 = vmatprep.subr.mxu0 0.0
  %5895 = vmatpush1.xpose.msra.mxu0 0.0
  %5896 = vmatprep.subr.mxu0 0.0
  %5897 = vmatpush1.xpose.msra.mxu0 0.0
  %5898 = vmatprep.mubr.f32.mxu0 0.0
  %v5899 = vand.u32 %v5618, 4294901760
  %5900 = vmatmul.mubr.f32.gmra.mrb[0].mxu0 %v5899
  %v5901 = vpop.f32.mrb[0].mxu0
  %v5902 = vadd.f32 %v5721, %v5901
  %v5903 = vpop.f32.mrb[0].mxu0
  %5904 = vmatprep.mubr.f32.mxu0 0.0
  %v5905 = vand.u32 %v5621, 4294901760
  %5906 = vmatmul.mubr.f32.gmra.mrb[0].mxu0 %v5905
  %v5907 = vpop.f32.mrb[0].mxu0
  %v5908 = vadd.f32 %v5731, %v5907
  %v5909 = vpop.f32.mrb[0].mxu0
  %5910 = vmatprep.mubr.f32.mxu0 0.0
  %v5911 = vand.u32 %v5624, 4294901760
  %5912 = vmatmul.mubr.f32.gmra.mrb[0].mxu0 %v5911
  %v5913 = vpop.f32.mrb[0].mxu0
  %v5914 = vadd.f32 %v5741, %v5913
  %v5915 = vpop.f32.mrb[0].mxu0
  %5916 = vmatprep.mubr.f32.mxu0 0.0
  %v5917 = vand.u32 %v5627, 4294901760
  %5918 = vmatmul.mubr.f32.gmra.mrb[0].mxu0 %v5917
  %v5919 = vpop.f32.mrb[0].mxu0
  %v5920 = vadd.f32 %v5751, %v5919
  %v5921 = vpop.f32.mrb[0].mxu0
  %5922 = vmatprep.mubr.f32.mxu0 0.0
  %v5923 = vand.u32 %v5630, 4294901760
  %5924 = vmatmul.mubr.f32.gmra.mrb[0].mxu0 %v5923
  %v5925 = vpop.f32.mrb[0].mxu0
  %v5926 = vadd.f32 %v5761, %v5925
  %v5927 = vpop.f32.mrb[0].mxu0
  %5928 = vmatprep.mubr.f32.mxu0 0.0
  %v5929 = vand.u32 %v5633, 4294901760
  %5930 = vmatmul.mubr.f32.gmra.mrb[0].mxu0 %v5929
  %v5931 = vpop.f32.mrb[0].mxu0
  %v5932 = vadd.f32 %v5771, %v5931
  %v5933 = vpop.f32.mrb[0].mxu0
  %5934 = vmatprep.mubr.f32.mxu0 0.0
  %v5935 = vand.u32 %v5636, 4294901760
  %5936 = vmatmul.mubr.f32.gmra.mrb[0].mxu0 %v5935
  %v5937 = vpop.f32.mrb[0].mxu0
  %v5938 = vadd.f32 %v5781, %v5937
  %v5939 = vpop.f32.mrb[0].mxu0
  %5940 = vmatprep.mubr.f32.mxu0 0.0
  %v5941 = vand.u32 %v5639, 4294901760
  %5942 = vmatmul.mubr.f32.gmra.mrb[0].mxu0 %v5941
  %v5943 = vpop.f32.mrb[0].mxu0
  %v5944 = vadd.f32 %v5791, %v5943
  %v5945 = vpop.f32.mrb[0].mxu0
  %5946 = vdwg.mxu0
  %5947 = vmatprep.subr.mxu0 0.0
  %v5948 = vand.u32 %v53, 4294901760
  %v5949 = vsub.f32 %v53, %v5948
  %5950 = vmatpush1.xpose.msra.mxu0 %v5949
  %5951 = vmatprep.subr.mxu0 0.0
  %v5952 = vand.u32 %v56, 4294901760
  %v5953 = vsub.f32 %v56, %v5952
  %5954 = vmatpush1.xpose.msra.mxu0 %v5953
  %5955 = vmatprep.subr.mxu0 0.0
  %v5956 = vand.u32 %v59, 4294901760
  %v5957 = vsub.f32 %v59, %v5956
  %5958 = vmatpush1.xpose.msra.mxu0 %v5957
  %5959 = vmatprep.subr.mxu0 0.0
  %v5960 = vand.u32 %v62, 4294901760
  %v5961 = vsub.f32 %v62, %v5960
  %5962 = vmatpush1.xpose.msra.mxu0 %v5961
  %5963 = vmatprep.subr.mxu0 0.0
  %v5964 = vand.u32 %v65, 4294901760
  %v5965 = vsub.f32 %v65, %v5964
  %5966 = vmatpush1.xpose.msra.mxu0 %v5965
  %5967 = vmatprep.subr.mxu0 0.0
  %v5968 = vand.u32 %v68, 4294901760
  %v5969 = vsub.f32 %v68, %v5968
  %5970 = vmatpush1.xpose.msra.mxu0 %v5969
  %5971 = vmatprep.subr.mxu0 0.0
  %v5972 = vand.u32 %v71, 4294901760
  %v5973 = vsub.f32 %v71, %v5972
  %5974 = vmatpush1.xpose.msra.mxu0 %v5973
  %5975 = vmatprep.subr.mxu0 0.0
  %v5976 = vand.u32 %v74, 4294901760
  %v5977 = vsub.f32 %v74, %v5976
  %5978 = vmatpush1.xpose.msra.mxu0 %v5977
  %5979 = vmatprep.subr.mxu0 0.0
  %5980 = vmatpush1.xpose.msra.mxu0 0.0
  %5981 = vmatprep.subr.mxu0 0.0
  %5982 = vmatpush1.xpose.msra.mxu0 0.0
  %5983 = vmatprep.subr.mxu0 0.0
  %5984 = vmatpush1.xpose.msra.mxu0 0.0
  %5985 = vmatprep.subr.mxu0 0.0
  %5986 = vmatpush1.xpose.msra.mxu0 0.0
  %5987 = vmatprep.subr.mxu0 0.0
  %5988 = vmatpush1.xpose.msra.mxu0 0.0
  %5989 = vmatprep.subr.mxu0 0.0
  %5990 = vmatpush1.xpose.msra.mxu0 0.0
  %5991 = vmatprep.subr.mxu0 0.0
  %5992 = vmatpush1.xpose.msra.mxu0 0.0
  %5993 = vmatprep.subr.mxu0 0.0
  %5994 = vmatpush1.xpose.msra.mxu0 0.0
  %5995 = vmatprep.subr.mxu0 0.0
  %5996 = vmatpush1.xpose.msra.mxu0 0.0
  %5997 = vmatprep.subr.mxu0 0.0
  %5998 = vmatpush1.xpose.msra.mxu0 0.0
  %5999 = vmatprep.subr.mxu0 0.0
  %6000 = vmatpush1.xpose.msra.mxu0 0.0
  %6001 = vmatprep.subr.mxu0 0.0
  %6002 = vmatpush1.xpose.msra.mxu0 0.0
  %6003 = vmatprep.subr.mxu0 0.0
  %6004 = vmatpush1.xpose.msra.mxu0 0.0
  %6005 = vmatprep.subr.mxu0 0.0
  %6006 = vmatpush1.xpose.msra.mxu0 0.0
  %6007 = vmatprep.subr.mxu0 0.0
  %6008 = vmatpush1.xpose.msra.mxu0 0.0
  %6009 = vmatprep.subr.mxu0 0.0
  %6010 = vmatpush1.xpose.msra.mxu0 0.0
  %6011 = vmatprep.subr.mxu0 0.0
  %6012 = vmatpush1.xpose.msra.mxu0 0.0
  %6013 = vmatprep.subr.mxu0 0.0
  %6014 = vmatpush1.xpose.msra.mxu0 0.0
  %6015 = vmatprep.subr.mxu0 0.0
  %6016 = vmatpush1.xpose.msra.mxu0 0.0
  %6017 = vmatprep.subr.mxu0 0.0
  %6018 = vmatpush1.xpose.msra.mxu0 0.0
  %6019 = vmatprep.subr.mxu0 0.0
  %6020 = vmatpush1.xpose.msra.mxu0 0.0
  %6021 = vmatprep.subr.mxu0 0.0
  %6022 = vmatpush1.xpose.msra.mxu0 0.0
  %6023 = vmatprep.subr.mxu0 0.0
  %6024 = vmatpush1.xpose.msra.mxu0 0.0
  %6025 = vmatprep.subr.mxu0 0.0
  %6026 = vmatpush1.xpose.msra.mxu0 0.0
  %6027 = vmatprep.mubr.f32.mxu0 0.0
  %v6028 = vand.u32 %v5618, 4294901760
  %v6029 = vsub.f32 %v5618, %v6028
  %6030 = vmatmul.mubr.f32.gmra.mrb[0].mxu0 %v6029
  %v6031 = vpop.f32.mrb[0].mxu0
  %v6032 = vadd.f32 %v5902, %v6031
  %v6033 = vpop.f32.mrb[0].mxu0
  %6034 = vmatprep.mubr.f32.mxu0 0.0
  %v6035 = vand.u32 %v5621, 4294901760
  %v6036 = vsub.f32 %v5621, %v6035
  %6037 = vmatmul.mubr.f32.gmra.mrb[0].mxu0 %v6036
  %v6038 = vpop.f32.mrb[0].mxu0
  %v6039 = vadd.f32 %v5908, %v6038
  %v6040 = vpop.f32.mrb[0].mxu0
  %6041 = vmatprep.mubr.f32.mxu0 0.0
  %v6042 = vand.u32 %v5624, 4294901760
  %v6043 = vsub.f32 %v5624, %v6042
  %6044 = vmatmul.mubr.f32.gmra.mrb[0].mxu0 %v6043
  %v6045 = vpop.f32.mrb[0].mxu0
  %v6046 = vadd.f32 %v5914, %v6045
  %v6047 = vpop.f32.mrb[0].mxu0
  %6048 = vmatprep.mubr.f32.mxu0 0.0
  %v6049 = vand.u32 %v5627, 4294901760
  %v6050 = vsub.f32 %v5627, %v6049
  %6051 = vmatmul.mubr.f32.gmra.mrb[0].mxu0 %v6050
  %v6052 = vpop.f32.mrb[0].mxu0
  %v6053 = vadd.f32 %v5920, %v6052
  %v6054 = vpop.f32.mrb[0].mxu0
  %6055 = vmatprep.mubr.f32.mxu0 0.0
  %v6056 = vand.u32 %v5630, 4294901760
  %v6057 = vsub.f32 %v5630, %v6056
  %6058 = vmatmul.mubr.f32.gmra.mrb[0].mxu0 %v6057
  %v6059 = vpop.f32.mrb[0].mxu0
  %v6060 = vadd.f32 %v5926, %v6059
  %v6061 = vpop.f32.mrb[0].mxu0
  %6062 = vmatprep.mubr.f32.mxu0 0.0
  %v6063 = vand.u32 %v5633, 4294901760
  %v6064 = vsub.f32 %v5633, %v6063
  %6065 = vmatmul.mubr.f32.gmra.mrb[0].mxu0 %v6064
  %v6066 = vpop.f32.mrb[0].mxu0
  %v6067 = vadd.f32 %v5932, %v6066
  %v6068 = vpop.f32.mrb[0].mxu0
  %6069 = vmatprep.mubr.f32.mxu0 0.0
  %v6070 = vand.u32 %v5636, 4294901760
  %v6071 = vsub.f32 %v5636, %v6070
  %6072 = vmatmul.mubr.f32.gmra.mrb[0].mxu0 %v6071
  %v6073 = vpop.f32.mrb[0].mxu0
  %v6074 = vadd.f32 %v5938, %v6073
  %v6075 = vpop.f32.mrb[0].mxu0
  %6076 = vmatprep.mubr.f32.mxu0 0.0
  %v6077 = vand.u32 %v5639, 4294901760
  %v6078 = vsub.f32 %v5639, %v6077
  %6079 = vmatmul.mubr.f32.gmra.mrb[0].mxu0 %v6078
  %v6080 = vpop.f32.mrb[0].mxu0
  %v6081 = vadd.f32 %v5944, %v6080
  %v6082 = vpop.f32.mrb[0].mxu0
  %6083 = vdwg.mxu0
  %6084 = vmatprep.subr.mxu0 0.0
  %v6085 = vand.u32 %v53, 4294901760
  %6086 = vmatpush1.xpose.msra.mxu0 %v6085
  %6087 = vmatprep.subr.mxu0 0.0
  %v6088 = vand.u32 %v56, 4294901760
  %6089 = vmatpush1.xpose.msra.mxu0 %v6088
  %6090 = vmatprep.subr.mxu0 0.0
  %v6091 = vand.u32 %v59, 4294901760
  %6092 = vmatpush1.xpose.msra.mxu0 %v6091
  %6093 = vmatprep.subr.mxu0 0.0
  %v6094 = vand.u32 %v62, 4294901760
  %6095 = vmatpush1.xpose.msra.mxu0 %v6094
  %6096 = vmatprep.subr.mxu0 0.0
  %v6097 = vand.u32 %v65, 4294901760
  %6098 = vmatpush1.xpose.msra.mxu0 %v6097
  %6099 = vmatprep.subr.mxu0 0.0
  %v6100 = vand.u32 %v68, 4294901760
  %6101 = vmatpush1.xpose.msra.mxu0 %v6100
  %6102 = vmatprep.subr.mxu0 0.0
  %v6103 = vand.u32 %v71, 4294901760
  %6104 = vmatpush1.xpose.msra.mxu0 %v6103
  %6105 = vmatprep.subr.mxu0 0.0
  %v6106 = vand.u32 %v74, 4294901760
  %6107 = vmatpush1.xpose.msra.mxu0 %v6106
  %6108 = vmatprep.subr.mxu0 0.0
  %6109 = vmatpush1.xpose.msra.mxu0 0.0
  %6110 = vmatprep.subr.mxu0 0.0
  %6111 = vmatpush1.xpose.msra.mxu0 0.0
  %6112 = vmatprep.subr.mxu0 0.0
  %6113 = vmatpush1.xpose.msra.mxu0 0.0
  %6114 = vmatprep.subr.mxu0 0.0
  %6115 = vmatpush1.xpose.msra.mxu0 0.0
  %6116 = vmatprep.subr.mxu0 0.0
  %6117 = vmatpush1.xpose.msra.mxu0 0.0
  %6118 = vmatprep.subr.mxu0 0.0
  %6119 = vmatpush1.xpose.msra.mxu0 0.0
  %6120 = vmatprep.subr.mxu0 0.0
  %6121 = vmatpush1.xpose.msra.mxu0 0.0
  %6122 = vmatprep.subr.mxu0 0.0
  %6123 = vmatpush1.xpose.msra.mxu0 0.0
  %6124 = vmatprep.subr.mxu0 0.0
  %6125 = vmatpush1.xpose.msra.mxu0 0.0
  %6126 = vmatprep.subr.mxu0 0.0
  %6127 = vmatpush1.xpose.msra.mxu0 0.0
  %6128 = vmatprep.subr.mxu0 0.0
  %6129 = vmatpush1.xpose.msra.mxu0 0.0
  %6130 = vmatprep.subr.mxu0 0.0
  %6131 = vmatpush1.xpose.msra.mxu0 0.0
  %6132 = vmatprep.subr.mxu0 0.0
  %6133 = vmatpush1.xpose.msra.mxu0 0.0
  %6134 = vmatprep.subr.mxu0 0.0
  %6135 = vmatpush1.xpose.msra.mxu0 0.0
  %6136 = vmatprep.subr.mxu0 0.0
  %6137 = vmatpush1.xpose.msra.mxu0 0.0
  %6138 = vmatprep.subr.mxu0 0.0
  %6139 = vmatpush1.xpose.msra.mxu0 0.0
  %6140 = vmatprep.subr.mxu0 0.0
  %6141 = vmatpush1.xpose.msra.mxu0 0.0
  %6142 = vmatprep.subr.mxu0 0.0
  %6143 = vmatpush1.xpose.msra.mxu0 0.0
  %6144 = vmatprep.subr.mxu0 0.0
  %6145 = vmatpush1.xpose.msra.mxu0 0.0
  %6146 = vmatprep.subr.mxu0 0.0
  %6147 = vmatpush1.xpose.msra.mxu0 0.0
  %6148 = vmatprep.subr.mxu0 0.0
  %6149 = vmatpush1.xpose.msra.mxu0 0.0
  %6150 = vmatprep.subr.mxu0 0.0
  %6151 = vmatpush1.xpose.msra.mxu0 0.0
  %6152 = vmatprep.subr.mxu0 0.0
  %6153 = vmatpush1.xpose.msra.mxu0 0.0
  %6154 = vmatprep.subr.mxu0 0.0
  %6155 = vmatpush1.xpose.msra.mxu0 0.0
  %6156 = vmatprep.mubr.f32.mxu0 0.0
  %v6157 = vand.u32 %v5618, 4294901760
  %v6158 = vsub.f32 %v5618, %v6157
  %v6159 = vand.u32 %v6158, 4294901760
  %6160 = vmatmul.mubr.f32.gmra.mrb[0].mxu0 %v6159
  %v6161 = vpop.f32.mrb[0].mxu0
  %v6162 = vadd.f32 %v6032, %v6161
  %v6163 = vpop.f32.mrb[0].mxu0
  %6164 = vmatprep.mubr.f32.mxu0 0.0
  %v6165 = vand.u32 %v5621, 4294901760
  %v6166 = vsub.f32 %v5621, %v6165
  %v6167 = vand.u32 %v6166, 4294901760
  %6168 = vmatmul.mubr.f32.gmra.mrb[0].mxu0 %v6167
  %v6169 = vpop.f32.mrb[0].mxu0
  %v6170 = vadd.f32 %v6039, %v6169
  %v6171 = vpop.f32.mrb[0].mxu0
  %6172 = vmatprep.mubr.f32.mxu0 0.0
  %v6173 = vand.u32 %v5624, 4294901760
  %v6174 = vsub.f32 %v5624, %v6173
  %v6175 = vand.u32 %v6174, 4294901760
  %6176 = vmatmul.mubr.f32.gmra.mrb[0].mxu0 %v6175
  %v6177 = vpop.f32.mrb[0].mxu0
  %v6178 = vadd.f32 %v6046, %v6177
  %v6179 = vpop.f32.mrb[0].mxu0
  %6180 = vmatprep.mubr.f32.mxu0 0.0
  %v6181 = vand.u32 %v5627, 4294901760
  %v6182 = vsub.f32 %v5627, %v6181
  %v6183 = vand.u32 %v6182, 4294901760
  %6184 = vmatmul.mubr.f32.gmra.mrb[0].mxu0 %v6183
  %v6185 = vpop.f32.mrb[0].mxu0
  %v6186 = vadd.f32 %v6053, %v6185
  %v6187 = vpop.f32.mrb[0].mxu0
  %6188 = vmatprep.mubr.f32.mxu0 0.0
  %v6189 = vand.u32 %v5630, 4294901760
  %v6190 = vsub.f32 %v5630, %v6189
  %v6191 = vand.u32 %v6190, 4294901760
  %6192 = vmatmul.mubr.f32.gmra.mrb[0].mxu0 %v6191
  %v6193 = vpop.f32.mrb[0].mxu0
  %v6194 = vadd.f32 %v6060, %v6193
  %v6195 = vpop.f32.mrb[0].mxu0
  %6196 = vmatprep.mubr.f32.mxu0 0.0
  %v6197 = vand.u32 %v5633, 4294901760
  %v6198 = vsub.f32 %v5633, %v6197
  %v6199 = vand.u32 %v6198, 4294901760
  %6200 = vmatmul.mubr.f32.gmra.mrb[0].mxu0 %v6199
  %v6201 = vpop.f32.mrb[0].mxu0
  %v6202 = vadd.f32 %v6067, %v6201
  %v6203 = vpop.f32.mrb[0].mxu0
  %6204 = vmatprep.mubr.f32.mxu0 0.0
  %v6205 = vand.u32 %v5636, 4294901760
  %v6206 = vsub.f32 %v5636, %v6205
  %v6207 = vand.u32 %v6206, 4294901760
  %6208 = vmatmul.mubr.f32.gmra.mrb[0].mxu0 %v6207
  %v6209 = vpop.f32.mrb[0].mxu0
  %v6210 = vadd.f32 %v6074, %v6209
  %v6211 = vpop.f32.mrb[0].mxu0
  %6212 = vmatprep.mubr.f32.mxu0 0.0
  %v6213 = vand.u32 %v5639, 4294901760
  %v6214 = vsub.f32 %v5639, %v6213
  %v6215 = vand.u32 %v6214, 4294901760
  %6216 = vmatmul.mubr.f32.gmra.mrb[0].mxu0 %v6215
  %v6217 = vpop.f32.mrb[0].mxu0
  %v6218 = vadd.f32 %v6081, %v6217
  %v6219 = vpop.f32.mrb[0].mxu0
  %6220 = vdwg.mxu0
  %6221 = vmatprep.subr.mxu0 0.0
  %v6222 = vand.u32 %v53, 4294901760
  %v6223 = vsub.f32 %v53, %v6222
  %v6224 = vand.u32 %v6223, 4294901760
  %6225 = vmatpush1.xpose.msra.mxu0 %v6224
  %6226 = vmatprep.subr.mxu0 0.0
  %v6227 = vand.u32 %v56, 4294901760
  %v6228 = vsub.f32 %v56, %v6227
  %v6229 = vand.u32 %v6228, 4294901760
  %6230 = vmatpush1.xpose.msra.mxu0 %v6229
  %6231 = vmatprep.subr.mxu0 0.0
  %v6232 = vand.u32 %v59, 4294901760
  %v6233 = vsub.f32 %v59, %v6232
  %v6234 = vand.u32 %v6233, 4294901760
  %6235 = vmatpush1.xpose.msra.mxu0 %v6234
  %6236 = vmatprep.subr.mxu0 0.0
  %v6237 = vand.u32 %v62, 4294901760
  %v6238 = vsub.f32 %v62, %v6237
  %v6239 = vand.u32 %v6238, 4294901760
  %6240 = vmatpush1.xpose.msra.mxu0 %v6239
  %6241 = vmatprep.subr.mxu0 0.0
  %v6242 = vand.u32 %v65, 4294901760
  %v6243 = vsub.f32 %v65, %v6242
  %v6244 = vand.u32 %v6243, 4294901760
  %6245 = vmatpush1.xpose.msra.mxu0 %v6244
  %6246 = vmatprep.subr.mxu0 0.0
  %v6247 = vand.u32 %v68, 4294901760
  %v6248 = vsub.f32 %v68, %v6247
  %v6249 = vand.u32 %v6248, 4294901760
  %6250 = vmatpush1.xpose.msra.mxu0 %v6249
  %6251 = vmatprep.subr.mxu0 0.0
  %v6252 = vand.u32 %v71, 4294901760
  %v6253 = vsub.f32 %v71, %v6252
  %v6254 = vand.u32 %v6253, 4294901760
  %6255 = vmatpush1.xpose.msra.mxu0 %v6254
  %6256 = vmatprep.subr.mxu0 0.0
  %v6257 = vand.u32 %v74, 4294901760
  %v6258 = vsub.f32 %v74, %v6257
  %v6259 = vand.u32 %v6258, 4294901760
  %6260 = vmatpush1.xpose.msra.mxu0 %v6259
  %6261 = vmatprep.subr.mxu0 0.0
  %6262 = vmatpush1.xpose.msra.mxu0 0.0
  %6263 = vmatprep.subr.mxu0 0.0
  %6264 = vmatpush1.xpose.msra.mxu0 0.0
  %6265 = vmatprep.subr.mxu0 0.0
  %6266 = vmatpush1.xpose.msra.mxu0 0.0
  %6267 = vmatprep.subr.mxu0 0.0
  %6268 = vmatpush1.xpose.msra.mxu0 0.0
  %6269 = vmatprep.subr.mxu0 0.0
  %6270 = vmatpush1.xpose.msra.mxu0 0.0
  %6271 = vmatprep.subr.mxu0 0.0
  %6272 = vmatpush1.xpose.msra.mxu0 0.0
  %6273 = vmatprep.subr.mxu0 0.0
  %6274 = vmatpush1.xpose.msra.mxu0 0.0
  %6275 = vmatprep.subr.mxu0 0.0
  %6276 = vmatpush1.xpose.msra.mxu0 0.0
  %6277 = vmatprep.subr.mxu0 0.0
  %6278 = vmatpush1.xpose.msra.mxu0 0.0
  %6279 = vmatprep.subr.mxu0 0.0
  %6280 = vmatpush1.xpose.msra.mxu0 0.0
  %6281 = vmatprep.subr.mxu0 0.0
  %6282 = vmatpush1.xpose.msra.mxu0 0.0
  %6283 = vmatprep.subr.mxu0 0.0
  %6284 = vmatpush1.xpose.msra.mxu0 0.0
  %6285 = vmatprep.subr.mxu0 0.0
  %6286 = vmatpush1.xpose.msra.mxu0 0.0
  %6287 = vmatprep.subr.mxu0 0.0
  %6288 = vmatpush1.xpose.msra.mxu0 0.0
  %6289 = vmatprep.subr.mxu0 0.0
  %6290 = vmatpush1.xpose.msra.mxu0 0.0
  %6291 = vmatprep.subr.mxu0 0.0
  %6292 = vmatpush1.xpose.msra.mxu0 0.0
  %6293 = vmatprep.subr.mxu0 0.0
  %6294 = vmatpush1.xpose.msra.mxu0 0.0
  %6295 = vmatprep.subr.mxu0 0.0
  %6296 = vmatpush1.xpose.msra.mxu0 0.0
  %6297 = vmatprep.subr.mxu0 0.0
  %6298 = vmatpush1.xpose.msra.mxu0 0.0
  %6299 = vmatprep.subr.mxu0 0.0
  %6300 = vmatpush1.xpose.msra.mxu0 0.0
  %6301 = vmatprep.subr.mxu0 0.0
  %6302 = vmatpush1.xpose.msra.mxu0 0.0
  %6303 = vmatprep.subr.mxu0 0.0
  %6304 = vmatpush1.xpose.msra.mxu0 0.0
  %6305 = vmatprep.subr.mxu0 0.0
  %6306 = vmatpush1.xpose.msra.mxu0 0.0
  %6307 = vmatprep.subr.mxu0 0.0
  %6308 = vmatpush1.xpose.msra.mxu0 0.0
  %6309 = vmatprep.mubr.f32.mxu0 0.0
  %v6310 = vand.u32 %v5618, 4294901760
  %6311 = vmatmul.mubr.f32.gmra.mrb[0].mxu0 %v6310
  %v6312 = vpop.f32.mrb[0].mxu0
  %v6313 = vadd.f32 %v6162, %v6312
  %v6314 = vpop.f32.mrb[0].mxu0
  %6315 = vmatprep.mubr.f32.mxu0 0.0
  %v6316 = vand.u32 %v5621, 4294901760
  %6317 = vmatmul.mubr.f32.gmra.mrb[0].mxu0 %v6316
  %v6318 = vpop.f32.mrb[0].mxu0
  %v6319 = vadd.f32 %v6170, %v6318
  %v6320 = vpop.f32.mrb[0].mxu0
  %6321 = vmatprep.mubr.f32.mxu0 0.0
  %v6322 = vand.u32 %v5624, 4294901760
  %6323 = vmatmul.mubr.f32.gmra.mrb[0].mxu0 %v6322
  %v6324 = vpop.f32.mrb[0].mxu0
  %v6325 = vadd.f32 %v6178, %v6324
  %v6326 = vpop.f32.mrb[0].mxu0
  %6327 = vmatprep.mubr.f32.mxu0 0.0
  %v6328 = vand.u32 %v5627, 4294901760
  %6329 = vmatmul.mubr.f32.gmra.mrb[0].mxu0 %v6328
  %v6330 = vpop.f32.mrb[0].mxu0
  %v6331 = vadd.f32 %v6186, %v6330
  %v6332 = vpop.f32.mrb[0].mxu0
  %6333 = vmatprep.mubr.f32.mxu0 0.0
  %v6334 = vand.u32 %v5630, 4294901760
  %6335 = vmatmul.mubr.f32.gmra.mrb[0].mxu0 %v6334
  %v6336 = vpop.f32.mrb[0].mxu0
  %v6337 = vadd.f32 %v6194, %v6336
  %v6338 = vpop.f32.mrb[0].mxu0
  %6339 = vmatprep.mubr.f32.mxu0 0.0
  %v6340 = vand.u32 %v5633, 4294901760
  %6341 = vmatmul.mubr.f32.gmra.mrb[0].mxu0 %v6340
  %v6342 = vpop.f32.mrb[0].mxu0
  %v6343 = vadd.f32 %v6202, %v6342
  %v6344 = vpop.f32.mrb[0].mxu0
  %6345 = vmatprep.mubr.f32.mxu0 0.0
  %v6346 = vand.u32 %v5636, 4294901760
  %6347 = vmatmul.mubr.f32.gmra.mrb[0].mxu0 %v6346
  %v6348 = vpop.f32.mrb[0].mxu0
  %v6349 = vadd.f32 %v6210, %v6348
  %v6350 = vpop.f32.mrb[0].mxu0
  %6351 = vmatprep.mubr.f32.mxu0 0.0
  %v6352 = vand.u32 %v5639, 4294901760
  %6353 = vmatmul.mubr.f32.gmra.mrb[0].mxu0 %v6352
  %v6354 = vpop.f32.mrb[0].mxu0
  %v6355 = vadd.f32 %v6218, %v6354
  %v6356 = vpop.f32.mrb[0].mxu0
  %6357 = vdwg.mxu0
  %6358 = vmatprep.subr.mxu0 0.0
  %v6359 = vand.u32 %v53, 4294901760
  %6360 = vmatpush1.xpose.msra.mxu0 %v6359
  %6361 = vmatprep.subr.mxu0 0.0
  %v6362 = vand.u32 %v56, 4294901760
  %6363 = vmatpush1.xpose.msra.mxu0 %v6362
  %6364 = vmatprep.subr.mxu0 0.0
  %v6365 = vand.u32 %v59, 4294901760
  %6366 = vmatpush1.xpose.msra.mxu0 %v6365
  %6367 = vmatprep.subr.mxu0 0.0
  %v6368 = vand.u32 %v62, 4294901760
  %6369 = vmatpush1.xpose.msra.mxu0 %v6368
  %6370 = vmatprep.subr.mxu0 0.0
  %v6371 = vand.u32 %v65, 4294901760
  %6372 = vmatpush1.xpose.msra.mxu0 %v6371
  %6373 = vmatprep.subr.mxu0 0.0
  %v6374 = vand.u32 %v68, 4294901760
  %6375 = vmatpush1.xpose.msra.mxu0 %v6374
  %6376 = vmatprep.subr.mxu0 0.0
  %v6377 = vand.u32 %v71, 4294901760
  %6378 = vmatpush1.xpose.msra.mxu0 %v6377
  %6379 = vmatprep.subr.mxu0 0.0
  %v6380 = vand.u32 %v74, 4294901760
  %6381 = vmatpush1.xpose.msra.mxu0 %v6380
  %6382 = vmatprep.subr.mxu0 0.0
  %6383 = vmatpush1.xpose.msra.mxu0 0.0
  %6384 = vmatprep.subr.mxu0 0.0
  %6385 = vmatpush1.xpose.msra.mxu0 0.0
  %6386 = vmatprep.subr.mxu0 0.0
  %6387 = vmatpush1.xpose.msra.mxu0 0.0
  %6388 = vmatprep.subr.mxu0 0.0
  %6389 = vmatpush1.xpose.msra.mxu0 0.0
  %6390 = vmatprep.subr.mxu0 0.0
  %6391 = vmatpush1.xpose.msra.mxu0 0.0
  %6392 = vmatprep.subr.mxu0 0.0
  %6393 = vmatpush1.xpose.msra.mxu0 0.0
  %6394 = vmatprep.subr.mxu0 0.0
  %6395 = vmatpush1.xpose.msra.mxu0 0.0
  %6396 = vmatprep.subr.mxu0 0.0
  %6397 = vmatpush1.xpose.msra.mxu0 0.0
  %6398 = vmatprep.subr.mxu0 0.0
  %6399 = vmatpush1.xpose.msra.mxu0 0.0
  %6400 = vmatprep.subr.mxu0 0.0
  %6401 = vmatpush1.xpose.msra.mxu0 0.0
  %6402 = vmatprep.subr.mxu0 0.0
  %6403 = vmatpush1.xpose.msra.mxu0 0.0
  %6404 = vmatprep.subr.mxu0 0.0
  %6405 = vmatpush1.xpose.msra.mxu0 0.0
  %6406 = vmatprep.subr.mxu0 0.0
  %6407 = vmatpush1.xpose.msra.mxu0 0.0
  %6408 = vmatprep.subr.mxu0 0.0
  %6409 = vmatpush1.xpose.msra.mxu0 0.0
  %6410 = vmatprep.subr.mxu0 0.0
  %6411 = vmatpush1.xpose.msra.mxu0 0.0
  %6412 = vmatprep.subr.mxu0 0.0
  %6413 = vmatpush1.xpose.msra.mxu0 0.0
  %6414 = vmatprep.subr.mxu0 0.0
  %6415 = vmatpush1.xpose.msra.mxu0 0.0
  %6416 = vmatprep.subr.mxu0 0.0
  %6417 = vmatpush1.xpose.msra.mxu0 0.0
  %6418 = vmatprep.subr.mxu0 0.0
  %6419 = vmatpush1.xpose.msra.mxu0 0.0
  %6420 = vmatprep.subr.mxu0 0.0
  %6421 = vmatpush1.xpose.msra.mxu0 0.0
  %6422 = vmatprep.subr.mxu0 0.0
  %6423 = vmatpush1.xpose.msra.mxu0 0.0
  %6424 = vmatprep.subr.mxu0 0.0
  %6425 = vmatpush1.xpose.msra.mxu0 0.0
  %6426 = vmatprep.subr.mxu0 0.0
  %6427 = vmatpush1.xpose.msra.mxu0 0.0
  %6428 = vmatprep.subr.mxu0 0.0
  %6429 = vmatpush1.xpose.msra.mxu0 0.0
  %6430 = vmatprep.mubr.f32.mxu0 0.0
  %v6431 = vand.u32 %v5618, 4294901760
  %6432 = vmatmul.mubr.f32.gmra.mrb[0].mxu0 %v6431
  %v6433 = vpop.f32.mrb[0].mxu0
  %v6434 = vadd.f32 %v6313, %v6433
  %v6435 = vpop.f32.mrb[0].mxu0
  %6436 = vmatprep.mubr.f32.mxu0 0.0
  %v6437 = vand.u32 %v5621, 4294901760
  %6438 = vmatmul.mubr.f32.gmra.mrb[0].mxu0 %v6437
  %v6439 = vpop.f32.mrb[0].mxu0
  %v6440 = vadd.f32 %v6319, %v6439
  %v6441 = vpop.f32.mrb[0].mxu0
  %6442 = vmatprep.mubr.f32.mxu0 0.0
  %v6443 = vand.u32 %v5624, 4294901760
  %6444 = vmatmul.mubr.f32.gmra.mrb[0].mxu0 %v6443
  %v6445 = vpop.f32.mrb[0].mxu0
  %v6446 = vadd.f32 %v6325, %v6445
  %v6447 = vpop.f32.mrb[0].mxu0
  %6448 = vmatprep.mubr.f32.mxu0 0.0
  %v6449 = vand.u32 %v5627, 4294901760
  %6450 = vmatmul.mubr.f32.gmra.mrb[0].mxu0 %v6449
  %v6451 = vpop.f32.mrb[0].mxu0
  %v6452 = vadd.f32 %v6331, %v6451
  %v6453 = vpop.f32.mrb[0].mxu0
  %6454 = vmatprep.mubr.f32.mxu0 0.0
  %v6455 = vand.u32 %v5630, 4294901760
  %6456 = vmatmul.mubr.f32.gmra.mrb[0].mxu0 %v6455
  %v6457 = vpop.f32.mrb[0].mxu0
  %v6458 = vadd.f32 %v6337, %v6457
  %v6459 = vpop.f32.mrb[0].mxu0
  %6460 = vmatprep.mubr.f32.mxu0 0.0
  %v6461 = vand.u32 %v5633, 4294901760
  %6462 = vmatmul.mubr.f32.gmra.mrb[0].mxu0 %v6461
  %v6463 = vpop.f32.mrb[0].mxu0
  %v6464 = vadd.f32 %v6343, %v6463
  %v6465 = vpop.f32.mrb[0].mxu0
  %6466 = vmatprep.mubr.f32.mxu0 0.0
  %v6467 = vand.u32 %v5636, 4294901760
  %6468 = vmatmul.mubr.f32.gmra.mrb[0].mxu0 %v6467
  %v6469 = vpop.f32.mrb[0].mxu0
  %v6470 = vadd.f32 %v6349, %v6469
  %v6471 = vpop.f32.mrb[0].mxu0
  %6472 = vmatprep.mubr.f32.mxu0 0.0
  %v6473 = vand.u32 %v5639, 4294901760
  %6474 = vmatmul.mubr.f32.gmra.mrb[0].mxu0 %v6473
  %v6475 = vpop.f32.mrb[0].mxu0
  %v6476 = vadd.f32 %v6355, %v6475
  %v6477 = vpop.f32.mrb[0].mxu0
  %6478 = vdwg.mxu0
  %6479 = vst.msk [vmem:[%s2 + $0x10] sm:$0xff] %vm51, %v6434
  %6480 = vst.msk [vmem:[%s2 + $0x30] sm:$0xff] %vm51, %v6440
  %6481 = vst.msk [vmem:[%s2 + $0x50] sm:$0xff] %vm51, %v6446
  %6482 = vst.msk [vmem:[%s2 + $0x70] sm:$0xff] %vm51, %v6452
  %6483 = vst.msk [vmem:[%s2 + $0x90] sm:$0xff] %vm51, %v6458
  %6484 = vst.msk [vmem:[%s2 + $0xb0] sm:$0xff] %vm51, %v6464
  %6485 = vst.msk [vmem:[%s2 + $0xd0] sm:$0xff] %vm51, %v6470
  %6486 = vst.msk [vmem:[%s2 + $0xf0] sm:$0xff] %vm51, %v6476
  %6487 = vrot.lane.b32.xlu0 %v2003, 64
  %v6488 = vpop.permute.xlu0 %6487
  %6489 = vrot.lane.b32.xlu0 %v2010, 64
  %v6490 = vpop.permute.xlu0 %6489
  %6491 = vrot.lane.b32.xlu0 %v2017, 64
  %v6492 = vpop.permute.xlu0 %6491
  %6493 = vrot.lane.b32.xlu0 %v2024, 64
  %v6494 = vpop.permute.xlu0 %6493
  %6495 = vrot.lane.b32.xlu0 %v2031, 64
  %v6496 = vpop.permute.xlu0 %6495
  %6497 = vrot.lane.b32.xlu0 %v2038, 64
  %v6498 = vpop.permute.xlu0 %6497
  %6499 = vrot.lane.b32.xlu0 %v2045, 64
  %v6500 = vpop.permute.xlu0 %6499
  %6501 = vrot.lane.b32.xlu0 %v2052, 64
  %v6502 = vpop.permute.xlu0 %6501
  %v6503 = vsel %vm51, %v6488, 0
  %v6505 = vsel %vm51, %v6490, 0
  %v6507 = vsel %vm51, %v6492, 0
  %v6509 = vsel %vm51, %v6494, 0
  %v6511 = vsel %vm51, %v6496, 0
  %v6513 = vsel %vm51, %v6498, 0
  %v6515 = vsel %vm51, %v6500, 0
  %v6517 = vsel %vm51, %v6502, 0
  %6519 = vmatprep.subr.mxu0 0.0
  %v6520 = vand.u32 %v53, 4294901760
  %6521 = vmatpush1.xpose.msra.mxu0 %v6520
  %6522 = vmatprep.subr.mxu0 0.0
  %v6523 = vand.u32 %v56, 4294901760
  %6524 = vmatpush1.xpose.msra.mxu0 %v6523
  %6525 = vmatprep.subr.mxu0 0.0
  %v6526 = vand.u32 %v59, 4294901760
  %6527 = vmatpush1.xpose.msra.mxu0 %v6526
  %6528 = vmatprep.subr.mxu0 0.0
  %v6529 = vand.u32 %v62, 4294901760
  %6530 = vmatpush1.xpose.msra.mxu0 %v6529
  %6531 = vmatprep.subr.mxu0 0.0
  %v6532 = vand.u32 %v65, 4294901760
  %6533 = vmatpush1.xpose.msra.mxu0 %v6532
  %6534 = vmatprep.subr.mxu0 0.0
  %v6535 = vand.u32 %v68, 4294901760
  %6536 = vmatpush1.xpose.msra.mxu0 %v6535
  %6537 = vmatprep.subr.mxu0 0.0
  %v6538 = vand.u32 %v71, 4294901760
  %6539 = vmatpush1.xpose.msra.mxu0 %v6538
  %6540 = vmatprep.subr.mxu0 0.0
  %v6541 = vand.u32 %v74, 4294901760
  %6542 = vmatpush1.xpose.msra.mxu0 %v6541
  %6543 = vmatprep.subr.mxu0 0.0
  %6544 = vmatpush1.xpose.msra.mxu0 0.0
  %6545 = vmatprep.subr.mxu0 0.0
  %6546 = vmatpush1.xpose.msra.mxu0 0.0
  %6547 = vmatprep.subr.mxu0 0.0
  %6548 = vmatpush1.xpose.msra.mxu0 0.0
  %6549 = vmatprep.subr.mxu0 0.0
  %6550 = vmatpush1.xpose.msra.mxu0 0.0
  %6551 = vmatprep.subr.mxu0 0.0
  %6552 = vmatpush1.xpose.msra.mxu0 0.0
  %6553 = vmatprep.subr.mxu0 0.0
  %6554 = vmatpush1.xpose.msra.mxu0 0.0
  %6555 = vmatprep.subr.mxu0 0.0
  %6556 = vmatpush1.xpose.msra.mxu0 0.0
  %6557 = vmatprep.subr.mxu0 0.0
  %6558 = vmatpush1.xpose.msra.mxu0 0.0
  %6559 = vmatprep.subr.mxu0 0.0
  %6560 = vmatpush1.xpose.msra.mxu0 0.0
  %6561 = vmatprep.subr.mxu0 0.0
  %6562 = vmatpush1.xpose.msra.mxu0 0.0
  %6563 = vmatprep.subr.mxu0 0.0
  %6564 = vmatpush1.xpose.msra.mxu0 0.0
  %6565 = vmatprep.subr.mxu0 0.0
  %6566 = vmatpush1.xpose.msra.mxu0 0.0
  %6567 = vmatprep.subr.mxu0 0.0
  %6568 = vmatpush1.xpose.msra.mxu0 0.0
  %6569 = vmatprep.subr.mxu0 0.0
  %6570 = vmatpush1.xpose.msra.mxu0 0.0
  %6571 = vmatprep.subr.mxu0 0.0
  %6572 = vmatpush1.xpose.msra.mxu0 0.0
  %6573 = vmatprep.subr.mxu0 0.0
  %6574 = vmatpush1.xpose.msra.mxu0 0.0
  %6575 = vmatprep.subr.mxu0 0.0
  %6576 = vmatpush1.xpose.msra.mxu0 0.0
  %6577 = vmatprep.subr.mxu0 0.0
  %6578 = vmatpush1.xpose.msra.mxu0 0.0
  %6579 = vmatprep.subr.mxu0 0.0
  %6580 = vmatpush1.xpose.msra.mxu0 0.0
  %6581 = vmatprep.subr.mxu0 0.0
  %6582 = vmatpush1.xpose.msra.mxu0 0.0
  %6583 = vmatprep.subr.mxu0 0.0
  %6584 = vmatpush1.xpose.msra.mxu0 0.0
  %6585 = vmatprep.subr.mxu0 0.0
  %6586 = vmatpush1.xpose.msra.mxu0 0.0
  %6587 = vmatprep.subr.mxu0 0.0
  %6588 = vmatpush1.xpose.msra.mxu0 0.0
  %6589 = vmatprep.subr.mxu0 0.0
  %6590 = vmatpush1.xpose.msra.mxu0 0.0
  %6591 = vmatprep.mubr.f32.mxu0 0.0
  %v6592 = vand.u32 %v6503, 4294901760
  %v6593 = vsub.f32 %v6503, %v6592
  %v6594 = vand.u32 %v6593, 4294901760
  %v6595 = vsub.f32 %v6593, %v6594
  %v6596 = vand.u32 %v6595, 4294901760
  %6597 = vmatmul.mubr.f32.gmra.mrb[0].mxu0 %v6596
  %v6598 = vpop.f32.mrb[0].mxu0
  %v6599 = vadd.f32 0.0, %v6598
  %v6600 = vpop.f32.mrb[0].mxu0
  %6601 = vmatprep.mubr.f32.mxu0 0.0
  %v6602 = vand.u32 %v6505, 4294901760
  %v6603 = vsub.f32 %v6505, %v6602
  %v6604 = vand.u32 %v6603, 4294901760
  %v6605 = vsub.f32 %v6603, %v6604
  %v6606 = vand.u32 %v6605, 4294901760
  %6607 = vmatmul.mubr.f32.gmra.mrb[0].mxu0 %v6606
  %v6608 = vpop.f32.mrb[0].mxu0
  %v6609 = vadd.f32 0.0, %v6608
  %v6610 = vpop.f32.mrb[0].mxu0
  %6611 = vmatprep.mubr.f32.mxu0 0.0
  %v6612 = vand.u32 %v6507, 4294901760
  %v6613 = vsub.f32 %v6507, %v6612
  %v6614 = vand.u32 %v6613, 4294901760
  %v6615 = vsub.f32 %v6613, %v6614
  %v6616 = vand.u32 %v6615, 4294901760
  %6617 = vmatmul.mubr.f32.gmra.mrb[0].mxu0 %v6616
  %v6618 = vpop.f32.mrb[0].mxu0
  %v6619 = vadd.f32 0.0, %v6618
  %v6620 = vpop.f32.mrb[0].mxu0
  %6621 = vmatprep.mubr.f32.mxu0 0.0
  %v6622 = vand.u32 %v6509, 4294901760
  %v6623 = vsub.f32 %v6509, %v6622
  %v6624 = vand.u32 %v6623, 4294901760
  %v6625 = vsub.f32 %v6623, %v6624
  %v6626 = vand.u32 %v6625, 4294901760
  %6627 = vmatmul.mubr.f32.gmra.mrb[0].mxu0 %v6626
  %v6628 = vpop.f32.mrb[0].mxu0
  %v6629 = vadd.f32 0.0, %v6628
  %v6630 = vpop.f32.mrb[0].mxu0
  %6631 = vmatprep.mubr.f32.mxu0 0.0
  %v6632 = vand.u32 %v6511, 4294901760
  %v6633 = vsub.f32 %v6511, %v6632
  %v6634 = vand.u32 %v6633, 4294901760
  %v6635 = vsub.f32 %v6633, %v6634
  %v6636 = vand.u32 %v6635, 4294901760
  %6637 = vmatmul.mubr.f32.gmra.mrb[0].mxu0 %v6636
  %v6638 = vpop.f32.mrb[0].mxu0
  %v6639 = vadd.f32 0.0, %v6638
  %v6640 = vpop.f32.mrb[0].mxu0
  %6641 = vmatprep.mubr.f32.mxu0 0.0
  %v6642 = vand.u32 %v6513, 4294901760
  %v6643 = vsub.f32 %v6513, %v6642
  %v6644 = vand.u32 %v6643, 4294901760
  %v6645 = vsub.f32 %v6643, %v6644
  %v6646 = vand.u32 %v6645, 4294901760
  %6647 = vmatmul.mubr.f32.gmra.mrb[0].mxu0 %v6646
  %v6648 = vpop.f32.mrb[0].mxu0
  %v6649 = vadd.f32 0.0, %v6648
  %v6650 = vpop.f32.mrb[0].mxu0
  %6651 = vmatprep.mubr.f32.mxu0 0.0
  %v6652 = vand.u32 %v6515, 4294901760
  %v6653 = vsub.f32 %v6515, %v6652
  %v6654 = vand.u32 %v6653, 4294901760
  %v6655 = vsub.f32 %v6653, %v6654
  %v6656 = vand.u32 %v6655, 4294901760
  %6657 = vmatmul.mubr.f32.gmra.mrb[0].mxu0 %v6656
  %v6658 = vpop.f32.mrb[0].mxu0
  %v6659 = vadd.f32 0.0, %v6658
  %v6660 = vpop.f32.mrb[0].mxu0
  %6661 = vmatprep.mubr.f32.mxu0 0.0
  %v6662 = vand.u32 %v6517, 4294901760
  %v6663 = vsub.f32 %v6517, %v6662
  %v6664 = vand.u32 %v6663, 4294901760
  %v6665 = vsub.f32 %v6663, %v6664
  %v6666 = vand.u32 %v6665, 4294901760
  %6667 = vmatmul.mubr.f32.gmra.mrb[0].mxu0 %v6666
  %v6668 = vpop.f32.mrb[0].mxu0
  %v6669 = vadd.f32 0.0, %v6668
  %v6670 = vpop.f32.mrb[0].mxu0
  %6671 = vdwg.mxu0
  %6672 = vmatprep.subr.mxu0 0.0
  %v6673 = vand.u32 %v53, 4294901760
  %v6674 = vsub.f32 %v53, %v6673
  %v6675 = vand.u32 %v6674, 4294901760
  %v6676 = vsub.f32 %v6674, %v6675
  %v6677 = vand.u32 %v6676, 4294901760
  %6678 = vmatpush1.xpose.msra.mxu0 %v6677
  %6679 = vmatprep.subr.mxu0 0.0
  %v6680 = vand.u32 %v56, 4294901760
  %v6681 = vsub.f32 %v56, %v6680
  %v6682 = vand.u32 %v6681, 4294901760
  %v6683 = vsub.f32 %v6681, %v6682
  %v6684 = vand.u32 %v6683, 4294901760
  %6685 = vmatpush1.xpose.msra.mxu0 %v6684
  %6686 = vmatprep.subr.mxu0 0.0
  %v6687 = vand.u32 %v59, 4294901760
  %v6688 = vsub.f32 %v59, %v6687
  %v6689 = vand.u32 %v6688, 4294901760
  %v6690 = vsub.f32 %v6688, %v6689
  %v6691 = vand.u32 %v6690, 4294901760
  %6692 = vmatpush1.xpose.msra.mxu0 %v6691
  %6693 = vmatprep.subr.mxu0 0.0
  %v6694 = vand.u32 %v62, 4294901760
  %v6695 = vsub.f32 %v62, %v6694
  %v6696 = vand.u32 %v6695, 4294901760
  %v6697 = vsub.f32 %v6695, %v6696
  %v6698 = vand.u32 %v6697, 4294901760
  %6699 = vmatpush1.xpose.msra.mxu0 %v6698
  %6700 = vmatprep.subr.mxu0 0.0
  %v6701 = vand.u32 %v65, 4294901760
  %v6702 = vsub.f32 %v65, %v6701
  %v6703 = vand.u32 %v6702, 4294901760
  %v6704 = vsub.f32 %v6702, %v6703
  %v6705 = vand.u32 %v6704, 4294901760
  %6706 = vmatpush1.xpose.msra.mxu0 %v6705
  %6707 = vmatprep.subr.mxu0 0.0
  %v6708 = vand.u32 %v68, 4294901760
  %v6709 = vsub.f32 %v68, %v6708
  %v6710 = vand.u32 %v6709, 4294901760
  %v6711 = vsub.f32 %v6709, %v6710
  %v6712 = vand.u32 %v6711, 4294901760
  %6713 = vmatpush1.xpose.msra.mxu0 %v6712
  %6714 = vmatprep.subr.mxu0 0.0
  %v6715 = vand.u32 %v71, 4294901760
  %v6716 = vsub.f32 %v71, %v6715
  %v6717 = vand.u32 %v6716, 4294901760
  %v6718 = vsub.f32 %v6716, %v6717
  %v6719 = vand.u32 %v6718, 4294901760
  %6720 = vmatpush1.xpose.msra.mxu0 %v6719
  %6721 = vmatprep.subr.mxu0 0.0
  %v6722 = vand.u32 %v74, 4294901760
  %v6723 = vsub.f32 %v74, %v6722
  %v6724 = vand.u32 %v6723, 4294901760
  %v6725 = vsub.f32 %v6723, %v6724
  %v6726 = vand.u32 %v6725, 4294901760
  %6727 = vmatpush1.xpose.msra.mxu0 %v6726
  %6728 = vmatprep.subr.mxu0 0.0
  %6729 = vmatpush1.xpose.msra.mxu0 0.0
  %6730 = vmatprep.subr.mxu0 0.0
  %6731 = vmatpush1.xpose.msra.mxu0 0.0
  %6732 = vmatprep.subr.mxu0 0.0
  %6733 = vmatpush1.xpose.msra.mxu0 0.0
  %6734 = vmatprep.subr.mxu0 0.0
  %6735 = vmatpush1.xpose.msra.mxu0 0.0
  %6736 = vmatprep.subr.mxu0 0.0
  %6737 = vmatpush1.xpose.msra.mxu0 0.0
  %6738 = vmatprep.subr.mxu0 0.0
  %6739 = vmatpush1.xpose.msra.mxu0 0.0
  %6740 = vmatprep.subr.mxu0 0.0
  %6741 = vmatpush1.xpose.msra.mxu0 0.0
  %6742 = vmatprep.subr.mxu0 0.0
  %6743 = vmatpush1.xpose.msra.mxu0 0.0
  %6744 = vmatprep.subr.mxu0 0.0
  %6745 = vmatpush1.xpose.msra.mxu0 0.0
  %6746 = vmatprep.subr.mxu0 0.0
  %6747 = vmatpush1.xpose.msra.mxu0 0.0
  %6748 = vmatprep.subr.mxu0 0.0
  %6749 = vmatpush1.xpose.msra.mxu0 0.0
  %6750 = vmatprep.subr.mxu0 0.0
  %6751 = vmatpush1.xpose.msra.mxu0 0.0
  %6752 = vmatprep.subr.mxu0 0.0
  %6753 = vmatpush1.xpose.msra.mxu0 0.0
  %6754 = vmatprep.subr.mxu0 0.0
  %6755 = vmatpush1.xpose.msra.mxu0 0.0
  %6756 = vmatprep.subr.mxu0 0.0
  %6757 = vmatpush1.xpose.msra.mxu0 0.0
  %6758 = vmatprep.subr.mxu0 0.0
  %6759 = vmatpush1.xpose.msra.mxu0 0.0
  %6760 = vmatprep.subr.mxu0 0.0
  %6761 = vmatpush1.xpose.msra.mxu0 0.0
  %6762 = vmatprep.subr.mxu0 0.0
  %6763 = vmatpush1.xpose.msra.mxu0 0.0
  %6764 = vmatprep.subr.mxu0 0.0
  %6765 = vmatpush1.xpose.msra.mxu0 0.0
  %6766 = vmatprep.subr.mxu0 0.0
  %6767 = vmatpush1.xpose.msra.mxu0 0.0
  %6768 = vmatprep.subr.mxu0 0.0
  %6769 = vmatpush1.xpose.msra.mxu0 0.0
  %6770 = vmatprep.subr.mxu0 0.0
  %6771 = vmatpush1.xpose.msra.mxu0 0.0
  %6772 = vmatprep.subr.mxu0 0.0
  %6773 = vmatpush1.xpose.msra.mxu0 0.0
  %6774 = vmatprep.subr.mxu0 0.0
  %6775 = vmatpush1.xpose.msra.mxu0 0.0
  %6776 = vmatprep.mubr.f32.mxu0 0.0
  %v6777 = vand.u32 %v6503, 4294901760
  %6778 = vmatmul.mubr.f32.gmra.mrb[0].mxu0 %v6777
  %v6779 = vpop.f32.mrb[0].mxu0
  %v6780 = vadd.f32 %v6599, %v6779
  %v6781 = vpop.f32.mrb[0].mxu0
  %6782 = vmatprep.mubr.f32.mxu0 0.0
  %v6783 = vand.u32 %v6505, 4294901760
  %6784 = vmatmul.mubr.f32.gmra.mrb[0].mxu0 %v6783
  %v6785 = vpop.f32.mrb[0].mxu0
  %v6786 = vadd.f32 %v6609, %v6785
  %v6787 = vpop.f32.mrb[0].mxu0
  %6788 = vmatprep.mubr.f32.mxu0 0.0
  %v6789 = vand.u32 %v6507, 4294901760
  %6790 = vmatmul.mubr.f32.gmra.mrb[0].mxu0 %v6789
  %v6791 = vpop.f32.mrb[0].mxu0
  %v6792 = vadd.f32 %v6619, %v6791
  %v6793 = vpop.f32.mrb[0].mxu0
  %6794 = vmatprep.mubr.f32.mxu0 0.0
  %v6795 = vand.u32 %v6509, 4294901760
  %6796 = vmatmul.mubr.f32.gmra.mrb[0].mxu0 %v6795
  %v6797 = vpop.f32.mrb[0].mxu0
  %v6798 = vadd.f32 %v6629, %v6797
  %v6799 = vpop.f32.mrb[0].mxu0
  %6800 = vmatprep.mubr.f32.mxu0 0.0
  %v6801 = vand.u32 %v6511, 4294901760
  %6802 = vmatmul.mubr.f32.gmra.mrb[0].mxu0 %v6801
  %v6803 = vpop.f32.mrb[0].mxu0
  %v6804 = vadd.f32 %v6639, %v6803
  %v6805 = vpop.f32.mrb[0].mxu0
  %6806 = vmatprep.mubr.f32.mxu0 0.0
  %v6807 = vand.u32 %v6513, 4294901760
  %6808 = vmatmul.mubr.f32.gmra.mrb[0].mxu0 %v6807
  %v6809 = vpop.f32.mrb[0].mxu0
  %v6810 = vadd.f32 %v6649, %v6809
  %v6811 = vpop.f32.mrb[0].mxu0
  %6812 = vmatprep.mubr.f32.mxu0 0.0
  %v6813 = vand.u32 %v6515, 4294901760
  %6814 = vmatmul.mubr.f32.gmra.mrb[0].mxu0 %v6813
  %v6815 = vpop.f32.mrb[0].mxu0
  %v6816 = vadd.f32 %v6659, %v6815
  %v6817 = vpop.f32.mrb[0].mxu0
  %6818 = vmatprep.mubr.f32.mxu0 0.0
  %v6819 = vand.u32 %v6517, 4294901760
  %6820 = vmatmul.mubr.f32.gmra.mrb[0].mxu0 %v6819
  %v6821 = vpop.f32.mrb[0].mxu0
  %v6822 = vadd.f32 %v6669, %v6821
  %v6823 = vpop.f32.mrb[0].mxu0
  %6824 = vdwg.mxu0
  %6825 = vmatprep.subr.mxu0 0.0
  %v6826 = vand.u32 %v53, 4294901760
  %v6827 = vsub.f32 %v53, %v6826
  %6828 = vmatpush1.xpose.msra.mxu0 %v6827
  %6829 = vmatprep.subr.mxu0 0.0
  %v6830 = vand.u32 %v56, 4294901760
  %v6831 = vsub.f32 %v56, %v6830
  %6832 = vmatpush1.xpose.msra.mxu0 %v6831
  %6833 = vmatprep.subr.mxu0 0.0
  %v6834 = vand.u32 %v59, 4294901760
  %v6835 = vsub.f32 %v59, %v6834
  %6836 = vmatpush1.xpose.msra.mxu0 %v6835
  %6837 = vmatprep.subr.mxu0 0.0
  %v6838 = vand.u32 %v62, 4294901760
  %v6839 = vsub.f32 %v62, %v6838
  %6840 = vmatpush1.xpose.msra.mxu0 %v6839
  %6841 = vmatprep.subr.mxu0 0.0
  %v6842 = vand.u32 %v65, 4294901760
  %v6843 = vsub.f32 %v65, %v6842
  %6844 = vmatpush1.xpose.msra.mxu0 %v6843
  %6845 = vmatprep.subr.mxu0 0.0
  %v6846 = vand.u32 %v68, 4294901760
  %v6847 = vsub.f32 %v68, %v6846
  %6848 = vmatpush1.xpose.msra.mxu0 %v6847
  %6849 = vmatprep.subr.mxu0 0.0
  %v6850 = vand.u32 %v71, 4294901760
  %v6851 = vsub.f32 %v71, %v6850
  %6852 = vmatpush1.xpose.msra.mxu0 %v6851
  %6853 = vmatprep.subr.mxu0 0.0
  %v6854 = vand.u32 %v74, 4294901760
  %v6855 = vsub.f32 %v74, %v6854
  %6856 = vmatpush1.xpose.msra.mxu0 %v6855
  %6857 = vmatprep.subr.mxu0 0.0
  %6858 = vmatpush1.xpose.msra.mxu0 0.0
  %6859 = vmatprep.subr.mxu0 0.0
  %6860 = vmatpush1.xpose.msra.mxu0 0.0
  %6861 = vmatprep.subr.mxu0 0.0
  %6862 = vmatpush1.xpose.msra.mxu0 0.0
  %6863 = vmatprep.subr.mxu0 0.0
  %6864 = vmatpush1.xpose.msra.mxu0 0.0
  %6865 = vmatprep.subr.mxu0 0.0
  %6866 = vmatpush1.xpose.msra.mxu0 0.0
  %6867 = vmatprep.subr.mxu0 0.0
  %6868 = vmatpush1.xpose.msra.mxu0 0.0
  %6869 = vmatprep.subr.mxu0 0.0
  %6870 = vmatpush1.xpose.msra.mxu0 0.0
  %6871 = vmatprep.subr.mxu0 0.0
  %6872 = vmatpush1.xpose.msra.mxu0 0.0
  %6873 = vmatprep.subr.mxu0 0.0
  %6874 = vmatpush1.xpose.msra.mxu0 0.0
  %6875 = vmatprep.subr.mxu0 0.0
  %6876 = vmatpush1.xpose.msra.mxu0 0.0
  %6877 = vmatprep.subr.mxu0 0.0
  %6878 = vmatpush1.xpose.msra.mxu0 0.0
  %6879 = vmatprep.subr.mxu0 0.0
  %6880 = vmatpush1.xpose.msra.mxu0 0.0
  %6881 = vmatprep.subr.mxu0 0.0
  %6882 = vmatpush1.xpose.msra.mxu0 0.0
  %6883 = vmatprep.subr.mxu0 0.0
  %6884 = vmatpush1.xpose.msra.mxu0 0.0
  %6885 = vmatprep.subr.mxu0 0.0
  %6886 = vmatpush1.xpose.msra.mxu0 0.0
  %6887 = vmatprep.subr.mxu0 0.0
  %6888 = vmatpush1.xpose.msra.mxu0 0.0
  %6889 = vmatprep.subr.mxu0 0.0
  %6890 = vmatpush1.xpose.msra.mxu0 0.0
  %6891 = vmatprep.subr.mxu0 0.0
  %6892 = vmatpush1.xpose.msra.mxu0 0.0
  %6893 = vmatprep.subr.mxu0 0.0
  %6894 = vmatpush1.xpose.msra.mxu0 0.0
  %6895 = vmatprep.subr.mxu0 0.0
  %6896 = vmatpush1.xpose.msra.mxu0 0.0
  %6897 = vmatprep.subr.mxu0 0.0
  %6898 = vmatpush1.xpose.msra.mxu0 0.0
  %6899 = vmatprep.subr.mxu0 0.0
  %6900 = vmatpush1.xpose.msra.mxu0 0.0
  %6901 = vmatprep.subr.mxu0 0.0
  %6902 = vmatpush1.xpose.msra.mxu0 0.0
  %6903 = vmatprep.subr.mxu0 0.0
  %6904 = vmatpush1.xpose.msra.mxu0 0.0
  %6905 = vmatprep.mubr.f32.mxu0 0.0
  %v6906 = vand.u32 %v6503, 4294901760
  %v6907 = vsub.f32 %v6503, %v6906
  %6908 = vmatmul.mubr.f32.gmra.mrb[0].mxu0 %v6907
  %v6909 = vpop.f32.mrb[0].mxu0
  %v6910 = vadd.f32 %v6780, %v6909
  %v6911 = vpop.f32.mrb[0].mxu0
  %6912 = vmatprep.mubr.f32.mxu0 0.0
  %v6913 = vand.u32 %v6505, 4294901760
  %v6914 = vsub.f32 %v6505, %v6913
  %6915 = vmatmul.mubr.f32.gmra.mrb[0].mxu0 %v6914
  %v6916 = vpop.f32.mrb[0].mxu0
  %v6917 = vadd.f32 %v6786, %v6916
  %v6918 = vpop.f32.mrb[0].mxu0
  %6919 = vmatprep.mubr.f32.mxu0 0.0
  %v6920 = vand.u32 %v6507, 4294901760
  %v6921 = vsub.f32 %v6507, %v6920
  %6922 = vmatmul.mubr.f32.gmra.mrb[0].mxu0 %v6921
  %v6923 = vpop.f32.mrb[0].mxu0
  %v6924 = vadd.f32 %v6792, %v6923
  %v6925 = vpop.f32.mrb[0].mxu0
  %6926 = vmatprep.mubr.f32.mxu0 0.0
  %v6927 = vand.u32 %v6509, 4294901760
  %v6928 = vsub.f32 %v6509, %v6927
  %6929 = vmatmul.mubr.f32.gmra.mrb[0].mxu0 %v6928
  %v6930 = vpop.f32.mrb[0].mxu0
  %v6931 = vadd.f32 %v6798, %v6930
  %v6932 = vpop.f32.mrb[0].mxu0
  %6933 = vmatprep.mubr.f32.mxu0 0.0
  %v6934 = vand.u32 %v6511, 4294901760
  %v6935 = vsub.f32 %v6511, %v6934
  %6936 = vmatmul.mubr.f32.gmra.mrb[0].mxu0 %v6935
  %v6937 = vpop.f32.mrb[0].mxu0
  %v6938 = vadd.f32 %v6804, %v6937
  %v6939 = vpop.f32.mrb[0].mxu0
  %6940 = vmatprep.mubr.f32.mxu0 0.0
  %v6941 = vand.u32 %v6513, 4294901760
  %v6942 = vsub.f32 %v6513, %v6941
  %6943 = vmatmul.mubr.f32.gmra.mrb[0].mxu0 %v6942
  %v6944 = vpop.f32.mrb[0].mxu0
  %v6945 = vadd.f32 %v6810, %v6944
  %v6946 = vpop.f32.mrb[0].mxu0
  %6947 = vmatprep.mubr.f32.mxu0 0.0
  %v6948 = vand.u32 %v6515, 4294901760
  %v6949 = vsub.f32 %v6515, %v6948
  %6950 = vmatmul.mubr.f32.gmra.mrb[0].mxu0 %v6949
  %v6951 = vpop.f32.mrb[0].mxu0
  %v6952 = vadd.f32 %v6816, %v6951
  %v6953 = vpop.f32.mrb[0].mxu0
  %6954 = vmatprep.mubr.f32.mxu0 0.0
  %v6955 = vand.u32 %v6517, 4294901760
  %v6956 = vsub.f32 %v6517, %v6955
  %6957 = vmatmul.mubr.f32.gmra.mrb[0].mxu0 %v6956
  %v6958 = vpop.f32.mrb[0].mxu0
  %v6959 = vadd.f32 %v6822, %v6958
  %v6960 = vpop.f32.mrb[0].mxu0
  %6961 = vdwg.mxu0
  %6962 = vmatprep.subr.mxu0 0.0
  %v6963 = vand.u32 %v53, 4294901760
  %6964 = vmatpush1.xpose.msra.mxu0 %v6963
  %6965 = vmatprep.subr.mxu0 0.0
  %v6966 = vand.u32 %v56, 4294901760
  %6967 = vmatpush1.xpose.msra.mxu0 %v6966
  %6968 = vmatprep.subr.mxu0 0.0
  %v6969 = vand.u32 %v59, 4294901760
  %6970 = vmatpush1.xpose.msra.mxu0 %v6969
  %6971 = vmatprep.subr.mxu0 0.0
  %v6972 = vand.u32 %v62, 4294901760
  %6973 = vmatpush1.xpose.msra.mxu0 %v6972
  %6974 = vmatprep.subr.mxu0 0.0
  %v6975 = vand.u32 %v65, 4294901760
  %6976 = vmatpush1.xpose.msra.mxu0 %v6975
  %6977 = vmatprep.subr.mxu0 0.0
  %v6978 = vand.u32 %v68, 4294901760
  %6979 = vmatpush1.xpose.msra.mxu0 %v6978
  %6980 = vmatprep.subr.mxu0 0.0
  %v6981 = vand.u32 %v71, 4294901760
  %6982 = vmatpush1.xpose.msra.mxu0 %v6981
  %6983 = vmatprep.subr.mxu0 0.0
  %v6984 = vand.u32 %v74, 4294901760
  %6985 = vmatpush1.xpose.msra.mxu0 %v6984
  %6986 = vmatprep.subr.mxu0 0.0
  %6987 = vmatpush1.xpose.msra.mxu0 0.0
  %6988 = vmatprep.subr.mxu0 0.0
  %6989 = vmatpush1.xpose.msra.mxu0 0.0
  %6990 = vmatprep.subr.mxu0 0.0
  %6991 = vmatpush1.xpose.msra.mxu0 0.0
  %6992 = vmatprep.subr.mxu0 0.0
  %6993 = vmatpush1.xpose.msra.mxu0 0.0
  %6994 = vmatprep.subr.mxu0 0.0
  %6995 = vmatpush1.xpose.msra.mxu0 0.0
  %6996 = vmatprep.subr.mxu0 0.0
  %6997 = vmatpush1.xpose.msra.mxu0 0.0
  %6998 = vmatprep.subr.mxu0 0.0
  %6999 = vmatpush1.xpose.msra.mxu0 0.0
  %7000 = vmatprep.subr.mxu0 0.0
  %7001 = vmatpush1.xpose.msra.mxu0 0.0
  %7002 = vmatprep.subr.mxu0 0.0
  %7003 = vmatpush1.xpose.msra.mxu0 0.0
  %7004 = vmatprep.subr.mxu0 0.0
  %7005 = vmatpush1.xpose.msra.mxu0 0.0
  %7006 = vmatprep.subr.mxu0 0.0
  %7007 = vmatpush1.xpose.msra.mxu0 0.0
  %7008 = vmatprep.subr.mxu0 0.0
  %7009 = vmatpush1.xpose.msra.mxu0 0.0
  %7010 = vmatprep.subr.mxu0 0.0
  %7011 = vmatpush1.xpose.msra.mxu0 0.0
  %7012 = vmatprep.subr.mxu0 0.0
  %7013 = vmatpush1.xpose.msra.mxu0 0.0
  %7014 = vmatprep.subr.mxu0 0.0
  %7015 = vmatpush1.xpose.msra.mxu0 0.0
  %7016 = vmatprep.subr.mxu0 0.0
  %7017 = vmatpush1.xpose.msra.mxu0 0.0
  %7018 = vmatprep.subr.mxu0 0.0
  %7019 = vmatpush1.xpose.msra.mxu0 0.0
  %7020 = vmatprep.subr.mxu0 0.0
  %7021 = vmatpush1.xpose.msra.mxu0 0.0
  %7022 = vmatprep.subr.mxu0 0.0
  %7023 = vmatpush1.xpose.msra.mxu0 0.0
  %7024 = vmatprep.subr.mxu0 0.0
  %7025 = vmatpush1.xpose.msra.mxu0 0.0
  %7026 = vmatprep.subr.mxu0 0.0
  %7027 = vmatpush1.xpose.msra.mxu0 0.0
  %7028 = vmatprep.subr.mxu0 0.0
  %7029 = vmatpush1.xpose.msra.mxu0 0.0
  %7030 = vmatprep.subr.mxu0 0.0
  %7031 = vmatpush1.xpose.msra.mxu0 0.0
  %7032 = vmatprep.subr.mxu0 0.0
  %7033 = vmatpush1.xpose.msra.mxu0 0.0
  %7034 = vmatprep.mubr.f32.mxu0 0.0
  %v7035 = vand.u32 %v6503, 4294901760
  %v7036 = vsub.f32 %v6503, %v7035
  %v7037 = vand.u32 %v7036, 4294901760
  %7038 = vmatmul.mubr.f32.gmra.mrb[0].mxu0 %v7037
  %v7039 = vpop.f32.mrb[0].mxu0
  %v7040 = vadd.f32 %v6910, %v7039
  %v7041 = vpop.f32.mrb[0].mxu0
  %7042 = vmatprep.mubr.f32.mxu0 0.0
  %v7043 = vand.u32 %v6505, 4294901760
  %v7044 = vsub.f32 %v6505, %v7043
  %v7045 = vand.u32 %v7044, 4294901760
  %7046 = vmatmul.mubr.f32.gmra.mrb[0].mxu0 %v7045
  %v7047 = vpop.f32.mrb[0].mxu0
  %v7048 = vadd.f32 %v6917, %v7047
  %v7049 = vpop.f32.mrb[0].mxu0
  %7050 = vmatprep.mubr.f32.mxu0 0.0
  %v7051 = vand.u32 %v6507, 4294901760
  %v7052 = vsub.f32 %v6507, %v7051
  %v7053 = vand.u32 %v7052, 4294901760
  %7054 = vmatmul.mubr.f32.gmra.mrb[0].mxu0 %v7053
  %v7055 = vpop.f32.mrb[0].mxu0
  %v7056 = vadd.f32 %v6924, %v7055
  %v7057 = vpop.f32.mrb[0].mxu0
  %7058 = vmatprep.mubr.f32.mxu0 0.0
  %v7059 = vand.u32 %v6509, 4294901760
  %v7060 = vsub.f32 %v6509, %v7059
  %v7061 = vand.u32 %v7060, 4294901760
  %7062 = vmatmul.mubr.f32.gmra.mrb[0].mxu0 %v7061
  %v7063 = vpop.f32.mrb[0].mxu0
  %v7064 = vadd.f32 %v6931, %v7063
  %v7065 = vpop.f32.mrb[0].mxu0
  %7066 = vmatprep.mubr.f32.mxu0 0.0
  %v7067 = vand.u32 %v6511, 4294901760
  %v7068 = vsub.f32 %v6511, %v7067
  %v7069 = vand.u32 %v7068, 4294901760
  %7070 = vmatmul.mubr.f32.gmra.mrb[0].mxu0 %v7069
  %v7071 = vpop.f32.mrb[0].mxu0
  %v7072 = vadd.f32 %v6938, %v7071
  %v7073 = vpop.f32.mrb[0].mxu0
  %7074 = vmatprep.mubr.f32.mxu0 0.0
  %v7075 = vand.u32 %v6513, 4294901760
  %v7076 = vsub.f32 %v6513, %v7075
  %v7077 = vand.u32 %v7076, 4294901760
  %7078 = vmatmul.mubr.f32.gmra.mrb[0].mxu0 %v7077
  %v7079 = vpop.f32.mrb[0].mxu0
  %v7080 = vadd.f32 %v6945, %v7079
  %v7081 = vpop.f32.mrb[0].mxu0
  %7082 = vmatprep.mubr.f32.mxu0 0.0
  %v7083 = vand.u32 %v6515, 4294901760
  %v7084 = vsub.f32 %v6515, %v7083
  %v7085 = vand.u32 %v7084, 4294901760
  %7086 = vmatmul.mubr.f32.gmra.mrb[0].mxu0 %v7085
  %v7087 = vpop.f32.mrb[0].mxu0
  %v7088 = vadd.f32 %v6952, %v7087
  %v7089 = vpop.f32.mrb[0].mxu0
  %7090 = vmatprep.mubr.f32.mxu0 0.0
  %v7091 = vand.u32 %v6517, 4294901760
  %v7092 = vsub.f32 %v6517, %v7091
  %v7093 = vand.u32 %v7092, 4294901760
  %7094 = vmatmul.mubr.f32.gmra.mrb[0].mxu0 %v7093
  %v7095 = vpop.f32.mrb[0].mxu0
  %v7096 = vadd.f32 %v6959, %v7095
  %v7097 = vpop.f32.mrb[0].mxu0
  %7098 = vdwg.mxu0
  %7099 = vmatprep.subr.mxu0 0.0
  %v7100 = vand.u32 %v53, 4294901760
  %v7101 = vsub.f32 %v53, %v7100
  %v7102 = vand.u32 %v7101, 4294901760
  %7103 = vmatpush1.xpose.msra.mxu0 %v7102
  %7104 = vmatprep.subr.mxu0 0.0
  %v7105 = vand.u32 %v56, 4294901760
  %v7106 = vsub.f32 %v56, %v7105
  %v7107 = vand.u32 %v7106, 4294901760
  %7108 = vmatpush1.xpose.msra.mxu0 %v7107
  %7109 = vmatprep.subr.mxu0 0.0
  %v7110 = vand.u32 %v59, 4294901760
  %v7111 = vsub.f32 %v59, %v7110
  %v7112 = vand.u32 %v7111, 4294901760
  %7113 = vmatpush1.xpose.msra.mxu0 %v7112
  %7114 = vmatprep.subr.mxu0 0.0
  %v7115 = vand.u32 %v62, 4294901760
  %v7116 = vsub.f32 %v62, %v7115
  %v7117 = vand.u32 %v7116, 4294901760
  %7118 = vmatpush1.xpose.msra.mxu0 %v7117
  %7119 = vmatprep.subr.mxu0 0.0
  %v7120 = vand.u32 %v65, 4294901760
  %v7121 = vsub.f32 %v65, %v7120
  %v7122 = vand.u32 %v7121, 4294901760
  %7123 = vmatpush1.xpose.msra.mxu0 %v7122
  %7124 = vmatprep.subr.mxu0 0.0
  %v7125 = vand.u32 %v68, 4294901760
  %v7126 = vsub.f32 %v68, %v7125
  %v7127 = vand.u32 %v7126, 4294901760
  %7128 = vmatpush1.xpose.msra.mxu0 %v7127
  %7129 = vmatprep.subr.mxu0 0.0
  %v7130 = vand.u32 %v71, 4294901760
  %v7131 = vsub.f32 %v71, %v7130
  %v7132 = vand.u32 %v7131, 4294901760
  %7133 = vmatpush1.xpose.msra.mxu0 %v7132
  %7134 = vmatprep.subr.mxu0 0.0
  %v7135 = vand.u32 %v74, 4294901760
  %v7136 = vsub.f32 %v74, %v7135
  %v7137 = vand.u32 %v7136, 4294901760
  %7138 = vmatpush1.xpose.msra.mxu0 %v7137
  %7139 = vmatprep.subr.mxu0 0.0
  %7140 = vmatpush1.xpose.msra.mxu0 0.0
  %7141 = vmatprep.subr.mxu0 0.0
  %7142 = vmatpush1.xpose.msra.mxu0 0.0
  %7143 = vmatprep.subr.mxu0 0.0
  %7144 = vmatpush1.xpose.msra.mxu0 0.0
  %7145 = vmatprep.subr.mxu0 0.0
  %7146 = vmatpush1.xpose.msra.mxu0 0.0
  %7147 = vmatprep.subr.mxu0 0.0
  %7148 = vmatpush1.xpose.msra.mxu0 0.0
  %7149 = vmatprep.subr.mxu0 0.0
  %7150 = vmatpush1.xpose.msra.mxu0 0.0
  %7151 = vmatprep.subr.mxu0 0.0
  %7152 = vmatpush1.xpose.msra.mxu0 0.0
  %7153 = vmatprep.subr.mxu0 0.0
  %7154 = vmatpush1.xpose.msra.mxu0 0.0
  %7155 = vmatprep.subr.mxu0 0.0
  %7156 = vmatpush1.xpose.msra.mxu0 0.0
  %7157 = vmatprep.subr.mxu0 0.0
  %7158 = vmatpush1.xpose.msra.mxu0 0.0
  %7159 = vmatprep.subr.mxu0 0.0
  %7160 = vmatpush1.xpose.msra.mxu0 0.0
  %7161 = vmatprep.subr.mxu0 0.0
  %7162 = vmatpush1.xpose.msra.mxu0 0.0
  %7163 = vmatprep.subr.mxu0 0.0
  %7164 = vmatpush1.xpose.msra.mxu0 0.0
  %7165 = vmatprep.subr.mxu0 0.0
  %7166 = vmatpush1.xpose.msra.mxu0 0.0
  %7167 = vmatprep.subr.mxu0 0.0
  %7168 = vmatpush1.xpose.msra.mxu0 0.0
  %7169 = vmatprep.subr.mxu0 0.0
  %7170 = vmatpush1.xpose.msra.mxu0 0.0
  %7171 = vmatprep.subr.mxu0 0.0
  %7172 = vmatpush1.xpose.msra.mxu0 0.0
  %7173 = vmatprep.subr.mxu0 0.0
  %7174 = vmatpush1.xpose.msra.mxu0 0.0
  %7175 = vmatprep.subr.mxu0 0.0
  %7176 = vmatpush1.xpose.msra.mxu0 0.0
  %7177 = vmatprep.subr.mxu0 0.0
  %7178 = vmatpush1.xpose.msra.mxu0 0.0
  %7179 = vmatprep.subr.mxu0 0.0
  %7180 = vmatpush1.xpose.msra.mxu0 0.0
  %7181 = vmatprep.subr.mxu0 0.0
  %7182 = vmatpush1.xpose.msra.mxu0 0.0
  %7183 = vmatprep.subr.mxu0 0.0
  %7184 = vmatpush1.xpose.msra.mxu0 0.0
  %7185 = vmatprep.subr.mxu0 0.0
  %7186 = vmatpush1.xpose.msra.mxu0 0.0
  %7187 = vmatprep.mubr.f32.mxu0 0.0
  %v7188 = vand.u32 %v6503, 4294901760
  %7189 = vmatmul.mubr.f32.gmra.mrb[0].mxu0 %v7188
  %v7190 = vpop.f32.mrb[0].mxu0
  %v7191 = vadd.f32 %v7040, %v7190
  %v7192 = vpop.f32.mrb[0].mxu0
  %7193 = vmatprep.mubr.f32.mxu0 0.0
  %v7194 = vand.u32 %v6505, 4294901760
  %7195 = vmatmul.mubr.f32.gmra.mrb[0].mxu0 %v7194
  %v7196 = vpop.f32.mrb[0].mxu0
  %v7197 = vadd.f32 %v7048, %v7196
  %v7198 = vpop.f32.mrb[0].mxu0
  %7199 = vmatprep.mubr.f32.mxu0 0.0
  %v7200 = vand.u32 %v6507, 4294901760
  %7201 = vmatmul.mubr.f32.gmra.mrb[0].mxu0 %v7200
  %v7202 = vpop.f32.mrb[0].mxu0
  %v7203 = vadd.f32 %v7056, %v7202
  %v7204 = vpop.f32.mrb[0].mxu0
  %7205 = vmatprep.mubr.f32.mxu0 0.0
  %v7206 = vand.u32 %v6509, 4294901760
  %7207 = vmatmul.mubr.f32.gmra.mrb[0].mxu0 %v7206
  %v7208 = vpop.f32.mrb[0].mxu0
  %v7209 = vadd.f32 %v7064, %v7208
  %v7210 = vpop.f32.mrb[0].mxu0
  %7211 = vmatprep.mubr.f32.mxu0 0.0
  %v7212 = vand.u32 %v6511, 4294901760
  %7213 = vmatmul.mubr.f32.gmra.mrb[0].mxu0 %v7212
  %v7214 = vpop.f32.mrb[0].mxu0
  %v7215 = vadd.f32 %v7072, %v7214
  %v7216 = vpop.f32.mrb[0].mxu0
  %7217 = vmatprep.mubr.f32.mxu0 0.0
  %v7218 = vand.u32 %v6513, 4294901760
  %7219 = vmatmul.mubr.f32.gmra.mrb[0].mxu0 %v7218
  %v7220 = vpop.f32.mrb[0].mxu0
  %v7221 = vadd.f32 %v7080, %v7220
  %v7222 = vpop.f32.mrb[0].mxu0
  %7223 = vmatprep.mubr.f32.mxu0 0.0
  %v7224 = vand.u32 %v6515, 4294901760
  %7225 = vmatmul.mubr.f32.gmra.mrb[0].mxu0 %v7224
  %v7226 = vpop.f32.mrb[0].mxu0
  %v7227 = vadd.f32 %v7088, %v7226
  %v7228 = vpop.f32.mrb[0].mxu0
  %7229 = vmatprep.mubr.f32.mxu0 0.0
  %v7230 = vand.u32 %v6517, 4294901760
  %7231 = vmatmul.mubr.f32.gmra.mrb[0].mxu0 %v7230
  %v7232 = vpop.f32.mrb[0].mxu0
  %v7233 = vadd.f32 %v7096, %v7232
  %v7234 = vpop.f32.mrb[0].mxu0
  %7235 = vdwg.mxu0
  %7236 = vmatprep.subr.mxu0 0.0
  %v7237 = vand.u32 %v53, 4294901760
  %7238 = vmatpush1.xpose.msra.mxu0 %v7237
  %7239 = vmatprep.subr.mxu0 0.0
  %v7240 = vand.u32 %v56, 4294901760
  %7241 = vmatpush1.xpose.msra.mxu0 %v7240
  %7242 = vmatprep.subr.mxu0 0.0
  %v7243 = vand.u32 %v59, 4294901760
  %7244 = vmatpush1.xpose.msra.mxu0 %v7243
  %7245 = vmatprep.subr.mxu0 0.0
  %v7246 = vand.u32 %v62, 4294901760
  %7247 = vmatpush1.xpose.msra.mxu0 %v7246
  %7248 = vmatprep.subr.mxu0 0.0
  %v7249 = vand.u32 %v65, 4294901760
  %7250 = vmatpush1.xpose.msra.mxu0 %v7249
  %7251 = vmatprep.subr.mxu0 0.0
  %v7252 = vand.u32 %v68, 4294901760
  %7253 = vmatpush1.xpose.msra.mxu0 %v7252
  %7254 = vmatprep.subr.mxu0 0.0
  %v7255 = vand.u32 %v71, 4294901760
  %7256 = vmatpush1.xpose.msra.mxu0 %v7255
  %7257 = vmatprep.subr.mxu0 0.0
  %v7258 = vand.u32 %v74, 4294901760
  %7259 = vmatpush1.xpose.msra.mxu0 %v7258
  %7260 = vmatprep.subr.mxu0 0.0
  %7261 = vmatpush1.xpose.msra.mxu0 0.0
  %7262 = vmatprep.subr.mxu0 0.0
  %7263 = vmatpush1.xpose.msra.mxu0 0.0
  %7264 = vmatprep.subr.mxu0 0.0
  %7265 = vmatpush1.xpose.msra.mxu0 0.0
  %7266 = vmatprep.subr.mxu0 0.0
  %7267 = vmatpush1.xpose.msra.mxu0 0.0
  %7268 = vmatprep.subr.mxu0 0.0
  %7269 = vmatpush1.xpose.msra.mxu0 0.0
  %7270 = vmatprep.subr.mxu0 0.0
  %7271 = vmatpush1.xpose.msra.mxu0 0.0
  %7272 = vmatprep.subr.mxu0 0.0
  %7273 = vmatpush1.xpose.msra.mxu0 0.0
  %7274 = vmatprep.subr.mxu0 0.0
  %7275 = vmatpush1.xpose.msra.mxu0 0.0
  %7276 = vmatprep.subr.mxu0 0.0
  %7277 = vmatpush1.xpose.msra.mxu0 0.0
  %7278 = vmatprep.subr.mxu0 0.0
  %7279 = vmatpush1.xpose.msra.mxu0 0.0
  %7280 = vmatprep.subr.mxu0 0.0
  %7281 = vmatpush1.xpose.msra.mxu0 0.0
  %7282 = vmatprep.subr.mxu0 0.0
  %7283 = vmatpush1.xpose.msra.mxu0 0.0
  %7284 = vmatprep.subr.mxu0 0.0
  %7285 = vmatpush1.xpose.msra.mxu0 0.0
  %7286 = vmatprep.subr.mxu0 0.0
  %7287 = vmatpush1.xpose.msra.mxu0 0.0
  %7288 = vmatprep.subr.mxu0 0.0
  %7289 = vmatpush1.xpose.msra.mxu0 0.0
  %7290 = vmatprep.subr.mxu0 0.0
  %7291 = vmatpush1.xpose.msra.mxu0 0.0
  %7292 = vmatprep.subr.mxu0 0.0
  %7293 = vmatpush1.xpose.msra.mxu0 0.0
  %7294 = vmatprep.subr.mxu0 0.0
  %7295 = vmatpush1.xpose.msra.mxu0 0.0
  %7296 = vmatprep.subr.mxu0 0.0
  %7297 = vmatpush1.xpose.msra.mxu0 0.0
  %7298 = vmatprep.subr.mxu0 0.0
  %7299 = vmatpush1.xpose.msra.mxu0 0.0
  %7300 = vmatprep.subr.mxu0 0.0
  %7301 = vmatpush1.xpose.msra.mxu0 0.0
  %7302 = vmatprep.subr.mxu0 0.0
  %7303 = vmatpush1.xpose.msra.mxu0 0.0
  %7304 = vmatprep.subr.mxu0 0.0
  %7305 = vmatpush1.xpose.msra.mxu0 0.0
  %7306 = vmatprep.subr.mxu0 0.0
  %7307 = vmatpush1.xpose.msra.mxu0 0.0
  %7308 = vmatprep.mubr.f32.mxu0 0.0
  %v7309 = vand.u32 %v6503, 4294901760
  %7310 = vmatmul.mubr.f32.gmra.mrb[0].mxu0 %v7309
  %v7311 = vpop.f32.mrb[0].mxu0
  %v7312 = vadd.f32 %v7191, %v7311
  %v7313 = vpop.f32.mrb[0].mxu0
  %7314 = vmatprep.mubr.f32.mxu0 0.0
  %v7315 = vand.u32 %v6505, 4294901760
  %7316 = vmatmul.mubr.f32.gmra.mrb[0].mxu0 %v7315
  %v7317 = vpop.f32.mrb[0].mxu0
  %v7318 = vadd.f32 %v7197, %v7317
  %v7319 = vpop.f32.mrb[0].mxu0
  %7320 = vmatprep.mubr.f32.mxu0 0.0
  %v7321 = vand.u32 %v6507, 4294901760
  %7322 = vmatmul.mubr.f32.gmra.mrb[0].mxu0 %v7321
  %v7323 = vpop.f32.mrb[0].mxu0
  %v7324 = vadd.f32 %v7203, %v7323
  %v7325 = vpop.f32.mrb[0].mxu0
  %7326 = vmatprep.mubr.f32.mxu0 0.0
  %v7327 = vand.u32 %v6509, 4294901760
  %7328 = vmatmul.mubr.f32.gmra.mrb[0].mxu0 %v7327
  %v7329 = vpop.f32.mrb[0].mxu0
  %v7330 = vadd.f32 %v7209, %v7329
  %v7331 = vpop.f32.mrb[0].mxu0
  %7332 = vmatprep.mubr.f32.mxu0 0.0
  %v7333 = vand.u32 %v6511, 4294901760
  %7334 = vmatmul.mubr.f32.gmra.mrb[0].mxu0 %v7333
  %v7335 = vpop.f32.mrb[0].mxu0
  %v7336 = vadd.f32 %v7215, %v7335
  %v7337 = vpop.f32.mrb[0].mxu0
  %7338 = vmatprep.mubr.f32.mxu0 0.0
  %v7339 = vand.u32 %v6513, 4294901760
  %7340 = vmatmul.mubr.f32.gmra.mrb[0].mxu0 %v7339
  %v7341 = vpop.f32.mrb[0].mxu0
  %v7342 = vadd.f32 %v7221, %v7341
  %v7343 = vpop.f32.mrb[0].mxu0
  %7344 = vmatprep.mubr.f32.mxu0 0.0
  %v7345 = vand.u32 %v6515, 4294901760
  %7346 = vmatmul.mubr.f32.gmra.mrb[0].mxu0 %v7345
  %v7347 = vpop.f32.mrb[0].mxu0
  %v7348 = vadd.f32 %v7227, %v7347
  %v7349 = vpop.f32.mrb[0].mxu0
  %7350 = vmatprep.mubr.f32.mxu0 0.0
  %v7351 = vand.u32 %v6517, 4294901760
  %7352 = vmatmul.mubr.f32.gmra.mrb[0].mxu0 %v7351
  %v7353 = vpop.f32.mrb[0].mxu0
  %v7354 = vadd.f32 %v7233, %v7353
  %v7355 = vpop.f32.mrb[0].mxu0
  %7356 = vdwg.mxu0
  %7365 = vrot.lane.b32.xlu0 %v7312, 64
  %v7366 = vpop.permute.xlu0 %7365
  %7367 = vrot.lane.b32.xlu0 %v7318, 64
  %v7368 = vpop.permute.xlu0 %7367
  %7369 = vrot.lane.b32.xlu0 %v7324, 64
  %v7370 = vpop.permute.xlu0 %7369
  %7371 = vrot.lane.b32.xlu0 %v7330, 64
  %v7372 = vpop.permute.xlu0 %7371
  %7373 = vrot.lane.b32.xlu0 %v7336, 64
  %v7374 = vpop.permute.xlu0 %7373
  %7375 = vrot.lane.b32.xlu0 %v7342, 64
  %v7376 = vpop.permute.xlu0 %7375
  %7377 = vrot.lane.b32.xlu0 %v7348, 64
  %v7378 = vpop.permute.xlu0 %7377
  %7379 = vrot.lane.b32.xlu0 %v7354, 64
  %v7380 = vpop.permute.xlu0 %7379
  %7389 = vst.msk [vmem:[%s2 + $0x10] sm:$0xff] %vm3828, %v7366
  %7390 = vst.msk [vmem:[%s2 + $0x30] sm:$0xff] %vm3828, %v7368
  %7391 = vst.msk [vmem:[%s2 + $0x50] sm:$0xff] %vm3828, %v7370
  %7392 = vst.msk [vmem:[%s2 + $0x70] sm:$0xff] %vm3828, %v7372
  %7393 = vst.msk [vmem:[%s2 + $0x90] sm:$0xff] %vm3828, %v7374
  %7394 = vst.msk [vmem:[%s2 + $0xb0] sm:$0xff] %vm3828, %v7376
  %7395 = vst.msk [vmem:[%s2 + $0xd0] sm:$0xff] %vm3828, %v7378
  %7396 = vst.msk [vmem:[%s2 + $0xf0] sm:$0xff] %vm3828, %v7380
  %v7398 = vsel %vm51, %v2005, 0
  %v7401 = vsel %vm51, %v2012, 0
  %v7404 = vsel %vm51, %v2019, 0
  %v7407 = vsel %vm51, %v2026, 0
  %v7410 = vsel %vm51, %v2033, 0
  %v7413 = vsel %vm51, %v2040, 0
  %v7416 = vsel %vm51, %v2047, 0
  %v7419 = vsel %vm51, %v2054, 0
  %7421 = vmatprep.subr.mxu0 0.0
  %v7422 = vand.u32 %v53, 4294901760
  %7423 = vmatpush1.xpose.msra.mxu0 %v7422
  %7424 = vmatprep.subr.mxu0 0.0
  %v7425 = vand.u32 %v56, 4294901760
  %7426 = vmatpush1.xpose.msra.mxu0 %v7425
  %7427 = vmatprep.subr.mxu0 0.0
  %v7428 = vand.u32 %v59, 4294901760
  %7429 = vmatpush1.xpose.msra.mxu0 %v7428
  %7430 = vmatprep.subr.mxu0 0.0
  %v7431 = vand.u32 %v62, 4294901760
  %7432 = vmatpush1.xpose.msra.mxu0 %v7431
  %7433 = vmatprep.subr.mxu0 0.0
  %v7434 = vand.u32 %v65, 4294901760
  %7435 = vmatpush1.xpose.msra.mxu0 %v7434
  %7436 = vmatprep.subr.mxu0 0.0
  %v7437 = vand.u32 %v68, 4294901760
  %7438 = vmatpush1.xpose.msra.mxu0 %v7437
  %7439 = vmatprep.subr.mxu0 0.0
  %v7440 = vand.u32 %v71, 4294901760
  %7441 = vmatpush1.xpose.msra.mxu0 %v7440
  %7442 = vmatprep.subr.mxu0 0.0
  %v7443 = vand.u32 %v74, 4294901760
  %7444 = vmatpush1.xpose.msra.mxu0 %v7443
  %7445 = vmatprep.subr.mxu0 0.0
  %7446 = vmatpush1.xpose.msra.mxu0 0.0
  %7447 = vmatprep.subr.mxu0 0.0
  %7448 = vmatpush1.xpose.msra.mxu0 0.0
  %7449 = vmatprep.subr.mxu0 0.0
  %7450 = vmatpush1.xpose.msra.mxu0 0.0
  %7451 = vmatprep.subr.mxu0 0.0
  %7452 = vmatpush1.xpose.msra.mxu0 0.0
  %7453 = vmatprep.subr.mxu0 0.0
  %7454 = vmatpush1.xpose.msra.mxu0 0.0
  %7455 = vmatprep.subr.mxu0 0.0
  %7456 = vmatpush1.xpose.msra.mxu0 0.0
  %7457 = vmatprep.subr.mxu0 0.0
  %7458 = vmatpush1.xpose.msra.mxu0 0.0
  %7459 = vmatprep.subr.mxu0 0.0
  %7460 = vmatpush1.xpose.msra.mxu0 0.0
  %7461 = vmatprep.subr.mxu0 0.0
  %7462 = vmatpush1.xpose.msra.mxu0 0.0
  %7463 = vmatprep.subr.mxu0 0.0
  %7464 = vmatpush1.xpose.msra.mxu0 0.0
  %7465 = vmatprep.subr.mxu0 0.0
  %7466 = vmatpush1.xpose.msra.mxu0 0.0
  %7467 = vmatprep.subr.mxu0 0.0
  %7468 = vmatpush1.xpose.msra.mxu0 0.0
  %7469 = vmatprep.subr.mxu0 0.0
  %7470 = vmatpush1.xpose.msra.mxu0 0.0
  %7471 = vmatprep.subr.mxu0 0.0
  %7472 = vmatpush1.xpose.msra.mxu0 0.0
  %7473 = vmatprep.subr.mxu0 0.0
  %7474 = vmatpush1.xpose.msra.mxu0 0.0
  %7475 = vmatprep.subr.mxu0 0.0
  %7476 = vmatpush1.xpose.msra.mxu0 0.0
  %7477 = vmatprep.subr.mxu0 0.0
  %7478 = vmatpush1.xpose.msra.mxu0 0.0
  %7479 = vmatprep.subr.mxu0 0.0
  %7480 = vmatpush1.xpose.msra.mxu0 0.0
  %7481 = vmatprep.subr.mxu0 0.0
  %7482 = vmatpush1.xpose.msra.mxu0 0.0
  %7483 = vmatprep.subr.mxu0 0.0
  %7484 = vmatpush1.xpose.msra.mxu0 0.0
  %7485 = vmatprep.subr.mxu0 0.0
  %7486 = vmatpush1.xpose.msra.mxu0 0.0
  %7487 = vmatprep.subr.mxu0 0.0
  %7488 = vmatpush1.xpose.msra.mxu0 0.0
  %7489 = vmatprep.subr.mxu0 0.0
  %7490 = vmatpush1.xpose.msra.mxu0 0.0
  %7491 = vmatprep.subr.mxu0 0.0
  %7492 = vmatpush1.xpose.msra.mxu0 0.0
  %7493 = vmatprep.mubr.f32.mxu0 0.0
  %v7494 = vand.u32 %v7398, 4294901760
  %v7495 = vsub.f32 %v7398, %v7494
  %v7496 = vand.u32 %v7495, 4294901760
  %v7497 = vsub.f32 %v7495, %v7496
  %v7498 = vand.u32 %v7497, 4294901760
  %7499 = vmatmul.mubr.f32.gmra.mrb[0].mxu0 %v7498
  %v7500 = vpop.f32.mrb[0].mxu0
  %v7501 = vadd.f32 0.0, %v7500
  %v7502 = vpop.f32.mrb[0].mxu0
  %7503 = vmatprep.mubr.f32.mxu0 0.0
  %v7504 = vand.u32 %v7401, 4294901760
  %v7505 = vsub.f32 %v7401, %v7504
  %v7506 = vand.u32 %v7505, 4294901760
  %v7507 = vsub.f32 %v7505, %v7506
  %v7508 = vand.u32 %v7507, 4294901760
  %7509 = vmatmul.mubr.f32.gmra.mrb[0].mxu0 %v7508
  %v7510 = vpop.f32.mrb[0].mxu0
  %v7511 = vadd.f32 0.0, %v7510
  %v7512 = vpop.f32.mrb[0].mxu0
  %7513 = vmatprep.mubr.f32.mxu0 0.0
  %v7514 = vand.u32 %v7404, 4294901760
  %v7515 = vsub.f32 %v7404, %v7514
  %v7516 = vand.u32 %v7515, 4294901760
  %v7517 = vsub.f32 %v7515, %v7516
  %v7518 = vand.u32 %v7517, 4294901760
  %7519 = vmatmul.mubr.f32.gmra.mrb[0].mxu0 %v7518
  %v7520 = vpop.f32.mrb[0].mxu0
  %v7521 = vadd.f32 0.0, %v7520
  %v7522 = vpop.f32.mrb[0].mxu0
  %7523 = vmatprep.mubr.f32.mxu0 0.0
  %v7524 = vand.u32 %v7407, 4294901760
  %v7525 = vsub.f32 %v7407, %v7524
  %v7526 = vand.u32 %v7525, 4294901760
  %v7527 = vsub.f32 %v7525, %v7526
  %v7528 = vand.u32 %v7527, 4294901760
  %7529 = vmatmul.mubr.f32.gmra.mrb[0].mxu0 %v7528
  %v7530 = vpop.f32.mrb[0].mxu0
  %v7531 = vadd.f32 0.0, %v7530
  %v7532 = vpop.f32.mrb[0].mxu0
  %7533 = vmatprep.mubr.f32.mxu0 0.0
  %v7534 = vand.u32 %v7410, 4294901760
  %v7535 = vsub.f32 %v7410, %v7534
  %v7536 = vand.u32 %v7535, 4294901760
  %v7537 = vsub.f32 %v7535, %v7536
  %v7538 = vand.u32 %v7537, 4294901760
  %7539 = vmatmul.mubr.f32.gmra.mrb[0].mxu0 %v7538
  %v7540 = vpop.f32.mrb[0].mxu0
  %v7541 = vadd.f32 0.0, %v7540
  %v7542 = vpop.f32.mrb[0].mxu0
  %7543 = vmatprep.mubr.f32.mxu0 0.0
  %v7544 = vand.u32 %v7413, 4294901760
  %v7545 = vsub.f32 %v7413, %v7544
  %v7546 = vand.u32 %v7545, 4294901760
  %v7547 = vsub.f32 %v7545, %v7546
  %v7548 = vand.u32 %v7547, 4294901760
  %7549 = vmatmul.mubr.f32.gmra.mrb[0].mxu0 %v7548
  %v7550 = vpop.f32.mrb[0].mxu0
  %v7551 = vadd.f32 0.0, %v7550
  %v7552 = vpop.f32.mrb[0].mxu0
  %7553 = vmatprep.mubr.f32.mxu0 0.0
  %v7554 = vand.u32 %v7416, 4294901760
  %v7555 = vsub.f32 %v7416, %v7554
  %v7556 = vand.u32 %v7555, 4294901760
  %v7557 = vsub.f32 %v7555, %v7556
  %v7558 = vand.u32 %v7557, 4294901760
  %7559 = vmatmul.mubr.f32.gmra.mrb[0].mxu0 %v7558
  %v7560 = vpop.f32.mrb[0].mxu0
  %v7561 = vadd.f32 0.0, %v7560
  %v7562 = vpop.f32.mrb[0].mxu0
  %7563 = vmatprep.mubr.f32.mxu0 0.0
  %v7564 = vand.u32 %v7419, 4294901760
  %v7565 = vsub.f32 %v7419, %v7564
  %v7566 = vand.u32 %v7565, 4294901760
  %v7567 = vsub.f32 %v7565, %v7566
  %v7568 = vand.u32 %v7567, 4294901760
  %7569 = vmatmul.mubr.f32.gmra.mrb[0].mxu0 %v7568
  %v7570 = vpop.f32.mrb[0].mxu0
  %v7571 = vadd.f32 0.0, %v7570
  %v7572 = vpop.f32.mrb[0].mxu0
  %7573 = vdwg.mxu0
  %7574 = vmatprep.subr.mxu0 0.0
  %v7575 = vand.u32 %v53, 4294901760
  %v7576 = vsub.f32 %v53, %v7575
  %v7577 = vand.u32 %v7576, 4294901760
  %v7578 = vsub.f32 %v7576, %v7577
  %v7579 = vand.u32 %v7578, 4294901760
  %7580 = vmatpush1.xpose.msra.mxu0 %v7579
  %7581 = vmatprep.subr.mxu0 0.0
  %v7582 = vand.u32 %v56, 4294901760
  %v7583 = vsub.f32 %v56, %v7582
  %v7584 = vand.u32 %v7583, 4294901760
  %v7585 = vsub.f32 %v7583, %v7584
  %v7586 = vand.u32 %v7585, 4294901760
  %7587 = vmatpush1.xpose.msra.mxu0 %v7586
  %7588 = vmatprep.subr.mxu0 0.0
  %v7589 = vand.u32 %v59, 4294901760
  %v7590 = vsub.f32 %v59, %v7589
  %v7591 = vand.u32 %v7590, 4294901760
  %v7592 = vsub.f32 %v7590, %v7591
  %v7593 = vand.u32 %v7592, 4294901760
  %7594 = vmatpush1.xpose.msra.mxu0 %v7593
  %7595 = vmatprep.subr.mxu0 0.0
  %v7596 = vand.u32 %v62, 4294901760
  %v7597 = vsub.f32 %v62, %v7596
  %v7598 = vand.u32 %v7597, 4294901760
  %v7599 = vsub.f32 %v7597, %v7598
  %v7600 = vand.u32 %v7599, 4294901760
  %7601 = vmatpush1.xpose.msra.mxu0 %v7600
  %7602 = vmatprep.subr.mxu0 0.0
  %v7603 = vand.u32 %v65, 4294901760
  %v7604 = vsub.f32 %v65, %v7603
  %v7605 = vand.u32 %v7604, 4294901760
  %v7606 = vsub.f32 %v7604, %v7605
  %v7607 = vand.u32 %v7606, 4294901760
  %7608 = vmatpush1.xpose.msra.mxu0 %v7607
  %7609 = vmatprep.subr.mxu0 0.0
  %v7610 = vand.u32 %v68, 4294901760
  %v7611 = vsub.f32 %v68, %v7610
  %v7612 = vand.u32 %v7611, 4294901760
  %v7613 = vsub.f32 %v7611, %v7612
  %v7614 = vand.u32 %v7613, 4294901760
  %7615 = vmatpush1.xpose.msra.mxu0 %v7614
  %7616 = vmatprep.subr.mxu0 0.0
  %v7617 = vand.u32 %v71, 4294901760
  %v7618 = vsub.f32 %v71, %v7617
  %v7619 = vand.u32 %v7618, 4294901760
  %v7620 = vsub.f32 %v7618, %v7619
  %v7621 = vand.u32 %v7620, 4294901760
  %7622 = vmatpush1.xpose.msra.mxu0 %v7621
  %7623 = vmatprep.subr.mxu0 0.0
  %v7624 = vand.u32 %v74, 4294901760
  %v7625 = vsub.f32 %v74, %v7624
  %v7626 = vand.u32 %v7625, 4294901760
  %v7627 = vsub.f32 %v7625, %v7626
  %v7628 = vand.u32 %v7627, 4294901760
  %7629 = vmatpush1.xpose.msra.mxu0 %v7628
  %7630 = vmatprep.subr.mxu0 0.0
  %7631 = vmatpush1.xpose.msra.mxu0 0.0
  %7632 = vmatprep.subr.mxu0 0.0
  %7633 = vmatpush1.xpose.msra.mxu0 0.0
  %7634 = vmatprep.subr.mxu0 0.0
  %7635 = vmatpush1.xpose.msra.mxu0 0.0
  %7636 = vmatprep.subr.mxu0 0.0
  %7637 = vmatpush1.xpose.msra.mxu0 0.0
  %7638 = vmatprep.subr.mxu0 0.0
  %7639 = vmatpush1.xpose.msra.mxu0 0.0
  %7640 = vmatprep.subr.mxu0 0.0
  %7641 = vmatpush1.xpose.msra.mxu0 0.0
  %7642 = vmatprep.subr.mxu0 0.0
  %7643 = vmatpush1.xpose.msra.mxu0 0.0
  %7644 = vmatprep.subr.mxu0 0.0
  %7645 = vmatpush1.xpose.msra.mxu0 0.0
  %7646 = vmatprep.subr.mxu0 0.0
  %7647 = vmatpush1.xpose.msra.mxu0 0.0
  %7648 = vmatprep.subr.mxu0 0.0
  %7649 = vmatpush1.xpose.msra.mxu0 0.0
  %7650 = vmatprep.subr.mxu0 0.0
  %7651 = vmatpush1.xpose.msra.mxu0 0.0
  %7652 = vmatprep.subr.mxu0 0.0
  %7653 = vmatpush1.xpose.msra.mxu0 0.0
  %7654 = vmatprep.subr.mxu0 0.0
  %7655 = vmatpush1.xpose.msra.mxu0 0.0
  %7656 = vmatprep.subr.mxu0 0.0
  %7657 = vmatpush1.xpose.msra.mxu0 0.0
  %7658 = vmatprep.subr.mxu0 0.0
  %7659 = vmatpush1.xpose.msra.mxu0 0.0
  %7660 = vmatprep.subr.mxu0 0.0
  %7661 = vmatpush1.xpose.msra.mxu0 0.0
  %7662 = vmatprep.subr.mxu0 0.0
  %7663 = vmatpush1.xpose.msra.mxu0 0.0
  %7664 = vmatprep.subr.mxu0 0.0
  %7665 = vmatpush1.xpose.msra.mxu0 0.0
  %7666 = vmatprep.subr.mxu0 0.0
  %7667 = vmatpush1.xpose.msra.mxu0 0.0
  %7668 = vmatprep.subr.mxu0 0.0
  %7669 = vmatpush1.xpose.msra.mxu0 0.0
  %7670 = vmatprep.subr.mxu0 0.0
  %7671 = vmatpush1.xpose.msra.mxu0 0.0
  %7672 = vmatprep.subr.mxu0 0.0
  %7673 = vmatpush1.xpose.msra.mxu0 0.0
  %7674 = vmatprep.subr.mxu0 0.0
  %7675 = vmatpush1.xpose.msra.mxu0 0.0
  %7676 = vmatprep.subr.mxu0 0.0
  %7677 = vmatpush1.xpose.msra.mxu0 0.0
  %7678 = vmatprep.mubr.f32.mxu0 0.0
  %v7679 = vand.u32 %v7398, 4294901760
  %7680 = vmatmul.mubr.f32.gmra.mrb[0].mxu0 %v7679
  %v7681 = vpop.f32.mrb[0].mxu0
  %v7682 = vadd.f32 %v7501, %v7681
  %v7683 = vpop.f32.mrb[0].mxu0
  %7684 = vmatprep.mubr.f32.mxu0 0.0
  %v7685 = vand.u32 %v7401, 4294901760
  %7686 = vmatmul.mubr.f32.gmra.mrb[0].mxu0 %v7685
  %v7687 = vpop.f32.mrb[0].mxu0
  %v7688 = vadd.f32 %v7511, %v7687
  %v7689 = vpop.f32.mrb[0].mxu0
  %7690 = vmatprep.mubr.f32.mxu0 0.0
  %v7691 = vand.u32 %v7404, 4294901760
  %7692 = vmatmul.mubr.f32.gmra.mrb[0].mxu0 %v7691
  %v7693 = vpop.f32.mrb[0].mxu0
  %v7694 = vadd.f32 %v7521, %v7693
  %v7695 = vpop.f32.mrb[0].mxu0
  %7696 = vmatprep.mubr.f32.mxu0 0.0
  %v7697 = vand.u32 %v7407, 4294901760
  %7698 = vmatmul.mubr.f32.gmra.mrb[0].mxu0 %v7697
  %v7699 = vpop.f32.mrb[0].mxu0
  %v7700 = vadd.f32 %v7531, %v7699
  %v7701 = vpop.f32.mrb[0].mxu0
  %7702 = vmatprep.mubr.f32.mxu0 0.0
  %v7703 = vand.u32 %v7410, 4294901760
  %7704 = vmatmul.mubr.f32.gmra.mrb[0].mxu0 %v7703
  %v7705 = vpop.f32.mrb[0].mxu0
  %v7706 = vadd.f32 %v7541, %v7705
  %v7707 = vpop.f32.mrb[0].mxu0
  %7708 = vmatprep.mubr.f32.mxu0 0.0
  %v7709 = vand.u32 %v7413, 4294901760
  %7710 = vmatmul.mubr.f32.gmra.mrb[0].mxu0 %v7709
  %v7711 = vpop.f32.mrb[0].mxu0
  %v7712 = vadd.f32 %v7551, %v7711
  %v7713 = vpop.f32.mrb[0].mxu0
  %7714 = vmatprep.mubr.f32.mxu0 0.0
  %v7715 = vand.u32 %v7416, 4294901760
  %7716 = vmatmul.mubr.f32.gmra.mrb[0].mxu0 %v7715
  %v7717 = vpop.f32.mrb[0].mxu0
  %v7718 = vadd.f32 %v7561, %v7717
  %v7719 = vpop.f32.mrb[0].mxu0
  %7720 = vmatprep.mubr.f32.mxu0 0.0
  %v7721 = vand.u32 %v7419, 4294901760
  %7722 = vmatmul.mubr.f32.gmra.mrb[0].mxu0 %v7721
  %v7723 = vpop.f32.mrb[0].mxu0
  %v7724 = vadd.f32 %v7571, %v7723
  %v7725 = vpop.f32.mrb[0].mxu0
  %7726 = vdwg.mxu0
  %7727 = vmatprep.subr.mxu0 0.0
  %v7728 = vand.u32 %v53, 4294901760
  %v7729 = vsub.f32 %v53, %v7728
  %7730 = vmatpush1.xpose.msra.mxu0 %v7729
  %7731 = vmatprep.subr.mxu0 0.0
  %v7732 = vand.u32 %v56, 4294901760
  %v7733 = vsub.f32 %v56, %v7732
  %7734 = vmatpush1.xpose.msra.mxu0 %v7733
  %7735 = vmatprep.subr.mxu0 0.0
  %v7736 = vand.u32 %v59, 4294901760
  %v7737 = vsub.f32 %v59, %v7736
  %7738 = vmatpush1.xpose.msra.mxu0 %v7737
  %7739 = vmatprep.subr.mxu0 0.0
  %v7740 = vand.u32 %v62, 4294901760
  %v7741 = vsub.f32 %v62, %v7740
  %7742 = vmatpush1.xpose.msra.mxu0 %v7741
  %7743 = vmatprep.subr.mxu0 0.0
  %v7744 = vand.u32 %v65, 4294901760
  %v7745 = vsub.f32 %v65, %v7744
  %7746 = vmatpush1.xpose.msra.mxu0 %v7745
  %7747 = vmatprep.subr.mxu0 0.0
  %v7748 = vand.u32 %v68, 4294901760
  %v7749 = vsub.f32 %v68, %v7748
  %7750 = vmatpush1.xpose.msra.mxu0 %v7749
  %7751 = vmatprep.subr.mxu0 0.0
  %v7752 = vand.u32 %v71, 4294901760
  %v7753 = vsub.f32 %v71, %v7752
  %7754 = vmatpush1.xpose.msra.mxu0 %v7753
  %7755 = vmatprep.subr.mxu0 0.0
  %v7756 = vand.u32 %v74, 4294901760
  %v7757 = vsub.f32 %v74, %v7756
  %7758 = vmatpush1.xpose.msra.mxu0 %v7757
  %7759 = vmatprep.subr.mxu0 0.0
  %7760 = vmatpush1.xpose.msra.mxu0 0.0
  %7761 = vmatprep.subr.mxu0 0.0
  %7762 = vmatpush1.xpose.msra.mxu0 0.0
  %7763 = vmatprep.subr.mxu0 0.0
  %7764 = vmatpush1.xpose.msra.mxu0 0.0
  %7765 = vmatprep.subr.mxu0 0.0
  %7766 = vmatpush1.xpose.msra.mxu0 0.0
  %7767 = vmatprep.subr.mxu0 0.0
  %7768 = vmatpush1.xpose.msra.mxu0 0.0
  %7769 = vmatprep.subr.mxu0 0.0
  %7770 = vmatpush1.xpose.msra.mxu0 0.0
  %7771 = vmatprep.subr.mxu0 0.0
  %7772 = vmatpush1.xpose.msra.mxu0 0.0
  %7773 = vmatprep.subr.mxu0 0.0
  %7774 = vmatpush1.xpose.msra.mxu0 0.0
  %7775 = vmatprep.subr.mxu0 0.0
  %7776 = vmatpush1.xpose.msra.mxu0 0.0
  %7777 = vmatprep.subr.mxu0 0.0
  %7778 = vmatpush1.xpose.msra.mxu0 0.0
  %7779 = vmatprep.subr.mxu0 0.0
  %7780 = vmatpush1.xpose.msra.mxu0 0.0
  %7781 = vmatprep.subr.mxu0 0.0
  %7782 = vmatpush1.xpose.msra.mxu0 0.0
  %7783 = vmatprep.subr.mxu0 0.0
  %7784 = vmatpush1.xpose.msra.mxu0 0.0
  %7785 = vmatprep.subr.mxu0 0.0
  %7786 = vmatpush1.xpose.msra.mxu0 0.0
  %7787 = vmatprep.subr.mxu0 0.0
  %7788 = vmatpush1.xpose.msra.mxu0 0.0
  %7789 = vmatprep.subr.mxu0 0.0
  %7790 = vmatpush1.xpose.msra.mxu0 0.0
  %7791 = vmatprep.subr.mxu0 0.0
  %7792 = vmatpush1.xpose.msra.mxu0 0.0
  %7793 = vmatprep.subr.mxu0 0.0
  %7794 = vmatpush1.xpose.msra.mxu0 0.0
  %7795 = vmatprep.subr.mxu0 0.0
  %7796 = vmatpush1.xpose.msra.mxu0 0.0
  %7797 = vmatprep.subr.mxu0 0.0
  %7798 = vmatpush1.xpose.msra.mxu0 0.0
  %7799 = vmatprep.subr.mxu0 0.0
  %7800 = vmatpush1.xpose.msra.mxu0 0.0
  %7801 = vmatprep.subr.mxu0 0.0
  %7802 = vmatpush1.xpose.msra.mxu0 0.0
  %7803 = vmatprep.subr.mxu0 0.0
  %7804 = vmatpush1.xpose.msra.mxu0 0.0
  %7805 = vmatprep.subr.mxu0 0.0
  %7806 = vmatpush1.xpose.msra.mxu0 0.0
  %7807 = vmatprep.mubr.f32.mxu0 0.0
  %v7808 = vand.u32 %v7398, 4294901760
  %v7809 = vsub.f32 %v7398, %v7808
  %7810 = vmatmul.mubr.f32.gmra.mrb[0].mxu0 %v7809
  %v7811 = vpop.f32.mrb[0].mxu0
  %v7812 = vadd.f32 %v7682, %v7811
  %v7813 = vpop.f32.mrb[0].mxu0
  %7814 = vmatprep.mubr.f32.mxu0 0.0
  %v7815 = vand.u32 %v7401, 4294901760
  %v7816 = vsub.f32 %v7401, %v7815
  %7817 = vmatmul.mubr.f32.gmra.mrb[0].mxu0 %v7816
  %v7818 = vpop.f32.mrb[0].mxu0
  %v7819 = vadd.f32 %v7688, %v7818
  %v7820 = vpop.f32.mrb[0].mxu0
  %7821 = vmatprep.mubr.f32.mxu0 0.0
  %v7822 = vand.u32 %v7404, 4294901760
  %v7823 = vsub.f32 %v7404, %v7822
  %7824 = vmatmul.mubr.f32.gmra.mrb[0].mxu0 %v7823
  %v7825 = vpop.f32.mrb[0].mxu0
  %v7826 = vadd.f32 %v7694, %v7825
  %v7827 = vpop.f32.mrb[0].mxu0
  %7828 = vmatprep.mubr.f32.mxu0 0.0
  %v7829 = vand.u32 %v7407, 4294901760
  %v7830 = vsub.f32 %v7407, %v7829
  %7831 = vmatmul.mubr.f32.gmra.mrb[0].mxu0 %v7830
  %v7832 = vpop.f32.mrb[0].mxu0
  %v7833 = vadd.f32 %v7700, %v7832
  %v7834 = vpop.f32.mrb[0].mxu0
  %7835 = vmatprep.mubr.f32.mxu0 0.0
  %v7836 = vand.u32 %v7410, 4294901760
  %v7837 = vsub.f32 %v7410, %v7836
  %7838 = vmatmul.mubr.f32.gmra.mrb[0].mxu0 %v7837
  %v7839 = vpop.f32.mrb[0].mxu0
  %v7840 = vadd.f32 %v7706, %v7839
  %v7841 = vpop.f32.mrb[0].mxu0
  %7842 = vmatprep.mubr.f32.mxu0 0.0
  %v7843 = vand.u32 %v7413, 4294901760
  %v7844 = vsub.f32 %v7413, %v7843
  %7845 = vmatmul.mubr.f32.gmra.mrb[0].mxu0 %v7844
  %v7846 = vpop.f32.mrb[0].mxu0
  %v7847 = vadd.f32 %v7712, %v7846
  %v7848 = vpop.f32.mrb[0].mxu0
  %7849 = vmatprep.mubr.f32.mxu0 0.0
  %v7850 = vand.u32 %v7416, 4294901760
  %v7851 = vsub.f32 %v7416, %v7850
  %7852 = vmatmul.mubr.f32.gmra.mrb[0].mxu0 %v7851
  %v7853 = vpop.f32.mrb[0].mxu0
  %v7854 = vadd.f32 %v7718, %v7853
  %v7855 = vpop.f32.mrb[0].mxu0
  %7856 = vmatprep.mubr.f32.mxu0 0.0
  %v7857 = vand.u32 %v7419, 4294901760
  %v7858 = vsub.f32 %v7419, %v7857
  %7859 = vmatmul.mubr.f32.gmra.mrb[0].mxu0 %v7858
  %v7860 = vpop.f32.mrb[0].mxu0
  %v7861 = vadd.f32 %v7724, %v7860
  %v7862 = vpop.f32.mrb[0].mxu0
  %7863 = vdwg.mxu0
  %7864 = vmatprep.subr.mxu0 0.0
  %v7865 = vand.u32 %v53, 4294901760
  %7866 = vmatpush1.xpose.msra.mxu0 %v7865
  %7867 = vmatprep.subr.mxu0 0.0
  %v7868 = vand.u32 %v56, 4294901760
  %7869 = vmatpush1.xpose.msra.mxu0 %v7868
  %7870 = vmatprep.subr.mxu0 0.0
  %v7871 = vand.u32 %v59, 4294901760
  %7872 = vmatpush1.xpose.msra.mxu0 %v7871
  %7873 = vmatprep.subr.mxu0 0.0
  %v7874 = vand.u32 %v62, 4294901760
  %7875 = vmatpush1.xpose.msra.mxu0 %v7874
  %7876 = vmatprep.subr.mxu0 0.0
  %v7877 = vand.u32 %v65, 4294901760
  %7878 = vmatpush1.xpose.msra.mxu0 %v7877
  %7879 = vmatprep.subr.mxu0 0.0
  %v7880 = vand.u32 %v68, 4294901760
  %7881 = vmatpush1.xpose.msra.mxu0 %v7880
  %7882 = vmatprep.subr.mxu0 0.0
  %v7883 = vand.u32 %v71, 4294901760
  %7884 = vmatpush1.xpose.msra.mxu0 %v7883
  %7885 = vmatprep.subr.mxu0 0.0
  %v7886 = vand.u32 %v74, 4294901760
  %7887 = vmatpush1.xpose.msra.mxu0 %v7886
  %7888 = vmatprep.subr.mxu0 0.0
  %7889 = vmatpush1.xpose.msra.mxu0 0.0
  %7890 = vmatprep.subr.mxu0 0.0
  %7891 = vmatpush1.xpose.msra.mxu0 0.0
  %7892 = vmatprep.subr.mxu0 0.0
  %7893 = vmatpush1.xpose.msra.mxu0 0.0
  %7894 = vmatprep.subr.mxu0 0.0
  %7895 = vmatpush1.xpose.msra.mxu0 0.0
  %7896 = vmatprep.subr.mxu0 0.0
  %7897 = vmatpush1.xpose.msra.mxu0 0.0
  %7898 = vmatprep.subr.mxu0 0.0
  %7899 = vmatpush1.xpose.msra.mxu0 0.0
  %7900 = vmatprep.subr.mxu0 0.0
  %7901 = vmatpush1.xpose.msra.mxu0 0.0
  %7902 = vmatprep.subr.mxu0 0.0
  %7903 = vmatpush1.xpose.msra.mxu0 0.0
  %7904 = vmatprep.subr.mxu0 0.0
  %7905 = vmatpush1.xpose.msra.mxu0 0.0
  %7906 = vmatprep.subr.mxu0 0.0
  %7907 = vmatpush1.xpose.msra.mxu0 0.0
  %7908 = vmatprep.subr.mxu0 0.0
  %7909 = vmatpush1.xpose.msra.mxu0 0.0
  %7910 = vmatprep.subr.mxu0 0.0
  %7911 = vmatpush1.xpose.msra.mxu0 0.0
  %7912 = vmatprep.subr.mxu0 0.0
  %7913 = vmatpush1.xpose.msra.mxu0 0.0
  %7914 = vmatprep.subr.mxu0 0.0
  %7915 = vmatpush1.xpose.msra.mxu0 0.0
  %7916 = vmatprep.subr.mxu0 0.0
  %7917 = vmatpush1.xpose.msra.mxu0 0.0
  %7918 = vmatprep.subr.mxu0 0.0
  %7919 = vmatpush1.xpose.msra.mxu0 0.0
  %7920 = vmatprep.subr.mxu0 0.0
  %7921 = vmatpush1.xpose.msra.mxu0 0.0
  %7922 = vmatprep.subr.mxu0 0.0
  %7923 = vmatpush1.xpose.msra.mxu0 0.0
  %7924 = vmatprep.subr.mxu0 0.0
  %7925 = vmatpush1.xpose.msra.mxu0 0.0
  %7926 = vmatprep.subr.mxu0 0.0
  %7927 = vmatpush1.xpose.msra.mxu0 0.0
  %7928 = vmatprep.subr.mxu0 0.0
  %7929 = vmatpush1.xpose.msra.mxu0 0.0
  %7930 = vmatprep.subr.mxu0 0.0
  %7931 = vmatpush1.xpose.msra.mxu0 0.0
  %7932 = vmatprep.subr.mxu0 0.0
  %7933 = vmatpush1.xpose.msra.mxu0 0.0
  %7934 = vmatprep.subr.mxu0 0.0
  %7935 = vmatpush1.xpose.msra.mxu0 0.0
  %7936 = vmatprep.mubr.f32.mxu0 0.0
  %v7937 = vand.u32 %v7398, 4294901760
  %v7938 = vsub.f32 %v7398, %v7937
  %v7939 = vand.u32 %v7938, 4294901760
  %7940 = vmatmul.mubr.f32.gmra.mrb[0].mxu0 %v7939
  %v7941 = vpop.f32.mrb[0].mxu0
  %v7942 = vadd.f32 %v7812, %v7941
  %v7943 = vpop.f32.mrb[0].mxu0
  %7944 = vmatprep.mubr.f32.mxu0 0.0
  %v7945 = vand.u32 %v7401, 4294901760
  %v7946 = vsub.f32 %v7401, %v7945
  %v7947 = vand.u32 %v7946, 4294901760
  %7948 = vmatmul.mubr.f32.gmra.mrb[0].mxu0 %v7947
  %v7949 = vpop.f32.mrb[0].mxu0
  %v7950 = vadd.f32 %v7819, %v7949
  %v7951 = vpop.f32.mrb[0].mxu0
  %7952 = vmatprep.mubr.f32.mxu0 0.0
  %v7953 = vand.u32 %v7404, 4294901760
  %v7954 = vsub.f32 %v7404, %v7953
  %v7955 = vand.u32 %v7954, 4294901760
  %7956 = vmatmul.mubr.f32.gmra.mrb[0].mxu0 %v7955
  %v7957 = vpop.f32.mrb[0].mxu0
  %v7958 = vadd.f32 %v7826, %v7957
  %v7959 = vpop.f32.mrb[0].mxu0
  %7960 = vmatprep.mubr.f32.mxu0 0.0
  %v7961 = vand.u32 %v7407, 4294901760
  %v7962 = vsub.f32 %v7407, %v7961
  %v7963 = vand.u32 %v7962, 4294901760
  %7964 = vmatmul.mubr.f32.gmra.mrb[0].mxu0 %v7963
  %v7965 = vpop.f32.mrb[0].mxu0
  %v7966 = vadd.f32 %v7833, %v7965
  %v7967 = vpop.f32.mrb[0].mxu0
  %7968 = vmatprep.mubr.f32.mxu0 0.0
  %v7969 = vand.u32 %v7410, 4294901760
  %v7970 = vsub.f32 %v7410, %v7969
  %v7971 = vand.u32 %v7970, 4294901760
  %7972 = vmatmul.mubr.f32.gmra.mrb[0].mxu0 %v7971
  %v7973 = vpop.f32.mrb[0].mxu0
  %v7974 = vadd.f32 %v7840, %v7973
  %v7975 = vpop.f32.mrb[0].mxu0
  %7976 = vmatprep.mubr.f32.mxu0 0.0
  %v7977 = vand.u32 %v7413, 4294901760
  %v7978 = vsub.f32 %v7413, %v7977
  %v7979 = vand.u32 %v7978, 4294901760
  %7980 = vmatmul.mubr.f32.gmra.mrb[0].mxu0 %v7979
  %v7981 = vpop.f32.mrb[0].mxu0
  %v7982 = vadd.f32 %v7847, %v7981
  %v7983 = vpop.f32.mrb[0].mxu0
  %7984 = vmatprep.mubr.f32.mxu0 0.0
  %v7985 = vand.u32 %v7416, 4294901760
  %v7986 = vsub.f32 %v7416, %v7985
  %v7987 = vand.u32 %v7986, 4294901760
  %7988 = vmatmul.mubr.f32.gmra.mrb[0].mxu0 %v7987
  %v7989 = vpop.f32.mrb[0].mxu0
  %v7990 = vadd.f32 %v7854, %v7989
  %v7991 = vpop.f32.mrb[0].mxu0
  %7992 = vmatprep.mubr.f32.mxu0 0.0
  %v7993 = vand.u32 %v7419, 4294901760
  %v7994 = vsub.f32 %v7419, %v7993
  %v7995 = vand.u32 %v7994, 4294901760
  %7996 = vmatmul.mubr.f32.gmra.mrb[0].mxu0 %v7995
  %v7997 = vpop.f32.mrb[0].mxu0
  %v7998 = vadd.f32 %v7861, %v7997
  %v7999 = vpop.f32.mrb[0].mxu0
  %8000 = vdwg.mxu0
  %8001 = vmatprep.subr.mxu0 0.0
  %v8002 = vand.u32 %v53, 4294901760
  %v8003 = vsub.f32 %v53, %v8002
  %v8004 = vand.u32 %v8003, 4294901760
  %8005 = vmatpush1.xpose.msra.mxu0 %v8004
  %8006 = vmatprep.subr.mxu0 0.0
  %v8007 = vand.u32 %v56, 4294901760
  %v8008 = vsub.f32 %v56, %v8007
  %v8009 = vand.u32 %v8008, 4294901760
  %8010 = vmatpush1.xpose.msra.mxu0 %v8009
  %8011 = vmatprep.subr.mxu0 0.0
  %v8012 = vand.u32 %v59, 4294901760
  %v8013 = vsub.f32 %v59, %v8012
  %v8014 = vand.u32 %v8013, 4294901760
  %8015 = vmatpush1.xpose.msra.mxu0 %v8014
  %8016 = vmatprep.subr.mxu0 0.0
  %v8017 = vand.u32 %v62, 4294901760
  %v8018 = vsub.f32 %v62, %v8017
  %v8019 = vand.u32 %v8018, 4294901760
  %8020 = vmatpush1.xpose.msra.mxu0 %v8019
  %8021 = vmatprep.subr.mxu0 0.0
  %v8022 = vand.u32 %v65, 4294901760
  %v8023 = vsub.f32 %v65, %v8022
  %v8024 = vand.u32 %v8023, 4294901760
  %8025 = vmatpush1.xpose.msra.mxu0 %v8024
  %8026 = vmatprep.subr.mxu0 0.0
  %v8027 = vand.u32 %v68, 4294901760
  %v8028 = vsub.f32 %v68, %v8027
  %v8029 = vand.u32 %v8028, 4294901760
  %8030 = vmatpush1.xpose.msra.mxu0 %v8029
  %8031 = vmatprep.subr.mxu0 0.0
  %v8032 = vand.u32 %v71, 4294901760
  %v8033 = vsub.f32 %v71, %v8032
  %v8034 = vand.u32 %v8033, 4294901760
  %8035 = vmatpush1.xpose.msra.mxu0 %v8034
  %8036 = vmatprep.subr.mxu0 0.0
  %v8037 = vand.u32 %v74, 4294901760
  %v8038 = vsub.f32 %v74, %v8037
  %v8039 = vand.u32 %v8038, 4294901760
  %8040 = vmatpush1.xpose.msra.mxu0 %v8039
  %8041 = vmatprep.subr.mxu0 0.0
  %8042 = vmatpush1.xpose.msra.mxu0 0.0
  %8043 = vmatprep.subr.mxu0 0.0
  %8044 = vmatpush1.xpose.msra.mxu0 0.0
  %8045 = vmatprep.subr.mxu0 0.0
  %8046 = vmatpush1.xpose.msra.mxu0 0.0
  %8047 = vmatprep.subr.mxu0 0.0
  %8048 = vmatpush1.xpose.msra.mxu0 0.0
  %8049 = vmatprep.subr.mxu0 0.0
  %8050 = vmatpush1.xpose.msra.mxu0 0.0
  %8051 = vmatprep.subr.mxu0 0.0
  %8052 = vmatpush1.xpose.msra.mxu0 0.0
  %8053 = vmatprep.subr.mxu0 0.0
  %8054 = vmatpush1.xpose.msra.mxu0 0.0
  %8055 = vmatprep.subr.mxu0 0.0
  %8056 = vmatpush1.xpose.msra.mxu0 0.0
  %8057 = vmatprep.subr.mxu0 0.0
  %8058 = vmatpush1.xpose.msra.mxu0 0.0
  %8059 = vmatprep.subr.mxu0 0.0
  %8060 = vmatpush1.xpose.msra.mxu0 0.0
  %8061 = vmatprep.subr.mxu0 0.0
  %8062 = vmatpush1.xpose.msra.mxu0 0.0
  %8063 = vmatprep.subr.mxu0 0.0
  %8064 = vmatpush1.xpose.msra.mxu0 0.0
  %8065 = vmatprep.subr.mxu0 0.0
  %8066 = vmatpush1.xpose.msra.mxu0 0.0
  %8067 = vmatprep.subr.mxu0 0.0
  %8068 = vmatpush1.xpose.msra.mxu0 0.0
  %8069 = vmatprep.subr.mxu0 0.0
  %8070 = vmatpush1.xpose.msra.mxu0 0.0
  %8071 = vmatprep.subr.mxu0 0.0
  %8072 = vmatpush1.xpose.msra.mxu0 0.0
  %8073 = vmatprep.subr.mxu0 0.0
  %8074 = vmatpush1.xpose.msra.mxu0 0.0
  %8075 = vmatprep.subr.mxu0 0.0
  %8076 = vmatpush1.xpose.msra.mxu0 0.0
  %8077 = vmatprep.subr.mxu0 0.0
  %8078 = vmatpush1.xpose.msra.mxu0 0.0
  %8079 = vmatprep.subr.mxu0 0.0
  %8080 = vmatpush1.xpose.msra.mxu0 0.0
  %8081 = vmatprep.subr.mxu0 0.0
  %8082 = vmatpush1.xpose.msra.mxu0 0.0
  %8083 = vmatprep.subr.mxu0 0.0
  %8084 = vmatpush1.xpose.msra.mxu0 0.0
  %8085 = vmatprep.subr.mxu0 0.0
  %8086 = vmatpush1.xpose.msra.mxu0 0.0
  %8087 = vmatprep.subr.mxu0 0.0
  %8088 = vmatpush1.xpose.msra.mxu0 0.0
  %8089 = vmatprep.mubr.f32.mxu0 0.0
  %v8090 = vand.u32 %v7398, 4294901760
  %8091 = vmatmul.mubr.f32.gmra.mrb[0].mxu0 %v8090
  %v8092 = vpop.f32.mrb[0].mxu0
  %v8093 = vadd.f32 %v7942, %v8092
  %v8094 = vpop.f32.mrb[0].mxu0
  %8095 = vmatprep.mubr.f32.mxu0 0.0
  %v8096 = vand.u32 %v7401, 4294901760
  %8097 = vmatmul.mubr.f32.gmra.mrb[0].mxu0 %v8096
  %v8098 = vpop.f32.mrb[0].mxu0
  %v8099 = vadd.f32 %v7950, %v8098
  %v8100 = vpop.f32.mrb[0].mxu0
  %8101 = vmatprep.mubr.f32.mxu0 0.0
  %v8102 = vand.u32 %v7404, 4294901760
  %8103 = vmatmul.mubr.f32.gmra.mrb[0].mxu0 %v8102
  %v8104 = vpop.f32.mrb[0].mxu0
  %v8105 = vadd.f32 %v7958, %v8104
  %v8106 = vpop.f32.mrb[0].mxu0
  %8107 = vmatprep.mubr.f32.mxu0 0.0
  %v8108 = vand.u32 %v7407, 4294901760
  %8109 = vmatmul.mubr.f32.gmra.mrb[0].mxu0 %v8108
  %v8110 = vpop.f32.mrb[0].mxu0
  %v8111 = vadd.f32 %v7966, %v8110
  %v8112 = vpop.f32.mrb[0].mxu0
  %8113 = vmatprep.mubr.f32.mxu0 0.0
  %v8114 = vand.u32 %v7410, 4294901760
  %8115 = vmatmul.mubr.f32.gmra.mrb[0].mxu0 %v8114
  %v8116 = vpop.f32.mrb[0].mxu0
  %v8117 = vadd.f32 %v7974, %v8116
  %v8118 = vpop.f32.mrb[0].mxu0
  %8119 = vmatprep.mubr.f32.mxu0 0.0
  %v8120 = vand.u32 %v7413, 4294901760
  %8121 = vmatmul.mubr.f32.gmra.mrb[0].mxu0 %v8120
  %v8122 = vpop.f32.mrb[0].mxu0
  %v8123 = vadd.f32 %v7982, %v8122
  %v8124 = vpop.f32.mrb[0].mxu0
  %8125 = vmatprep.mubr.f32.mxu0 0.0
  %v8126 = vand.u32 %v7416, 4294901760
  %8127 = vmatmul.mubr.f32.gmra.mrb[0].mxu0 %v8126
  %v8128 = vpop.f32.mrb[0].mxu0
  %v8129 = vadd.f32 %v7990, %v8128
  %v8130 = vpop.f32.mrb[0].mxu0
  %8131 = vmatprep.mubr.f32.mxu0 0.0
  %v8132 = vand.u32 %v7419, 4294901760
  %8133 = vmatmul.mubr.f32.gmra.mrb[0].mxu0 %v8132
  %v8134 = vpop.f32.mrb[0].mxu0
  %v8135 = vadd.f32 %v7998, %v8134
  %v8136 = vpop.f32.mrb[0].mxu0
  %8137 = vdwg.mxu0
  %8138 = vmatprep.subr.mxu0 0.0
  %v8139 = vand.u32 %v53, 4294901760
  %8140 = vmatpush1.xpose.msra.mxu0 %v8139
  %8141 = vmatprep.subr.mxu0 0.0
  %v8142 = vand.u32 %v56, 4294901760
  %8143 = vmatpush1.xpose.msra.mxu0 %v8142
  %8144 = vmatprep.subr.mxu0 0.0
  %v8145 = vand.u32 %v59, 4294901760
  %8146 = vmatpush1.xpose.msra.mxu0 %v8145
  %8147 = vmatprep.subr.mxu0 0.0
  %v8148 = vand.u32 %v62, 4294901760
  %8149 = vmatpush1.xpose.msra.mxu0 %v8148
  %8150 = vmatprep.subr.mxu0 0.0
  %v8151 = vand.u32 %v65, 4294901760
  %8152 = vmatpush1.xpose.msra.mxu0 %v8151
  %8153 = vmatprep.subr.mxu0 0.0
  %v8154 = vand.u32 %v68, 4294901760
  %8155 = vmatpush1.xpose.msra.mxu0 %v8154
  %8156 = vmatprep.subr.mxu0 0.0
  %v8157 = vand.u32 %v71, 4294901760
  %8158 = vmatpush1.xpose.msra.mxu0 %v8157
  %8159 = vmatprep.subr.mxu0 0.0
  %v8160 = vand.u32 %v74, 4294901760
  %8161 = vmatpush1.xpose.msra.mxu0 %v8160
  %8162 = vmatprep.subr.mxu0 0.0
  %8163 = vmatpush1.xpose.msra.mxu0 0.0
  %8164 = vmatprep.subr.mxu0 0.0
  %8165 = vmatpush1.xpose.msra.mxu0 0.0
  %8166 = vmatprep.subr.mxu0 0.0
  %8167 = vmatpush1.xpose.msra.mxu0 0.0
  %8168 = vmatprep.subr.mxu0 0.0
  %8169 = vmatpush1.xpose.msra.mxu0 0.0
  %8170 = vmatprep.subr.mxu0 0.0
  %8171 = vmatpush1.xpose.msra.mxu0 0.0
  %8172 = vmatprep.subr.mxu0 0.0
  %8173 = vmatpush1.xpose.msra.mxu0 0.0
  %8174 = vmatprep.subr.mxu0 0.0
  %8175 = vmatpush1.xpose.msra.mxu0 0.0
  %8176 = vmatprep.subr.mxu0 0.0
  %8177 = vmatpush1.xpose.msra.mxu0 0.0
  %8178 = vmatprep.subr.mxu0 0.0
  %8179 = vmatpush1.xpose.msra.mxu0 0.0
  %8180 = vmatprep.subr.mxu0 0.0
  %8181 = vmatpush1.xpose.msra.mxu0 0.0
  %8182 = vmatprep.subr.mxu0 0.0
  %8183 = vmatpush1.xpose.msra.mxu0 0.0
  %8184 = vmatprep.subr.mxu0 0.0
  %8185 = vmatpush1.xpose.msra.mxu0 0.0
  %8186 = vmatprep.subr.mxu0 0.0
  %8187 = vmatpush1.xpose.msra.mxu0 0.0
  %8188 = vmatprep.subr.mxu0 0.0
  %8189 = vmatpush1.xpose.msra.mxu0 0.0
  %8190 = vmatprep.subr.mxu0 0.0
  %8191 = vmatpush1.xpose.msra.mxu0 0.0
  %8192 = vmatprep.subr.mxu0 0.0
  %8193 = vmatpush1.xpose.msra.mxu0 0.0
  %8194 = vmatprep.subr.mxu0 0.0
  %8195 = vmatpush1.xpose.msra.mxu0 0.0
  %8196 = vmatprep.subr.mxu0 0.0
  %8197 = vmatpush1.xpose.msra.mxu0 0.0
  %8198 = vmatprep.subr.mxu0 0.0
  %8199 = vmatpush1.xpose.msra.mxu0 0.0
  %8200 = vmatprep.subr.mxu0 0.0
  %8201 = vmatpush1.xpose.msra.mxu0 0.0
  %8202 = vmatprep.subr.mxu0 0.0
  %8203 = vmatpush1.xpose.msra.mxu0 0.0
  %8204 = vmatprep.subr.mxu0 0.0
  %8205 = vmatpush1.xpose.msra.mxu0 0.0
  %8206 = vmatprep.subr.mxu0 0.0
  %8207 = vmatpush1.xpose.msra.mxu0 0.0
  %8208 = vmatprep.subr.mxu0 0.0
  %8209 = vmatpush1.xpose.msra.mxu0 0.0
  %8210 = vmatprep.mubr.f32.mxu0 0.0
  %v8211 = vand.u32 %v7398, 4294901760
  %8212 = vmatmul.mubr.f32.gmra.mrb[0].mxu0 %v8211
  %v8213 = vpop.f32.mrb[0].mxu0
  %v8214 = vadd.f32 %v8093, %v8213
  %v8215 = vpop.f32.mrb[0].mxu0
  %8216 = vmatprep.mubr.f32.mxu0 0.0
  %v8217 = vand.u32 %v7401, 4294901760
  %8218 = vmatmul.mubr.f32.gmra.mrb[0].mxu0 %v8217
  %v8219 = vpop.f32.mrb[0].mxu0
  %v8220 = vadd.f32 %v8099, %v8219
  %v8221 = vpop.f32.mrb[0].mxu0
  %8222 = vmatprep.mubr.f32.mxu0 0.0
  %v8223 = vand.u32 %v7404, 4294901760
  %8224 = vmatmul.mubr.f32.gmra.mrb[0].mxu0 %v8223
  %v8225 = vpop.f32.mrb[0].mxu0
  %v8226 = vadd.f32 %v8105, %v8225
  %v8227 = vpop.f32.mrb[0].mxu0
  %8228 = vmatprep.mubr.f32.mxu0 0.0
  %v8229 = vand.u32 %v7407, 4294901760
  %8230 = vmatmul.mubr.f32.gmra.mrb[0].mxu0 %v8229
  %v8231 = vpop.f32.mrb[0].mxu0
  %v8232 = vadd.f32 %v8111, %v8231
  %v8233 = vpop.f32.mrb[0].mxu0
  %8234 = vmatprep.mubr.f32.mxu0 0.0
  %v8235 = vand.u32 %v7410, 4294901760
  %8236 = vmatmul.mubr.f32.gmra.mrb[0].mxu0 %v8235
  %v8237 = vpop.f32.mrb[0].mxu0
  %v8238 = vadd.f32 %v8117, %v8237
  %v8239 = vpop.f32.mrb[0].mxu0
  %8240 = vmatprep.mubr.f32.mxu0 0.0
  %v8241 = vand.u32 %v7413, 4294901760
  %8242 = vmatmul.mubr.f32.gmra.mrb[0].mxu0 %v8241
  %v8243 = vpop.f32.mrb[0].mxu0
  %v8244 = vadd.f32 %v8123, %v8243
  %v8245 = vpop.f32.mrb[0].mxu0
  %8246 = vmatprep.mubr.f32.mxu0 0.0
  %v8247 = vand.u32 %v7416, 4294901760
  %8248 = vmatmul.mubr.f32.gmra.mrb[0].mxu0 %v8247
  %v8249 = vpop.f32.mrb[0].mxu0
  %v8250 = vadd.f32 %v8129, %v8249
  %v8251 = vpop.f32.mrb[0].mxu0
  %8252 = vmatprep.mubr.f32.mxu0 0.0
  %v8253 = vand.u32 %v7419, 4294901760
  %8254 = vmatmul.mubr.f32.gmra.mrb[0].mxu0 %v8253
  %v8255 = vpop.f32.mrb[0].mxu0
  %v8256 = vadd.f32 %v8135, %v8255
  %v8257 = vpop.f32.mrb[0].mxu0
  %8258 = vdwg.mxu0
  %8259 = vst.msk [vmem:[%s2 + $0x18] sm:$0xff] %vm51, %v8214
  %8260 = vst.msk [vmem:[%s2 + $0x38] sm:$0xff] %vm51, %v8220
  %8261 = vst.msk [vmem:[%s2 + $0x58] sm:$0xff] %vm51, %v8226
  %8262 = vst.msk [vmem:[%s2 + $0x78] sm:$0xff] %vm51, %v8232
  %8263 = vst.msk [vmem:[%s2 + $0x98] sm:$0xff] %vm51, %v8238
  %8264 = vst.msk [vmem:[%s2 + $0xb8] sm:$0xff] %vm51, %v8244
  %8265 = vst.msk [vmem:[%s2 + $0xd8] sm:$0xff] %vm51, %v8250
  %8266 = vst.msk [vmem:[%s2 + $0xf8] sm:$0xff] %vm51, %v8256
  %8267 = vrot.lane.b32.xlu0 %v2005, 64
  %v8268 = vpop.permute.xlu0 %8267
  %8269 = vrot.lane.b32.xlu0 %v2012, 64
  %v8270 = vpop.permute.xlu0 %8269
  %8271 = vrot.lane.b32.xlu0 %v2019, 64
  %v8272 = vpop.permute.xlu0 %8271
  %8273 = vrot.lane.b32.xlu0 %v2026, 64
  %v8274 = vpop.permute.xlu0 %8273
  %8275 = vrot.lane.b32.xlu0 %v2033, 64
  %v8276 = vpop.permute.xlu0 %8275
  %8277 = vrot.lane.b32.xlu0 %v2040, 64
  %v8278 = vpop.permute.xlu0 %8277
  %8279 = vrot.lane.b32.xlu0 %v2047, 64
  %v8280 = vpop.permute.xlu0 %8279
  %8281 = vrot.lane.b32.xlu0 %v2054, 64
  %v8282 = vpop.permute.xlu0 %8281
  %v8283 = vsel %vm51, %v8268, 0
  %v8285 = vsel %vm51, %v8270, 0
  %v8287 = vsel %vm51, %v8272, 0
  %v8289 = vsel %vm51, %v8274, 0
  %v8291 = vsel %vm51, %v8276, 0
  %v8293 = vsel %vm51, %v8278, 0
  %v8295 = vsel %vm51, %v8280, 0
  %v8297 = vsel %vm51, %v8282, 0
  %8299 = vmatprep.subr.mxu0 0.0
  %v8300 = vand.u32 %v53, 4294901760
  %8301 = vmatpush1.xpose.msra.mxu0 %v8300
  %8302 = vmatprep.subr.mxu0 0.0
  %v8303 = vand.u32 %v56, 4294901760
  %8304 = vmatpush1.xpose.msra.mxu0 %v8303
  %8305 = vmatprep.subr.mxu0 0.0
  %v8306 = vand.u32 %v59, 4294901760
  %8307 = vmatpush1.xpose.msra.mxu0 %v8306
  %8308 = vmatprep.subr.mxu0 0.0
  %v8309 = vand.u32 %v62, 4294901760
  %8310 = vmatpush1.xpose.msra.mxu0 %v8309
  %8311 = vmatprep.subr.mxu0 0.0
  %v8312 = vand.u32 %v65, 4294901760
  %8313 = vmatpush1.xpose.msra.mxu0 %v8312
  %8314 = vmatprep.subr.mxu0 0.0
  %v8315 = vand.u32 %v68, 4294901760
  %8316 = vmatpush1.xpose.msra.mxu0 %v8315
  %8317 = vmatprep.subr.mxu0 0.0
  %v8318 = vand.u32 %v71, 4294901760
  %8319 = vmatpush1.xpose.msra.mxu0 %v8318
  %8320 = vmatprep.subr.mxu0 0.0
  %v8321 = vand.u32 %v74, 4294901760
  %8322 = vmatpush1.xpose.msra.mxu0 %v8321
  %8323 = vmatprep.subr.mxu0 0.0
  %8324 = vmatpush1.xpose.msra.mxu0 0.0
  %8325 = vmatprep.subr.mxu0 0.0
  %8326 = vmatpush1.xpose.msra.mxu0 0.0
  %8327 = vmatprep.subr.mxu0 0.0
  %8328 = vmatpush1.xpose.msra.mxu0 0.0
  %8329 = vmatprep.subr.mxu0 0.0
  %8330 = vmatpush1.xpose.msra.mxu0 0.0
  %8331 = vmatprep.subr.mxu0 0.0
  %8332 = vmatpush1.xpose.msra.mxu0 0.0
  %8333 = vmatprep.subr.mxu0 0.0
  %8334 = vmatpush1.xpose.msra.mxu0 0.0
  %8335 = vmatprep.subr.mxu0 0.0
  %8336 = vmatpush1.xpose.msra.mxu0 0.0
  %8337 = vmatprep.subr.mxu0 0.0
  %8338 = vmatpush1.xpose.msra.mxu0 0.0
  %8339 = vmatprep.subr.mxu0 0.0
  %8340 = vmatpush1.xpose.msra.mxu0 0.0
  %8341 = vmatprep.subr.mxu0 0.0
  %8342 = vmatpush1.xpose.msra.mxu0 0.0
  %8343 = vmatprep.subr.mxu0 0.0
  %8344 = vmatpush1.xpose.msra.mxu0 0.0
  %8345 = vmatprep.subr.mxu0 0.0
  %8346 = vmatpush1.xpose.msra.mxu0 0.0
  %8347 = vmatprep.subr.mxu0 0.0
  %8348 = vmatpush1.xpose.msra.mxu0 0.0
  %8349 = vmatprep.subr.mxu0 0.0
  %8350 = vmatpush1.xpose.msra.mxu0 0.0
  %8351 = vmatprep.subr.mxu0 0.0
  %8352 = vmatpush1.xpose.msra.mxu0 0.0
  %8353 = vmatprep.subr.mxu0 0.0
  %8354 = vmatpush1.xpose.msra.mxu0 0.0
  %8355 = vmatprep.subr.mxu0 0.0
  %8356 = vmatpush1.xpose.msra.mxu0 0.0
  %8357 = vmatprep.subr.mxu0 0.0
  %8358 = vmatpush1.xpose.msra.mxu0 0.0
  %8359 = vmatprep.subr.mxu0 0.0
  %8360 = vmatpush1.xpose.msra.mxu0 0.0
  %8361 = vmatprep.subr.mxu0 0.0
  %8362 = vmatpush1.xpose.msra.mxu0 0.0
  %8363 = vmatprep.subr.mxu0 0.0
  %8364 = vmatpush1.xpose.msra.mxu0 0.0
  %8365 = vmatprep.subr.mxu0 0.0
  %8366 = vmatpush1.xpose.msra.mxu0 0.0
  %8367 = vmatprep.subr.mxu0 0.0
  %8368 = vmatpush1.xpose.msra.mxu0 0.0
  %8369 = vmatprep.subr.mxu0 0.0
  %8370 = vmatpush1.xpose.msra.mxu0 0.0
  %8371 = vmatprep.mubr.f32.mxu0 0.0
  %v8372 = vand.u32 %v8283, 4294901760
  %v8373 = vsub.f32 %v8283, %v8372
  %v8374 = vand.u32 %v8373, 4294901760
  %v8375 = vsub.f32 %v8373, %v8374
  %v8376 = vand.u32 %v8375, 4294901760
  %8377 = vmatmul.mubr.f32.gmra.mrb[0].mxu0 %v8376
  %v8378 = vpop.f32.mrb[0].mxu0
  %v8379 = vadd.f32 0.0, %v8378
  %v8380 = vpop.f32.mrb[0].mxu0
  %8381 = vmatprep.mubr.f32.mxu0 0.0
  %v8382 = vand.u32 %v8285, 4294901760
  %v8383 = vsub.f32 %v8285, %v8382
  %v8384 = vand.u32 %v8383, 4294901760
  %v8385 = vsub.f32 %v8383, %v8384
  %v8386 = vand.u32 %v8385, 4294901760
  %8387 = vmatmul.mubr.f32.gmra.mrb[0].mxu0 %v8386
  %v8388 = vpop.f32.mrb[0].mxu0
  %v8389 = vadd.f32 0.0, %v8388
  %v8390 = vpop.f32.mrb[0].mxu0
  %8391 = vmatprep.mubr.f32.mxu0 0.0
  %v8392 = vand.u32 %v8287, 4294901760
  %v8393 = vsub.f32 %v8287, %v8392
  %v8394 = vand.u32 %v8393, 4294901760
  %v8395 = vsub.f32 %v8393, %v8394
  %v8396 = vand.u32 %v8395, 4294901760
  %8397 = vmatmul.mubr.f32.gmra.mrb[0].mxu0 %v8396
  %v8398 = vpop.f32.mrb[0].mxu0
  %v8399 = vadd.f32 0.0, %v8398
  %v8400 = vpop.f32.mrb[0].mxu0
  %8401 = vmatprep.mubr.f32.mxu0 0.0
  %v8402 = vand.u32 %v8289, 4294901760
  %v8403 = vsub.f32 %v8289, %v8402
  %v8404 = vand.u32 %v8403, 4294901760
  %v8405 = vsub.f32 %v8403, %v8404
  %v8406 = vand.u32 %v8405, 4294901760
  %8407 = vmatmul.mubr.f32.gmra.mrb[0].mxu0 %v8406
  %v8408 = vpop.f32.mrb[0].mxu0
  %v8409 = vadd.f32 0.0, %v8408
  %v8410 = vpop.f32.mrb[0].mxu0
  %8411 = vmatprep.mubr.f32.mxu0 0.0
  %v8412 = vand.u32 %v8291, 4294901760
  %v8413 = vsub.f32 %v8291, %v8412
  %v8414 = vand.u32 %v8413, 4294901760
  %v8415 = vsub.f32 %v8413, %v8414
  %v8416 = vand.u32 %v8415, 4294901760
  %8417 = vmatmul.mubr.f32.gmra.mrb[0].mxu0 %v8416
  %v8418 = vpop.f32.mrb[0].mxu0
  %v8419 = vadd.f32 0.0, %v8418
  %v8420 = vpop.f32.mrb[0].mxu0
  %8421 = vmatprep.mubr.f32.mxu0 0.0
  %v8422 = vand.u32 %v8293, 4294901760
  %v8423 = vsub.f32 %v8293, %v8422
  %v8424 = vand.u32 %v8423, 4294901760
  %v8425 = vsub.f32 %v8423, %v8424
  %v8426 = vand.u32 %v8425, 4294901760
  %8427 = vmatmul.mubr.f32.gmra.mrb[0].mxu0 %v8426
  %v8428 = vpop.f32.mrb[0].mxu0
  %v8429 = vadd.f32 0.0, %v8428
  %v8430 = vpop.f32.mrb[0].mxu0
  %8431 = vmatprep.mubr.f32.mxu0 0.0
  %v8432 = vand.u32 %v8295, 4294901760
  %v8433 = vsub.f32 %v8295, %v8432
  %v8434 = vand.u32 %v8433, 4294901760
  %v8435 = vsub.f32 %v8433, %v8434
  %v8436 = vand.u32 %v8435, 4294901760
  %8437 = vmatmul.mubr.f32.gmra.mrb[0].mxu0 %v8436
  %v8438 = vpop.f32.mrb[0].mxu0
  %v8439 = vadd.f32 0.0, %v8438
  %v8440 = vpop.f32.mrb[0].mxu0
  %8441 = vmatprep.mubr.f32.mxu0 0.0
  %v8442 = vand.u32 %v8297, 4294901760
  %v8443 = vsub.f32 %v8297, %v8442
  %v8444 = vand.u32 %v8443, 4294901760
  %v8445 = vsub.f32 %v8443, %v8444
  %v8446 = vand.u32 %v8445, 4294901760
  %8447 = vmatmul.mubr.f32.gmra.mrb[0].mxu0 %v8446
  %v8448 = vpop.f32.mrb[0].mxu0
  %v8449 = vadd.f32 0.0, %v8448
  %v8450 = vpop.f32.mrb[0].mxu0
  %8451 = vdwg.mxu0
  %8452 = vmatprep.subr.mxu0 0.0
  %v8453 = vand.u32 %v53, 4294901760
  %v8454 = vsub.f32 %v53, %v8453
  %v8455 = vand.u32 %v8454, 4294901760
  %v8456 = vsub.f32 %v8454, %v8455
  %v8457 = vand.u32 %v8456, 4294901760
  %8458 = vmatpush1.xpose.msra.mxu0 %v8457
  %8459 = vmatprep.subr.mxu0 0.0
  %v8460 = vand.u32 %v56, 4294901760
  %v8461 = vsub.f32 %v56, %v8460
  %v8462 = vand.u32 %v8461, 4294901760
  %v8463 = vsub.f32 %v8461, %v8462
  %v8464 = vand.u32 %v8463, 4294901760
  %8465 = vmatpush1.xpose.msra.mxu0 %v8464
  %8466 = vmatprep.subr.mxu0 0.0
  %v8467 = vand.u32 %v59, 4294901760
  %v8468 = vsub.f32 %v59, %v8467
  %v8469 = vand.u32 %v8468, 4294901760
  %v8470 = vsub.f32 %v8468, %v8469
  %v8471 = vand.u32 %v8470, 4294901760
  %8472 = vmatpush1.xpose.msra.mxu0 %v8471
  %8473 = vmatprep.subr.mxu0 0.0
  %v8474 = vand.u32 %v62, 4294901760
  %v8475 = vsub.f32 %v62, %v8474
  %v8476 = vand.u32 %v8475, 4294901760
  %v8477 = vsub.f32 %v8475, %v8476
  %v8478 = vand.u32 %v8477, 4294901760
  %8479 = vmatpush1.xpose.msra.mxu0 %v8478
  %8480 = vmatprep.subr.mxu0 0.0
  %v8481 = vand.u32 %v65, 4294901760
  %v8482 = vsub.f32 %v65, %v8481
  %v8483 = vand.u32 %v8482, 4294901760
  %v8484 = vsub.f32 %v8482, %v8483
  %v8485 = vand.u32 %v8484, 4294901760
  %8486 = vmatpush1.xpose.msra.mxu0 %v8485
  %8487 = vmatprep.subr.mxu0 0.0
  %v8488 = vand.u32 %v68, 4294901760
  %v8489 = vsub.f32 %v68, %v8488
  %v8490 = vand.u32 %v8489, 4294901760
  %v8491 = vsub.f32 %v8489, %v8490
  %v8492 = vand.u32 %v8491, 4294901760
  %8493 = vmatpush1.xpose.msra.mxu0 %v8492
  %8494 = vmatprep.subr.mxu0 0.0
  %v8495 = vand.u32 %v71, 4294901760
  %v8496 = vsub.f32 %v71, %v8495
  %v8497 = vand.u32 %v8496, 4294901760
  %v8498 = vsub.f32 %v8496, %v8497
  %v8499 = vand.u32 %v8498, 4294901760
  %8500 = vmatpush1.xpose.msra.mxu0 %v8499
  %8501 = vmatprep.subr.mxu0 0.0
  %v8502 = vand.u32 %v74, 4294901760
  %v8503 = vsub.f32 %v74, %v8502
  %v8504 = vand.u32 %v8503, 4294901760
  %v8505 = vsub.f32 %v8503, %v8504
  %v8506 = vand.u32 %v8505, 4294901760
  %8507 = vmatpush1.xpose.msra.mxu0 %v8506
  %8508 = vmatprep.subr.mxu0 0.0
  %8509 = vmatpush1.xpose.msra.mxu0 0.0
  %8510 = vmatprep.subr.mxu0 0.0
  %8511 = vmatpush1.xpose.msra.mxu0 0.0
  %8512 = vmatprep.subr.mxu0 0.0
  %8513 = vmatpush1.xpose.msra.mxu0 0.0
  %8514 = vmatprep.subr.mxu0 0.0
  %8515 = vmatpush1.xpose.msra.mxu0 0.0
  %8516 = vmatprep.subr.mxu0 0.0
  %8517 = vmatpush1.xpose.msra.mxu0 0.0
  %8518 = vmatprep.subr.mxu0 0.0
  %8519 = vmatpush1.xpose.msra.mxu0 0.0
  %8520 = vmatprep.subr.mxu0 0.0
  %8521 = vmatpush1.xpose.msra.mxu0 0.0
  %8522 = vmatprep.subr.mxu0 0.0
  %8523 = vmatpush1.xpose.msra.mxu0 0.0
  %8524 = vmatprep.subr.mxu0 0.0
  %8525 = vmatpush1.xpose.msra.mxu0 0.0
  %8526 = vmatprep.subr.mxu0 0.0
  %8527 = vmatpush1.xpose.msra.mxu0 0.0
  %8528 = vmatprep.subr.mxu0 0.0
  %8529 = vmatpush1.xpose.msra.mxu0 0.0
  %8530 = vmatprep.subr.mxu0 0.0
  %8531 = vmatpush1.xpose.msra.mxu0 0.0
  %8532 = vmatprep.subr.mxu0 0.0
  %8533 = vmatpush1.xpose.msra.mxu0 0.0
  %8534 = vmatprep.subr.mxu0 0.0
  %8535 = vmatpush1.xpose.msra.mxu0 0.0
  %8536 = vmatprep.subr.mxu0 0.0
  %8537 = vmatpush1.xpose.msra.mxu0 0.0
  %8538 = vmatprep.subr.mxu0 0.0
  %8539 = vmatpush1.xpose.msra.mxu0 0.0
  %8540 = vmatprep.subr.mxu0 0.0
  %8541 = vmatpush1.xpose.msra.mxu0 0.0
  %8542 = vmatprep.subr.mxu0 0.0
  %8543 = vmatpush1.xpose.msra.mxu0 0.0
  %8544 = vmatprep.subr.mxu0 0.0
  %8545 = vmatpush1.xpose.msra.mxu0 0.0
  %8546 = vmatprep.subr.mxu0 0.0
  %8547 = vmatpush1.xpose.msra.mxu0 0.0
  %8548 = vmatprep.subr.mxu0 0.0
  %8549 = vmatpush1.xpose.msra.mxu0 0.0
  %8550 = vmatprep.subr.mxu0 0.0
  %8551 = vmatpush1.xpose.msra.mxu0 0.0
  %8552 = vmatprep.subr.mxu0 0.0
  %8553 = vmatpush1.xpose.msra.mxu0 0.0
  %8554 = vmatprep.subr.mxu0 0.0
  %8555 = vmatpush1.xpose.msra.mxu0 0.0
  %8556 = vmatprep.mubr.f32.mxu0 0.0
  %v8557 = vand.u32 %v8283, 4294901760
  %8558 = vmatmul.mubr.f32.gmra.mrb[0].mxu0 %v8557
  %v8559 = vpop.f32.mrb[0].mxu0
  %v8560 = vadd.f32 %v8379, %v8559
  %v8561 = vpop.f32.mrb[0].mxu0
  %8562 = vmatprep.mubr.f32.mxu0 0.0
  %v8563 = vand.u32 %v8285, 4294901760
  %8564 = vmatmul.mubr.f32.gmra.mrb[0].mxu0 %v8563
  %v8565 = vpop.f32.mrb[0].mxu0
  %v8566 = vadd.f32 %v8389, %v8565
  %v8567 = vpop.f32.mrb[0].mxu0
  %8568 = vmatprep.mubr.f32.mxu0 0.0
  %v8569 = vand.u32 %v8287, 4294901760
  %8570 = vmatmul.mubr.f32.gmra.mrb[0].mxu0 %v8569
  %v8571 = vpop.f32.mrb[0].mxu0
  %v8572 = vadd.f32 %v8399, %v8571
  %v8573 = vpop.f32.mrb[0].mxu0
  %8574 = vmatprep.mubr.f32.mxu0 0.0
  %v8575 = vand.u32 %v8289, 4294901760
  %8576 = vmatmul.mubr.f32.gmra.mrb[0].mxu0 %v8575
  %v8577 = vpop.f32.mrb[0].mxu0
  %v8578 = vadd.f32 %v8409, %v8577
  %v8579 = vpop.f32.mrb[0].mxu0
  %8580 = vmatprep.mubr.f32.mxu0 0.0
  %v8581 = vand.u32 %v8291, 4294901760
  %8582 = vmatmul.mubr.f32.gmra.mrb[0].mxu0 %v8581
  %v8583 = vpop.f32.mrb[0].mxu0
  %v8584 = vadd.f32 %v8419, %v8583
  %v8585 = vpop.f32.mrb[0].mxu0
  %8586 = vmatprep.mubr.f32.mxu0 0.0
  %v8587 = vand.u32 %v8293, 4294901760
  %8588 = vmatmul.mubr.f32.gmra.mrb[0].mxu0 %v8587
  %v8589 = vpop.f32.mrb[0].mxu0
  %v8590 = vadd.f32 %v8429, %v8589
  %v8591 = vpop.f32.mrb[0].mxu0
  %8592 = vmatprep.mubr.f32.mxu0 0.0
  %v8593 = vand.u32 %v8295, 4294901760
  %8594 = vmatmul.mubr.f32.gmra.mrb[0].mxu0 %v8593
  %v8595 = vpop.f32.mrb[0].mxu0
  %v8596 = vadd.f32 %v8439, %v8595
  %v8597 = vpop.f32.mrb[0].mxu0
  %8598 = vmatprep.mubr.f32.mxu0 0.0
  %v8599 = vand.u32 %v8297, 4294901760
  %8600 = vmatmul.mubr.f32.gmra.mrb[0].mxu0 %v8599
  %v8601 = vpop.f32.mrb[0].mxu0
  %v8602 = vadd.f32 %v8449, %v8601
  %v8603 = vpop.f32.mrb[0].mxu0
  %8604 = vdwg.mxu0
  %8605 = vmatprep.subr.mxu0 0.0
  %v8606 = vand.u32 %v53, 4294901760
  %v8607 = vsub.f32 %v53, %v8606
  %8608 = vmatpush1.xpose.msra.mxu0 %v8607
  %8609 = vmatprep.subr.mxu0 0.0
  %v8610 = vand.u32 %v56, 4294901760
  %v8611 = vsub.f32 %v56, %v8610
  %8612 = vmatpush1.xpose.msra.mxu0 %v8611
  %8613 = vmatprep.subr.mxu0 0.0
  %v8614 = vand.u32 %v59, 4294901760
  %v8615 = vsub.f32 %v59, %v8614
  %8616 = vmatpush1.xpose.msra.mxu0 %v8615
  %8617 = vmatprep.subr.mxu0 0.0
  %v8618 = vand.u32 %v62, 4294901760
  %v8619 = vsub.f32 %v62, %v8618
  %8620 = vmatpush1.xpose.msra.mxu0 %v8619
  %8621 = vmatprep.subr.mxu0 0.0
  %v8622 = vand.u32 %v65, 4294901760
  %v8623 = vsub.f32 %v65, %v8622
  %8624 = vmatpush1.xpose.msra.mxu0 %v8623
  %8625 = vmatprep.subr.mxu0 0.0
  %v8626 = vand.u32 %v68, 4294901760
  %v8627 = vsub.f32 %v68, %v8626
  %8628 = vmatpush1.xpose.msra.mxu0 %v8627
  %8629 = vmatprep.subr.mxu0 0.0
  %v8630 = vand.u32 %v71, 4294901760
  %v8631 = vsub.f32 %v71, %v8630
  %8632 = vmatpush1.xpose.msra.mxu0 %v8631
  %8633 = vmatprep.subr.mxu0 0.0
  %v8634 = vand.u32 %v74, 4294901760
  %v8635 = vsub.f32 %v74, %v8634
  %8636 = vmatpush1.xpose.msra.mxu0 %v8635
  %8637 = vmatprep.subr.mxu0 0.0
  %8638 = vmatpush1.xpose.msra.mxu0 0.0
  %8639 = vmatprep.subr.mxu0 0.0
  %8640 = vmatpush1.xpose.msra.mxu0 0.0
  %8641 = vmatprep.subr.mxu0 0.0
  %8642 = vmatpush1.xpose.msra.mxu0 0.0
  %8643 = vmatprep.subr.mxu0 0.0
  %8644 = vmatpush1.xpose.msra.mxu0 0.0
  %8645 = vmatprep.subr.mxu0 0.0
  %8646 = vmatpush1.xpose.msra.mxu0 0.0
  %8647 = vmatprep.subr.mxu0 0.0
  %8648 = vmatpush1.xpose.msra.mxu0 0.0
  %8649 = vmatprep.subr.mxu0 0.0
  %8650 = vmatpush1.xpose.msra.mxu0 0.0
  %8651 = vmatprep.subr.mxu0 0.0
  %8652 = vmatpush1.xpose.msra.mxu0 0.0
  %8653 = vmatprep.subr.mxu0 0.0
  %8654 = vmatpush1.xpose.msra.mxu0 0.0
  %8655 = vmatprep.subr.mxu0 0.0
  %8656 = vmatpush1.xpose.msra.mxu0 0.0
  %8657 = vmatprep.subr.mxu0 0.0
  %8658 = vmatpush1.xpose.msra.mxu0 0.0
  %8659 = vmatprep.subr.mxu0 0.0
  %8660 = vmatpush1.xpose.msra.mxu0 0.0
  %8661 = vmatprep.subr.mxu0 0.0
  %8662 = vmatpush1.xpose.msra.mxu0 0.0
  %8663 = vmatprep.subr.mxu0 0.0
  %8664 = vmatpush1.xpose.msra.mxu0 0.0
  %8665 = vmatprep.subr.mxu0 0.0
  %8666 = vmatpush1.xpose.msra.mxu0 0.0
  %8667 = vmatprep.subr.mxu0 0.0
  %8668 = vmatpush1.xpose.msra.mxu0 0.0
  %8669 = vmatprep.subr.mxu0 0.0
  %8670 = vmatpush1.xpose.msra.mxu0 0.0
  %8671 = vmatprep.subr.mxu0 0.0
  %8672 = vmatpush1.xpose.msra.mxu0 0.0
  %8673 = vmatprep.subr.mxu0 0.0
  %8674 = vmatpush1.xpose.msra.mxu0 0.0
  %8675 = vmatprep.subr.mxu0 0.0
  %8676 = vmatpush1.xpose.msra.mxu0 0.0
  %8677 = vmatprep.subr.mxu0 0.0
  %8678 = vmatpush1.xpose.msra.mxu0 0.0
  %8679 = vmatprep.subr.mxu0 0.0
  %8680 = vmatpush1.xpose.msra.mxu0 0.0
  %8681 = vmatprep.subr.mxu0 0.0
  %8682 = vmatpush1.xpose.msra.mxu0 0.0
  %8683 = vmatprep.subr.mxu0 0.0
  %8684 = vmatpush1.xpose.msra.mxu0 0.0
  %8685 = vmatprep.mubr.f32.mxu0 0.0
  %v8686 = vand.u32 %v8283, 4294901760
  %v8687 = vsub.f32 %v8283, %v8686
  %8688 = vmatmul.mubr.f32.gmra.mrb[0].mxu0 %v8687
  %v8689 = vpop.f32.mrb[0].mxu0
  %v8690 = vadd.f32 %v8560, %v8689
  %v8691 = vpop.f32.mrb[0].mxu0
  %8692 = vmatprep.mubr.f32.mxu0 0.0
  %v8693 = vand.u32 %v8285, 4294901760
  %v8694 = vsub.f32 %v8285, %v8693
  %8695 = vmatmul.mubr.f32.gmra.mrb[0].mxu0 %v8694
  %v8696 = vpop.f32.mrb[0].mxu0
  %v8697 = vadd.f32 %v8566, %v8696
  %v8698 = vpop.f32.mrb[0].mxu0
  %8699 = vmatprep.mubr.f32.mxu0 0.0
  %v8700 = vand.u32 %v8287, 4294901760
  %v8701 = vsub.f32 %v8287, %v8700
  %8702 = vmatmul.mubr.f32.gmra.mrb[0].mxu0 %v8701
  %v8703 = vpop.f32.mrb[0].mxu0
  %v8704 = vadd.f32 %v8572, %v8703
  %v8705 = vpop.f32.mrb[0].mxu0
  %8706 = vmatprep.mubr.f32.mxu0 0.0
  %v8707 = vand.u32 %v8289, 4294901760
  %v8708 = vsub.f32 %v8289, %v8707
  %8709 = vmatmul.mubr.f32.gmra.mrb[0].mxu0 %v8708
  %v8710 = vpop.f32.mrb[0].mxu0
  %v8711 = vadd.f32 %v8578, %v8710
  %v8712 = vpop.f32.mrb[0].mxu0
  %8713 = vmatprep.mubr.f32.mxu0 0.0
  %v8714 = vand.u32 %v8291, 4294901760
  %v8715 = vsub.f32 %v8291, %v8714
  %8716 = vmatmul.mubr.f32.gmra.mrb[0].mxu0 %v8715
  %v8717 = vpop.f32.mrb[0].mxu0
  %v8718 = vadd.f32 %v8584, %v8717
  %v8719 = vpop.f32.mrb[0].mxu0
  %8720 = vmatprep.mubr.f32.mxu0 0.0
  %v8721 = vand.u32 %v8293, 4294901760
  %v8722 = vsub.f32 %v8293, %v8721
  %8723 = vmatmul.mubr.f32.gmra.mrb[0].mxu0 %v8722
  %v8724 = vpop.f32.mrb[0].mxu0
  %v8725 = vadd.f32 %v8590, %v8724
  %v8726 = vpop.f32.mrb[0].mxu0
  %8727 = vmatprep.mubr.f32.mxu0 0.0
  %v8728 = vand.u32 %v8295, 4294901760
  %v8729 = vsub.f32 %v8295, %v8728
  %8730 = vmatmul.mubr.f32.gmra.mrb[0].mxu0 %v8729
  %v8731 = vpop.f32.mrb[0].mxu0
  %v8732 = vadd.f32 %v8596, %v8731
  %v8733 = vpop.f32.mrb[0].mxu0
  %8734 = vmatprep.mubr.f32.mxu0 0.0
  %v8735 = vand.u32 %v8297, 4294901760
  %v8736 = vsub.f32 %v8297, %v8735
  %8737 = vmatmul.mubr.f32.gmra.mrb[0].mxu0 %v8736
  %v8738 = vpop.f32.mrb[0].mxu0
  %v8739 = vadd.f32 %v8602, %v8738
  %v8740 = vpop.f32.mrb[0].mxu0
  %8741 = vdwg.mxu0
  %8742 = vmatprep.subr.mxu0 0.0
  %v8743 = vand.u32 %v53, 4294901760
  %8744 = vmatpush1.xpose.msra.mxu0 %v8743
  %8745 = vmatprep.subr.mxu0 0.0
  %v8746 = vand.u32 %v56, 4294901760
  %8747 = vmatpush1.xpose.msra.mxu0 %v8746
  %8748 = vmatprep.subr.mxu0 0.0
  %v8749 = vand.u32 %v59, 4294901760
  %8750 = vmatpush1.xpose.msra.mxu0 %v8749
  %8751 = vmatprep.subr.mxu0 0.0
  %v8752 = vand.u32 %v62, 4294901760
  %8753 = vmatpush1.xpose.msra.mxu0 %v8752
  %8754 = vmatprep.subr.mxu0 0.0
  %v8755 = vand.u32 %v65, 4294901760
  %8756 = vmatpush1.xpose.msra.mxu0 %v8755
  %8757 = vmatprep.subr.mxu0 0.0
  %v8758 = vand.u32 %v68, 4294901760
  %8759 = vmatpush1.xpose.msra.mxu0 %v8758
  %8760 = vmatprep.subr.mxu0 0.0
  %v8761 = vand.u32 %v71, 4294901760
  %8762 = vmatpush1.xpose.msra.mxu0 %v8761
  %8763 = vmatprep.subr.mxu0 0.0
  %v8764 = vand.u32 %v74, 4294901760
  %8765 = vmatpush1.xpose.msra.mxu0 %v8764
  %8766 = vmatprep.subr.mxu0 0.0
  %8767 = vmatpush1.xpose.msra.mxu0 0.0
  %8768 = vmatprep.subr.mxu0 0.0
  %8769 = vmatpush1.xpose.msra.mxu0 0.0
  %8770 = vmatprep.subr.mxu0 0.0
  %8771 = vmatpush1.xpose.msra.mxu0 0.0
  %8772 = vmatprep.subr.mxu0 0.0
  %8773 = vmatpush1.xpose.msra.mxu0 0.0
  %8774 = vmatprep.subr.mxu0 0.0
  %8775 = vmatpush1.xpose.msra.mxu0 0.0
  %8776 = vmatprep.subr.mxu0 0.0
  %8777 = vmatpush1.xpose.msra.mxu0 0.0
  %8778 = vmatprep.subr.mxu0 0.0
  %8779 = vmatpush1.xpose.msra.mxu0 0.0
  %8780 = vmatprep.subr.mxu0 0.0
  %8781 = vmatpush1.xpose.msra.mxu0 0.0
  %8782 = vmatprep.subr.mxu0 0.0
  %8783 = vmatpush1.xpose.msra.mxu0 0.0
  %8784 = vmatprep.subr.mxu0 0.0
  %8785 = vmatpush1.xpose.msra.mxu0 0.0
  %8786 = vmatprep.subr.mxu0 0.0
  %8787 = vmatpush1.xpose.msra.mxu0 0.0
  %8788 = vmatprep.subr.mxu0 0.0
  %8789 = vmatpush1.xpose.msra.mxu0 0.0
  %8790 = vmatprep.subr.mxu0 0.0
  %8791 = vmatpush1.xpose.msra.mxu0 0.0
  %8792 = vmatprep.subr.mxu0 0.0
  %8793 = vmatpush1.xpose.msra.mxu0 0.0
  %8794 = vmatprep.subr.mxu0 0.0
  %8795 = vmatpush1.xpose.msra.mxu0 0.0
  %8796 = vmatprep.subr.mxu0 0.0
  %8797 = vmatpush1.xpose.msra.mxu0 0.0
  %8798 = vmatprep.subr.mxu0 0.0
  %8799 = vmatpush1.xpose.msra.mxu0 0.0
  %8800 = vmatprep.subr.mxu0 0.0
  %8801 = vmatpush1.xpose.msra.mxu0 0.0
  %8802 = vmatprep.subr.mxu0 0.0
  %8803 = vmatpush1.xpose.msra.mxu0 0.0
  %8804 = vmatprep.subr.mxu0 0.0
  %8805 = vmatpush1.xpose.msra.mxu0 0.0
  %8806 = vmatprep.subr.mxu0 0.0
  %8807 = vmatpush1.xpose.msra.mxu0 0.0
  %8808 = vmatprep.subr.mxu0 0.0
  %8809 = vmatpush1.xpose.msra.mxu0 0.0
  %8810 = vmatprep.subr.mxu0 0.0
  %8811 = vmatpush1.xpose.msra.mxu0 0.0
  %8812 = vmatprep.subr.mxu0 0.0
  %8813 = vmatpush1.xpose.msra.mxu0 0.0
  %8814 = vmatprep.mubr.f32.mxu0 0.0
  %v8815 = vand.u32 %v8283, 4294901760
  %v8816 = vsub.f32 %v8283, %v8815
  %v8817 = vand.u32 %v8816, 4294901760
  %8818 = vmatmul.mubr.f32.gmra.mrb[0].mxu0 %v8817
  %v8819 = vpop.f32.mrb[0].mxu0
  %v8820 = vadd.f32 %v8690, %v8819
  %v8821 = vpop.f32.mrb[0].mxu0
  %8822 = vmatprep.mubr.f32.mxu0 0.0
  %v8823 = vand.u32 %v8285, 4294901760
  %v8824 = vsub.f32 %v8285, %v8823
  %v8825 = vand.u32 %v8824, 4294901760
  %8826 = vmatmul.mubr.f32.gmra.mrb[0].mxu0 %v8825
  %v8827 = vpop.f32.mrb[0].mxu0
  %v8828 = vadd.f32 %v8697, %v8827
  %v8829 = vpop.f32.mrb[0].mxu0
  %8830 = vmatprep.mubr.f32.mxu0 0.0
  %v8831 = vand.u32 %v8287, 4294901760
  %v8832 = vsub.f32 %v8287, %v8831
  %v8833 = vand.u32 %v8832, 4294901760
  %8834 = vmatmul.mubr.f32.gmra.mrb[0].mxu0 %v8833
  %v8835 = vpop.f32.mrb[0].mxu0
  %v8836 = vadd.f32 %v8704, %v8835
  %v8837 = vpop.f32.mrb[0].mxu0
  %8838 = vmatprep.mubr.f32.mxu0 0.0
  %v8839 = vand.u32 %v8289, 4294901760
  %v8840 = vsub.f32 %v8289, %v8839
  %v8841 = vand.u32 %v8840, 4294901760
  %8842 = vmatmul.mubr.f32.gmra.mrb[0].mxu0 %v8841
  %v8843 = vpop.f32.mrb[0].mxu0
  %v8844 = vadd.f32 %v8711, %v8843
  %v8845 = vpop.f32.mrb[0].mxu0
  %8846 = vmatprep.mubr.f32.mxu0 0.0
  %v8847 = vand.u32 %v8291, 4294901760
  %v8848 = vsub.f32 %v8291, %v8847
  %v8849 = vand.u32 %v8848, 4294901760
  %8850 = vmatmul.mubr.f32.gmra.mrb[0].mxu0 %v8849
  %v8851 = vpop.f32.mrb[0].mxu0
  %v8852 = vadd.f32 %v8718, %v8851
  %v8853 = vpop.f32.mrb[0].mxu0
  %8854 = vmatprep.mubr.f32.mxu0 0.0
  %v8855 = vand.u32 %v8293, 4294901760
  %v8856 = vsub.f32 %v8293, %v8855
  %v8857 = vand.u32 %v8856, 4294901760
  %8858 = vmatmul.mubr.f32.gmra.mrb[0].mxu0 %v8857
  %v8859 = vpop.f32.mrb[0].mxu0
  %v8860 = vadd.f32 %v8725, %v8859
  %v8861 = vpop.f32.mrb[0].mxu0
  %8862 = vmatprep.mubr.f32.mxu0 0.0
  %v8863 = vand.u32 %v8295, 4294901760
  %v8864 = vsub.f32 %v8295, %v8863
  %v8865 = vand.u32 %v8864, 4294901760
  %8866 = vmatmul.mubr.f32.gmra.mrb[0].mxu0 %v8865
  %v8867 = vpop.f32.mrb[0].mxu0
  %v8868 = vadd.f32 %v8732, %v8867
  %v8869 = vpop.f32.mrb[0].mxu0
  %8870 = vmatprep.mubr.f32.mxu0 0.0
  %v8871 = vand.u32 %v8297, 4294901760
  %v8872 = vsub.f32 %v8297, %v8871
  %v8873 = vand.u32 %v8872, 4294901760
  %8874 = vmatmul.mubr.f32.gmra.mrb[0].mxu0 %v8873
  %v8875 = vpop.f32.mrb[0].mxu0
  %v8876 = vadd.f32 %v8739, %v8875
  %v8877 = vpop.f32.mrb[0].mxu0
  %8878 = vdwg.mxu0
  %8879 = vmatprep.subr.mxu0 0.0
  %v8880 = vand.u32 %v53, 4294901760
  %v8881 = vsub.f32 %v53, %v8880
  %v8882 = vand.u32 %v8881, 4294901760
  %8883 = vmatpush1.xpose.msra.mxu0 %v8882
  %8884 = vmatprep.subr.mxu0 0.0
  %v8885 = vand.u32 %v56, 4294901760
  %v8886 = vsub.f32 %v56, %v8885
  %v8887 = vand.u32 %v8886, 4294901760
  %8888 = vmatpush1.xpose.msra.mxu0 %v8887
  %8889 = vmatprep.subr.mxu0 0.0
  %v8890 = vand.u32 %v59, 4294901760
  %v8891 = vsub.f32 %v59, %v8890
  %v8892 = vand.u32 %v8891, 4294901760
  %8893 = vmatpush1.xpose.msra.mxu0 %v8892
  %8894 = vmatprep.subr.mxu0 0.0
  %v8895 = vand.u32 %v62, 4294901760
  %v8896 = vsub.f32 %v62, %v8895
  %v8897 = vand.u32 %v8896, 4294901760
  %8898 = vmatpush1.xpose.msra.mxu0 %v8897
  %8899 = vmatprep.subr.mxu0 0.0
  %v8900 = vand.u32 %v65, 4294901760
  %v8901 = vsub.f32 %v65, %v8900
  %v8902 = vand.u32 %v8901, 4294901760
  %8903 = vmatpush1.xpose.msra.mxu0 %v8902
  %8904 = vmatprep.subr.mxu0 0.0
  %v8905 = vand.u32 %v68, 4294901760
  %v8906 = vsub.f32 %v68, %v8905
  %v8907 = vand.u32 %v8906, 4294901760
  %8908 = vmatpush1.xpose.msra.mxu0 %v8907
  %8909 = vmatprep.subr.mxu0 0.0
  %v8910 = vand.u32 %v71, 4294901760
  %v8911 = vsub.f32 %v71, %v8910
  %v8912 = vand.u32 %v8911, 4294901760
  %8913 = vmatpush1.xpose.msra.mxu0 %v8912
  %8914 = vmatprep.subr.mxu0 0.0
  %v8915 = vand.u32 %v74, 4294901760
  %v8916 = vsub.f32 %v74, %v8915
  %v8917 = vand.u32 %v8916, 4294901760
  %8918 = vmatpush1.xpose.msra.mxu0 %v8917
  %8919 = vmatprep.subr.mxu0 0.0
  %8920 = vmatpush1.xpose.msra.mxu0 0.0
  %8921 = vmatprep.subr.mxu0 0.0
  %8922 = vmatpush1.xpose.msra.mxu0 0.0
  %8923 = vmatprep.subr.mxu0 0.0
  %8924 = vmatpush1.xpose.msra.mxu0 0.0
  %8925 = vmatprep.subr.mxu0 0.0
  %8926 = vmatpush1.xpose.msra.mxu0 0.0
  %8927 = vmatprep.subr.mxu0 0.0
  %8928 = vmatpush1.xpose.msra.mxu0 0.0
  %8929 = vmatprep.subr.mxu0 0.0
  %8930 = vmatpush1.xpose.msra.mxu0 0.0
  %8931 = vmatprep.subr.mxu0 0.0
  %8932 = vmatpush1.xpose.msra.mxu0 0.0
  %8933 = vmatprep.subr.mxu0 0.0
  %8934 = vmatpush1.xpose.msra.mxu0 0.0
  %8935 = vmatprep.subr.mxu0 0.0
  %8936 = vmatpush1.xpose.msra.mxu0 0.0
  %8937 = vmatprep.subr.mxu0 0.0
  %8938 = vmatpush1.xpose.msra.mxu0 0.0
  %8939 = vmatprep.subr.mxu0 0.0
  %8940 = vmatpush1.xpose.msra.mxu0 0.0
  %8941 = vmatprep.subr.mxu0 0.0
  %8942 = vmatpush1.xpose.msra.mxu0 0.0
  %8943 = vmatprep.subr.mxu0 0.0
  %8944 = vmatpush1.xpose.msra.mxu0 0.0
  %8945 = vmatprep.subr.mxu0 0.0
  %8946 = vmatpush1.xpose.msra.mxu0 0.0
  %8947 = vmatprep.subr.mxu0 0.0
  %8948 = vmatpush1.xpose.msra.mxu0 0.0
  %8949 = vmatprep.subr.mxu0 0.0
  %8950 = vmatpush1.xpose.msra.mxu0 0.0
  %8951 = vmatprep.subr.mxu0 0.0
  %8952 = vmatpush1.xpose.msra.mxu0 0.0
  %8953 = vmatprep.subr.mxu0 0.0
  %8954 = vmatpush1.xpose.msra.mxu0 0.0
  %8955 = vmatprep.subr.mxu0 0.0
  %8956 = vmatpush1.xpose.msra.mxu0 0.0
  %8957 = vmatprep.subr.mxu0 0.0
  %8958 = vmatpush1.xpose.msra.mxu0 0.0
  %8959 = vmatprep.subr.mxu0 0.0
  %8960 = vmatpush1.xpose.msra.mxu0 0.0
  %8961 = vmatprep.subr.mxu0 0.0
  %8962 = vmatpush1.xpose.msra.mxu0 0.0
  %8963 = vmatprep.subr.mxu0 0.0
  %8964 = vmatpush1.xpose.msra.mxu0 0.0
  %8965 = vmatprep.subr.mxu0 0.0
  %8966 = vmatpush1.xpose.msra.mxu0 0.0
  %8967 = vmatprep.mubr.f32.mxu0 0.0
  %v8968 = vand.u32 %v8283, 4294901760
  %8969 = vmatmul.mubr.f32.gmra.mrb[0].mxu0 %v8968
  %v8970 = vpop.f32.mrb[0].mxu0
  %v8971 = vadd.f32 %v8820, %v8970
  %v8972 = vpop.f32.mrb[0].mxu0
  %8973 = vmatprep.mubr.f32.mxu0 0.0
  %v8974 = vand.u32 %v8285, 4294901760
  %8975 = vmatmul.mubr.f32.gmra.mrb[0].mxu0 %v8974
  %v8976 = vpop.f32.mrb[0].mxu0
  %v8977 = vadd.f32 %v8828, %v8976
  %v8978 = vpop.f32.mrb[0].mxu0
  %8979 = vmatprep.mubr.f32.mxu0 0.0
  %v8980 = vand.u32 %v8287, 4294901760
  %8981 = vmatmul.mubr.f32.gmra.mrb[0].mxu0 %v8980
  %v8982 = vpop.f32.mrb[0].mxu0
  %v8983 = vadd.f32 %v8836, %v8982
  %v8984 = vpop.f32.mrb[0].mxu0
  %8985 = vmatprep.mubr.f32.mxu0 0.0
  %v8986 = vand.u32 %v8289, 4294901760
  %8987 = vmatmul.mubr.f32.gmra.mrb[0].mxu0 %v8986
  %v8988 = vpop.f32.mrb[0].mxu0
  %v8989 = vadd.f32 %v8844, %v8988
  %v8990 = vpop.f32.mrb[0].mxu0
  %8991 = vmatprep.mubr.f32.mxu0 0.0
  %v8992 = vand.u32 %v8291, 4294901760
  %8993 = vmatmul.mubr.f32.gmra.mrb[0].mxu0 %v8992
  %v8994 = vpop.f32.mrb[0].mxu0
  %v8995 = vadd.f32 %v8852, %v8994
  %v8996 = vpop.f32.mrb[0].mxu0
  %8997 = vmatprep.mubr.f32.mxu0 0.0
  %v8998 = vand.u32 %v8293, 4294901760
  %8999 = vmatmul.mubr.f32.gmra.mrb[0].mxu0 %v8998
  %v9000 = vpop.f32.mrb[0].mxu0
  %v9001 = vadd.f32 %v8860, %v9000
  %v9002 = vpop.f32.mrb[0].mxu0
  %9003 = vmatprep.mubr.f32.mxu0 0.0
  %v9004 = vand.u32 %v8295, 4294901760
  %9005 = vmatmul.mubr.f32.gmra.mrb[0].mxu0 %v9004
  %v9006 = vpop.f32.mrb[0].mxu0
  %v9007 = vadd.f32 %v8868, %v9006
  %v9008 = vpop.f32.mrb[0].mxu0
  %9009 = vmatprep.mubr.f32.mxu0 0.0
  %v9010 = vand.u32 %v8297, 4294901760
  %9011 = vmatmul.mubr.f32.gmra.mrb[0].mxu0 %v9010
  %v9012 = vpop.f32.mrb[0].mxu0
  %v9013 = vadd.f32 %v8876, %v9012
  %v9014 = vpop.f32.mrb[0].mxu0
  %9015 = vdwg.mxu0
  %9016 = vmatprep.subr.mxu0 0.0
  %v9017 = vand.u32 %v53, 4294901760
  %9018 = vmatpush1.xpose.msra.mxu0 %v9017
  %9019 = vmatprep.subr.mxu0 0.0
  %v9020 = vand.u32 %v56, 4294901760
  %9021 = vmatpush1.xpose.msra.mxu0 %v9020
  %9022 = vmatprep.subr.mxu0 0.0
  %v9023 = vand.u32 %v59, 4294901760
  %9024 = vmatpush1.xpose.msra.mxu0 %v9023
  %9025 = vmatprep.subr.mxu0 0.0
  %v9026 = vand.u32 %v62, 4294901760
  %9027 = vmatpush1.xpose.msra.mxu0 %v9026
  %9028 = vmatprep.subr.mxu0 0.0
  %v9029 = vand.u32 %v65, 4294901760
  %9030 = vmatpush1.xpose.msra.mxu0 %v9029
  %9031 = vmatprep.subr.mxu0 0.0
  %v9032 = vand.u32 %v68, 4294901760
  %9033 = vmatpush1.xpose.msra.mxu0 %v9032
  %9034 = vmatprep.subr.mxu0 0.0
  %v9035 = vand.u32 %v71, 4294901760
  %9036 = vmatpush1.xpose.msra.mxu0 %v9035
  %9037 = vmatprep.subr.mxu0 0.0
  %v9038 = vand.u32 %v74, 4294901760
  %9039 = vmatpush1.xpose.msra.mxu0 %v9038
  %9040 = vmatprep.subr.mxu0 0.0
  %9041 = vmatpush1.xpose.msra.mxu0 0.0
  %9042 = vmatprep.subr.mxu0 0.0
  %9043 = vmatpush1.xpose.msra.mxu0 0.0
  %9044 = vmatprep.subr.mxu0 0.0
  %9045 = vmatpush1.xpose.msra.mxu0 0.0
  %9046 = vmatprep.subr.mxu0 0.0
  %9047 = vmatpush1.xpose.msra.mxu0 0.0
  %9048 = vmatprep.subr.mxu0 0.0
  %9049 = vmatpush1.xpose.msra.mxu0 0.0
  %9050 = vmatprep.subr.mxu0 0.0
  %9051 = vmatpush1.xpose.msra.mxu0 0.0
  %9052 = vmatprep.subr.mxu0 0.0
  %9053 = vmatpush1.xpose.msra.mxu0 0.0
  %9054 = vmatprep.subr.mxu0 0.0
  %9055 = vmatpush1.xpose.msra.mxu0 0.0
  %9056 = vmatprep.subr.mxu0 0.0
  %9057 = vmatpush1.xpose.msra.mxu0 0.0
  %9058 = vmatprep.subr.mxu0 0.0
  %9059 = vmatpush1.xpose.msra.mxu0 0.0
  %9060 = vmatprep.subr.mxu0 0.0
  %9061 = vmatpush1.xpose.msra.mxu0 0.0
  %9062 = vmatprep.subr.mxu0 0.0
  %9063 = vmatpush1.xpose.msra.mxu0 0.0
  %9064 = vmatprep.subr.mxu0 0.0
  %9065 = vmatpush1.xpose.msra.mxu0 0.0
  %9066 = vmatprep.subr.mxu0 0.0
  %9067 = vmatpush1.xpose.msra.mxu0 0.0
  %9068 = vmatprep.subr.mxu0 0.0
  %9069 = vmatpush1.xpose.msra.mxu0 0.0
  %9070 = vmatprep.subr.mxu0 0.0
  %9071 = vmatpush1.xpose.msra.mxu0 0.0
  %9072 = vmatprep.subr.mxu0 0.0
  %9073 = vmatpush1.xpose.msra.mxu0 0.0
  %9074 = vmatprep.subr.mxu0 0.0
  %9075 = vmatpush1.xpose.msra.mxu0 0.0
  %9076 = vmatprep.subr.mxu0 0.0
  %9077 = vmatpush1.xpose.msra.mxu0 0.0
  %9078 = vmatprep.subr.mxu0 0.0
  %9079 = vmatpush1.xpose.msra.mxu0 0.0
  %9080 = vmatprep.subr.mxu0 0.0
  %9081 = vmatpush1.xpose.msra.mxu0 0.0
  %9082 = vmatprep.subr.mxu0 0.0
  %9083 = vmatpush1.xpose.msra.mxu0 0.0
  %9084 = vmatprep.subr.mxu0 0.0
  %9085 = vmatpush1.xpose.msra.mxu0 0.0
  %9086 = vmatprep.subr.mxu0 0.0
  %9087 = vmatpush1.xpose.msra.mxu0 0.0
  %9088 = vmatprep.mubr.f32.mxu0 0.0
  %v9089 = vand.u32 %v8283, 4294901760
  %9090 = vmatmul.mubr.f32.gmra.mrb[0].mxu0 %v9089
  %v9091 = vpop.f32.mrb[0].mxu0
  %v9092 = vadd.f32 %v8971, %v9091
  %v9093 = vpop.f32.mrb[0].mxu0
  %9094 = vmatprep.mubr.f32.mxu0 0.0
  %v9095 = vand.u32 %v8285, 4294901760
  %9096 = vmatmul.mubr.f32.gmra.mrb[0].mxu0 %v9095
  %v9097 = vpop.f32.mrb[0].mxu0
  %v9098 = vadd.f32 %v8977, %v9097
  %v9099 = vpop.f32.mrb[0].mxu0
  %9100 = vmatprep.mubr.f32.mxu0 0.0
  %v9101 = vand.u32 %v8287, 4294901760
  %9102 = vmatmul.mubr.f32.gmra.mrb[0].mxu0 %v9101
  %v9103 = vpop.f32.mrb[0].mxu0
  %v9104 = vadd.f32 %v8983, %v9103
  %v9105 = vpop.f32.mrb[0].mxu0
  %9106 = vmatprep.mubr.f32.mxu0 0.0
  %v9107 = vand.u32 %v8289, 4294901760
  %9108 = vmatmul.mubr.f32.gmra.mrb[0].mxu0 %v9107
  %v9109 = vpop.f32.mrb[0].mxu0
  %v9110 = vadd.f32 %v8989, %v9109
  %v9111 = vpop.f32.mrb[0].mxu0
  %9112 = vmatprep.mubr.f32.mxu0 0.0
  %v9113 = vand.u32 %v8291, 4294901760
  %9114 = vmatmul.mubr.f32.gmra.mrb[0].mxu0 %v9113
  %v9115 = vpop.f32.mrb[0].mxu0
  %v9116 = vadd.f32 %v8995, %v9115
  %v9117 = vpop.f32.mrb[0].mxu0
  %9118 = vmatprep.mubr.f32.mxu0 0.0
  %v9119 = vand.u32 %v8293, 4294901760
  %9120 = vmatmul.mubr.f32.gmra.mrb[0].mxu0 %v9119
  %v9121 = vpop.f32.mrb[0].mxu0
  %v9122 = vadd.f32 %v9001, %v9121
  %v9123 = vpop.f32.mrb[0].mxu0
  %9124 = vmatprep.mubr.f32.mxu0 0.0
  %v9125 = vand.u32 %v8295, 4294901760
  %9126 = vmatmul.mubr.f32.gmra.mrb[0].mxu0 %v9125
  %v9127 = vpop.f32.mrb[0].mxu0
  %v9128 = vadd.f32 %v9007, %v9127
  %v9129 = vpop.f32.mrb[0].mxu0
  %9130 = vmatprep.mubr.f32.mxu0 0.0
  %v9131 = vand.u32 %v8297, 4294901760
  %9132 = vmatmul.mubr.f32.gmra.mrb[0].mxu0 %v9131
  %v9133 = vpop.f32.mrb[0].mxu0
  %v9134 = vadd.f32 %v9013, %v9133
  %v9135 = vpop.f32.mrb[0].mxu0
  %9136 = vdwg.mxu0
  %9145 = vrot.lane.b32.xlu0 %v9092, 64
  %v9146 = vpop.permute.xlu0 %9145
  %9147 = vrot.lane.b32.xlu0 %v9098, 64
  %v9148 = vpop.permute.xlu0 %9147
  %9149 = vrot.lane.b32.xlu0 %v9104, 64
  %v9150 = vpop.permute.xlu0 %9149
  %9151 = vrot.lane.b32.xlu0 %v9110, 64
  %v9152 = vpop.permute.xlu0 %9151
  %9153 = vrot.lane.b32.xlu0 %v9116, 64
  %v9154 = vpop.permute.xlu0 %9153
  %9155 = vrot.lane.b32.xlu0 %v9122, 64
  %v9156 = vpop.permute.xlu0 %9155
  %9157 = vrot.lane.b32.xlu0 %v9128, 64
  %v9158 = vpop.permute.xlu0 %9157
  %9159 = vrot.lane.b32.xlu0 %v9134, 64
  %v9160 = vpop.permute.xlu0 %9159
  %9169 = vst.msk [vmem:[%s2 + $0x18] sm:$0xff] %vm3828, %v9146
  %9170 = vst.msk [vmem:[%s2 + $0x38] sm:$0xff] %vm3828, %v9148
  %9171 = vst.msk [vmem:[%s2 + $0x58] sm:$0xff] %vm3828, %v9150
  %9172 = vst.msk [vmem:[%s2 + $0x78] sm:$0xff] %vm3828, %v9152
  %9173 = vst.msk [vmem:[%s2 + $0x98] sm:$0xff] %vm3828, %v9154
  %9174 = vst.msk [vmem:[%s2 + $0xb8] sm:$0xff] %vm3828, %v9156
  %9175 = vst.msk [vmem:[%s2 + $0xd8] sm:$0xff] %vm3828, %v9158
  %9176 = vst.msk [vmem:[%s2 + $0xf8] sm:$0xff] %vm3828, %v9160
  // Predicated region
  $region10: #{forward.1} parent=0 // pred_check
    _
  $region11: #{forward.1} parent=0 // pred_check_branch
    %9178 = sbr.rel (0) target = $region13
  $region12: #{forward.1} parent=0 // pred_region
    _
  $region13: #{forward.1} parent=0 // pred_fallthru
    _
  // Predicated region
  $region14: #{forward.1} parent=0 // pred_check
    _
  $region15: #{forward.1} parent=0 // pred_check_branch
    %9180 = sbr.rel (0) target = $region17
  $region16: #{forward.1} parent=0 // pred_region
    _
  $region17: #{forward.1} parent=0 // pred_fallthru
    _

</llo_original>
